<compile_context>
chip_gen: v5e
topology: v5e:2x2
jax: 0.10.0
libtpu: 0.0.40
codegen_flags: <defaults>
</compile_context>

<pallas_src>
import numpy as np
import jax
import jax.numpy as jnp
from jax.experimental import pallas as pl
from jax.experimental.pallas import tpu as pltpu


# ---------------- Pallas kernels ----------------

def _gcn_fused_kernel(x_ref, a_ref, w_ref, s_ref, t_ref, o_ref, h_ref):
    # GCNConv + BatchNorm1d(eval) + ReLU, fully fused:
    #   h = X @ W                       (held in VMEM scratch)
    #   o = relu((A_norm @ h) * s + t)  (s/t fold the BN affine and the conv bias)
    h_ref[...] = jnp.dot(x_ref[...], w_ref[...], preferred_element_type=jnp.float32)
    y = jnp.dot(a_ref[...], h_ref[...], preferred_element_type=jnp.float32)
    o_ref[...] = jnp.maximum(y * s_ref[...] + t_ref[...], 0.0)


def _mlp_head_kernel(x_ref, w1_ref, s1_ref, t1_ref, w2_ref, s2_ref, t2_ref,
                     w3_ref, b3_ref, o_ref):
    # fc1+BN+ReLU -> fc2+BN+ReLU -> fc3 -> log_softmax, all resident in VMEM, one call.
    h = jnp.dot(x_ref[...], w1_ref[...], preferred_element_type=jnp.float32)
    h = jnp.maximum(h * s1_ref[...] + t1_ref[...], 0.0)
    h = jnp.dot(h, w2_ref[...], preferred_element_type=jnp.float32)
    h = jnp.maximum(h * s2_ref[...] + t2_ref[...], 0.0)
    logits = jnp.dot(h, w3_ref[...], preferred_element_type=jnp.float32) + b3_ref[...]
    m = jnp.max(logits, axis=-1, keepdims=True)
    lse = jnp.log(jnp.sum(jnp.exp(logits - m), axis=-1, keepdims=True))
    o_ref[...] = logits - m - lse


# ---------------- wrappers ----------------

def _full(shape):
    # Single grid step; block == whole array (exempt from (8,128) divisibility).
    return pl.BlockSpec(shape, lambda i: (0,) * len(shape))


def gcn_layer_fused(x, a_norm, W, scale, shift):
    """relu((A_norm @ (x @ W)) * scale + shift) in one pallas_call."""
    M = x.shape[0]
    N = W.shape[1]
    return pl.pallas_call(
        _gcn_fused_kernel,
        out_shape=jax.ShapeDtypeStruct((M, N), jnp.float32),
        grid=(1,),
        in_specs=[_full(x.shape), _full(a_norm.shape), _full(W.shape),
                  _full((1, N)), _full((1, N))],
        out_specs=_full((M, N)),
        scratch_shapes=[pltpu.VMEM((M, N), jnp.float32)],
        compiler_params=pltpu.CompilerParams(dimension_semantics=("arbitrary",)),
    )(x.astype(jnp.float32), a_norm.astype(jnp.float32), W.astype(jnp.float32),
      scale.reshape(1, N).astype(jnp.float32), shift.reshape(1, N).astype(jnp.float32))


def mlp_head_fused(x, W1, s1, t1, W2, s2, t2, W3, b3):
    """fc1+BN+ReLU -> fc2+BN+ReLU -> fc3 -> log_softmax in one pallas_call."""
    G = x.shape[0]
    H1, H2, C = W1.shape[1], W2.shape[1], W3.shape[1]
    return pl.pallas_call(
        _mlp_head_kernel,
        out_shape=jax.ShapeDtypeStruct((G, C), jnp.float32),
        grid=(1,),
        in_specs=[_full(x.shape),
                  _full(W1.shape), _full((1, H1)), _full((1, H1)),
                  _full(W2.shape), _full((1, H2)), _full((1, H2)),
                  _full(W3.shape), _full((1, C))],
        out_specs=_full((G, C)),
        compiler_params=pltpu.CompilerParams(dimension_semantics=("arbitrary",)),
    )(x.astype(jnp.float32),
      W1.astype(jnp.float32), s1.reshape(1, H1), t1.reshape(1, H1),
      W2.astype(jnp.float32), s2.reshape(1, H2), t2.reshape(1, H2),
      W3.astype(jnp.float32), b3.reshape(1, C).astype(jnp.float32))


# ---------------- model glue ----------------

def bn_affine(gamma, beta, mean, var, eps=1e-5):
    s = gamma / jnp.sqrt(var + eps)
    t = beta - mean * s
    return s, t


def normalized_adjacency(edge_index, num_nodes):
    src, dst = edge_index
    A = jnp.zeros((num_nodes, num_nodes), jnp.float32).at[dst, src].add(1.0)
    A = A + jnp.eye(num_nodes, dtype=jnp.float32)  # add self loops
    deg = A.sum(axis=1)
    dinv = 1.0 / jnp.sqrt(deg)
    return A * dinv[:, None] * dinv[None, :]


# ---------------- main ----------------

if __name__ == "__main__":
    key = jax.random.PRNGKey(0)
    in_channels, classes = 16, 10
    graphs, nodes_per_graph = 2, 32
    N = graphs * nodes_per_graph

    k_pos, k_params = jax.random.split(key)
    pos = jax.random.normal(k_pos, (N, in_channels), jnp.float32)       # data.pos
    batch = jnp.repeat(jnp.arange(graphs), nodes_per_graph)             # data.batch

    # data.edge_index: a ring graph inside each example (undirected)
    idx = np.arange(nodes_per_graph)
    src_list, dst_list = [], []
    for g in range(graphs):
        off = g * nodes_per_graph
        src_list += list(idx + off) + list((idx + 1) % nodes_per_graph + off)
        dst_list += list((idx + 1) % nodes_per_graph + off) + list(idx + off)
    edge_index = jnp.array([src_list, dst_list], dtype=jnp.int32)

    a_norm = normalized_adjacency(edge_index, N)

    sizes = [(in_channels, 128), (128 + in_channels, 128),
             (in_channels + 256, 512), (in_channels + 768, 1024)]
    fc_in = in_channels + 768 + 1024

    def init_linear(k, fin, fout):
        kw, kb = jax.random.split(k)
        W = jax.random.normal(kw, (fin, fout), jnp.float32) * (1.0 / np.sqrt(fin))
        b = jax.random.normal(kb, (fout,), jnp.float32) * 0.01
        return W, b

    def init_bn(k, f):
        kg, kb = jax.random.split(k)
        gamma = 1.0 + 0.1 * jax.random.normal(kg, (f,), jnp.float32)
        beta = 0.1 * jax.random.normal(kb, (f,), jnp.float32)
        mean = jnp.zeros((f,), jnp.float32)   # fresh BN running stats (eval mode)
        var = jnp.ones((f,), jnp.float32)
        return gamma, beta, mean, var

    keys = jax.random.split(k_params, 16)
    gcn_params = []
    for li, (fi, fo) in enumerate(sizes):
        W, b = init_linear(keys[2 * li], fi, fo)
        bn = init_bn(keys[2 * li + 1], fo)
        gcn_params.append((W, b, bn))

    fc1_W, fc1_b = init_linear(keys[8], fc_in, 512)
    fc1_bn = init_bn(keys[9], 512)
    fc2_W, fc2_b = init_linear(keys[10], 512, 128)
    fc2_bn = init_bn(keys[11], 128)
    fc3_W, fc3_b = init_linear(keys[12], 128, classes)

    params = {
        "gcn": gcn_params,
        "fc1": (fc1_W, fc1_b, fc1_bn),
        "fc2": (fc2_W, fc2_b, fc2_bn),
        "fc3": (fc3_W, fc3_b),
    }

    @jax.jit
    def forward(x, a_norm, params):
        out = x
        for (W, b, bn) in params["gcn"]:         # dense links: concat input with output
            s, t = bn_affine(*bn)
            _out = gcn_layer_fused(out, a_norm, W, s, b * s + t)
            out = jnp.concatenate([out, _out], axis=1)
        # TODO(synk): arbitrary-index scatter_max kept as plain-JAX segment_max glue.
        out = jax.ops.segment_max(out, batch, num_segments=graphs)
        W1, b1, bn1 = params["fc1"]
        W2, b2, bn2 = params["fc2"]
        W3, b3 = params["fc3"]
        s1, t1 = bn_affine(*bn1)
        s2, t2 = bn_affine(*bn2)
        return mlp_head_fused(out, W1, s1, b1 * s1 + t1,
                              W2, s2, b2 * s2 + t2, W3, b3)

    result = jax.block_until_ready(forward(pos, a_norm, params))

    # pure-jnp reference for a correctness sanity check
    def ref_forward(x):
        def bn_eval(v, bn):
            g, be, m, va = bn
            return (v - m) / jnp.sqrt(va + 1e-5) * g + be
        out = x
        for (W, b, bn) in gcn_params:
            h = a_norm @ (out @ W) + b
            out = jnp.concatenate([out, jax.nn.relu(bn_eval(h, bn))], axis=1)
        out = jax.ops.segment_max(out, batch, num_segments=graphs)
        out = jax.nn.relu(bn_eval(out @ fc1_W + fc1_b, fc1_bn))
        out = jax.nn.relu(bn_eval(out @ fc2_W + fc2_b, fc2_bn))
        out = out @ fc3_W + fc3_b
        return jax.nn.log_softmax(out, axis=1)

    ref = jax.block_until_ready(ref_forward(pos))
    assert result.shape == (graphs, classes)
    assert np.allclose(np.asarray(result), np.asarray(ref), atol=1e-3, rtol=1e-3)
    print("KERNEL_OK")
</pallas_src>

<mosaic_0001>
module attributes {stable_mosaic.version = 11 : i64} {
  func.func @_gcn_fused_kernel(%arg0: i32, %arg1: memref<64x16xf32, #tpu.memory_space<vmem>>, %arg2: memref<64x64xf32, #tpu.memory_space<vmem>>, %arg3: memref<16x128xf32, #tpu.memory_space<vmem>>, %arg4: memref<1x128xf32, #tpu.memory_space<vmem>>, %arg5: memref<1x128xf32, #tpu.memory_space<vmem>>, %arg6: memref<64x128xf32, #tpu.memory_space<vmem>>, %arg7: memref<64x128xf32, #tpu.memory_space<vmem>>) attributes {dimension_semantics = [#tpu.dimension_semantics<arbitrary>], iteration_bounds = array<i64: 1>, scalar_prefetch = 0 : i64, scratch_operands = 1 : i64, tpu.core_type = #tpu.core_type<tc>, window_params = [{pipeline_mode = #tpu.pipeline_mode<synchronous>, transform_indices = @transform_0, window_bounds = array<i64: 64, 16>}, {pipeline_mode = #tpu.pipeline_mode<synchronous>, transform_indices = @transform_1, window_bounds = array<i64: 64, 64>}, {pipeline_mode = #tpu.pipeline_mode<synchronous>, transform_indices = @transform_2, window_bounds = array<i64: 16, 128>}, {pipeline_mode = #tpu.pipeline_mode<synchronous>, transform_indices = @transform_3, window_bounds = array<i64: 1, 128>}, {pipeline_mode = #tpu.pipeline_mode<synchronous>, transform_indices = @transform_4, window_bounds = array<i64: 1, 128>}, {pipeline_mode = #tpu.pipeline_mode<synchronous>, transform_indices = @transform_5, window_bounds = array<i64: 64, 128>}]} {
    %c0 = arith.constant 0 : index
    %c0_0 = arith.constant 0 : index
    %0 = vector.load %arg1[%c0, %c0_0] : memref<64x16xf32, #tpu.memory_space<vmem>>, vector<64x16xf32>
    %c0_1 = arith.constant 0 : index
    %c0_2 = arith.constant 0 : index
    %1 = vector.load %arg3[%c0_1, %c0_2] : memref<16x128xf32, #tpu.memory_space<vmem>>, vector<16x128xf32>
    %cst = arith.constant dense<0.000000e+00> : vector<64x128xf32>
    %2 = tpu.matmul %0, %1, %cst {dimension_numbers = #tpu.dot_dimension_numbers<[1], [0], [0], [1], [0, 0, 1, 1], [], []>} : vector<64x16xf32>, vector<16x128xf32>, vector<64x128xf32> -> vector<64x128xf32>
    %c0_3 = arith.constant 0 : index
    %c0_4 = arith.constant 0 : index
    %3 = vector.load %arg7[%c0_3, %c0_4] : memref<64x128xf32, #tpu.memory_space<vmem>>, vector<64x128xf32>
    tpu.vector_store %arg7[%c0_3, %c0_4], %2 {strides = array<i32>} : memref<64x128xf32, #tpu.memory_space<vmem>>, vector<64x128xf32>,
    %c0_5 = arith.constant 0 : index
    %c0_6 = arith.constant 0 : index
    %4 = vector.load %arg2[%c0_5, %c0_6] : memref<64x64xf32, #tpu.memory_space<vmem>>, vector<64x64xf32>
    %c0_7 = arith.constant 0 : index
    %c0_8 = arith.constant 0 : index
    %5 = vector.load %arg7[%c0_7, %c0_8] : memref<64x128xf32, #tpu.memory_space<vmem>>, vector<64x128xf32>
    %cst_9 = arith.constant dense<0.000000e+00> : vector<64x128xf32>
    %6 = tpu.matmul %4, %5, %cst_9 {dimension_numbers = #tpu.dot_dimension_numbers<[1], [0], [0], [1], [0, 0, 1, 1], [], []>} : vector<64x64xf32>, vector<64x128xf32>, vector<64x128xf32> -> vector<64x128xf32>
    %c0_10 = arith.constant 0 : index
    %c0_11 = arith.constant 0 : index
    %7 = vector.load %arg4[%c0_10, %c0_11] : memref<1x128xf32, #tpu.memory_space<vmem>>, vector<1x128xf32>
    %8 = vector.broadcast %7 : vector<1x128xf32> to vector<64x128xf32>
    %9 = arith.mulf %6, %8 : vector<64x128xf32>
    %c0_12 = arith.constant 0 : index
    %c0_13 = arith.constant 0 : index
    %10 = vector.load %arg5[%c0_12, %c0_13] : memref<1x128xf32, #tpu.memory_space<vmem>>, vector<1x128xf32>
    %11 = vector.broadcast %10 : vector<1x128xf32> to vector<64x128xf32>
    %12 = arith.addf %9, %11 : vector<64x128xf32>
    %cst_14 = arith.constant 0.000000e+00 : f32
    %13 = vector.broadcast %cst_14 : f32 to vector<64x128xf32>
    %14 = arith.maximumf %12, %13 : vector<64x128xf32>
    %c0_15 = arith.constant 0 : index
    %c0_16 = arith.constant 0 : index
    %15 = vector.load %arg6[%c0_15, %c0_16] : memref<64x128xf32, #tpu.memory_space<vmem>>, vector<64x128xf32>
    tpu.vector_store %arg6[%c0_15, %c0_16], %14 {strides = array<i32>} : memref<64x128xf32, #tpu.memory_space<vmem>>, vector<64x128xf32>,
    return
  }
  func.func @transform_0(%arg0: i32) -> (i32, i32) {
    %c0_i32 = arith.constant 0 : i32
    %c0_i32_0 = arith.constant 0 : i32
    %c0_i32_1 = arith.constant 0 : i32
    return %c0_i32, %c0_i32_0 : i32, i32
  }
  func.func @transform_1(%arg0: i32) -> (i32, i32) {
    %c0_i32 = arith.constant 0 : i32
    %c0_i32_0 = arith.constant 0 : i32
    %c0_i32_1 = arith.constant 0 : i32
    return %c0_i32, %c0_i32_0 : i32, i32
  }
  func.func @transform_2(%arg0: i32) -> (i32, i32) {
    %c0_i32 = arith.constant 0 : i32
    %c0_i32_0 = arith.constant 0 : i32
    %c0_i32_1 = arith.constant 0 : i32
    return %c0_i32, %c0_i32_0 : i32, i32
  }
  func.func @transform_3(%arg0: i32) -> (i32, i32) {
    %c0_i32 = arith.constant 0 : i32
    %c0_i32_0 = arith.constant 0 : i32
    %c0_i32_1 = arith.constant 0 : i32
    return %c0_i32, %c0_i32_0 : i32, i32
  }
  func.func @transform_4(%arg0: i32) -> (i32, i32) {
    %c0_i32 = arith.constant 0 : i32
    %c0_i32_0 = arith.constant 0 : i32
    %c0_i32_1 = arith.constant 0 : i32
    return %c0_i32, %c0_i32_0 : i32, i32
  }
  func.func @transform_5(%arg0: i32) -> (i32, i32) {
    %c0_i32 = arith.constant 0 : i32
    %c0_i32_0 = arith.constant 0 : i32
    %c0_i32_1 = arith.constant 0 : i32
    return %c0_i32, %c0_i32_0 : i32, i32
  }
}

module attributes {stable_mosaic.version = 11 : i64} {
  func.func @_gcn_fused_kernel(%arg0: i32, %arg1: memref<64x272xf32, #tpu.memory_space<vmem>>, %arg2: memref<64x64xf32, #tpu.memory_space<vmem>>, %arg3: memref<272x512xf32, #tpu.memory_space<vmem>>, %arg4: memref<1x512xf32, #tpu.memory_space<vmem>>, %arg5: memref<1x512xf32, #tpu.memory_space<vmem>>, %arg6: memref<64x512xf32, #tpu.memory_space<vmem>>, %arg7: memref<64x512xf32, #tpu.memory_space<vmem>>) attributes {dimension_semantics = [#tpu.dimension_semantics<arbitrary>], iteration_bounds = array<i64: 1>, scalar_prefetch = 0 : i64, scratch_operands = 1 : i64, tpu.core_type = #tpu.core_type<tc>, window_params = [{pipeline_mode = #tpu.pipeline_mode<synchronous>, transform_indices = @transform_0, window_bounds = array<i64: 64, 272>}, {pipeline_mode = #tpu.pipeline_mode<synchronous>, transform_indices = @transform_1, window_bounds = array<i64: 64, 64>}, {pipeline_mode = #tpu.pipeline_mode<synchronous>, transform_indices = @transform_2, window_bounds = array<i64: 272, 512>}, {pipeline_mode = #tpu.pipeline_mode<synchronous>, transform_indices = @transform_3, window_bounds = array<i64: 1, 512>}, {pipeline_mode = #tpu.pipeline_mode<synchronous>, transform_indices = @transform_4, window_bounds = array<i64: 1, 512>}, {pipeline_mode = #tpu.pipeline_mode<synchronous>, transform_indices = @transform_5, window_bounds = array<i64: 64, 512>}]} {
    %c0 = arith.constant 0 : index
    %c0_0 = arith.constant 0 : index
    %0 = vector.load %arg1[%c0, %c0_0] : memref<64x272xf32, #tpu.memory_space<vmem>>, vector<64x272xf32>
    %c0_1 = arith.constant 0 : index
    %c0_2 = arith.constant 0 : index
    %1 = vector.load %arg3[%c0_1, %c0_2] : memref<272x512xf32, #tpu.memory_space<vmem>>, vector<272x512xf32>
    %cst = arith.constant dense<0.000000e+00> : vector<64x512xf32>
    %2 = tpu.matmul %0, %1, %cst {dimension_numbers = #tpu.dot_dimension_numbers<[1], [0], [0], [1], [0, 0, 1, 1], [], []>} : vector<64x272xf32>, vector<272x512xf32>, vector<64x512xf32> -> vector<64x512xf32>
    %c0_3 = arith.constant 0 : index
    %c0_4 = arith.constant 0 : index
    %3 = vector.load %arg7[%c0_3, %c0_4] : memref<64x512xf32, #tpu.memory_space<vmem>>, vector<64x512xf32>
    tpu.vector_store %arg7[%c0_3, %c0_4], %2 {strides = array<i32>} : memref<64x512xf32, #tpu.memory_space<vmem>>, vector<64x512xf32>,
    %c0_5 = arith.constant 0 : index
    %c0_6 = arith.constant 0 : index
    %4 = vector.load %arg2[%c0_5, %c0_6] : memref<64x64xf32, #tpu.memory_space<vmem>>, vector<64x64xf32>
    %c0_7 = arith.constant 0 : index
    %c0_8 = arith.constant 0 : index
    %5 = vector.load %arg7[%c0_7, %c0_8] : memref<64x512xf32, #tpu.memory_space<vmem>>, vector<64x512xf32>
    %cst_9 = arith.constant dense<0.000000e+00> : vector<64x512xf32>
    %6 = tpu.matmul %4, %5, %cst_9 {dimension_numbers = #tpu.dot_dimension_numbers<[1], [0], [0], [1], [0, 0, 1, 1], [], []>} : vector<64x64xf32>, vector<64x512xf32>, vector<64x512xf32> -> vector<64x512xf32>
    %c0_10 = arith.constant 0 : index
    %c0_11 = arith.constant 0 : index
    %7 = vector.load %arg4[%c0_10, %c0_11] : memref<1x512xf32, #tpu.memory_space<vmem>>, vector<1x512xf32>
    %8 = vector.broadcast %7 : vector<1x512xf32> to vector<64x512xf32>
    %9 = arith.mulf %6, %8 : vector<64x512xf32>
    %c0_12 = arith.constant 0 : index
    %c0_13 = arith.constant 0 : index
    %10 = vector.load %arg5[%c0_12, %c0_13] : memref<1x512xf32, #tpu.memory_space<vmem>>, vector<1x512xf32>
    %11 = vector.broadcast %10 : vector<1x512xf32> to vector<64x512xf32>
    %12 = arith.addf %9, %11 : vector<64x512xf32>
    %cst_14 = arith.constant 0.000000e+00 : f32
    %13 = vector.broadcast %cst_14 : f32 to vector<64x512xf32>
    %14 = arith.maximumf %12, %13 : vector<64x512xf32>
    %c0_15 = arith.constant 0 : index
    %c0_16 = arith.constant 0 : index
    %15 = vector.load %arg6[%c0_15, %c0_16] : memref<64x512xf32, #tpu.memory_space<vmem>>, vector<64x512xf32>
    tpu.vector_store %arg6[%c0_15, %c0_16], %14 {strides = array<i32>} : memref<64x512xf32, #tpu.memory_space<vmem>>, vector<64x512xf32>,
    return
  }
  func.func @transform_0(%arg0: i32) -> (i32, i32) {
    %c0_i32 = arith.constant 0 : i32
    %c0_i32_0 = arith.constant 0 : i32
    %c0_i32_1 = arith.constant 0 : i32
    return %c0_i32, %c0_i32_0 : i32, i32
  }
  func.func @transform_1(%arg0: i32) -> (i32, i32) {
    %c0_i32 = arith.constant 0 : i32
    %c0_i32_0 = arith.constant 0 : i32
    %c0_i32_1 = arith.constant 0 : i32
    return %c0_i32, %c0_i32_0 : i32, i32
  }
  func.func @transform_2(%arg0: i32) -> (i32, i32) {
    %c0_i32 = arith.constant 0 : i32
    %c0_i32_0 = arith.constant 0 : i32
    %c0_i32_1 = arith.constant 0 : i32
    return %c0_i32, %c0_i32_0 : i32, i32
  }
  func.func @transform_3(%arg0: i32) -> (i32, i32) {
    %c0_i32 = arith.constant 0 : i32
    %c0_i32_0 = arith.constant 0 : i32
    %c0_i32_1 = arith.constant 0 : i32
    return %c0_i32, %c0_i32_0 : i32, i32
  }
  func.func @transform_4(%arg0: i32) -> (i32, i32) {
    %c0_i32 = arith.constant 0 : i32
    %c0_i32_0 = arith.constant 0 : i32
    %c0_i32_1 = arith.constant 0 : i32
    return %c0_i32, %c0_i32_0 : i32, i32
  }
  func.func @transform_5(%arg0: i32) -> (i32, i32) {
    %c0_i32 = arith.constant 0 : i32
    %c0_i32_0 = arith.constant 0 : i32
    %c0_i32_1 = arith.constant 0 : i32
    return %c0_i32, %c0_i32_0 : i32, i32
  }
}

module attributes {stable_mosaic.version = 11 : i64} {
  func.func @_gcn_fused_kernel(%arg0: i32, %arg1: memref<64x144xf32, #tpu.memory_space<vmem>>, %arg2: memref<64x64xf32, #tpu.memory_space<vmem>>, %arg3: memref<144x128xf32, #tpu.memory_space<vmem>>, %arg4: memref<1x128xf32, #tpu.memory_space<vmem>>, %arg5: memref<1x128xf32, #tpu.memory_space<vmem>>, %arg6: memref<64x128xf32, #tpu.memory_space<vmem>>, %arg7: memref<64x128xf32, #tpu.memory_space<vmem>>) attributes {dimension_semantics = [#tpu.dimension_semantics<arbitrary>], iteration_bounds = array<i64: 1>, scalar_prefetch = 0 : i64, scratch_operands = 1 : i64, tpu.core_type = #tpu.core_type<tc>, window_params = [{pipeline_mode = #tpu.pipeline_mode<synchronous>, transform_indices = @transform_0, window_bounds = array<i64: 64, 144>}, {pipeline_mode = #tpu.pipeline_mode<synchronous>, transform_indices = @transform_1, window_bounds = array<i64: 64, 64>}, {pipeline_mode = #tpu.pipeline_mode<synchronous>, transform_indices = @transform_2, window_bounds = array<i64: 144, 128>}, {pipeline_mode = #tpu.pipeline_mode<synchronous>, transform_indices = @transform_3, window_bounds = array<i64: 1, 128>}, {pipeline_mode = #tpu.pipeline_mode<synchronous>, transform_indices = @transform_4, window_bounds = array<i64: 1, 128>}, {pipeline_mode = #tpu.pipeline_mode<synchronous>, transform_indices = @transform_5, window_bounds = array<i64: 64, 128>}]} {
    %c0 = arith.constant 0 : index
    %c0_0 = arith.constant 0 : index
    %0 = vector.load %arg1[%c0, %c0_0] : memref<64x144xf32, #tpu.memory_space<vmem>>, vector<64x144xf32>
    %c0_1 = arith.constant 0 : index
    %c0_2 = arith.constant 0 : index
    %1 = vector.load %arg3[%c0_1, %c0_2] : memref<144x128xf32, #tpu.memory_space<vmem>>, vector<144x128xf32>
    %cst = arith.constant dense<0.000000e+00> : vector<64x128xf32>
    %2 = tpu.matmul %0, %1, %cst {dimension_numbers = #tpu.dot_dimension_numbers<[1], [0], [0], [1], [0, 0, 1, 1], [], []>} : vector<64x144xf32>, vector<144x128xf32>, vector<64x128xf32> -> vector<64x128xf32>
    %c0_3 = arith.constant 0 : index
    %c0_4 = arith.constant 0 : index
    %3 = vector.load %arg7[%c0_3, %c0_4] : memref<64x128xf32, #tpu.memory_space<vmem>>, vector<64x128xf32>
    tpu.vector_store %arg7[%c0_3, %c0_4], %2 {strides = array<i32>} : memref<64x128xf32, #tpu.memory_space<vmem>>, vector<64x128xf32>,
    %c0_5 = arith.constant 0 : index
    %c0_6 = arith.constant 0 : index
    %4 = vector.load %arg2[%c0_5, %c0_6] : memref<64x64xf32, #tpu.memory_space<vmem>>, vector<64x64xf32>
    %c0_7 = arith.constant 0 : index
    %c0_8 = arith.constant 0 : index
    %5 = vector.load %arg7[%c0_7, %c0_8] : memref<64x128xf32, #tpu.memory_space<vmem>>, vector<64x128xf32>
    %cst_9 = arith.constant dense<0.000000e+00> : vector<64x128xf32>
    %6 = tpu.matmul %4, %5, %cst_9 {dimension_numbers = #tpu.dot_dimension_numbers<[1], [0], [0], [1], [0, 0, 1, 1], [], []>} : vector<64x64xf32>, vector<64x128xf32>, vector<64x128xf32> -> vector<64x128xf32>
    %c0_10 = arith.constant 0 : index
    %c0_11 = arith.constant 0 : index
    %7 = vector.load %arg4[%c0_10, %c0_11] : memref<1x128xf32, #tpu.memory_space<vmem>>, vector<1x128xf32>
    %8 = vector.broadcast %7 : vector<1x128xf32> to vector<64x128xf32>
    %9 = arith.mulf %6, %8 : vector<64x128xf32>
    %c0_12 = arith.constant 0 : index
    %c0_13 = arith.constant 0 : index
    %10 = vector.load %arg5[%c0_12, %c0_13] : memref<1x128xf32, #tpu.memory_space<vmem>>, vector<1x128xf32>
    %11 = vector.broadcast %10 : vector<1x128xf32> to vector<64x128xf32>
    %12 = arith.addf %9, %11 : vector<64x128xf32>
    %cst_14 = arith.constant 0.000000e+00 : f32
    %13 = vector.broadcast %cst_14 : f32 to vector<64x128xf32>
    %14 = arith.maximumf %12, %13 : vector<64x128xf32>
    %c0_15 = arith.constant 0 : index
    %c0_16 = arith.constant 0 : index
    %15 = vector.load %arg6[%c0_15, %c0_16] : memref<64x128xf32, #tpu.memory_space<vmem>>, vector<64x128xf32>
    tpu.vector_store %arg6[%c0_15, %c0_16], %14 {strides = array<i32>} : memref<64x128xf32, #tpu.memory_space<vmem>>, vector<64x128xf32>,
    return
  }
  func.func @transform_0(%arg0: i32) -> (i32, i32) {
    %c0_i32 = arith.constant 0 : i32
    %c0_i32_0 = arith.constant 0 : i32
    %c0_i32_1 = arith.constant 0 : i32
    return %c0_i32, %c0_i32_0 : i32, i32
  }
  func.func @transform_1(%arg0: i32) -> (i32, i32) {
    %c0_i32 = arith.constant 0 : i32
    %c0_i32_0 = arith.constant 0 : i32
    %c0_i32_1 = arith.constant 0 : i32
    return %c0_i32, %c0_i32_0 : i32, i32
  }
  func.func @transform_2(%arg0: i32) -> (i32, i32) {
    %c0_i32 = arith.constant 0 : i32
    %c0_i32_0 = arith.constant 0 : i32
    %c0_i32_1 = arith.constant 0 : i32
    return %c0_i32, %c0_i32_0 : i32, i32
  }
  func.func @transform_3(%arg0: i32) -> (i32, i32) {
    %c0_i32 = arith.constant 0 : i32
    %c0_i32_0 = arith.constant 0 : i32
    %c0_i32_1 = arith.constant 0 : i32
    return %c0_i32, %c0_i32_0 : i32, i32
  }
  func.func @transform_4(%arg0: i32) -> (i32, i32) {
    %c0_i32 = arith.constant 0 : i32
    %c0_i32_0 = arith.constant 0 : i32
    %c0_i32_1 = arith.constant 0 : i32
    return %c0_i32, %c0_i32_0 : i32, i32
  }
  func.func @transform_5(%arg0: i32) -> (i32, i32) {
    %c0_i32 = arith.constant 0 : i32
    %c0_i32_0 = arith.constant 0 : i32
    %c0_i32_1 = arith.constant 0 : i32
    return %c0_i32, %c0_i32_0 : i32, i32
  }
}

module attributes {stable_mosaic.version = 11 : i64} {
  func.func @_gcn_fused_kernel(%arg0: i32, %arg1: memref<64x784xf32, #tpu.memory_space<vmem>>, %arg2: memref<64x64xf32, #tpu.memory_space<vmem>>, %arg3: memref<784x1024xf32, #tpu.memory_space<vmem>>, %arg4: memref<1x1024xf32, #tpu.memory_space<vmem>>, %arg5: memref<1x1024xf32, #tpu.memory_space<vmem>>, %arg6: memref<64x1024xf32, #tpu.memory_space<vmem>>, %arg7: memref<64x1024xf32, #tpu.memory_space<vmem>>) attributes {dimension_semantics = [#tpu.dimension_semantics<arbitrary>], iteration_bounds = array<i64: 1>, scalar_prefetch = 0 : i64, scratch_operands = 1 : i64, tpu.core_type = #tpu.core_type<tc>, window_params = [{pipeline_mode = #tpu.pipeline_mode<synchronous>, transform_indices = @transform_0, window_bounds = array<i64: 64, 784>}, {pipeline_mode = #tpu.pipeline_mode<synchronous>, transform_indices = @transform_1, window_bounds = array<i64: 64, 64>}, {pipeline_mode = #tpu.pipeline_mode<synchronous>, transform_indices = @transform_2, window_bounds = array<i64: 784, 1024>}, {pipeline_mode = #tpu.pipeline_mode<synchronous>, transform_indices = @transform_3, window_bounds = array<i64: 1, 1024>}, {pipeline_mode = #tpu.pipeline_mode<synchronous>, transform_indices = @transform_4, window_bounds = array<i64: 1, 1024>}, {pipeline_mode = #tpu.pipeline_mode<synchronous>, transform_indices = @transform_5, window_bounds = array<i64: 64, 1024>}]} {
    %c0 = arith.constant 0 : index
    %c0_0 = arith.constant 0 : index
    %0 = vector.load %arg1[%c0, %c0_0] : memref<64x784xf32, #tpu.memory_space<vmem>>, vector<64x784xf32>
    %c0_1 = arith.constant 0 : index
    %c0_2 = arith.constant 0 : index
    %1 = vector.load %arg3[%c0_1, %c0_2] : memref<784x1024xf32, #tpu.memory_space<vmem>>, vector<784x1024xf32>
    %cst = arith.constant dense<0.000000e+00> : vector<64x1024xf32>
    %2 = tpu.matmul %0, %1, %cst {dimension_numbers = #tpu.dot_dimension_numbers<[1], [0], [0], [1], [0, 0, 1, 1], [], []>} : vector<64x784xf32>, vector<784x1024xf32>, vector<64x1024xf32> -> vector<64x1024xf32>
    %c0_3 = arith.constant 0 : index
    %c0_4 = arith.constant 0 : index
    %3 = vector.load %arg7[%c0_3, %c0_4] : memref<64x1024xf32, #tpu.memory_space<vmem>>, vector<64x1024xf32>
    tpu.vector_store %arg7[%c0_3, %c0_4], %2 {strides = array<i32>} : memref<64x1024xf32, #tpu.memory_space<vmem>>, vector<64x1024xf32>,
    %c0_5 = arith.constant 0 : index
    %c0_6 = arith.constant 0 : index
    %4 = vector.load %arg2[%c0_5, %c0_6] : memref<64x64xf32, #tpu.memory_space<vmem>>, vector<64x64xf32>
    %c0_7 = arith.constant 0 : index
    %c0_8 = arith.constant 0 : index
    %5 = vector.load %arg7[%c0_7, %c0_8] : memref<64x1024xf32, #tpu.memory_space<vmem>>, vector<64x1024xf32>
    %cst_9 = arith.constant dense<0.000000e+00> : vector<64x1024xf32>
    %6 = tpu.matmul %4, %5, %cst_9 {dimension_numbers = #tpu.dot_dimension_numbers<[1], [0], [0], [1], [0, 0, 1, 1], [], []>} : vector<64x64xf32>, vector<64x1024xf32>, vector<64x1024xf32> -> vector<64x1024xf32>
    %c0_10 = arith.constant 0 : index
    %c0_11 = arith.constant 0 : index
    %7 = vector.load %arg4[%c0_10, %c0_11] : memref<1x1024xf32, #tpu.memory_space<vmem>>, vector<1x1024xf32>
    %8 = vector.broadcast %7 : vector<1x1024xf32> to vector<64x1024xf32>
    %9 = arith.mulf %6, %8 : vector<64x1024xf32>
    %c0_12 = arith.constant 0 : index
    %c0_13 = arith.constant 0 : index
    %10 = vector.load %arg5[%c0_12, %c0_13] : memref<1x1024xf32, #tpu.memory_space<vmem>>, vector<1x1024xf32>
    %11 = vector.broadcast %10 : vector<1x1024xf32> to vector<64x1024xf32>
    %12 = arith.addf %9, %11 : vector<64x1024xf32>
    %cst_14 = arith.constant 0.000000e+00 : f32
    %13 = vector.broadcast %cst_14 : f32 to vector<64x1024xf32>
    %14 = arith.maximumf %12, %13 : vector<64x1024xf32>
    %c0_15 = arith.constant 0 : index
    %c0_16 = arith.constant 0 : index
    %15 = vector.load %arg6[%c0_15, %c0_16] : memref<64x1024xf32, #tpu.memory_space<vmem>>, vector<64x1024xf32>
    tpu.vector_store %arg6[%c0_15, %c0_16], %14 {strides = array<i32>} : memref<64x1024xf32, #tpu.memory_space<vmem>>, vector<64x1024xf32>,
    return
  }
  func.func @transform_0(%arg0: i32) -> (i32, i32) {
    %c0_i32 = arith.constant 0 : i32
    %c0_i32_0 = arith.constant 0 : i32
    %c0_i32_1 = arith.constant 0 : i32
    return %c0_i32, %c0_i32_0 : i32, i32
  }
  func.func @transform_1(%arg0: i32) -> (i32, i32) {
    %c0_i32 = arith.constant 0 : i32
    %c0_i32_0 = arith.constant 0 : i32
    %c0_i32_1 = arith.constant 0 : i32
    return %c0_i32, %c0_i32_0 : i32, i32
  }
  func.func @transform_2(%arg0: i32) -> (i32, i32) {
    %c0_i32 = arith.constant 0 : i32
    %c0_i32_0 = arith.constant 0 : i32
    %c0_i32_1 = arith.constant 0 : i32
    return %c0_i32, %c0_i32_0 : i32, i32
  }
  func.func @transform_3(%arg0: i32) -> (i32, i32) {
    %c0_i32 = arith.constant 0 : i32
    %c0_i32_0 = arith.constant 0 : i32
    %c0_i32_1 = arith.constant 0 : i32
    return %c0_i32, %c0_i32_0 : i32, i32
  }
  func.func @transform_4(%arg0: i32) -> (i32, i32) {
    %c0_i32 = arith.constant 0 : i32
    %c0_i32_0 = arith.constant 0 : i32
    %c0_i32_1 = arith.constant 0 : i32
    return %c0_i32, %c0_i32_0 : i32, i32
  }
  func.func @transform_5(%arg0: i32) -> (i32, i32) {
    %c0_i32 = arith.constant 0 : i32
    %c0_i32_0 = arith.constant 0 : i32
    %c0_i32_1 = arith.constant 0 : i32
    return %c0_i32, %c0_i32_0 : i32, i32
  }
}

module attributes {stable_mosaic.version = 11 : i64} {
  func.func @_mlp_head_kernel(%arg0: i32, %arg1: memref<2x1808xf32, #tpu.memory_space<vmem>>, %arg2: memref<1808x512xf32, #tpu.memory_space<vmem>>, %arg3: memref<1x512xf32, #tpu.memory_space<vmem>>, %arg4: memref<1x512xf32, #tpu.memory_space<vmem>>, %arg5: memref<512x128xf32, #tpu.memory_space<vmem>>, %arg6: memref<1x128xf32, #tpu.memory_space<vmem>>, %arg7: memref<1x128xf32, #tpu.memory_space<vmem>>, %arg8: memref<128x10xf32, #tpu.memory_space<vmem>>, %arg9: memref<1x10xf32, #tpu.memory_space<vmem>>, %arg10: memref<2x10xf32, #tpu.memory_space<vmem>>) attributes {dimension_semantics = [#tpu.dimension_semantics<arbitrary>], iteration_bounds = array<i64: 1>, scalar_prefetch = 0 : i64, scratch_operands = 0 : i64, tpu.core_type = #tpu.core_type<tc>, window_params = [{pipeline_mode = #tpu.pipeline_mode<synchronous>, transform_indices = @transform_0, window_bounds = array<i64: 2, 1808>}, {pipeline_mode = #tpu.pipeline_mode<synchronous>, transform_indices = @transform_1, window_bounds = array<i64: 1808, 512>}, {pipeline_mode = #tpu.pipeline_mode<synchronous>, transform_indices = @transform_2, window_bounds = array<i64: 1, 512>}, {pipeline_mode = #tpu.pipeline_mode<synchronous>, transform_indices = @transform_3, window_bounds = array<i64: 1, 512>}, {pipeline_mode = #tpu.pipeline_mode<synchronous>, transform_indices = @transform_4, window_bounds = array<i64: 512, 128>}, {pipeline_mode = #tpu.pipeline_mode<synchronous>, transform_indices = @transform_5, window_bounds = array<i64: 1, 128>}, {pipeline_mode = #tpu.pipeline_mode<synchronous>, transform_indices = @transform_6, window_bounds = array<i64: 1, 128>}, {pipeline_mode = #tpu.pipeline_mode<synchronous>, transform_indices = @transform_7, window_bounds = array<i64: 128, 10>}, {pipeline_mode = #tpu.pipeline_mode<synchronous>, transform_indices = @transform_8, window_bounds = array<i64: 1, 10>}, {pipeline_mode = #tpu.pipeline_mode<synchronous>, transform_indices = @transform_9, window_bounds = array<i64: 2, 10>}]} {
    %c0 = arith.constant 0 : index
    %c0_0 = arith.constant 0 : index
    %0 = vector.load %arg1[%c0, %c0_0] : memref<2x1808xf32, #tpu.memory_space<vmem>>, vector<2x1808xf32>
    %c0_1 = arith.constant 0 : index
    %c0_2 = arith.constant 0 : index
    %1 = vector.load %arg2[%c0_1, %c0_2] : memref<1808x512xf32, #tpu.memory_space<vmem>>, vector<1808x512xf32>
    %cst = arith.constant dense<0.000000e+00> : vector<2x512xf32>
    %2 = tpu.matmul %0, %1, %cst {dimension_numbers = #tpu.dot_dimension_numbers<[1], [0], [0], [1], [0, 0, 1, 1], [], []>} : vector<2x1808xf32>, vector<1808x512xf32>, vector<2x512xf32> -> vector<2x512xf32>
    %c0_3 = arith.constant 0 : index
    %c0_4 = arith.constant 0 : index
    %3 = vector.load %arg3[%c0_3, %c0_4] : memref<1x512xf32, #tpu.memory_space<vmem>>, vector<1x512xf32>
    %4 = vector.broadcast %3 : vector<1x512xf32> to vector<2x512xf32>
    %5 = arith.mulf %2, %4 : vector<2x512xf32>
    %c0_5 = arith.constant 0 : index
    %c0_6 = arith.constant 0 : index
    %6 = vector.load %arg4[%c0_5, %c0_6] : memref<1x512xf32, #tpu.memory_space<vmem>>, vector<1x512xf32>
    %7 = vector.broadcast %6 : vector<1x512xf32> to vector<2x512xf32>
    %8 = arith.addf %5, %7 : vector<2x512xf32>
    %cst_7 = arith.constant 0.000000e+00 : f32
    %9 = vector.broadcast %cst_7 : f32 to vector<2x512xf32>
    %10 = arith.maximumf %8, %9 : vector<2x512xf32>
    %c0_8 = arith.constant 0 : index
    %c0_9 = arith.constant 0 : index
    %11 = vector.load %arg5[%c0_8, %c0_9] : memref<512x128xf32, #tpu.memory_space<vmem>>, vector<512x128xf32>
    %cst_10 = arith.constant dense<0.000000e+00> : vector<2x128xf32>
    %12 = tpu.matmul %10, %11, %cst_10 {dimension_numbers = #tpu.dot_dimension_numbers<[1], [0], [0], [1], [0, 0, 1, 1], [], []>} : vector<2x512xf32>, vector<512x128xf32>, vector<2x128xf32> -> vector<2x128xf32>
    %c0_11 = arith.constant 0 : index
    %c0_12 = arith.constant 0 : index
    %13 = vector.load %arg6[%c0_11, %c0_12] : memref<1x128xf32, #tpu.memory_space<vmem>>, vector<1x128xf32>
    %14 = vector.broadcast %13 : vector<1x128xf32> to vector<2x128xf32>
    %15 = arith.mulf %12, %14 : vector<2x128xf32>
    %c0_13 = arith.constant 0 : index
    %c0_14 = arith.constant 0 : index
    %16 = vector.load %arg7[%c0_13, %c0_14] : memref<1x128xf32, #tpu.memory_space<vmem>>, vector<1x128xf32>
    %17 = vector.broadcast %16 : vector<1x128xf32> to vector<2x128xf32>
    %18 = arith.addf %15, %17 : vector<2x128xf32>
    %cst_15 = arith.constant 0.000000e+00 : f32
    %19 = vector.broadcast %cst_15 : f32 to vector<2x128xf32>
    %20 = arith.maximumf %18, %19 : vector<2x128xf32>
    %c0_16 = arith.constant 0 : index
    %c0_17 = arith.constant 0 : index
    %21 = vector.load %arg8[%c0_16, %c0_17] : memref<128x10xf32, #tpu.memory_space<vmem>>, vector<128x10xf32>
    %cst_18 = arith.constant dense<0.000000e+00> : vector<2x10xf32>
    %22 = tpu.matmul %20, %21, %cst_18 {dimension_numbers = #tpu.dot_dimension_numbers<[1], [0], [0], [1], [0, 0, 1, 1], [], []>} : vector<2x128xf32>, vector<128x10xf32>, vector<2x10xf32> -> vector<2x10xf32>
    %c0_19 = arith.constant 0 : index
    %c0_20 = arith.constant 0 : index
    %23 = vector.load %arg9[%c0_19, %c0_20] : memref<1x10xf32, #tpu.memory_space<vmem>>, vector<1x10xf32>
    %24 = vector.broadcast %23 : vector<1x10xf32> to vector<2x10xf32>
    %25 = arith.addf %22, %24 : vector<2x10xf32>
    %cst_21 = arith.constant dense<0xFF800000> : vector<2xf32>
    %26 = vector.multi_reduction <maximumf>, %25, %cst_21 [1] : vector<2x10xf32> to vector<2xf32>
    %27 = vector.shape_cast %26 : vector<2xf32> to vector<2x1xf32>
    %28 = vector.broadcast %27 : vector<2x1xf32> to vector<2x10xf32>
    %29 = arith.subf %25, %28 : vector<2x10xf32>
    %30 = math.exp %29 : vector<2x10xf32>
    %cst_22 = arith.constant dense<0.000000e+00> : vector<2xf32>
    %31 = vector.multi_reduction <add>, %30, %cst_22 [1] : vector<2x10xf32> to vector<2xf32>
    %32 = vector.shape_cast %31 : vector<2xf32> to vector<2x1xf32>
    %33 = math.log %32 : vector<2x1xf32>
    %34 = vector.broadcast %27 : vector<2x1xf32> to vector<2x10xf32>
    %35 = arith.subf %25, %34 : vector<2x10xf32>
    %36 = vector.broadcast %33 : vector<2x1xf32> to vector<2x10xf32>
    %37 = arith.subf %35, %36 : vector<2x10xf32>
    %c0_23 = arith.constant 0 : index
    %c0_24 = arith.constant 0 : index
    %38 = vector.load %arg10[%c0_23, %c0_24] : memref<2x10xf32, #tpu.memory_space<vmem>>, vector<2x10xf32>
    tpu.vector_store %arg10[%c0_23, %c0_24], %37 {strides = array<i32>} : memref<2x10xf32, #tpu.memory_space<vmem>>, vector<2x10xf32>,
    return
  }
  func.func @transform_0(%arg0: i32) -> (i32, i32) {
    %c0_i32 = arith.constant 0 : i32
    %c0_i32_0 = arith.constant 0 : i32
    %c0_i32_1 = arith.constant 0 : i32
    return %c0_i32, %c0_i32_0 : i32, i32
  }
  func.func @transform_1(%arg0: i32) -> (i32, i32) {
    %c0_i32 = arith.constant 0 : i32
    %c0_i32_0 = arith.constant 0 : i32
    %c0_i32_1 = arith.constant 0 : i32
    return %c0_i32, %c0_i32_0 : i32, i32
  }
  func.func @transform_2(%arg0: i32) -> (i32, i32) {
    %c0_i32 = arith.constant 0 : i32
    %c0_i32_0 = arith.constant 0 : i32
    %c0_i32_1 = arith.constant 0 : i32
    return %c0_i32, %c0_i32_0 : i32, i32
  }
  func.func @transform_3(%arg0: i32) -> (i32, i32) {
    %c0_i32 = arith.constant 0 : i32
    %c0_i32_0 = arith.constant 0 : i32
    %c0_i32_1 = arith.constant 0 : i32
    return %c0_i32, %c0_i32_0 : i32, i32
  }
  func.func @transform_4(%arg0: i32) -> (i32, i32) {
    %c0_i32 = arith.constant 0 : i32
    %c0_i32_0 = arith.constant 0 : i32
    %c0_i32_1 = arith.constant 0 : i32
    return %c0_i32, %c0_i32_0 : i32, i32
  }
  func.func @transform_5(%arg0: i32) -> (i32, i32) {
    %c0_i32 = arith.constant 0 : i32
    %c0_i32_0 = arith.constant 0 : i32
    %c0_i32_1 = arith.constant 0 : i32
    return %c0_i32, %c0_i32_0 : i32, i32
  }
  func.func @transform_6(%arg0: i32) -> (i32, i32) {
    %c0_i32 = arith.constant 0 : i32
    %c0_i32_0 = arith.constant 0 : i32
    %c0_i32_1 = arith.constant 0 : i32
    return %c0_i32, %c0_i32_0 : i32, i32
  }
  func.func @transform_7(%arg0: i32) -> (i32, i32) {
    %c0_i32 = arith.constant 0 : i32
    %c0_i32_0 = arith.constant 0 : i32
    %c0_i32_1 = arith.constant 0 : i32
    return %c0_i32, %c0_i32_0 : i32, i32
  }
  func.func @transform_8(%arg0: i32) -> (i32, i32) {
    %c0_i32 = arith.constant 0 : i32
    %c0_i32_0 = arith.constant 0 : i32
    %c0_i32_1 = arith.constant 0 : i32
    return %c0_i32, %c0_i32_0 : i32, i32
  }
  func.func @transform_9(%arg0: i32) -> (i32, i32) {
    %c0_i32 = arith.constant 0 : i32
    %c0_i32_0 = arith.constant 0 : i32
    %c0_i32_1 = arith.constant 0 : i32
    return %c0_i32, %c0_i32_0 : i32, i32
  }
}

</mosaic_0001>

<llo_original>
// kernel: forward.5
$region0: #{forward.5}
  #allocation0 [shape = 'u32[]', space=smem, size = 0x4, offset = 0x4, fixed_abs, tag = 'smem constant byte address 0x4 - core index']
  #allocation1 [shape = 'u32[72,128]{1,0:T(1,128)}', space=vmem, size = 0x9000, scoped, tag = 'internal scratch']
  #allocation2 [shape = 'f32[64,128]{1,0:T(8,128)}', space=vmem, size = 0x8000, scoped, tag = 'scratch operand']
  %s0 = inlined_call_operand.vmem [shape: f32[64,16], index: 0, kind: input, shape index: {}]
  %s1 = inlined_call_operand.hbm [shape: f32[64,64], index: 1, kind: input, shape index: {}]
  %s2 = inlined_call_operand.hbm [shape: f32[16,128], index: 2, kind: input, shape index: {}]
  %s3 = inlined_call_operand.vmem [shape: f32[1,128], index: 3, kind: input, shape index: {}]
  %s4 = inlined_call_operand.vmem [shape: f32[1,128], index: 4, kind: input, shape index: {}]
  %s5 = inlined_call_operand.vmem [shape: f32[64,128], index: 5, kind: output, shape index: {}]
  %s6 = sld [smem:[#allocation0]]
  $region38: #{forward.5} parent=0
    _
  %s8 = ssub.s32 1, %s6
  %s9 = scalar_select 0, %s8, %s6
  $region1: #{forward.5} parent=0
    #allocation3 [shape = 'u8[32768]{0}', space=vmem, size = 0x8000, scoped, tag = 'input window, operand 1, single buffered']
    #allocation4 [shape = 's32[1]{0}', space=sflag, size = 0x4, scoped, tag = 'scoped memory for forward.5']
    #allocation5 [shape = 'u8[8192]{0}', space=vmem, size = 0x2000, scoped, tag = 'input window, operand 2, single buffered']
    #allocation6 [shape = 's32[1]{0}', space=sflag, size = 0x4, scoped, tag = 'scoped memory for forward.5']
    %10 = vsyncpa [#allocation4], 0
    %11 = vsyncpa [#allocation6], 0
    // Predicated region
    $region2: #{forward.5} parent=1 // pred_check
      _
    $region3: #{forward.5} parent=1 // pred_check_branch
      %13 = sbr.rel (0) target = $region5
    $region4: #{forward.5} parent=1 // pred_region
      _
    $region5: #{forward.5} parent=1 // pred_fallthru
      _
    // Predicated region
    $region6: #{forward.5} parent=1 // pred_check
      _
    $region7: #{forward.5} parent=1 // pred_check_branch
      %15 = sbr.rel (0) target = $region9
    $region8: #{forward.5} parent=1 // pred_region
      %17 = vsyncadd [#allocation4], 0
      %s18 = sshll.u32 %s1, 4
      %s19 = int_to_ptr.hbm [resolvable:$true] %s18
      %s20 = sshll.u32 [#allocation3], 4
      %s21 = int_to_ptr.vmem [resolvable:$true] %s20
      %26 = dma.hbm_to_vmem [thread:$0]  %s19, 1024, %s21, [#allocation4], 128, 128, 8
    $region9: #{forward.5} parent=1 // pred_fallthru
      _
    // Predicated region
    $region10: #{forward.5} parent=1 // pred_check
      _
    $region11: #{forward.5} parent=1 // pred_check_branch
      %28 = sbr.rel (0) target = $region13
    $region12: #{forward.5} parent=1 // pred_region
      %30 = vsyncadd [#allocation6], 0
      %s31 = sshll.u32 %s2, 4
      %s32 = int_to_ptr.hbm [resolvable:$true] %s31
      %s33 = sshll.u32 [#allocation5], 4
      %s34 = int_to_ptr.vmem [resolvable:$true] %s33
      %39 = dma.hbm_to_vmem [thread:$0]  %s32, 256, %s34, [#allocation6], 128, 128, 8
    $region13: #{forward.5} parent=1 // pred_fallthru
      _
    // Predicated region
    $region14: #{forward.5} parent=1 // pred_check
      _
    $region15: #{forward.5} parent=1 // pred_check_branch
      %41 = sbr.rel (0) target = $region17
    $region16: #{forward.5} parent=1 // pred_region
      _
    $region17: #{forward.5} parent=1 // pred_fallthru
      _
    // Predicated region
    $region18: #{forward.5} parent=1 // pred_check
      _
    $region19: #{forward.5} parent=1 // pred_check_branch
      %43 = sbr.rel (0) target = $region21
    $region20: #{forward.5} parent=1 // pred_region
      _
    $region21: #{forward.5} parent=1 // pred_fallthru
      _
    // Predicated region
    $region22: #{forward.5} parent=1 // pred_check
      _
    $region23: #{forward.5} parent=1 // pred_check_branch
      %45 = sbr.rel (0) target = $region25
    $region24: #{forward.5} parent=1 // pred_region
      %47 = dma.done [#allocation4], 1024
    $region25: #{forward.5} parent=1 // pred_fallthru
      _
    // Predicated region
    $region26: #{forward.5} parent=1 // pred_check
      _
    $region27: #{forward.5} parent=1 // pred_check_branch
      %49 = sbr.rel (0) target = $region29
    $region28: #{forward.5} parent=1 // pred_region
      %51 = dma.done [#allocation6], 256
    $region29: #{forward.5} parent=1 // pred_fallthru
      _
    %v52 = vld [vmem:[%s0] sm:$0xff]
    %v53 = vld [vmem:[%s0 + $0x8] sm:$0xff]
    %v54 = vld [vmem:[%s0 + $0x10] sm:$0xff]
    %v55 = vld [vmem:[%s0 + $0x18] sm:$0xff]
    %v56 = vld [vmem:[%s0 + $0x20] sm:$0xff]
    %v57 = vld [vmem:[%s0 + $0x28] sm:$0xff]
    %v58 = vld [vmem:[%s0 + $0x30] sm:$0xff]
    %v59 = vld [vmem:[%s0 + $0x38] sm:$0xff]
    %v60 = vld [vmem:[#allocation5] sm:$0xff]
    %v61 = vld [vmem:[#allocation5 + $0x8] sm:$0xff]
    %vm62 = vcmask 130048
    %v64 = vsel %vm62, %v52, 0
    %v67 = vsel %vm62, %v53, 0
    %v70 = vsel %vm62, %v54, 0
    %v73 = vsel %vm62, %v55, 0
    %v76 = vsel %vm62, %v56, 0
    %v79 = vsel %vm62, %v57, 0
    %v82 = vsel %vm62, %v58, 0
    %v85 = vsel %vm62, %v59, 0
    %87 = vmatpush.msra.mxu0 0.0
    %88 = vmatpush.msra.mxu0 0.0
    %89 = vmatpush.msra.mxu0 0.0
    %90 = vmatpush.msra.mxu0 0.0
    %91 = vmatpush.msra.mxu0 0.0
    %92 = vmatpush.msra.mxu0 0.0
    %93 = vmatpush.msra.mxu0 0.0
    %94 = vmatpush.msra.mxu0 0.0
    %95 = vmatpush.msra.mxu0 0.0
    %96 = vmatpush.msra.mxu0 0.0
    %97 = vmatpush.msra.mxu0 0.0
    %98 = vmatpush.msra.mxu0 0.0
    %99 = vmatpush.msra.mxu0 0.0
    %100 = vmatpush.msra.mxu0 0.0
    %101 = vmatpush.msra.mxu0 %v61
    %102 = vmatpush.msra.mxu0 %v60
    %103 = vmatmul.f32.gmra.mxu0 %v64
    %v104 = vpop.f32.mrf.mxu0
    %v105 = vadd.f32 0.0, %v104
    %106 = vmatmul.f32.gmra.mxu0 %v67
    %v107 = vpop.f32.mrf.mxu0
    %v108 = vadd.f32 0.0, %v107
    %109 = vmatmul.f32.gmra.mxu0 %v70
    %v110 = vpop.f32.mrf.mxu0
    %v111 = vadd.f32 0.0, %v110
    %112 = vmatmul.f32.gmra.mxu0 %v73
    %v113 = vpop.f32.mrf.mxu0
    %v114 = vadd.f32 0.0, %v113
    %115 = vmatmul.f32.gmra.mxu0 %v76
    %v116 = vpop.f32.mrf.mxu0
    %v117 = vadd.f32 0.0, %v116
    %118 = vmatmul.f32.gmra.mxu0 %v79
    %v119 = vpop.f32.mrf.mxu0
    %v120 = vadd.f32 0.0, %v119
    %121 = vmatmul.f32.gmra.mxu0 %v82
    %v122 = vpop.f32.mrf.mxu0
    %v123 = vadd.f32 0.0, %v122
    %124 = vmatmul.f32.gmra.mxu0 %v85
    %v125 = vpop.f32.mrf.mxu0
    %v126 = vadd.f32 0.0, %v125
    %127 = vdwg.mxu0
    %128 = vst [vmem:[#allocation2] sm:$0xff] %v105
    %129 = vst [vmem:[#allocation2 + $0x8] sm:$0xff] %v108
    %130 = vst [vmem:[#allocation2 + $0x10] sm:$0xff] %v111
    %131 = vst [vmem:[#allocation2 + $0x18] sm:$0xff] %v114
    %132 = vst [vmem:[#allocation2 + $0x20] sm:$0xff] %v117
    %133 = vst [vmem:[#allocation2 + $0x28] sm:$0xff] %v120
    %134 = vst [vmem:[#allocation2 + $0x30] sm:$0xff] %v123
    %135 = vst [vmem:[#allocation2 + $0x38] sm:$0xff] %v126
    %v136 = vld [vmem:[#allocation3] sm:$0xff]
    %v137 = vld [vmem:[#allocation3 + $0x8] sm:$0xff]
    %v138 = vld [vmem:[#allocation3 + $0x10] sm:$0xff]
    %v139 = vld [vmem:[#allocation3 + $0x18] sm:$0xff]
    %v140 = vld [vmem:[#allocation3 + $0x20] sm:$0xff]
    %v141 = vld [vmem:[#allocation3 + $0x28] sm:$0xff]
    %v142 = vld [vmem:[#allocation3 + $0x30] sm:$0xff]
    %v143 = vld [vmem:[#allocation3 + $0x38] sm:$0xff]
    %v144 = vld [vmem:[#allocation2] sm:$0xff]
    %v145 = vld [vmem:[#allocation2 + $0x8] sm:$0xff]
    %v146 = vld [vmem:[#allocation2 + $0x10] sm:$0xff]
    %v147 = vld [vmem:[#allocation2 + $0x18] sm:$0xff]
    %v148 = vld [vmem:[#allocation2 + $0x20] sm:$0xff]
    %v149 = vld [vmem:[#allocation2 + $0x28] sm:$0xff]
    %v150 = vld [vmem:[#allocation2 + $0x30] sm:$0xff]
    %v151 = vld [vmem:[#allocation2 + $0x38] sm:$0xff]
    %vm152 = vcmask 523264
    %v154 = vsel %vm152, %v136, 0
    %v157 = vsel %vm152, %v137, 0
    %v160 = vsel %vm152, %v138, 0
    %v163 = vsel %vm152, %v139, 0
    %v166 = vsel %vm152, %v140, 0
    %v169 = vsel %vm152, %v141, 0
    %v172 = vsel %vm152, %v142, 0
    %v175 = vsel %vm152, %v143, 0
    %177 = vmatpush.msra.mxu0 0.0
    %178 = vmatpush.msra.mxu0 0.0
    %179 = vmatpush.msra.mxu0 0.0
    %180 = vmatpush.msra.mxu0 0.0
    %181 = vmatpush.msra.mxu0 0.0
    %182 = vmatpush.msra.mxu0 0.0
    %183 = vmatpush.msra.mxu0 0.0
    %184 = vmatpush.msra.mxu0 0.0
    %185 = vmatpush.msra.mxu0 %v151
    %186 = vmatpush.msra.mxu0 %v150
    %187 = vmatpush.msra.mxu0 %v149
    %188 = vmatpush.msra.mxu0 %v148
    %189 = vmatpush.msra.mxu0 %v147
    %190 = vmatpush.msra.mxu0 %v146
    %191 = vmatpush.msra.mxu0 %v145
    %192 = vmatpush.msra.mxu0 %v144
    %193 = vmatmul.f32.gmra.mxu0 %v154
    %v194 = vpop.f32.mrf.mxu0
    %v195 = vadd.f32 0.0, %v194
    %196 = vmatmul.f32.gmra.mxu0 %v157
    %v197 = vpop.f32.mrf.mxu0
    %v198 = vadd.f32 0.0, %v197
    %199 = vmatmul.f32.gmra.mxu0 %v160
    %v200 = vpop.f32.mrf.mxu0
    %v201 = vadd.f32 0.0, %v200
    %202 = vmatmul.f32.gmra.mxu0 %v163
    %v203 = vpop.f32.mrf.mxu0
    %v204 = vadd.f32 0.0, %v203
    %205 = vmatmul.f32.gmra.mxu0 %v166
    %v206 = vpop.f32.mrf.mxu0
    %v207 = vadd.f32 0.0, %v206
    %208 = vmatmul.f32.gmra.mxu0 %v169
    %v209 = vpop.f32.mrf.mxu0
    %v210 = vadd.f32 0.0, %v209
    %211 = vmatmul.f32.gmra.mxu0 %v172
    %v212 = vpop.f32.mrf.mxu0
    %v213 = vadd.f32 0.0, %v212
    %214 = vmatmul.f32.gmra.mxu0 %v175
    %v215 = vpop.f32.mrf.mxu0
    %v216 = vadd.f32 0.0, %v215
    %217 = vdwg.mxu0
    %v218 = vld [vmem:[%s3] sm:$0x1]
    %v220 = vperm.slane %v218, 0
    %v222 = vmul.f32 %v195, %v220
    %v223 = vmul.f32 %v198, %v220
    %v224 = vmul.f32 %v201, %v220
    %v225 = vmul.f32 %v204, %v220
    %v226 = vmul.f32 %v207, %v220
    %v227 = vmul.f32 %v210, %v220
    %v228 = vmul.f32 %v213, %v220
    %v229 = vmul.f32 %v216, %v220
    %v230 = vld [vmem:[%s4] sm:$0x1]
    %v232 = vperm.slane %v230, 0
    %v234 = vadd.f32 %v222, %v232
    %v235 = vadd.f32 %v223, %v232
    %v236 = vadd.f32 %v224, %v232
    %v237 = vadd.f32 %v225, %v232
    %v238 = vadd.f32 %v226, %v232
    %v239 = vadd.f32 %v227, %v232
    %v240 = vadd.f32 %v228, %v232
    %v241 = vadd.f32 %v229, %v232
    %v242 = vmax.f32 %v234, 0.0
    %v243 = vmax.f32 %v235, 0.0
    %v244 = vmax.f32 %v236, 0.0
    %v245 = vmax.f32 %v237, 0.0
    %v246 = vmax.f32 %v238, 0.0
    %v247 = vmax.f32 %v239, 0.0
    %v248 = vmax.f32 %v240, 0.0
    %v249 = vmax.f32 %v241, 0.0
    %250 = vst [vmem:[%s5] sm:$0xff] %v242
    %251 = vst [vmem:[%s5 + $0x8] sm:$0xff] %v243
    %252 = vst [vmem:[%s5 + $0x10] sm:$0xff] %v244
    %253 = vst [vmem:[%s5 + $0x18] sm:$0xff] %v245
    %254 = vst [vmem:[%s5 + $0x20] sm:$0xff] %v246
    %255 = vst [vmem:[%s5 + $0x28] sm:$0xff] %v247
    %256 = vst [vmem:[%s5 + $0x30] sm:$0xff] %v248
    %257 = vst [vmem:[%s5 + $0x38] sm:$0xff] %v249
    // Predicated region
    $region30: #{forward.5} parent=1 // pred_check
      _
    $region31: #{forward.5} parent=1 // pred_check_branch
      %259 = sbr.rel (0) target = $region33
    $region32: #{forward.5} parent=1 // pred_region
      _
    $region33: #{forward.5} parent=1 // pred_fallthru
      _
    // Predicated region
    $region34: #{forward.5} parent=1 // pred_check
      _
    $region35: #{forward.5} parent=1 // pred_check_branch
      %261 = sbr.rel (0) target = $region37
    $region36: #{forward.5} parent=1 // pred_region
      _
    $region37: #{forward.5} parent=1 // pred_fallthru
      _
    %262 = vsyncpa [#allocation4], 1
    %263 = vsyncpa [#allocation6], 1

// kernel: forward.6
$region0: #{forward.6}
  #allocation0 [shape = 'u32[]', space=smem, size = 0x4, offset = 0x4, fixed_abs, tag = 'smem constant byte address 0x4 - core index']
  #allocation1 [shape = 'u32[72,128]{1,0:T(1,128)}', space=vmem, size = 0x9000, scoped, tag = 'internal scratch']
  #allocation2 [shape = 'f32[64,128]{1,0:T(8,128)}', space=vmem, size = 0x8000, scoped, tag = 'scratch operand']
  %s0 = inlined_call_operand.vmem [shape: f32[64,144], index: 0, kind: input, shape index: {}]
  %s1 = inlined_call_operand.hbm [shape: f32[64,64], index: 1, kind: input, shape index: {}]
  %s2 = inlined_call_operand.hbm [shape: f32[144,128], index: 2, kind: input, shape index: {}]
  %s3 = inlined_call_operand.vmem [shape: f32[1,128], index: 3, kind: input, shape index: {}]
  %s4 = inlined_call_operand.vmem [shape: f32[1,128], index: 4, kind: input, shape index: {}]
  %s5 = inlined_call_operand.vmem [shape: f32[64,128], index: 5, kind: output, shape index: {}]
  %s6 = sld [smem:[#allocation0]]
  $region38: #{forward.6} parent=0
    _
  %s8 = ssub.s32 1, %s6
  %s9 = scalar_select 0, %s8, %s6
  $region1: #{forward.6} parent=0
    #allocation3 [shape = 'u8[32768]{0}', space=vmem, size = 0x8000, scoped, tag = 'input window, operand 1, single buffered']
    #allocation4 [shape = 's32[1]{0}', space=sflag, size = 0x4, scoped, tag = 'scoped memory for forward.6']
    #allocation5 [shape = 'u8[73728]{0}', space=vmem, size = 0x12000, scoped, tag = 'input window, operand 2, single buffered']
    #allocation6 [shape = 's32[1]{0}', space=sflag, size = 0x4, scoped, tag = 'scoped memory for forward.6']
    %10 = vsyncpa [#allocation4], 0
    %11 = vsyncpa [#allocation6], 0
    // Predicated region
    $region2: #{forward.6} parent=1 // pred_check
      _
    $region3: #{forward.6} parent=1 // pred_check_branch
      %13 = sbr.rel (0) target = $region5
    $region4: #{forward.6} parent=1 // pred_region
      _
    $region5: #{forward.6} parent=1 // pred_fallthru
      _
    // Predicated region
    $region6: #{forward.6} parent=1 // pred_check
      _
    $region7: #{forward.6} parent=1 // pred_check_branch
      %15 = sbr.rel (0) target = $region9
    $region8: #{forward.6} parent=1 // pred_region
      %17 = vsyncadd [#allocation4], 0
      %s18 = sshll.u32 %s1, 4
      %s19 = int_to_ptr.hbm [resolvable:$true] %s18
      %s20 = sshll.u32 [#allocation3], 4
      %s21 = int_to_ptr.vmem [resolvable:$true] %s20
      %26 = dma.hbm_to_vmem [thread:$0]  %s19, 1024, %s21, [#allocation4], 128, 128, 8
    $region9: #{forward.6} parent=1 // pred_fallthru
      _
    // Predicated region
    $region10: #{forward.6} parent=1 // pred_check
      _
    $region11: #{forward.6} parent=1 // pred_check_branch
      %28 = sbr.rel (0) target = $region13
    $region12: #{forward.6} parent=1 // pred_region
      %30 = vsyncadd [#allocation6], 0
      %s31 = sshll.u32 %s2, 4
      %s32 = int_to_ptr.hbm [resolvable:$true] %s31
      %s33 = sshll.u32 [#allocation5], 4
      %s34 = int_to_ptr.vmem [resolvable:$true] %s33
      %39 = dma.hbm_to_vmem [thread:$0]  %s32, 2304, %s34, [#allocation6], 128, 128, 8
    $region13: #{forward.6} parent=1 // pred_fallthru
      _
    // Predicated region
    $region14: #{forward.6} parent=1 // pred_check
      _
    $region15: #{forward.6} parent=1 // pred_check_branch
      %41 = sbr.rel (0) target = $region17
    $region16: #{forward.6} parent=1 // pred_region
      _
    $region17: #{forward.6} parent=1 // pred_fallthru
      _
    // Predicated region
    $region18: #{forward.6} parent=1 // pred_check
      _
    $region19: #{forward.6} parent=1 // pred_check_branch
      %43 = sbr.rel (0) target = $region21
    $region20: #{forward.6} parent=1 // pred_region
      _
    $region21: #{forward.6} parent=1 // pred_fallthru
      _
    // Predicated region
    $region22: #{forward.6} parent=1 // pred_check
      _
    $region23: #{forward.6} parent=1 // pred_check_branch
      %45 = sbr.rel (0) target = $region25
    $region24: #{forward.6} parent=1 // pred_region
      %47 = dma.done [#allocation4], 1024
    $region25: #{forward.6} parent=1 // pred_fallthru
      _
    // Predicated region
    $region26: #{forward.6} parent=1 // pred_check
      _
    $region27: #{forward.6} parent=1 // pred_check_branch
      %49 = sbr.rel (0) target = $region29
    $region28: #{forward.6} parent=1 // pred_region
      %51 = dma.done [#allocation6], 2304
    $region29: #{forward.6} parent=1 // pred_fallthru
      _
    %v52 = vld [vmem:[%s0] sm:$0xff]
    %v53 = vld [vmem:[%s0 + $0x8] sm:$0xff]
    %v54 = vld [vmem:[%s0 + $0x10] sm:$0xff]
    %v55 = vld [vmem:[%s0 + $0x18] sm:$0xff]
    %v56 = vld [vmem:[%s0 + $0x20] sm:$0xff]
    %v57 = vld [vmem:[%s0 + $0x28] sm:$0xff]
    %v58 = vld [vmem:[%s0 + $0x30] sm:$0xff]
    %v59 = vld [vmem:[%s0 + $0x38] sm:$0xff]
    %v60 = vld [vmem:[%s0 + $0x40] sm:$0xff]
    %v61 = vld [vmem:[%s0 + $0x48] sm:$0xff]
    %v62 = vld [vmem:[%s0 + $0x50] sm:$0xff]
    %v63 = vld [vmem:[%s0 + $0x58] sm:$0xff]
    %v64 = vld [vmem:[%s0 + $0x60] sm:$0xff]
    %v65 = vld [vmem:[%s0 + $0x68] sm:$0xff]
    %v66 = vld [vmem:[%s0 + $0x70] sm:$0xff]
    %v67 = vld [vmem:[%s0 + $0x78] sm:$0xff]
    %v68 = vld [vmem:[#allocation5] sm:$0xff]
    %v69 = vld [vmem:[#allocation5 + $0x8] sm:$0xff]
    %v70 = vld [vmem:[#allocation5 + $0x10] sm:$0xff]
    %v71 = vld [vmem:[#allocation5 + $0x18] sm:$0xff]
    %v72 = vld [vmem:[#allocation5 + $0x20] sm:$0xff]
    %v73 = vld [vmem:[#allocation5 + $0x28] sm:$0xff]
    %v74 = vld [vmem:[#allocation5 + $0x30] sm:$0xff]
    %v75 = vld [vmem:[#allocation5 + $0x38] sm:$0xff]
    %v76 = vld [vmem:[#allocation5 + $0x40] sm:$0xff]
    %v77 = vld [vmem:[#allocation5 + $0x48] sm:$0xff]
    %v78 = vld [vmem:[#allocation5 + $0x50] sm:$0xff]
    %v79 = vld [vmem:[#allocation5 + $0x58] sm:$0xff]
    %v80 = vld [vmem:[#allocation5 + $0x60] sm:$0xff]
    %v81 = vld [vmem:[#allocation5 + $0x68] sm:$0xff]
    %v82 = vld [vmem:[#allocation5 + $0x70] sm:$0xff]
    %v83 = vld [vmem:[#allocation5 + $0x78] sm:$0xff]
    %v84 = vld [vmem:[#allocation5 + $0x80] sm:$0xff]
    %v85 = vld [vmem:[#allocation5 + $0x88] sm:$0xff]
    %vm86 = vcmask 130048
    %v88 = vsel %vm86, %v53, 0
    %v91 = vsel %vm86, %v55, 0
    %v94 = vsel %vm86, %v57, 0
    %v97 = vsel %vm86, %v59, 0
    %v100 = vsel %vm86, %v61, 0
    %v103 = vsel %vm86, %v63, 0
    %v106 = vsel %vm86, %v65, 0
    %v109 = vsel %vm86, %v67, 0
    %111 = vmatpush.msra.mxu0 %v83
    %112 = vmatpush.msra.mxu0 %v82
    %113 = vmatpush.msra.mxu0 %v81
    %114 = vmatpush.msra.mxu0 %v80
    %115 = vmatpush.msra.mxu0 %v79
    %116 = vmatpush.msra.mxu0 %v78
    %117 = vmatpush.msra.mxu0 %v77
    %118 = vmatpush.msra.mxu0 %v76
    %119 = vmatpush.msra.mxu0 %v75
    %120 = vmatpush.msra.mxu0 %v74
    %121 = vmatpush.msra.mxu0 %v73
    %122 = vmatpush.msra.mxu0 %v72
    %123 = vmatpush.msra.mxu0 %v71
    %124 = vmatpush.msra.mxu0 %v70
    %125 = vmatpush.msra.mxu0 %v69
    %126 = vmatpush.msra.mxu0 %v68
    %127 = vmatmul.f32.gmra.mxu0 %v52
    %v128 = vpop.f32.mrf.mxu0
    %v129 = vadd.f32 0.0, %v128
    %130 = vmatmul.f32.gmra.mxu0 %v54
    %v131 = vpop.f32.mrf.mxu0
    %v132 = vadd.f32 0.0, %v131
    %133 = vmatmul.f32.gmra.mxu0 %v56
    %v134 = vpop.f32.mrf.mxu0
    %v135 = vadd.f32 0.0, %v134
    %136 = vmatmul.f32.gmra.mxu0 %v58
    %v137 = vpop.f32.mrf.mxu0
    %v138 = vadd.f32 0.0, %v137
    %139 = vmatmul.f32.gmra.mxu0 %v60
    %v140 = vpop.f32.mrf.mxu0
    %v141 = vadd.f32 0.0, %v140
    %142 = vmatmul.f32.gmra.mxu0 %v62
    %v143 = vpop.f32.mrf.mxu0
    %v144 = vadd.f32 0.0, %v143
    %145 = vmatmul.f32.gmra.mxu0 %v64
    %v146 = vpop.f32.mrf.mxu0
    %v147 = vadd.f32 0.0, %v146
    %148 = vmatmul.f32.gmra.mxu0 %v66
    %v149 = vpop.f32.mrf.mxu0
    %v150 = vadd.f32 0.0, %v149
    %151 = vdwg.mxu0
    %152 = vmatpush.msra.mxu0 0.0
    %153 = vmatpush.msra.mxu0 0.0
    %154 = vmatpush.msra.mxu0 0.0
    %155 = vmatpush.msra.mxu0 0.0
    %156 = vmatpush.msra.mxu0 0.0
    %157 = vmatpush.msra.mxu0 0.0
    %158 = vmatpush.msra.mxu0 0.0
    %159 = vmatpush.msra.mxu0 0.0
    %160 = vmatpush.msra.mxu0 0.0
    %161 = vmatpush.msra.mxu0 0.0
    %162 = vmatpush.msra.mxu0 0.0
    %163 = vmatpush.msra.mxu0 0.0
    %164 = vmatpush.msra.mxu0 0.0
    %165 = vmatpush.msra.mxu0 0.0
    %166 = vmatpush.msra.mxu0 %v85
    %167 = vmatpush.msra.mxu0 %v84
    %168 = vmatmul.f32.gmra.mxu0 %v88
    %v169 = vpop.f32.mrf.mxu0
    %v170 = vadd.f32 %v129, %v169
    %171 = vmatmul.f32.gmra.mxu0 %v91
    %v172 = vpop.f32.mrf.mxu0
    %v173 = vadd.f32 %v132, %v172
    %174 = vmatmul.f32.gmra.mxu0 %v94
    %v175 = vpop.f32.mrf.mxu0
    %v176 = vadd.f32 %v135, %v175
    %177 = vmatmul.f32.gmra.mxu0 %v97
    %v178 = vpop.f32.mrf.mxu0
    %v179 = vadd.f32 %v138, %v178
    %180 = vmatmul.f32.gmra.mxu0 %v100
    %v181 = vpop.f32.mrf.mxu0
    %v182 = vadd.f32 %v141, %v181
    %183 = vmatmul.f32.gmra.mxu0 %v103
    %v184 = vpop.f32.mrf.mxu0
    %v185 = vadd.f32 %v144, %v184
    %186 = vmatmul.f32.gmra.mxu0 %v106
    %v187 = vpop.f32.mrf.mxu0
    %v188 = vadd.f32 %v147, %v187
    %189 = vmatmul.f32.gmra.mxu0 %v109
    %v190 = vpop.f32.mrf.mxu0
    %v191 = vadd.f32 %v150, %v190
    %192 = vdwg.mxu0
    %193 = vst [vmem:[#allocation2] sm:$0xff] %v170
    %194 = vst [vmem:[#allocation2 + $0x8] sm:$0xff] %v173
    %195 = vst [vmem:[#allocation2 + $0x10] sm:$0xff] %v176
    %196 = vst [vmem:[#allocation2 + $0x18] sm:$0xff] %v179
    %197 = vst [vmem:[#allocation2 + $0x20] sm:$0xff] %v182
    %198 = vst [vmem:[#allocation2 + $0x28] sm:$0xff] %v185
    %199 = vst [vmem:[#allocation2 + $0x30] sm:$0xff] %v188
    %200 = vst [vmem:[#allocation2 + $0x38] sm:$0xff] %v191
    %v201 = vld [vmem:[#allocation3] sm:$0xff]
    %v202 = vld [vmem:[#allocation3 + $0x8] sm:$0xff]
    %v203 = vld [vmem:[#allocation3 + $0x10] sm:$0xff]
    %v204 = vld [vmem:[#allocation3 + $0x18] sm:$0xff]
    %v205 = vld [vmem:[#allocation3 + $0x20] sm:$0xff]
    %v206 = vld [vmem:[#allocation3 + $0x28] sm:$0xff]
    %v207 = vld [vmem:[#allocation3 + $0x30] sm:$0xff]
    %v208 = vld [vmem:[#allocation3 + $0x38] sm:$0xff]
    %v209 = vld [vmem:[#allocation2] sm:$0xff]
    %v210 = vld [vmem:[#allocation2 + $0x8] sm:$0xff]
    %v211 = vld [vmem:[#allocation2 + $0x10] sm:$0xff]
    %v212 = vld [vmem:[#allocation2 + $0x18] sm:$0xff]
    %v213 = vld [vmem:[#allocation2 + $0x20] sm:$0xff]
    %v214 = vld [vmem:[#allocation2 + $0x28] sm:$0xff]
    %v215 = vld [vmem:[#allocation2 + $0x30] sm:$0xff]
    %v216 = vld [vmem:[#allocation2 + $0x38] sm:$0xff]
    %vm217 = vcmask 523264
    %v219 = vsel %vm217, %v201, 0
    %v222 = vsel %vm217, %v202, 0
    %v225 = vsel %vm217, %v203, 0
    %v228 = vsel %vm217, %v204, 0
    %v231 = vsel %vm217, %v205, 0
    %v234 = vsel %vm217, %v206, 0
    %v237 = vsel %vm217, %v207, 0
    %v240 = vsel %vm217, %v208, 0
    %242 = vmatpush.msra.mxu0 0.0
    %243 = vmatpush.msra.mxu0 0.0
    %244 = vmatpush.msra.mxu0 0.0
    %245 = vmatpush.msra.mxu0 0.0
    %246 = vmatpush.msra.mxu0 0.0
    %247 = vmatpush.msra.mxu0 0.0
    %248 = vmatpush.msra.mxu0 0.0
    %249 = vmatpush.msra.mxu0 0.0
    %250 = vmatpush.msra.mxu0 %v216
    %251 = vmatpush.msra.mxu0 %v215
    %252 = vmatpush.msra.mxu0 %v214
    %253 = vmatpush.msra.mxu0 %v213
    %254 = vmatpush.msra.mxu0 %v212
    %255 = vmatpush.msra.mxu0 %v211
    %256 = vmatpush.msra.mxu0 %v210
    %257 = vmatpush.msra.mxu0 %v209
    %258 = vmatmul.f32.gmra.mxu0 %v219
    %v259 = vpop.f32.mrf.mxu0
    %v260 = vadd.f32 0.0, %v259
    %261 = vmatmul.f32.gmra.mxu0 %v222
    %v262 = vpop.f32.mrf.mxu0
    %v263 = vadd.f32 0.0, %v262
    %264 = vmatmul.f32.gmra.mxu0 %v225
    %v265 = vpop.f32.mrf.mxu0
    %v266 = vadd.f32 0.0, %v265
    %267 = vmatmul.f32.gmra.mxu0 %v228
    %v268 = vpop.f32.mrf.mxu0
    %v269 = vadd.f32 0.0, %v268
    %270 = vmatmul.f32.gmra.mxu0 %v231
    %v271 = vpop.f32.mrf.mxu0
    %v272 = vadd.f32 0.0, %v271
    %273 = vmatmul.f32.gmra.mxu0 %v234
    %v274 = vpop.f32.mrf.mxu0
    %v275 = vadd.f32 0.0, %v274
    %276 = vmatmul.f32.gmra.mxu0 %v237
    %v277 = vpop.f32.mrf.mxu0
    %v278 = vadd.f32 0.0, %v277
    %279 = vmatmul.f32.gmra.mxu0 %v240
    %v280 = vpop.f32.mrf.mxu0
    %v281 = vadd.f32 0.0, %v280
    %282 = vdwg.mxu0
    %v283 = vld [vmem:[%s3] sm:$0x1]
    %v285 = vperm.slane %v283, 0
    %v287 = vmul.f32 %v260, %v285
    %v288 = vmul.f32 %v263, %v285
    %v289 = vmul.f32 %v266, %v285
    %v290 = vmul.f32 %v269, %v285
    %v291 = vmul.f32 %v272, %v285
    %v292 = vmul.f32 %v275, %v285
    %v293 = vmul.f32 %v278, %v285
    %v294 = vmul.f32 %v281, %v285
    %v295 = vld [vmem:[%s4] sm:$0x1]
    %v297 = vperm.slane %v295, 0
    %v299 = vadd.f32 %v287, %v297
    %v300 = vadd.f32 %v288, %v297
    %v301 = vadd.f32 %v289, %v297
    %v302 = vadd.f32 %v290, %v297
    %v303 = vadd.f32 %v291, %v297
    %v304 = vadd.f32 %v292, %v297
    %v305 = vadd.f32 %v293, %v297
    %v306 = vadd.f32 %v294, %v297
    %v307 = vmax.f32 %v299, 0.0
    %v308 = vmax.f32 %v300, 0.0
    %v309 = vmax.f32 %v301, 0.0
    %v310 = vmax.f32 %v302, 0.0
    %v311 = vmax.f32 %v303, 0.0
    %v312 = vmax.f32 %v304, 0.0
    %v313 = vmax.f32 %v305, 0.0
    %v314 = vmax.f32 %v306, 0.0
    %315 = vst [vmem:[%s5] sm:$0xff] %v307
    %316 = vst [vmem:[%s5 + $0x8] sm:$0xff] %v308
    %317 = vst [vmem:[%s5 + $0x10] sm:$0xff] %v309
    %318 = vst [vmem:[%s5 + $0x18] sm:$0xff] %v310
    %319 = vst [vmem:[%s5 + $0x20] sm:$0xff] %v311
    %320 = vst [vmem:[%s5 + $0x28] sm:$0xff] %v312
    %321 = vst [vmem:[%s5 + $0x30] sm:$0xff] %v313
    %322 = vst [vmem:[%s5 + $0x38] sm:$0xff] %v314
    // Predicated region
    $region30: #{forward.6} parent=1 // pred_check
      _
    $region31: #{forward.6} parent=1 // pred_check_branch
      %324 = sbr.rel (0) target = $region33
    $region32: #{forward.6} parent=1 // pred_region
      _
    $region33: #{forward.6} parent=1 // pred_fallthru
      _
    // Predicated region
    $region34: #{forward.6} parent=1 // pred_check
      _
    $region35: #{forward.6} parent=1 // pred_check_branch
      %326 = sbr.rel (0) target = $region37
    $region36: #{forward.6} parent=1 // pred_region
      _
    $region37: #{forward.6} parent=1 // pred_fallthru
      _
    %327 = vsyncpa [#allocation4], 1
    %328 = vsyncpa [#allocation6], 1

// kernel: forward.7
$region0: #{forward.7}
  #allocation0 [shape = 'u32[]', space=smem, size = 0x4, offset = 0x4, fixed_abs, tag = 'smem constant byte address 0x4 - core index']
  #allocation1 [shape = 'u32[72,128]{1,0:T(1,128)}', space=vmem, size = 0x9000, scoped, tag = 'internal scratch']
  #allocation2 [shape = 'f32[64,512]{1,0:T(8,128)}', space=vmem, size = 0x20000, scoped, tag = 'scratch operand']
  %s0 = inlined_call_operand.vmem [shape: f32[64,272], index: 0, kind: input, shape index: {}]
  %s1 = inlined_call_operand.hbm [shape: f32[64,64], index: 1, kind: input, shape index: {}]
  %s2 = inlined_call_operand.hbm [shape: f32[272,512], index: 2, kind: input, shape index: {}]
  %s3 = inlined_call_operand.vmem [shape: f32[1,512], index: 3, kind: input, shape index: {}]
  %s4 = inlined_call_operand.vmem [shape: f32[1,512], index: 4, kind: input, shape index: {}]
  %s5 = inlined_call_operand.vmem [shape: f32[64,512], index: 5, kind: output, shape index: {}]
  %s6 = sld [smem:[#allocation0]]
  $region38: #{forward.7} parent=0
    _
  %s8 = ssub.s32 1, %s6
  %s9 = scalar_select 0, %s8, %s6
  $region1: #{forward.7} parent=0
    #allocation3 [shape = 'u8[32768]{0}', space=vmem, size = 0x8000, scoped, tag = 'input window, operand 1, single buffered']
    #allocation4 [shape = 's32[1]{0}', space=sflag, size = 0x4, scoped, tag = 'scoped memory for forward.7']
    #allocation5 [shape = 'u8[557056]{0}', space=vmem, size = 0x88000, scoped, tag = 'input window, operand 2, single buffered']
    #allocation6 [shape = 's32[1]{0}', space=sflag, size = 0x4, scoped, tag = 'scoped memory for forward.7']
    %10 = vsyncpa [#allocation4], 0
    %11 = vsyncpa [#allocation6], 0
    // Predicated region
    $region2: #{forward.7} parent=1 // pred_check
      _
    $region3: #{forward.7} parent=1 // pred_check_branch
      %13 = sbr.rel (0) target = $region5
    $region4: #{forward.7} parent=1 // pred_region
      _
    $region5: #{forward.7} parent=1 // pred_fallthru
      _
    // Predicated region
    $region6: #{forward.7} parent=1 // pred_check
      _
    $region7: #{forward.7} parent=1 // pred_check_branch
      %15 = sbr.rel (0) target = $region9
    $region8: #{forward.7} parent=1 // pred_region
      %17 = vsyncadd [#allocation4], 0
      %s18 = sshll.u32 %s1, 4
      %s19 = int_to_ptr.hbm [resolvable:$true] %s18
      %s20 = sshll.u32 [#allocation3], 4
      %s21 = int_to_ptr.vmem [resolvable:$true] %s20
      %26 = dma.hbm_to_vmem [thread:$0]  %s19, 1024, %s21, [#allocation4], 128, 128, 8
    $region9: #{forward.7} parent=1 // pred_fallthru
      _
    // Predicated region
    $region10: #{forward.7} parent=1 // pred_check
      _
    $region11: #{forward.7} parent=1 // pred_check_branch
      %28 = sbr.rel (0) target = $region13
    $region12: #{forward.7} parent=1 // pred_region
      %30 = vsyncadd [#allocation6], 0
      %s31 = sshll.u32 %s2, 4
      %s32 = int_to_ptr.hbm [resolvable:$true] %s31
      %s33 = sshll.u32 [#allocation5], 4
      %s34 = int_to_ptr.vmem [resolvable:$true] %s33
      %39 = dma.hbm_to_vmem [thread:$0]  %s32, 17408, %s34, [#allocation6], 512, 512, 32
    $region13: #{forward.7} parent=1 // pred_fallthru
      _
    // Predicated region
    $region14: #{forward.7} parent=1 // pred_check
      _
    $region15: #{forward.7} parent=1 // pred_check_branch
      %41 = sbr.rel (0) target = $region17
    $region16: #{forward.7} parent=1 // pred_region
      _
    $region17: #{forward.7} parent=1 // pred_fallthru
      _
    // Predicated region
    $region18: #{forward.7} parent=1 // pred_check
      _
    $region19: #{forward.7} parent=1 // pred_check_branch
      %43 = sbr.rel (0) target = $region21
    $region20: #{forward.7} parent=1 // pred_region
      _
    $region21: #{forward.7} parent=1 // pred_fallthru
      _
    // Predicated region
    $region22: #{forward.7} parent=1 // pred_check
      _
    $region23: #{forward.7} parent=1 // pred_check_branch
      %45 = sbr.rel (0) target = $region25
    $region24: #{forward.7} parent=1 // pred_region
      %47 = dma.done [#allocation4], 1024
    $region25: #{forward.7} parent=1 // pred_fallthru
      _
    // Predicated region
    $region26: #{forward.7} parent=1 // pred_check
      _
    $region27: #{forward.7} parent=1 // pred_check_branch
      %49 = sbr.rel (0) target = $region29
    $region28: #{forward.7} parent=1 // pred_region
      %51 = dma.done [#allocation6], 17408
    $region29: #{forward.7} parent=1 // pred_fallthru
      _
    %v52 = vld [vmem:[%s0] sm:$0xff]
    %v53 = vld [vmem:[%s0 + $0x8] sm:$0xff]
    %v54 = vld [vmem:[%s0 + $0x10] sm:$0xff]
    %v55 = vld [vmem:[%s0 + $0x18] sm:$0xff]
    %v56 = vld [vmem:[%s0 + $0x20] sm:$0xff]
    %v57 = vld [vmem:[%s0 + $0x28] sm:$0xff]
    %v58 = vld [vmem:[%s0 + $0x30] sm:$0xff]
    %v59 = vld [vmem:[%s0 + $0x38] sm:$0xff]
    %v60 = vld [vmem:[%s0 + $0x40] sm:$0xff]
    %v61 = vld [vmem:[%s0 + $0x48] sm:$0xff]
    %v62 = vld [vmem:[%s0 + $0x50] sm:$0xff]
    %v63 = vld [vmem:[%s0 + $0x58] sm:$0xff]
    %v64 = vld [vmem:[%s0 + $0x60] sm:$0xff]
    %v65 = vld [vmem:[%s0 + $0x68] sm:$0xff]
    %v66 = vld [vmem:[%s0 + $0x70] sm:$0xff]
    %v67 = vld [vmem:[%s0 + $0x78] sm:$0xff]
    %v68 = vld [vmem:[%s0 + $0x80] sm:$0xff]
    %v69 = vld [vmem:[%s0 + $0x88] sm:$0xff]
    %v70 = vld [vmem:[%s0 + $0x90] sm:$0xff]
    %v71 = vld [vmem:[%s0 + $0x98] sm:$0xff]
    %v72 = vld [vmem:[%s0 + $0xa0] sm:$0xff]
    %v73 = vld [vmem:[%s0 + $0xa8] sm:$0xff]
    %v74 = vld [vmem:[%s0 + $0xb0] sm:$0xff]
    %v75 = vld [vmem:[%s0 + $0xb8] sm:$0xff]
    %v76 = vld [vmem:[#allocation5] sm:$0xff]
    %v77 = vld [vmem:[#allocation5 + $0x8] sm:$0xff]
    %v78 = vld [vmem:[#allocation5 + $0x10] sm:$0xff]
    %v79 = vld [vmem:[#allocation5 + $0x18] sm:$0xff]
    %v80 = vld [vmem:[#allocation5 + $0x20] sm:$0xff]
    %v81 = vld [vmem:[#allocation5 + $0x28] sm:$0xff]
    %v82 = vld [vmem:[#allocation5 + $0x30] sm:$0xff]
    %v83 = vld [vmem:[#allocation5 + $0x38] sm:$0xff]
    %v84 = vld [vmem:[#allocation5 + $0x40] sm:$0xff]
    %v85 = vld [vmem:[#allocation5 + $0x48] sm:$0xff]
    %v86 = vld [vmem:[#allocation5 + $0x50] sm:$0xff]
    %v87 = vld [vmem:[#allocation5 + $0x58] sm:$0xff]
    %v88 = vld [vmem:[#allocation5 + $0x60] sm:$0xff]
    %v89 = vld [vmem:[#allocation5 + $0x68] sm:$0xff]
    %v90 = vld [vmem:[#allocation5 + $0x70] sm:$0xff]
    %v91 = vld [vmem:[#allocation5 + $0x78] sm:$0xff]
    %v92 = vld [vmem:[#allocation5 + $0x80] sm:$0xff]
    %v93 = vld [vmem:[#allocation5 + $0x88] sm:$0xff]
    %v94 = vld [vmem:[#allocation5 + $0x90] sm:$0xff]
    %v95 = vld [vmem:[#allocation5 + $0x98] sm:$0xff]
    %v96 = vld [vmem:[#allocation5 + $0xa0] sm:$0xff]
    %v97 = vld [vmem:[#allocation5 + $0xa8] sm:$0xff]
    %v98 = vld [vmem:[#allocation5 + $0xb0] sm:$0xff]
    %v99 = vld [vmem:[#allocation5 + $0xb8] sm:$0xff]
    %v100 = vld [vmem:[#allocation5 + $0xc0] sm:$0xff]
    %v101 = vld [vmem:[#allocation5 + $0xc8] sm:$0xff]
    %v102 = vld [vmem:[#allocation5 + $0xd0] sm:$0xff]
    %v103 = vld [vmem:[#allocation5 + $0xd8] sm:$0xff]
    %v104 = vld [vmem:[#allocation5 + $0xe0] sm:$0xff]
    %v105 = vld [vmem:[#allocation5 + $0xe8] sm:$0xff]
    %v106 = vld [vmem:[#allocation5 + $0xf0] sm:$0xff]
    %v107 = vld [vmem:[#allocation5 + $0xf8] sm:$0xff]
    %v108 = vld [vmem:[#allocation5 + $0x100] sm:$0xff]
    %v109 = vld [vmem:[#allocation5 + $0x108] sm:$0xff]
    %v110 = vld [vmem:[#allocation5 + $0x110] sm:$0xff]
    %v111 = vld [vmem:[#allocation5 + $0x118] sm:$0xff]
    %v112 = vld [vmem:[#allocation5 + $0x120] sm:$0xff]
    %v113 = vld [vmem:[#allocation5 + $0x128] sm:$0xff]
    %v114 = vld [vmem:[#allocation5 + $0x130] sm:$0xff]
    %v115 = vld [vmem:[#allocation5 + $0x138] sm:$0xff]
    %v116 = vld [vmem:[#allocation5 + $0x140] sm:$0xff]
    %v117 = vld [vmem:[#allocation5 + $0x148] sm:$0xff]
    %v118 = vld [vmem:[#allocation5 + $0x150] sm:$0xff]
    %v119 = vld [vmem:[#allocation5 + $0x158] sm:$0xff]
    %v120 = vld [vmem:[#allocation5 + $0x160] sm:$0xff]
    %v121 = vld [vmem:[#allocation5 + $0x168] sm:$0xff]
    %v122 = vld [vmem:[#allocation5 + $0x170] sm:$0xff]
    %v123 = vld [vmem:[#allocation5 + $0x178] sm:$0xff]
    %v124 = vld [vmem:[#allocation5 + $0x180] sm:$0xff]
    %v125 = vld [vmem:[#allocation5 + $0x188] sm:$0xff]
    %v126 = vld [vmem:[#allocation5 + $0x190] sm:$0xff]
    %v127 = vld [vmem:[#allocation5 + $0x198] sm:$0xff]
    %v128 = vld [vmem:[#allocation5 + $0x1a0] sm:$0xff]
    %v129 = vld [vmem:[#allocation5 + $0x1a8] sm:$0xff]
    %v130 = vld [vmem:[#allocation5 + $0x1b0] sm:$0xff]
    %v131 = vld [vmem:[#allocation5 + $0x1b8] sm:$0xff]
    %v132 = vld [vmem:[#allocation5 + $0x1c0] sm:$0xff]
    %v133 = vld [vmem:[#allocation5 + $0x1c8] sm:$0xff]
    %v134 = vld [vmem:[#allocation5 + $0x1d0] sm:$0xff]
    %v135 = vld [vmem:[#allocation5 + $0x1d8] sm:$0xff]
    %v136 = vld [vmem:[#allocation5 + $0x1e0] sm:$0xff]
    %v137 = vld [vmem:[#allocation5 + $0x1e8] sm:$0xff]
    %v138 = vld [vmem:[#allocation5 + $0x1f0] sm:$0xff]
    %v139 = vld [vmem:[#allocation5 + $0x1f8] sm:$0xff]
    %v140 = vld [vmem:[#allocation5 + $0x200] sm:$0xff]
    %v141 = vld [vmem:[#allocation5 + $0x208] sm:$0xff]
    %v142 = vld [vmem:[#allocation5 + $0x210] sm:$0xff]
    %v143 = vld [vmem:[#allocation5 + $0x218] sm:$0xff]
    %v144 = vld [vmem:[#allocation5 + $0x220] sm:$0xff]
    %v145 = vld [vmem:[#allocation5 + $0x228] sm:$0xff]
    %v146 = vld [vmem:[#allocation5 + $0x230] sm:$0xff]
    %v147 = vld [vmem:[#allocation5 + $0x238] sm:$0xff]
    %v148 = vld [vmem:[#allocation5 + $0x240] sm:$0xff]
    %v149 = vld [vmem:[#allocation5 + $0x248] sm:$0xff]
    %v150 = vld [vmem:[#allocation5 + $0x250] sm:$0xff]
    %v151 = vld [vmem:[#allocation5 + $0x258] sm:$0xff]
    %v152 = vld [vmem:[#allocation5 + $0x260] sm:$0xff]
    %v153 = vld [vmem:[#allocation5 + $0x268] sm:$0xff]
    %v154 = vld [vmem:[#allocation5 + $0x270] sm:$0xff]
    %v155 = vld [vmem:[#allocation5 + $0x278] sm:$0xff]
    %v156 = vld [vmem:[#allocation5 + $0x280] sm:$0xff]
    %v157 = vld [vmem:[#allocation5 + $0x288] sm:$0xff]
    %v158 = vld [vmem:[#allocation5 + $0x290] sm:$0xff]
    %v159 = vld [vmem:[#allocation5 + $0x298] sm:$0xff]
    %v160 = vld [vmem:[#allocation5 + $0x2a0] sm:$0xff]
    %v161 = vld [vmem:[#allocation5 + $0x2a8] sm:$0xff]
    %v162 = vld [vmem:[#allocation5 + $0x2b0] sm:$0xff]
    %v163 = vld [vmem:[#allocation5 + $0x2b8] sm:$0xff]
    %v164 = vld [vmem:[#allocation5 + $0x2c0] sm:$0xff]
    %v165 = vld [vmem:[#allocation5 + $0x2c8] sm:$0xff]
    %v166 = vld [vmem:[#allocation5 + $0x2d0] sm:$0xff]
    %v167 = vld [vmem:[#allocation5 + $0x2d8] sm:$0xff]
    %v168 = vld [vmem:[#allocation5 + $0x2e0] sm:$0xff]
    %v169 = vld [vmem:[#allocation5 + $0x2e8] sm:$0xff]
    %v170 = vld [vmem:[#allocation5 + $0x2f0] sm:$0xff]
    %v171 = vld [vmem:[#allocation5 + $0x2f8] sm:$0xff]
    %v172 = vld [vmem:[#allocation5 + $0x300] sm:$0xff]
    %v173 = vld [vmem:[#allocation5 + $0x308] sm:$0xff]
    %v174 = vld [vmem:[#allocation5 + $0x310] sm:$0xff]
    %v175 = vld [vmem:[#allocation5 + $0x318] sm:$0xff]
    %v176 = vld [vmem:[#allocation5 + $0x320] sm:$0xff]
    %v177 = vld [vmem:[#allocation5 + $0x328] sm:$0xff]
    %v178 = vld [vmem:[#allocation5 + $0x330] sm:$0xff]
    %v179 = vld [vmem:[#allocation5 + $0x338] sm:$0xff]
    %v180 = vld [vmem:[#allocation5 + $0x340] sm:$0xff]
    %v181 = vld [vmem:[#allocation5 + $0x348] sm:$0xff]
    %v182 = vld [vmem:[#allocation5 + $0x350] sm:$0xff]
    %v183 = vld [vmem:[#allocation5 + $0x358] sm:$0xff]
    %v184 = vld [vmem:[#allocation5 + $0x360] sm:$0xff]
    %v185 = vld [vmem:[#allocation5 + $0x368] sm:$0xff]
    %v186 = vld [vmem:[#allocation5 + $0x370] sm:$0xff]
    %v187 = vld [vmem:[#allocation5 + $0x378] sm:$0xff]
    %v188 = vld [vmem:[#allocation5 + $0x380] sm:$0xff]
    %v189 = vld [vmem:[#allocation5 + $0x388] sm:$0xff]
    %v190 = vld [vmem:[#allocation5 + $0x390] sm:$0xff]
    %v191 = vld [vmem:[#allocation5 + $0x398] sm:$0xff]
    %v192 = vld [vmem:[#allocation5 + $0x3a0] sm:$0xff]
    %v193 = vld [vmem:[#allocation5 + $0x3a8] sm:$0xff]
    %v194 = vld [vmem:[#allocation5 + $0x3b0] sm:$0xff]
    %v195 = vld [vmem:[#allocation5 + $0x3b8] sm:$0xff]
    %v196 = vld [vmem:[#allocation5 + $0x3c0] sm:$0xff]
    %v197 = vld [vmem:[#allocation5 + $0x3c8] sm:$0xff]
    %v198 = vld [vmem:[#allocation5 + $0x3d0] sm:$0xff]
    %v199 = vld [vmem:[#allocation5 + $0x3d8] sm:$0xff]
    %v200 = vld [vmem:[#allocation5 + $0x3e0] sm:$0xff]
    %v201 = vld [vmem:[#allocation5 + $0x3e8] sm:$0xff]
    %v202 = vld [vmem:[#allocation5 + $0x3f0] sm:$0xff]
    %v203 = vld [vmem:[#allocation5 + $0x3f8] sm:$0xff]
    %v204 = vld [vmem:[#allocation5 + $0x400] sm:$0xff]
    %v205 = vld [vmem:[#allocation5 + $0x408] sm:$0xff]
    %v206 = vld [vmem:[#allocation5 + $0x410] sm:$0xff]
    %v207 = vld [vmem:[#allocation5 + $0x418] sm:$0xff]
    %v208 = vld [vmem:[#allocation5 + $0x420] sm:$0xff]
    %v209 = vld [vmem:[#allocation5 + $0x428] sm:$0xff]
    %v210 = vld [vmem:[#allocation5 + $0x430] sm:$0xff]
    %v211 = vld [vmem:[#allocation5 + $0x438] sm:$0xff]
    %vm212 = vcmask 130048
    %v214 = vsel %vm212, %v54, 0
    %v217 = vsel %vm212, %v57, 0
    %v220 = vsel %vm212, %v60, 0
    %v223 = vsel %vm212, %v63, 0
    %v226 = vsel %vm212, %v66, 0
    %v229 = vsel %vm212, %v69, 0
    %v232 = vsel %vm212, %v72, 0
    %v235 = vsel %vm212, %v75, 0
    %237 = vmatpush.msra.mxu0 %v136
    %238 = vmatpush.msra.mxu0 %v132
    %239 = vmatpush.msra.mxu0 %v128
    %240 = vmatpush.msra.mxu0 %v124
    %241 = vmatpush.msra.mxu0 %v120
    %242 = vmatpush.msra.mxu0 %v116
    %243 = vmatpush.msra.mxu0 %v112
    %244 = vmatpush.msra.mxu0 %v108
    %245 = vmatpush.msra.mxu0 %v104
    %246 = vmatpush.msra.mxu0 %v100
    %247 = vmatpush.msra.mxu0 %v96
    %248 = vmatpush.msra.mxu0 %v92
    %249 = vmatpush.msra.mxu0 %v88
    %250 = vmatpush.msra.mxu0 %v84
    %251 = vmatpush.msra.mxu0 %v80
    %252 = vmatpush.msra.mxu0 %v76
    %253 = vmatmul.f32.gmra.mxu0 %v52
    %v254 = vpop.f32.mrf.mxu0
    %v255 = vadd.f32 0.0, %v254
    %256 = vmatmul.f32.gmra.mxu0 %v55
    %v257 = vpop.f32.mrf.mxu0
    %v258 = vadd.f32 0.0, %v257
    %259 = vmatmul.f32.gmra.mxu0 %v58
    %v260 = vpop.f32.mrf.mxu0
    %v261 = vadd.f32 0.0, %v260
    %262 = vmatmul.f32.gmra.mxu0 %v61
    %v263 = vpop.f32.mrf.mxu0
    %v264 = vadd.f32 0.0, %v263
    %265 = vmatmul.f32.gmra.mxu0 %v64
    %v266 = vpop.f32.mrf.mxu0
    %v267 = vadd.f32 0.0, %v266
    %268 = vmatmul.f32.gmra.mxu0 %v67
    %v269 = vpop.f32.mrf.mxu0
    %v270 = vadd.f32 0.0, %v269
    %271 = vmatmul.f32.gmra.mxu0 %v70
    %v272 = vpop.f32.mrf.mxu0
    %v273 = vadd.f32 0.0, %v272
    %274 = vmatmul.f32.gmra.mxu0 %v73
    %v275 = vpop.f32.mrf.mxu0
    %v276 = vadd.f32 0.0, %v275
    %277 = vdwg.mxu0
    %278 = vmatpush.msra.mxu0 %v200
    %279 = vmatpush.msra.mxu0 %v196
    %280 = vmatpush.msra.mxu0 %v192
    %281 = vmatpush.msra.mxu0 %v188
    %282 = vmatpush.msra.mxu0 %v184
    %283 = vmatpush.msra.mxu0 %v180
    %284 = vmatpush.msra.mxu0 %v176
    %285 = vmatpush.msra.mxu0 %v172
    %286 = vmatpush.msra.mxu0 %v168
    %287 = vmatpush.msra.mxu0 %v164
    %288 = vmatpush.msra.mxu0 %v160
    %289 = vmatpush.msra.mxu0 %v156
    %290 = vmatpush.msra.mxu0 %v152
    %291 = vmatpush.msra.mxu0 %v148
    %292 = vmatpush.msra.mxu0 %v144
    %293 = vmatpush.msra.mxu0 %v140
    %294 = vmatmul.f32.gmra.mxu0 %v53
    %v295 = vpop.f32.mrf.mxu0
    %v296 = vadd.f32 %v255, %v295
    %297 = vmatmul.f32.gmra.mxu0 %v56
    %v298 = vpop.f32.mrf.mxu0
    %v299 = vadd.f32 %v258, %v298
    %300 = vmatmul.f32.gmra.mxu0 %v59
    %v301 = vpop.f32.mrf.mxu0
    %v302 = vadd.f32 %v261, %v301
    %303 = vmatmul.f32.gmra.mxu0 %v62
    %v304 = vpop.f32.mrf.mxu0
    %v305 = vadd.f32 %v264, %v304
    %306 = vmatmul.f32.gmra.mxu0 %v65
    %v307 = vpop.f32.mrf.mxu0
    %v308 = vadd.f32 %v267, %v307
    %309 = vmatmul.f32.gmra.mxu0 %v68
    %v310 = vpop.f32.mrf.mxu0
    %v311 = vadd.f32 %v270, %v310
    %312 = vmatmul.f32.gmra.mxu0 %v71
    %v313 = vpop.f32.mrf.mxu0
    %v314 = vadd.f32 %v273, %v313
    %315 = vmatmul.f32.gmra.mxu0 %v74
    %v316 = vpop.f32.mrf.mxu0
    %v317 = vadd.f32 %v276, %v316
    %318 = vdwg.mxu0
    %319 = vmatpush.msra.mxu0 0.0
    %320 = vmatpush.msra.mxu0 0.0
    %321 = vmatpush.msra.mxu0 0.0
    %322 = vmatpush.msra.mxu0 0.0
    %323 = vmatpush.msra.mxu0 0.0
    %324 = vmatpush.msra.mxu0 0.0
    %325 = vmatpush.msra.mxu0 0.0
    %326 = vmatpush.msra.mxu0 0.0
    %327 = vmatpush.msra.mxu0 0.0
    %328 = vmatpush.msra.mxu0 0.0
    %329 = vmatpush.msra.mxu0 0.0
    %330 = vmatpush.msra.mxu0 0.0
    %331 = vmatpush.msra.mxu0 0.0
    %332 = vmatpush.msra.mxu0 0.0
    %333 = vmatpush.msra.mxu0 %v208
    %334 = vmatpush.msra.mxu0 %v204
    %335 = vmatmul.f32.gmra.mxu0 %v214
    %v336 = vpop.f32.mrf.mxu0
    %v337 = vadd.f32 %v296, %v336
    %338 = vmatmul.f32.gmra.mxu0 %v217
    %v339 = vpop.f32.mrf.mxu0
    %v340 = vadd.f32 %v299, %v339
    %341 = vmatmul.f32.gmra.mxu0 %v220
    %v342 = vpop.f32.mrf.mxu0
    %v343 = vadd.f32 %v302, %v342
    %344 = vmatmul.f32.gmra.mxu0 %v223
    %v345 = vpop.f32.mrf.mxu0
    %v346 = vadd.f32 %v305, %v345
    %347 = vmatmul.f32.gmra.mxu0 %v226
    %v348 = vpop.f32.mrf.mxu0
    %v349 = vadd.f32 %v308, %v348
    %350 = vmatmul.f32.gmra.mxu0 %v229
    %v351 = vpop.f32.mrf.mxu0
    %v352 = vadd.f32 %v311, %v351
    %353 = vmatmul.f32.gmra.mxu0 %v232
    %v354 = vpop.f32.mrf.mxu0
    %v355 = vadd.f32 %v314, %v354
    %356 = vmatmul.f32.gmra.mxu0 %v235
    %v357 = vpop.f32.mrf.mxu0
    %v358 = vadd.f32 %v317, %v357
    %359 = vdwg.mxu0
    %360 = vmatpush.msra.mxu0 %v137
    %361 = vmatpush.msra.mxu0 %v133
    %362 = vmatpush.msra.mxu0 %v129
    %363 = vmatpush.msra.mxu0 %v125
    %364 = vmatpush.msra.mxu0 %v121
    %365 = vmatpush.msra.mxu0 %v117
    %366 = vmatpush.msra.mxu0 %v113
    %367 = vmatpush.msra.mxu0 %v109
    %368 = vmatpush.msra.mxu0 %v105
    %369 = vmatpush.msra.mxu0 %v101
    %370 = vmatpush.msra.mxu0 %v97
    %371 = vmatpush.msra.mxu0 %v93
    %372 = vmatpush.msra.mxu0 %v89
    %373 = vmatpush.msra.mxu0 %v85
    %374 = vmatpush.msra.mxu0 %v81
    %375 = vmatpush.msra.mxu0 %v77
    %376 = vmatmul.f32.gmra.mxu0 %v52
    %v377 = vpop.f32.mrf.mxu0
    %v378 = vadd.f32 0.0, %v377
    %379 = vmatmul.f32.gmra.mxu0 %v55
    %v380 = vpop.f32.mrf.mxu0
    %v381 = vadd.f32 0.0, %v380
    %382 = vmatmul.f32.gmra.mxu0 %v58
    %v383 = vpop.f32.mrf.mxu0
    %v384 = vadd.f32 0.0, %v383
    %385 = vmatmul.f32.gmra.mxu0 %v61
    %v386 = vpop.f32.mrf.mxu0
    %v387 = vadd.f32 0.0, %v386
    %388 = vmatmul.f32.gmra.mxu0 %v64
    %v389 = vpop.f32.mrf.mxu0
    %v390 = vadd.f32 0.0, %v389
    %391 = vmatmul.f32.gmra.mxu0 %v67
    %v392 = vpop.f32.mrf.mxu0
    %v393 = vadd.f32 0.0, %v392
    %394 = vmatmul.f32.gmra.mxu0 %v70
    %v395 = vpop.f32.mrf.mxu0
    %v396 = vadd.f32 0.0, %v395
    %397 = vmatmul.f32.gmra.mxu0 %v73
    %v398 = vpop.f32.mrf.mxu0
    %v399 = vadd.f32 0.0, %v398
    %400 = vdwg.mxu0
    %401 = vmatpush.msra.mxu0 %v201
    %402 = vmatpush.msra.mxu0 %v197
    %403 = vmatpush.msra.mxu0 %v193
    %404 = vmatpush.msra.mxu0 %v189
    %405 = vmatpush.msra.mxu0 %v185
    %406 = vmatpush.msra.mxu0 %v181
    %407 = vmatpush.msra.mxu0 %v177
    %408 = vmatpush.msra.mxu0 %v173
    %409 = vmatpush.msra.mxu0 %v169
    %410 = vmatpush.msra.mxu0 %v165
    %411 = vmatpush.msra.mxu0 %v161
    %412 = vmatpush.msra.mxu0 %v157
    %413 = vmatpush.msra.mxu0 %v153
    %414 = vmatpush.msra.mxu0 %v149
    %415 = vmatpush.msra.mxu0 %v145
    %416 = vmatpush.msra.mxu0 %v141
    %417 = vmatmul.f32.gmra.mxu0 %v53
    %v418 = vpop.f32.mrf.mxu0
    %v419 = vadd.f32 %v378, %v418
    %420 = vmatmul.f32.gmra.mxu0 %v56
    %v421 = vpop.f32.mrf.mxu0
    %v422 = vadd.f32 %v381, %v421
    %423 = vmatmul.f32.gmra.mxu0 %v59
    %v424 = vpop.f32.mrf.mxu0
    %v425 = vadd.f32 %v384, %v424
    %426 = vmatmul.f32.gmra.mxu0 %v62
    %v427 = vpop.f32.mrf.mxu0
    %v428 = vadd.f32 %v387, %v427
    %429 = vmatmul.f32.gmra.mxu0 %v65
    %v430 = vpop.f32.mrf.mxu0
    %v431 = vadd.f32 %v390, %v430
    %432 = vmatmul.f32.gmra.mxu0 %v68
    %v433 = vpop.f32.mrf.mxu0
    %v434 = vadd.f32 %v393, %v433
    %435 = vmatmul.f32.gmra.mxu0 %v71
    %v436 = vpop.f32.mrf.mxu0
    %v437 = vadd.f32 %v396, %v436
    %438 = vmatmul.f32.gmra.mxu0 %v74
    %v439 = vpop.f32.mrf.mxu0
    %v440 = vadd.f32 %v399, %v439
    %441 = vdwg.mxu0
    %442 = vmatpush.msra.mxu0 0.0
    %443 = vmatpush.msra.mxu0 0.0
    %444 = vmatpush.msra.mxu0 0.0
    %445 = vmatpush.msra.mxu0 0.0
    %446 = vmatpush.msra.mxu0 0.0
    %447 = vmatpush.msra.mxu0 0.0
    %448 = vmatpush.msra.mxu0 0.0
    %449 = vmatpush.msra.mxu0 0.0
    %450 = vmatpush.msra.mxu0 0.0
    %451 = vmatpush.msra.mxu0 0.0
    %452 = vmatpush.msra.mxu0 0.0
    %453 = vmatpush.msra.mxu0 0.0
    %454 = vmatpush.msra.mxu0 0.0
    %455 = vmatpush.msra.mxu0 0.0
    %456 = vmatpush.msra.mxu0 %v209
    %457 = vmatpush.msra.mxu0 %v205
    %458 = vmatmul.f32.gmra.mxu0 %v214
    %v459 = vpop.f32.mrf.mxu0
    %v460 = vadd.f32 %v419, %v459
    %461 = vmatmul.f32.gmra.mxu0 %v217
    %v462 = vpop.f32.mrf.mxu0
    %v463 = vadd.f32 %v422, %v462
    %464 = vmatmul.f32.gmra.mxu0 %v220
    %v465 = vpop.f32.mrf.mxu0
    %v466 = vadd.f32 %v425, %v465
    %467 = vmatmul.f32.gmra.mxu0 %v223
    %v468 = vpop.f32.mrf.mxu0
    %v469 = vadd.f32 %v428, %v468
    %470 = vmatmul.f32.gmra.mxu0 %v226
    %v471 = vpop.f32.mrf.mxu0
    %v472 = vadd.f32 %v431, %v471
    %473 = vmatmul.f32.gmra.mxu0 %v229
    %v474 = vpop.f32.mrf.mxu0
    %v475 = vadd.f32 %v434, %v474
    %476 = vmatmul.f32.gmra.mxu0 %v232
    %v477 = vpop.f32.mrf.mxu0
    %v478 = vadd.f32 %v437, %v477
    %479 = vmatmul.f32.gmra.mxu0 %v235
    %v480 = vpop.f32.mrf.mxu0
    %v481 = vadd.f32 %v440, %v480
    %482 = vdwg.mxu0
    %483 = vmatpush.msra.mxu0 %v138
    %484 = vmatpush.msra.mxu0 %v134
    %485 = vmatpush.msra.mxu0 %v130
    %486 = vmatpush.msra.mxu0 %v126
    %487 = vmatpush.msra.mxu0 %v122
    %488 = vmatpush.msra.mxu0 %v118
    %489 = vmatpush.msra.mxu0 %v114
    %490 = vmatpush.msra.mxu0 %v110
    %491 = vmatpush.msra.mxu0 %v106
    %492 = vmatpush.msra.mxu0 %v102
    %493 = vmatpush.msra.mxu0 %v98
    %494 = vmatpush.msra.mxu0 %v94
    %495 = vmatpush.msra.mxu0 %v90
    %496 = vmatpush.msra.mxu0 %v86
    %497 = vmatpush.msra.mxu0 %v82
    %498 = vmatpush.msra.mxu0 %v78
    %499 = vmatmul.f32.gmra.mxu0 %v52
    %v500 = vpop.f32.mrf.mxu0
    %v501 = vadd.f32 0.0, %v500
    %502 = vmatmul.f32.gmra.mxu0 %v55
    %v503 = vpop.f32.mrf.mxu0
    %v504 = vadd.f32 0.0, %v503
    %505 = vmatmul.f32.gmra.mxu0 %v58
    %v506 = vpop.f32.mrf.mxu0
    %v507 = vadd.f32 0.0, %v506
    %508 = vmatmul.f32.gmra.mxu0 %v61
    %v509 = vpop.f32.mrf.mxu0
    %v510 = vadd.f32 0.0, %v509
    %511 = vmatmul.f32.gmra.mxu0 %v64
    %v512 = vpop.f32.mrf.mxu0
    %v513 = vadd.f32 0.0, %v512
    %514 = vmatmul.f32.gmra.mxu0 %v67
    %v515 = vpop.f32.mrf.mxu0
    %v516 = vadd.f32 0.0, %v515
    %517 = vmatmul.f32.gmra.mxu0 %v70
    %v518 = vpop.f32.mrf.mxu0
    %v519 = vadd.f32 0.0, %v518
    %520 = vmatmul.f32.gmra.mxu0 %v73
    %v521 = vpop.f32.mrf.mxu0
    %v522 = vadd.f32 0.0, %v521
    %523 = vdwg.mxu0
    %524 = vmatpush.msra.mxu0 %v202
    %525 = vmatpush.msra.mxu0 %v198
    %526 = vmatpush.msra.mxu0 %v194
    %527 = vmatpush.msra.mxu0 %v190
    %528 = vmatpush.msra.mxu0 %v186
    %529 = vmatpush.msra.mxu0 %v182
    %530 = vmatpush.msra.mxu0 %v178
    %531 = vmatpush.msra.mxu0 %v174
    %532 = vmatpush.msra.mxu0 %v170
    %533 = vmatpush.msra.mxu0 %v166
    %534 = vmatpush.msra.mxu0 %v162
    %535 = vmatpush.msra.mxu0 %v158
    %536 = vmatpush.msra.mxu0 %v154
    %537 = vmatpush.msra.mxu0 %v150
    %538 = vmatpush.msra.mxu0 %v146
    %539 = vmatpush.msra.mxu0 %v142
    %540 = vmatmul.f32.gmra.mxu0 %v53
    %v541 = vpop.f32.mrf.mxu0
    %v542 = vadd.f32 %v501, %v541
    %543 = vmatmul.f32.gmra.mxu0 %v56
    %v544 = vpop.f32.mrf.mxu0
    %v545 = vadd.f32 %v504, %v544
    %546 = vmatmul.f32.gmra.mxu0 %v59
    %v547 = vpop.f32.mrf.mxu0
    %v548 = vadd.f32 %v507, %v547
    %549 = vmatmul.f32.gmra.mxu0 %v62
    %v550 = vpop.f32.mrf.mxu0
    %v551 = vadd.f32 %v510, %v550
    %552 = vmatmul.f32.gmra.mxu0 %v65
    %v553 = vpop.f32.mrf.mxu0
    %v554 = vadd.f32 %v513, %v553
    %555 = vmatmul.f32.gmra.mxu0 %v68
    %v556 = vpop.f32.mrf.mxu0
    %v557 = vadd.f32 %v516, %v556
    %558 = vmatmul.f32.gmra.mxu0 %v71
    %v559 = vpop.f32.mrf.mxu0
    %v560 = vadd.f32 %v519, %v559
    %561 = vmatmul.f32.gmra.mxu0 %v74
    %v562 = vpop.f32.mrf.mxu0
    %v563 = vadd.f32 %v522, %v562
    %564 = vdwg.mxu0
    %565 = vmatpush.msra.mxu0 0.0
    %566 = vmatpush.msra.mxu0 0.0
    %567 = vmatpush.msra.mxu0 0.0
    %568 = vmatpush.msra.mxu0 0.0
    %569 = vmatpush.msra.mxu0 0.0
    %570 = vmatpush.msra.mxu0 0.0
    %571 = vmatpush.msra.mxu0 0.0
    %572 = vmatpush.msra.mxu0 0.0
    %573 = vmatpush.msra.mxu0 0.0
    %574 = vmatpush.msra.mxu0 0.0
    %575 = vmatpush.msra.mxu0 0.0
    %576 = vmatpush.msra.mxu0 0.0
    %577 = vmatpush.msra.mxu0 0.0
    %578 = vmatpush.msra.mxu0 0.0
    %579 = vmatpush.msra.mxu0 %v210
    %580 = vmatpush.msra.mxu0 %v206
    %581 = vmatmul.f32.gmra.mxu0 %v214
    %v582 = vpop.f32.mrf.mxu0
    %v583 = vadd.f32 %v542, %v582
    %584 = vmatmul.f32.gmra.mxu0 %v217
    %v585 = vpop.f32.mrf.mxu0
    %v586 = vadd.f32 %v545, %v585
    %587 = vmatmul.f32.gmra.mxu0 %v220
    %v588 = vpop.f32.mrf.mxu0
    %v589 = vadd.f32 %v548, %v588
    %590 = vmatmul.f32.gmra.mxu0 %v223
    %v591 = vpop.f32.mrf.mxu0
    %v592 = vadd.f32 %v551, %v591
    %593 = vmatmul.f32.gmra.mxu0 %v226
    %v594 = vpop.f32.mrf.mxu0
    %v595 = vadd.f32 %v554, %v594
    %596 = vmatmul.f32.gmra.mxu0 %v229
    %v597 = vpop.f32.mrf.mxu0
    %v598 = vadd.f32 %v557, %v597
    %599 = vmatmul.f32.gmra.mxu0 %v232
    %v600 = vpop.f32.mrf.mxu0
    %v601 = vadd.f32 %v560, %v600
    %602 = vmatmul.f32.gmra.mxu0 %v235
    %v603 = vpop.f32.mrf.mxu0
    %v604 = vadd.f32 %v563, %v603
    %605 = vdwg.mxu0
    %606 = vmatpush.msra.mxu0 %v139
    %607 = vmatpush.msra.mxu0 %v135
    %608 = vmatpush.msra.mxu0 %v131
    %609 = vmatpush.msra.mxu0 %v127
    %610 = vmatpush.msra.mxu0 %v123
    %611 = vmatpush.msra.mxu0 %v119
    %612 = vmatpush.msra.mxu0 %v115
    %613 = vmatpush.msra.mxu0 %v111
    %614 = vmatpush.msra.mxu0 %v107
    %615 = vmatpush.msra.mxu0 %v103
    %616 = vmatpush.msra.mxu0 %v99
    %617 = vmatpush.msra.mxu0 %v95
    %618 = vmatpush.msra.mxu0 %v91
    %619 = vmatpush.msra.mxu0 %v87
    %620 = vmatpush.msra.mxu0 %v83
    %621 = vmatpush.msra.mxu0 %v79
    %622 = vmatmul.f32.gmra.mxu0 %v52
    %v623 = vpop.f32.mrf.mxu0
    %v624 = vadd.f32 0.0, %v623
    %625 = vmatmul.f32.gmra.mxu0 %v55
    %v626 = vpop.f32.mrf.mxu0
    %v627 = vadd.f32 0.0, %v626
    %628 = vmatmul.f32.gmra.mxu0 %v58
    %v629 = vpop.f32.mrf.mxu0
    %v630 = vadd.f32 0.0, %v629
    %631 = vmatmul.f32.gmra.mxu0 %v61
    %v632 = vpop.f32.mrf.mxu0
    %v633 = vadd.f32 0.0, %v632
    %634 = vmatmul.f32.gmra.mxu0 %v64
    %v635 = vpop.f32.mrf.mxu0
    %v636 = vadd.f32 0.0, %v635
    %637 = vmatmul.f32.gmra.mxu0 %v67
    %v638 = vpop.f32.mrf.mxu0
    %v639 = vadd.f32 0.0, %v638
    %640 = vmatmul.f32.gmra.mxu0 %v70
    %v641 = vpop.f32.mrf.mxu0
    %v642 = vadd.f32 0.0, %v641
    %643 = vmatmul.f32.gmra.mxu0 %v73
    %v644 = vpop.f32.mrf.mxu0
    %v645 = vadd.f32 0.0, %v644
    %646 = vdwg.mxu0
    %647 = vmatpush.msra.mxu0 %v203
    %648 = vmatpush.msra.mxu0 %v199
    %649 = vmatpush.msra.mxu0 %v195
    %650 = vmatpush.msra.mxu0 %v191
    %651 = vmatpush.msra.mxu0 %v187
    %652 = vmatpush.msra.mxu0 %v183
    %653 = vmatpush.msra.mxu0 %v179
    %654 = vmatpush.msra.mxu0 %v175
    %655 = vmatpush.msra.mxu0 %v171
    %656 = vmatpush.msra.mxu0 %v167
    %657 = vmatpush.msra.mxu0 %v163
    %658 = vmatpush.msra.mxu0 %v159
    %659 = vmatpush.msra.mxu0 %v155
    %660 = vmatpush.msra.mxu0 %v151
    %661 = vmatpush.msra.mxu0 %v147
    %662 = vmatpush.msra.mxu0 %v143
    %663 = vmatmul.f32.gmra.mxu0 %v53
    %v664 = vpop.f32.mrf.mxu0
    %v665 = vadd.f32 %v624, %v664
    %666 = vmatmul.f32.gmra.mxu0 %v56
    %v667 = vpop.f32.mrf.mxu0
    %v668 = vadd.f32 %v627, %v667
    %669 = vmatmul.f32.gmra.mxu0 %v59
    %v670 = vpop.f32.mrf.mxu0
    %v671 = vadd.f32 %v630, %v670
    %672 = vmatmul.f32.gmra.mxu0 %v62
    %v673 = vpop.f32.mrf.mxu0
    %v674 = vadd.f32 %v633, %v673
    %675 = vmatmul.f32.gmra.mxu0 %v65
    %v676 = vpop.f32.mrf.mxu0
    %v677 = vadd.f32 %v636, %v676
    %678 = vmatmul.f32.gmra.mxu0 %v68
    %v679 = vpop.f32.mrf.mxu0
    %v680 = vadd.f32 %v639, %v679
    %681 = vmatmul.f32.gmra.mxu0 %v71
    %v682 = vpop.f32.mrf.mxu0
    %v683 = vadd.f32 %v642, %v682
    %684 = vmatmul.f32.gmra.mxu0 %v74
    %v685 = vpop.f32.mrf.mxu0
    %v686 = vadd.f32 %v645, %v685
    %687 = vdwg.mxu0
    %688 = vmatpush.msra.mxu0 0.0
    %689 = vmatpush.msra.mxu0 0.0
    %690 = vmatpush.msra.mxu0 0.0
    %691 = vmatpush.msra.mxu0 0.0
    %692 = vmatpush.msra.mxu0 0.0
    %693 = vmatpush.msra.mxu0 0.0
    %694 = vmatpush.msra.mxu0 0.0
    %695 = vmatpush.msra.mxu0 0.0
    %696 = vmatpush.msra.mxu0 0.0
    %697 = vmatpush.msra.mxu0 0.0
    %698 = vmatpush.msra.mxu0 0.0
    %699 = vmatpush.msra.mxu0 0.0
    %700 = vmatpush.msra.mxu0 0.0
    %701 = vmatpush.msra.mxu0 0.0
    %702 = vmatpush.msra.mxu0 %v211
    %703 = vmatpush.msra.mxu0 %v207
    %704 = vmatmul.f32.gmra.mxu0 %v214
    %v705 = vpop.f32.mrf.mxu0
    %v706 = vadd.f32 %v665, %v705
    %707 = vmatmul.f32.gmra.mxu0 %v217
    %v708 = vpop.f32.mrf.mxu0
    %v709 = vadd.f32 %v668, %v708
    %710 = vmatmul.f32.gmra.mxu0 %v220
    %v711 = vpop.f32.mrf.mxu0
    %v712 = vadd.f32 %v671, %v711
    %713 = vmatmul.f32.gmra.mxu0 %v223
    %v714 = vpop.f32.mrf.mxu0
    %v715 = vadd.f32 %v674, %v714
    %716 = vmatmul.f32.gmra.mxu0 %v226
    %v717 = vpop.f32.mrf.mxu0
    %v718 = vadd.f32 %v677, %v717
    %719 = vmatmul.f32.gmra.mxu0 %v229
    %v720 = vpop.f32.mrf.mxu0
    %v721 = vadd.f32 %v680, %v720
    %722 = vmatmul.f32.gmra.mxu0 %v232
    %v723 = vpop.f32.mrf.mxu0
    %v724 = vadd.f32 %v683, %v723
    %725 = vmatmul.f32.gmra.mxu0 %v235
    %v726 = vpop.f32.mrf.mxu0
    %v727 = vadd.f32 %v686, %v726
    %728 = vdwg.mxu0
    %729 = vst [vmem:[#allocation2] sm:$0xff] %v337
    %730 = vst [vmem:[#allocation2 + $0x8] sm:$0xff] %v460
    %731 = vst [vmem:[#allocation2 + $0x10] sm:$0xff] %v583
    %732 = vst [vmem:[#allocation2 + $0x18] sm:$0xff] %v706
    %733 = vst [vmem:[#allocation2 + $0x20] sm:$0xff] %v340
    %734 = vst [vmem:[#allocation2 + $0x28] sm:$0xff] %v463
    %735 = vst [vmem:[#allocation2 + $0x30] sm:$0xff] %v586
    %736 = vst [vmem:[#allocation2 + $0x38] sm:$0xff] %v709
    %737 = vst [vmem:[#allocation2 + $0x40] sm:$0xff] %v343
    %738 = vst [vmem:[#allocation2 + $0x48] sm:$0xff] %v466
    %739 = vst [vmem:[#allocation2 + $0x50] sm:$0xff] %v589
    %740 = vst [vmem:[#allocation2 + $0x58] sm:$0xff] %v712
    %741 = vst [vmem:[#allocation2 + $0x60] sm:$0xff] %v346
    %742 = vst [vmem:[#allocation2 + $0x68] sm:$0xff] %v469
    %743 = vst [vmem:[#allocation2 + $0x70] sm:$0xff] %v592
    %744 = vst [vmem:[#allocation2 + $0x78] sm:$0xff] %v715
    %745 = vst [vmem:[#allocation2 + $0x80] sm:$0xff] %v349
    %746 = vst [vmem:[#allocation2 + $0x88] sm:$0xff] %v472
    %747 = vst [vmem:[#allocation2 + $0x90] sm:$0xff] %v595
    %748 = vst [vmem:[#allocation2 + $0x98] sm:$0xff] %v718
    %749 = vst [vmem:[#allocation2 + $0xa0] sm:$0xff] %v352
    %750 = vst [vmem:[#allocation2 + $0xa8] sm:$0xff] %v475
    %751 = vst [vmem:[#allocation2 + $0xb0] sm:$0xff] %v598
    %752 = vst [vmem:[#allocation2 + $0xb8] sm:$0xff] %v721
    %753 = vst [vmem:[#allocation2 + $0xc0] sm:$0xff] %v355
    %754 = vst [vmem:[#allocation2 + $0xc8] sm:$0xff] %v478
    %755 = vst [vmem:[#allocation2 + $0xd0] sm:$0xff] %v601
    %756 = vst [vmem:[#allocation2 + $0xd8] sm:$0xff] %v724
    %757 = vst [vmem:[#allocation2 + $0xe0] sm:$0xff] %v358
    %758 = vst [vmem:[#allocation2 + $0xe8] sm:$0xff] %v481
    %759 = vst [vmem:[#allocation2 + $0xf0] sm:$0xff] %v604
    %760 = vst [vmem:[#allocation2 + $0xf8] sm:$0xff] %v727
    %v761 = vld [vmem:[#allocation3] sm:$0xff]
    %v762 = vld [vmem:[#allocation3 + $0x8] sm:$0xff]
    %v763 = vld [vmem:[#allocation3 + $0x10] sm:$0xff]
    %v764 = vld [vmem:[#allocation3 + $0x18] sm:$0xff]
    %v765 = vld [vmem:[#allocation3 + $0x20] sm:$0xff]
    %v766 = vld [vmem:[#allocation3 + $0x28] sm:$0xff]
    %v767 = vld [vmem:[#allocation3 + $0x30] sm:$0xff]
    %v768 = vld [vmem:[#allocation3 + $0x38] sm:$0xff]
    %v769 = vld [vmem:[#allocation2] sm:$0xff]
    %v770 = vld [vmem:[#allocation2 + $0x8] sm:$0xff]
    %v771 = vld [vmem:[#allocation2 + $0x10] sm:$0xff]
    %v772 = vld [vmem:[#allocation2 + $0x18] sm:$0xff]
    %v773 = vld [vmem:[#allocation2 + $0x20] sm:$0xff]
    %v774 = vld [vmem:[#allocation2 + $0x28] sm:$0xff]
    %v775 = vld [vmem:[#allocation2 + $0x30] sm:$0xff]
    %v776 = vld [vmem:[#allocation2 + $0x38] sm:$0xff]
    %v777 = vld [vmem:[#allocation2 + $0x40] sm:$0xff]
    %v778 = vld [vmem:[#allocation2 + $0x48] sm:$0xff]
    %v779 = vld [vmem:[#allocation2 + $0x50] sm:$0xff]
    %v780 = vld [vmem:[#allocation2 + $0x58] sm:$0xff]
    %v781 = vld [vmem:[#allocation2 + $0x60] sm:$0xff]
    %v782 = vld [vmem:[#allocation2 + $0x68] sm:$0xff]
    %v783 = vld [vmem:[#allocation2 + $0x70] sm:$0xff]
    %v784 = vld [vmem:[#allocation2 + $0x78] sm:$0xff]
    %v785 = vld [vmem:[#allocation2 + $0x80] sm:$0xff]
    %v786 = vld [vmem:[#allocation2 + $0x88] sm:$0xff]
    %v787 = vld [vmem:[#allocation2 + $0x90] sm:$0xff]
    %v788 = vld [vmem:[#allocation2 + $0x98] sm:$0xff]
    %v789 = vld [vmem:[#allocation2 + $0xa0] sm:$0xff]
    %v790 = vld [vmem:[#allocation2 + $0xa8] sm:$0xff]
    %v791 = vld [vmem:[#allocation2 + $0xb0] sm:$0xff]
    %v792 = vld [vmem:[#allocation2 + $0xb8] sm:$0xff]
    %v793 = vld [vmem:[#allocation2 + $0xc0] sm:$0xff]
    %v794 = vld [vmem:[#allocation2 + $0xc8] sm:$0xff]
    %v795 = vld [vmem:[#allocation2 + $0xd0] sm:$0xff]
    %v796 = vld [vmem:[#allocation2 + $0xd8] sm:$0xff]
    %v797 = vld [vmem:[#allocation2 + $0xe0] sm:$0xff]
    %v798 = vld [vmem:[#allocation2 + $0xe8] sm:$0xff]
    %v799 = vld [vmem:[#allocation2 + $0xf0] sm:$0xff]
    %v800 = vld [vmem:[#allocation2 + $0xf8] sm:$0xff]
    %vm801 = vcmask 523264
    %v803 = vsel %vm801, %v761, 0
    %v806 = vsel %vm801, %v762, 0
    %v809 = vsel %vm801, %v763, 0
    %v812 = vsel %vm801, %v764, 0
    %v815 = vsel %vm801, %v765, 0
    %v818 = vsel %vm801, %v766, 0
    %v821 = vsel %vm801, %v767, 0
    %v824 = vsel %vm801, %v768, 0
    %826 = vmatpush.msra.mxu0 0.0
    %827 = vmatpush.msra.mxu0 0.0
    %828 = vmatpush.msra.mxu0 0.0
    %829 = vmatpush.msra.mxu0 0.0
    %830 = vmatpush.msra.mxu0 0.0
    %831 = vmatpush.msra.mxu0 0.0
    %832 = vmatpush.msra.mxu0 0.0
    %833 = vmatpush.msra.mxu0 0.0
    %834 = vmatpush.msra.mxu0 %v797
    %835 = vmatpush.msra.mxu0 %v793
    %836 = vmatpush.msra.mxu0 %v789
    %837 = vmatpush.msra.mxu0 %v785
    %838 = vmatpush.msra.mxu0 %v781
    %839 = vmatpush.msra.mxu0 %v777
    %840 = vmatpush.msra.mxu0 %v773
    %841 = vmatpush.msra.mxu0 %v769
    %842 = vmatmul.f32.gmra.mxu0 %v803
    %v843 = vpop.f32.mrf.mxu0
    %v844 = vadd.f32 0.0, %v843
    %845 = vmatmul.f32.gmra.mxu0 %v806
    %v846 = vpop.f32.mrf.mxu0
    %v847 = vadd.f32 0.0, %v846
    %848 = vmatmul.f32.gmra.mxu0 %v809
    %v849 = vpop.f32.mrf.mxu0
    %v850 = vadd.f32 0.0, %v849
    %851 = vmatmul.f32.gmra.mxu0 %v812
    %v852 = vpop.f32.mrf.mxu0
    %v853 = vadd.f32 0.0, %v852
    %854 = vmatmul.f32.gmra.mxu0 %v815
    %v855 = vpop.f32.mrf.mxu0
    %v856 = vadd.f32 0.0, %v855
    %857 = vmatmul.f32.gmra.mxu0 %v818
    %v858 = vpop.f32.mrf.mxu0
    %v859 = vadd.f32 0.0, %v858
    %860 = vmatmul.f32.gmra.mxu0 %v821
    %v861 = vpop.f32.mrf.mxu0
    %v862 = vadd.f32 0.0, %v861
    %863 = vmatmul.f32.gmra.mxu0 %v824
    %v864 = vpop.f32.mrf.mxu0
    %v865 = vadd.f32 0.0, %v864
    %866 = vdwg.mxu0
    %867 = vmatpush.msra.mxu0 0.0
    %868 = vmatpush.msra.mxu0 0.0
    %869 = vmatpush.msra.mxu0 0.0
    %870 = vmatpush.msra.mxu0 0.0
    %871 = vmatpush.msra.mxu0 0.0
    %872 = vmatpush.msra.mxu0 0.0
    %873 = vmatpush.msra.mxu0 0.0
    %874 = vmatpush.msra.mxu0 0.0
    %875 = vmatpush.msra.mxu0 %v798
    %876 = vmatpush.msra.mxu0 %v794
    %877 = vmatpush.msra.mxu0 %v790
    %878 = vmatpush.msra.mxu0 %v786
    %879 = vmatpush.msra.mxu0 %v782
    %880 = vmatpush.msra.mxu0 %v778
    %881 = vmatpush.msra.mxu0 %v774
    %882 = vmatpush.msra.mxu0 %v770
    %883 = vmatmul.f32.gmra.mxu0 %v803
    %v884 = vpop.f32.mrf.mxu0
    %v885 = vadd.f32 0.0, %v884
    %886 = vmatmul.f32.gmra.mxu0 %v806
    %v887 = vpop.f32.mrf.mxu0
    %v888 = vadd.f32 0.0, %v887
    %889 = vmatmul.f32.gmra.mxu0 %v809
    %v890 = vpop.f32.mrf.mxu0
    %v891 = vadd.f32 0.0, %v890
    %892 = vmatmul.f32.gmra.mxu0 %v812
    %v893 = vpop.f32.mrf.mxu0
    %v894 = vadd.f32 0.0, %v893
    %895 = vmatmul.f32.gmra.mxu0 %v815
    %v896 = vpop.f32.mrf.mxu0
    %v897 = vadd.f32 0.0, %v896
    %898 = vmatmul.f32.gmra.mxu0 %v818
    %v899 = vpop.f32.mrf.mxu0
    %v900 = vadd.f32 0.0, %v899
    %901 = vmatmul.f32.gmra.mxu0 %v821
    %v902 = vpop.f32.mrf.mxu0
    %v903 = vadd.f32 0.0, %v902
    %904 = vmatmul.f32.gmra.mxu0 %v824
    %v905 = vpop.f32.mrf.mxu0
    %v906 = vadd.f32 0.0, %v905
    %907 = vdwg.mxu0
    %908 = vmatpush.msra.mxu0 0.0
    %909 = vmatpush.msra.mxu0 0.0
    %910 = vmatpush.msra.mxu0 0.0
    %911 = vmatpush.msra.mxu0 0.0
    %912 = vmatpush.msra.mxu0 0.0
    %913 = vmatpush.msra.mxu0 0.0
    %914 = vmatpush.msra.mxu0 0.0
    %915 = vmatpush.msra.mxu0 0.0
    %916 = vmatpush.msra.mxu0 %v799
    %917 = vmatpush.msra.mxu0 %v795
    %918 = vmatpush.msra.mxu0 %v791
    %919 = vmatpush.msra.mxu0 %v787
    %920 = vmatpush.msra.mxu0 %v783
    %921 = vmatpush.msra.mxu0 %v779
    %922 = vmatpush.msra.mxu0 %v775
    %923 = vmatpush.msra.mxu0 %v771
    %924 = vmatmul.f32.gmra.mxu0 %v803
    %v925 = vpop.f32.mrf.mxu0
    %v926 = vadd.f32 0.0, %v925
    %927 = vmatmul.f32.gmra.mxu0 %v806
    %v928 = vpop.f32.mrf.mxu0
    %v929 = vadd.f32 0.0, %v928
    %930 = vmatmul.f32.gmra.mxu0 %v809
    %v931 = vpop.f32.mrf.mxu0
    %v932 = vadd.f32 0.0, %v931
    %933 = vmatmul.f32.gmra.mxu0 %v812
    %v934 = vpop.f32.mrf.mxu0
    %v935 = vadd.f32 0.0, %v934
    %936 = vmatmul.f32.gmra.mxu0 %v815
    %v937 = vpop.f32.mrf.mxu0
    %v938 = vadd.f32 0.0, %v937
    %939 = vmatmul.f32.gmra.mxu0 %v818
    %v940 = vpop.f32.mrf.mxu0
    %v941 = vadd.f32 0.0, %v940
    %942 = vmatmul.f32.gmra.mxu0 %v821
    %v943 = vpop.f32.mrf.mxu0
    %v944 = vadd.f32 0.0, %v943
    %945 = vmatmul.f32.gmra.mxu0 %v824
    %v946 = vpop.f32.mrf.mxu0
    %v947 = vadd.f32 0.0, %v946
    %948 = vdwg.mxu0
    %949 = vmatpush.msra.mxu0 0.0
    %950 = vmatpush.msra.mxu0 0.0
    %951 = vmatpush.msra.mxu0 0.0
    %952 = vmatpush.msra.mxu0 0.0
    %953 = vmatpush.msra.mxu0 0.0
    %954 = vmatpush.msra.mxu0 0.0
    %955 = vmatpush.msra.mxu0 0.0
    %956 = vmatpush.msra.mxu0 0.0
    %957 = vmatpush.msra.mxu0 %v800
    %958 = vmatpush.msra.mxu0 %v796
    %959 = vmatpush.msra.mxu0 %v792
    %960 = vmatpush.msra.mxu0 %v788
    %961 = vmatpush.msra.mxu0 %v784
    %962 = vmatpush.msra.mxu0 %v780
    %963 = vmatpush.msra.mxu0 %v776
    %964 = vmatpush.msra.mxu0 %v772
    %965 = vmatmul.f32.gmra.mxu0 %v803
    %v966 = vpop.f32.mrf.mxu0
    %v967 = vadd.f32 0.0, %v966
    %968 = vmatmul.f32.gmra.mxu0 %v806
    %v969 = vpop.f32.mrf.mxu0
    %v970 = vadd.f32 0.0, %v969
    %971 = vmatmul.f32.gmra.mxu0 %v809
    %v972 = vpop.f32.mrf.mxu0
    %v973 = vadd.f32 0.0, %v972
    %974 = vmatmul.f32.gmra.mxu0 %v812
    %v975 = vpop.f32.mrf.mxu0
    %v976 = vadd.f32 0.0, %v975
    %977 = vmatmul.f32.gmra.mxu0 %v815
    %v978 = vpop.f32.mrf.mxu0
    %v979 = vadd.f32 0.0, %v978
    %980 = vmatmul.f32.gmra.mxu0 %v818
    %v981 = vpop.f32.mrf.mxu0
    %v982 = vadd.f32 0.0, %v981
    %983 = vmatmul.f32.gmra.mxu0 %v821
    %v984 = vpop.f32.mrf.mxu0
    %v985 = vadd.f32 0.0, %v984
    %986 = vmatmul.f32.gmra.mxu0 %v824
    %v987 = vpop.f32.mrf.mxu0
    %v988 = vadd.f32 0.0, %v987
    %989 = vdwg.mxu0
    %v990 = vld [vmem:[%s3] sm:$0xf]
    %v992 = vperm.slane %v990, 0
    %v993 = vperm.slane %v990, 1
    %v994 = vperm.slane %v990, 2
    %v995 = vperm.slane %v990, 3
    %v1000 = vmul.f32 %v844, %v992
    %v1001 = vmul.f32 %v885, %v993
    %v1002 = vmul.f32 %v926, %v994
    %v1003 = vmul.f32 %v967, %v995
    %v1004 = vmul.f32 %v847, %v992
    %v1005 = vmul.f32 %v888, %v993
    %v1006 = vmul.f32 %v929, %v994
    %v1007 = vmul.f32 %v970, %v995
    %v1008 = vmul.f32 %v850, %v992
    %v1009 = vmul.f32 %v891, %v993
    %v1010 = vmul.f32 %v932, %v994
    %v1011 = vmul.f32 %v973, %v995
    %v1012 = vmul.f32 %v853, %v992
    %v1013 = vmul.f32 %v894, %v993
    %v1014 = vmul.f32 %v935, %v994
    %v1015 = vmul.f32 %v976, %v995
    %v1016 = vmul.f32 %v856, %v992
    %v1017 = vmul.f32 %v897, %v993
    %v1018 = vmul.f32 %v938, %v994
    %v1019 = vmul.f32 %v979, %v995
    %v1020 = vmul.f32 %v859, %v992
    %v1021 = vmul.f32 %v900, %v993
    %v1022 = vmul.f32 %v941, %v994
    %v1023 = vmul.f32 %v982, %v995
    %v1024 = vmul.f32 %v862, %v992
    %v1025 = vmul.f32 %v903, %v993
    %v1026 = vmul.f32 %v944, %v994
    %v1027 = vmul.f32 %v985, %v995
    %v1028 = vmul.f32 %v865, %v992
    %v1029 = vmul.f32 %v906, %v993
    %v1030 = vmul.f32 %v947, %v994
    %v1031 = vmul.f32 %v988, %v995
    %v1032 = vld [vmem:[%s4] sm:$0xf]
    %v1034 = vperm.slane %v1032, 0
    %v1035 = vperm.slane %v1032, 1
    %v1036 = vperm.slane %v1032, 2
    %v1037 = vperm.slane %v1032, 3
    %v1042 = vadd.f32 %v1000, %v1034
    %v1043 = vadd.f32 %v1001, %v1035
    %v1044 = vadd.f32 %v1002, %v1036
    %v1045 = vadd.f32 %v1003, %v1037
    %v1046 = vadd.f32 %v1004, %v1034
    %v1047 = vadd.f32 %v1005, %v1035
    %v1048 = vadd.f32 %v1006, %v1036
    %v1049 = vadd.f32 %v1007, %v1037
    %v1050 = vadd.f32 %v1008, %v1034
    %v1051 = vadd.f32 %v1009, %v1035
    %v1052 = vadd.f32 %v1010, %v1036
    %v1053 = vadd.f32 %v1011, %v1037
    %v1054 = vadd.f32 %v1012, %v1034
    %v1055 = vadd.f32 %v1013, %v1035
    %v1056 = vadd.f32 %v1014, %v1036
    %v1057 = vadd.f32 %v1015, %v1037
    %v1058 = vadd.f32 %v1016, %v1034
    %v1059 = vadd.f32 %v1017, %v1035
    %v1060 = vadd.f32 %v1018, %v1036
    %v1061 = vadd.f32 %v1019, %v1037
    %v1062 = vadd.f32 %v1020, %v1034
    %v1063 = vadd.f32 %v1021, %v1035
    %v1064 = vadd.f32 %v1022, %v1036
    %v1065 = vadd.f32 %v1023, %v1037
    %v1066 = vadd.f32 %v1024, %v1034
    %v1067 = vadd.f32 %v1025, %v1035
    %v1068 = vadd.f32 %v1026, %v1036
    %v1069 = vadd.f32 %v1027, %v1037
    %v1070 = vadd.f32 %v1028, %v1034
    %v1071 = vadd.f32 %v1029, %v1035
    %v1072 = vadd.f32 %v1030, %v1036
    %v1073 = vadd.f32 %v1031, %v1037
    %v1074 = vmax.f32 %v1042, 0.0
    %v1075 = vmax.f32 %v1043, 0.0
    %v1076 = vmax.f32 %v1044, 0.0
    %v1077 = vmax.f32 %v1045, 0.0
    %v1078 = vmax.f32 %v1046, 0.0
    %v1079 = vmax.f32 %v1047, 0.0
    %v1080 = vmax.f32 %v1048, 0.0
    %v1081 = vmax.f32 %v1049, 0.0
    %v1082 = vmax.f32 %v1050, 0.0
    %v1083 = vmax.f32 %v1051, 0.0
    %v1084 = vmax.f32 %v1052, 0.0
    %v1085 = vmax.f32 %v1053, 0.0
    %v1086 = vmax.f32 %v1054, 0.0
    %v1087 = vmax.f32 %v1055, 0.0
    %v1088 = vmax.f32 %v1056, 0.0
    %v1089 = vmax.f32 %v1057, 0.0
    %v1090 = vmax.f32 %v1058, 0.0
    %v1091 = vmax.f32 %v1059, 0.0
    %v1092 = vmax.f32 %v1060, 0.0
    %v1093 = vmax.f32 %v1061, 0.0
    %v1094 = vmax.f32 %v1062, 0.0
    %v1095 = vmax.f32 %v1063, 0.0
    %v1096 = vmax.f32 %v1064, 0.0
    %v1097 = vmax.f32 %v1065, 0.0
    %v1098 = vmax.f32 %v1066, 0.0
    %v1099 = vmax.f32 %v1067, 0.0
    %v1100 = vmax.f32 %v1068, 0.0
    %v1101 = vmax.f32 %v1069, 0.0
    %v1102 = vmax.f32 %v1070, 0.0
    %v1103 = vmax.f32 %v1071, 0.0
    %v1104 = vmax.f32 %v1072, 0.0
    %v1105 = vmax.f32 %v1073, 0.0
    %1106 = vst [vmem:[%s5] sm:$0xff] %v1074
    %1107 = vst [vmem:[%s5 + $0x8] sm:$0xff] %v1075
    %1108 = vst [vmem:[%s5 + $0x10] sm:$0xff] %v1076
    %1109 = vst [vmem:[%s5 + $0x18] sm:$0xff] %v1077
    %1110 = vst [vmem:[%s5 + $0x20] sm:$0xff] %v1078
    %1111 = vst [vmem:[%s5 + $0x28] sm:$0xff] %v1079
    %1112 = vst [vmem:[%s5 + $0x30] sm:$0xff] %v1080
    %1113 = vst [vmem:[%s5 + $0x38] sm:$0xff] %v1081
    %1114 = vst [vmem:[%s5 + $0x40] sm:$0xff] %v1082
    %1115 = vst [vmem:[%s5 + $0x48] sm:$0xff] %v1083
    %1116 = vst [vmem:[%s5 + $0x50] sm:$0xff] %v1084
    %1117 = vst [vmem:[%s5 + $0x58] sm:$0xff] %v1085
    %1118 = vst [vmem:[%s5 + $0x60] sm:$0xff] %v1086
    %1119 = vst [vmem:[%s5 + $0x68] sm:$0xff] %v1087
    %1120 = vst [vmem:[%s5 + $0x70] sm:$0xff] %v1088
    %1121 = vst [vmem:[%s5 + $0x78] sm:$0xff] %v1089
    %1122 = vst [vmem:[%s5 + $0x80] sm:$0xff] %v1090
    %1123 = vst [vmem:[%s5 + $0x88] sm:$0xff] %v1091
    %1124 = vst [vmem:[%s5 + $0x90] sm:$0xff] %v1092
    %1125 = vst [vmem:[%s5 + $0x98] sm:$0xff] %v1093
    %1126 = vst [vmem:[%s5 + $0xa0] sm:$0xff] %v1094
    %1127 = vst [vmem:[%s5 + $0xa8] sm:$0xff] %v1095
    %1128 = vst [vmem:[%s5 + $0xb0] sm:$0xff] %v1096
    %1129 = vst [vmem:[%s5 + $0xb8] sm:$0xff] %v1097
    %1130 = vst [vmem:[%s5 + $0xc0] sm:$0xff] %v1098
    %1131 = vst [vmem:[%s5 + $0xc8] sm:$0xff] %v1099
    %1132 = vst [vmem:[%s5 + $0xd0] sm:$0xff] %v1100
    %1133 = vst [vmem:[%s5 + $0xd8] sm:$0xff] %v1101
    %1134 = vst [vmem:[%s5 + $0xe0] sm:$0xff] %v1102
    %1135 = vst [vmem:[%s5 + $0xe8] sm:$0xff] %v1103
    %1136 = vst [vmem:[%s5 + $0xf0] sm:$0xff] %v1104
    %1137 = vst [vmem:[%s5 + $0xf8] sm:$0xff] %v1105
    // Predicated region
    $region30: #{forward.7} parent=1 // pred_check
      _
    $region31: #{forward.7} parent=1 // pred_check_branch
      %1139 = sbr.rel (0) target = $region33
    $region32: #{forward.7} parent=1 // pred_region
      _
    $region33: #{forward.7} parent=1 // pred_fallthru
      _
    // Predicated region
    $region34: #{forward.7} parent=1 // pred_check
      _
    $region35: #{forward.7} parent=1 // pred_check_branch
      %1141 = sbr.rel (0) target = $region37
    $region36: #{forward.7} parent=1 // pred_region
      _
    $region37: #{forward.7} parent=1 // pred_fallthru
      _
    %1142 = vsyncpa [#allocation4], 1
    %1143 = vsyncpa [#allocation6], 1

// kernel: forward.8
$region0: #{forward.8}
  #allocation0 [shape = 'u32[]', space=smem, size = 0x4, offset = 0x4, fixed_abs, tag = 'smem constant byte address 0x4 - core index']
  #allocation1 [shape = 'u32[72,128]{1,0:T(1,128)}', space=vmem, size = 0x9000, scoped, tag = 'internal scratch']
  #allocation2 [shape = 'f32[64,1024]{1,0:T(8,128)}', space=vmem, size = 0x40000, scoped, tag = 'scratch operand']
  %s0 = inlined_call_operand.vmem [shape: f32[64,784], index: 0, kind: input, shape index: {}]
  %s1 = inlined_call_operand.hbm [shape: f32[64,64], index: 1, kind: input, shape index: {}]
  %s2 = inlined_call_operand.hbm [shape: f32[784,1024], index: 2, kind: input, shape index: {}]
  %s3 = inlined_call_operand.vmem [shape: f32[1,1024], index: 3, kind: input, shape index: {}]
  %s4 = inlined_call_operand.vmem [shape: f32[1,1024], index: 4, kind: input, shape index: {}]
  %s5 = inlined_call_operand.vmem [shape: f32[64,1024], index: 5, kind: output, shape index: {}]
  %s6 = sld [smem:[#allocation0]]
  $region38: #{forward.8} parent=0
    _
  %s8 = ssub.s32 1, %s6
  %s9 = scalar_select 0, %s8, %s6
  $region1: #{forward.8} parent=0
    #allocation3 [shape = 'u8[32768]{0}', space=vmem, size = 0x8000, scoped, tag = 'input window, operand 1, single buffered']
    #allocation4 [shape = 's32[1]{0}', space=sflag, size = 0x4, scoped, tag = 'scoped memory for forward.8']
    #allocation5 [shape = 'u8[3211264]{0}', space=vmem, size = 0x310000, scoped, tag = 'input window, operand 2, single buffered']
    #allocation6 [shape = 's32[1]{0}', space=sflag, size = 0x4, scoped, tag = 'scoped memory for forward.8']
    %10 = vsyncpa [#allocation4], 0
    %11 = vsyncpa [#allocation6], 0
    // Predicated region
    $region2: #{forward.8} parent=1 // pred_check
      _
    $region3: #{forward.8} parent=1 // pred_check_branch
      %13 = sbr.rel (0) target = $region5
    $region4: #{forward.8} parent=1 // pred_region
      _
    $region5: #{forward.8} parent=1 // pred_fallthru
      _
    // Predicated region
    $region6: #{forward.8} parent=1 // pred_check
      _
    $region7: #{forward.8} parent=1 // pred_check_branch
      %15 = sbr.rel (0) target = $region9
    $region8: #{forward.8} parent=1 // pred_region
      %17 = vsyncadd [#allocation4], 0
      %s18 = sshll.u32 %s1, 4
      %s19 = int_to_ptr.hbm [resolvable:$true] %s18
      %s20 = sshll.u32 [#allocation3], 4
      %s21 = int_to_ptr.vmem [resolvable:$true] %s20
      %26 = dma.hbm_to_vmem [thread:$0]  %s19, 1024, %s21, [#allocation4], 128, 128, 8
    $region9: #{forward.8} parent=1 // pred_fallthru
      _
    // Predicated region
    $region10: #{forward.8} parent=1 // pred_check
      _
    $region11: #{forward.8} parent=1 // pred_check_branch
      %28 = sbr.rel (0) target = $region13
    $region12: #{forward.8} parent=1 // pred_region
      %30 = vsyncadd [#allocation6], 0
      %s31 = sshll.u32 %s2, 4
      %s32 = int_to_ptr.hbm [resolvable:$true] %s31
      %s33 = sshll.u32 [#allocation5], 4
      %s34 = int_to_ptr.vmem [resolvable:$true] %s33
      %39 = dma.hbm_to_vmem [thread:$0]  %s32, 100352, %s34, [#allocation6], 1024, 1024, 64
    $region13: #{forward.8} parent=1 // pred_fallthru
      _
    // Predicated region
    $region14: #{forward.8} parent=1 // pred_check
      _
    $region15: #{forward.8} parent=1 // pred_check_branch
      %41 = sbr.rel (0) target = $region17
    $region16: #{forward.8} parent=1 // pred_region
      _
    $region17: #{forward.8} parent=1 // pred_fallthru
      _
    // Predicated region
    $region18: #{forward.8} parent=1 // pred_check
      _
    $region19: #{forward.8} parent=1 // pred_check_branch
      %43 = sbr.rel (0) target = $region21
    $region20: #{forward.8} parent=1 // pred_region
      _
    $region21: #{forward.8} parent=1 // pred_fallthru
      _
    // Predicated region
    $region22: #{forward.8} parent=1 // pred_check
      _
    $region23: #{forward.8} parent=1 // pred_check_branch
      %45 = sbr.rel (0) target = $region25
    $region24: #{forward.8} parent=1 // pred_region
      %47 = dma.done [#allocation4], 1024
    $region25: #{forward.8} parent=1 // pred_fallthru
      _
    // Predicated region
    $region26: #{forward.8} parent=1 // pred_check
      _
    $region27: #{forward.8} parent=1 // pred_check_branch
      %49 = sbr.rel (0) target = $region29
    $region28: #{forward.8} parent=1 // pred_region
      %51 = dma.done [#allocation6], 100352
    $region29: #{forward.8} parent=1 // pred_fallthru
      _
    %v52 = vld [vmem:[%s0] sm:$0xff]
    %v53 = vld [vmem:[%s0 + $0x8] sm:$0xff]
    %v54 = vld [vmem:[%s0 + $0x10] sm:$0xff]
    %v55 = vld [vmem:[%s0 + $0x18] sm:$0xff]
    %v56 = vld [vmem:[%s0 + $0x20] sm:$0xff]
    %v57 = vld [vmem:[%s0 + $0x28] sm:$0xff]
    %v58 = vld [vmem:[%s0 + $0x30] sm:$0xff]
    %v59 = vld [vmem:[%s0 + $0x38] sm:$0xff]
    %v60 = vld [vmem:[%s0 + $0x40] sm:$0xff]
    %v61 = vld [vmem:[%s0 + $0x48] sm:$0xff]
    %v62 = vld [vmem:[%s0 + $0x50] sm:$0xff]
    %v63 = vld [vmem:[%s0 + $0x58] sm:$0xff]
    %v64 = vld [vmem:[%s0 + $0x60] sm:$0xff]
    %v65 = vld [vmem:[%s0 + $0x68] sm:$0xff]
    %v66 = vld [vmem:[%s0 + $0x70] sm:$0xff]
    %v67 = vld [vmem:[%s0 + $0x78] sm:$0xff]
    %v68 = vld [vmem:[%s0 + $0x80] sm:$0xff]
    %v69 = vld [vmem:[%s0 + $0x88] sm:$0xff]
    %v70 = vld [vmem:[%s0 + $0x90] sm:$0xff]
    %v71 = vld [vmem:[%s0 + $0x98] sm:$0xff]
    %v72 = vld [vmem:[%s0 + $0xa0] sm:$0xff]
    %v73 = vld [vmem:[%s0 + $0xa8] sm:$0xff]
    %v74 = vld [vmem:[%s0 + $0xb0] sm:$0xff]
    %v75 = vld [vmem:[%s0 + $0xb8] sm:$0xff]
    %v76 = vld [vmem:[%s0 + $0xc0] sm:$0xff]
    %v77 = vld [vmem:[%s0 + $0xc8] sm:$0xff]
    %v78 = vld [vmem:[%s0 + $0xd0] sm:$0xff]
    %v79 = vld [vmem:[%s0 + $0xd8] sm:$0xff]
    %v80 = vld [vmem:[%s0 + $0xe0] sm:$0xff]
    %v81 = vld [vmem:[%s0 + $0xe8] sm:$0xff]
    %v82 = vld [vmem:[%s0 + $0xf0] sm:$0xff]
    %v83 = vld [vmem:[%s0 + $0xf8] sm:$0xff]
    %v84 = vld [vmem:[%s0 + $0x100] sm:$0xff]
    %v85 = vld [vmem:[%s0 + $0x108] sm:$0xff]
    %v86 = vld [vmem:[%s0 + $0x110] sm:$0xff]
    %v87 = vld [vmem:[%s0 + $0x118] sm:$0xff]
    %v88 = vld [vmem:[%s0 + $0x120] sm:$0xff]
    %v89 = vld [vmem:[%s0 + $0x128] sm:$0xff]
    %v90 = vld [vmem:[%s0 + $0x130] sm:$0xff]
    %v91 = vld [vmem:[%s0 + $0x138] sm:$0xff]
    %v92 = vld [vmem:[%s0 + $0x140] sm:$0xff]
    %v93 = vld [vmem:[%s0 + $0x148] sm:$0xff]
    %v94 = vld [vmem:[%s0 + $0x150] sm:$0xff]
    %v95 = vld [vmem:[%s0 + $0x158] sm:$0xff]
    %v96 = vld [vmem:[%s0 + $0x160] sm:$0xff]
    %v97 = vld [vmem:[%s0 + $0x168] sm:$0xff]
    %v98 = vld [vmem:[%s0 + $0x170] sm:$0xff]
    %v99 = vld [vmem:[%s0 + $0x178] sm:$0xff]
    %v100 = vld [vmem:[%s0 + $0x180] sm:$0xff]
    %v101 = vld [vmem:[%s0 + $0x188] sm:$0xff]
    %v102 = vld [vmem:[%s0 + $0x190] sm:$0xff]
    %v103 = vld [vmem:[%s0 + $0x198] sm:$0xff]
    %v104 = vld [vmem:[%s0 + $0x1a0] sm:$0xff]
    %v105 = vld [vmem:[%s0 + $0x1a8] sm:$0xff]
    %v106 = vld [vmem:[%s0 + $0x1b0] sm:$0xff]
    %v107 = vld [vmem:[%s0 + $0x1b8] sm:$0xff]
    %v108 = vld [vmem:[#allocation5] sm:$0xff]
    %v109 = vld [vmem:[#allocation5 + $0x8] sm:$0xff]
    %v110 = vld [vmem:[#allocation5 + $0x10] sm:$0xff]
    %v111 = vld [vmem:[#allocation5 + $0x18] sm:$0xff]
    %v112 = vld [vmem:[#allocation5 + $0x20] sm:$0xff]
    %v113 = vld [vmem:[#allocation5 + $0x28] sm:$0xff]
    %v114 = vld [vmem:[#allocation5 + $0x30] sm:$0xff]
    %v115 = vld [vmem:[#allocation5 + $0x38] sm:$0xff]
    %v116 = vld [vmem:[#allocation5 + $0x40] sm:$0xff]
    %v117 = vld [vmem:[#allocation5 + $0x48] sm:$0xff]
    %v118 = vld [vmem:[#allocation5 + $0x50] sm:$0xff]
    %v119 = vld [vmem:[#allocation5 + $0x58] sm:$0xff]
    %v120 = vld [vmem:[#allocation5 + $0x60] sm:$0xff]
    %v121 = vld [vmem:[#allocation5 + $0x68] sm:$0xff]
    %v122 = vld [vmem:[#allocation5 + $0x70] sm:$0xff]
    %v123 = vld [vmem:[#allocation5 + $0x78] sm:$0xff]
    %v124 = vld [vmem:[#allocation5 + $0x80] sm:$0xff]
    %v125 = vld [vmem:[#allocation5 + $0x88] sm:$0xff]
    %v126 = vld [vmem:[#allocation5 + $0x90] sm:$0xff]
    %v127 = vld [vmem:[#allocation5 + $0x98] sm:$0xff]
    %v128 = vld [vmem:[#allocation5 + $0xa0] sm:$0xff]
    %v129 = vld [vmem:[#allocation5 + $0xa8] sm:$0xff]
    %v130 = vld [vmem:[#allocation5 + $0xb0] sm:$0xff]
    %v131 = vld [vmem:[#allocation5 + $0xb8] sm:$0xff]
    %v132 = vld [vmem:[#allocation5 + $0xc0] sm:$0xff]
    %v133 = vld [vmem:[#allocation5 + $0xc8] sm:$0xff]
    %v134 = vld [vmem:[#allocation5 + $0xd0] sm:$0xff]
    %v135 = vld [vmem:[#allocation5 + $0xd8] sm:$0xff]
    %v136 = vld [vmem:[#allocation5 + $0xe0] sm:$0xff]
    %v137 = vld [vmem:[#allocation5 + $0xe8] sm:$0xff]
    %v138 = vld [vmem:[#allocation5 + $0xf0] sm:$0xff]
    %v139 = vld [vmem:[#allocation5 + $0xf8] sm:$0xff]
    %v140 = vld [vmem:[#allocation5 + $0x100] sm:$0xff]
    %v141 = vld [vmem:[#allocation5 + $0x108] sm:$0xff]
    %v142 = vld [vmem:[#allocation5 + $0x110] sm:$0xff]
    %v143 = vld [vmem:[#allocation5 + $0x118] sm:$0xff]
    %v144 = vld [vmem:[#allocation5 + $0x120] sm:$0xff]
    %v145 = vld [vmem:[#allocation5 + $0x128] sm:$0xff]
    %v146 = vld [vmem:[#allocation5 + $0x130] sm:$0xff]
    %v147 = vld [vmem:[#allocation5 + $0x138] sm:$0xff]
    %v148 = vld [vmem:[#allocation5 + $0x140] sm:$0xff]
    %v149 = vld [vmem:[#allocation5 + $0x148] sm:$0xff]
    %v150 = vld [vmem:[#allocation5 + $0x150] sm:$0xff]
    %v151 = vld [vmem:[#allocation5 + $0x158] sm:$0xff]
    %v152 = vld [vmem:[#allocation5 + $0x160] sm:$0xff]
    %v153 = vld [vmem:[#allocation5 + $0x168] sm:$0xff]
    %v154 = vld [vmem:[#allocation5 + $0x170] sm:$0xff]
    %v155 = vld [vmem:[#allocation5 + $0x178] sm:$0xff]
    %v156 = vld [vmem:[#allocation5 + $0x180] sm:$0xff]
    %v157 = vld [vmem:[#allocation5 + $0x188] sm:$0xff]
    %v158 = vld [vmem:[#allocation5 + $0x190] sm:$0xff]
    %v159 = vld [vmem:[#allocation5 + $0x198] sm:$0xff]
    %v160 = vld [vmem:[#allocation5 + $0x1a0] sm:$0xff]
    %v161 = vld [vmem:[#allocation5 + $0x1a8] sm:$0xff]
    %v162 = vld [vmem:[#allocation5 + $0x1b0] sm:$0xff]
    %v163 = vld [vmem:[#allocation5 + $0x1b8] sm:$0xff]
    %v164 = vld [vmem:[#allocation5 + $0x1c0] sm:$0xff]
    %v165 = vld [vmem:[#allocation5 + $0x1c8] sm:$0xff]
    %v166 = vld [vmem:[#allocation5 + $0x1d0] sm:$0xff]
    %v167 = vld [vmem:[#allocation5 + $0x1d8] sm:$0xff]
    %v168 = vld [vmem:[#allocation5 + $0x1e0] sm:$0xff]
    %v169 = vld [vmem:[#allocation5 + $0x1e8] sm:$0xff]
    %v170 = vld [vmem:[#allocation5 + $0x1f0] sm:$0xff]
    %v171 = vld [vmem:[#allocation5 + $0x1f8] sm:$0xff]
    %v172 = vld [vmem:[#allocation5 + $0x200] sm:$0xff]
    %v173 = vld [vmem:[#allocation5 + $0x208] sm:$0xff]
    %v174 = vld [vmem:[#allocation5 + $0x210] sm:$0xff]
    %v175 = vld [vmem:[#allocation5 + $0x218] sm:$0xff]
    %v176 = vld [vmem:[#allocation5 + $0x220] sm:$0xff]
    %v177 = vld [vmem:[#allocation5 + $0x228] sm:$0xff]
    %v178 = vld [vmem:[#allocation5 + $0x230] sm:$0xff]
    %v179 = vld [vmem:[#allocation5 + $0x238] sm:$0xff]
    %v180 = vld [vmem:[#allocation5 + $0x240] sm:$0xff]
    %v181 = vld [vmem:[#allocation5 + $0x248] sm:$0xff]
    %v182 = vld [vmem:[#allocation5 + $0x250] sm:$0xff]
    %v183 = vld [vmem:[#allocation5 + $0x258] sm:$0xff]
    %v184 = vld [vmem:[#allocation5 + $0x260] sm:$0xff]
    %v185 = vld [vmem:[#allocation5 + $0x268] sm:$0xff]
    %v186 = vld [vmem:[#allocation5 + $0x270] sm:$0xff]
    %v187 = vld [vmem:[#allocation5 + $0x278] sm:$0xff]
    %v188 = vld [vmem:[#allocation5 + $0x280] sm:$0xff]
    %v189 = vld [vmem:[#allocation5 + $0x288] sm:$0xff]
    %v190 = vld [vmem:[#allocation5 + $0x290] sm:$0xff]
    %v191 = vld [vmem:[#allocation5 + $0x298] sm:$0xff]
    %v192 = vld [vmem:[#allocation5 + $0x2a0] sm:$0xff]
    %v193 = vld [vmem:[#allocation5 + $0x2a8] sm:$0xff]
    %v194 = vld [vmem:[#allocation5 + $0x2b0] sm:$0xff]
    %v195 = vld [vmem:[#allocation5 + $0x2b8] sm:$0xff]
    %v196 = vld [vmem:[#allocation5 + $0x2c0] sm:$0xff]
    %v197 = vld [vmem:[#allocation5 + $0x2c8] sm:$0xff]
    %v198 = vld [vmem:[#allocation5 + $0x2d0] sm:$0xff]
    %v199 = vld [vmem:[#allocation5 + $0x2d8] sm:$0xff]
    %v200 = vld [vmem:[#allocation5 + $0x2e0] sm:$0xff]
    %v201 = vld [vmem:[#allocation5 + $0x2e8] sm:$0xff]
    %v202 = vld [vmem:[#allocation5 + $0x2f0] sm:$0xff]
    %v203 = vld [vmem:[#allocation5 + $0x2f8] sm:$0xff]
    %v204 = vld [vmem:[#allocation5 + $0x300] sm:$0xff]
    %v205 = vld [vmem:[#allocation5 + $0x308] sm:$0xff]
    %v206 = vld [vmem:[#allocation5 + $0x310] sm:$0xff]
    %v207 = vld [vmem:[#allocation5 + $0x318] sm:$0xff]
    %v208 = vld [vmem:[#allocation5 + $0x320] sm:$0xff]
    %v209 = vld [vmem:[#allocation5 + $0x328] sm:$0xff]
    %v210 = vld [vmem:[#allocation5 + $0x330] sm:$0xff]
    %v211 = vld [vmem:[#allocation5 + $0x338] sm:$0xff]
    %v212 = vld [vmem:[#allocation5 + $0x340] sm:$0xff]
    %v213 = vld [vmem:[#allocation5 + $0x348] sm:$0xff]
    %v214 = vld [vmem:[#allocation5 + $0x350] sm:$0xff]
    %v215 = vld [vmem:[#allocation5 + $0x358] sm:$0xff]
    %v216 = vld [vmem:[#allocation5 + $0x360] sm:$0xff]
    %v217 = vld [vmem:[#allocation5 + $0x368] sm:$0xff]
    %v218 = vld [vmem:[#allocation5 + $0x370] sm:$0xff]
    %v219 = vld [vmem:[#allocation5 + $0x378] sm:$0xff]
    %v220 = vld [vmem:[#allocation5 + $0x380] sm:$0xff]
    %v221 = vld [vmem:[#allocation5 + $0x388] sm:$0xff]
    %v222 = vld [vmem:[#allocation5 + $0x390] sm:$0xff]
    %v223 = vld [vmem:[#allocation5 + $0x398] sm:$0xff]
    %v224 = vld [vmem:[#allocation5 + $0x3a0] sm:$0xff]
    %v225 = vld [vmem:[#allocation5 + $0x3a8] sm:$0xff]
    %v226 = vld [vmem:[#allocation5 + $0x3b0] sm:$0xff]
    %v227 = vld [vmem:[#allocation5 + $0x3b8] sm:$0xff]
    %v228 = vld [vmem:[#allocation5 + $0x3c0] sm:$0xff]
    %v229 = vld [vmem:[#allocation5 + $0x3c8] sm:$0xff]
    %v230 = vld [vmem:[#allocation5 + $0x3d0] sm:$0xff]
    %v231 = vld [vmem:[#allocation5 + $0x3d8] sm:$0xff]
    %v232 = vld [vmem:[#allocation5 + $0x3e0] sm:$0xff]
    %v233 = vld [vmem:[#allocation5 + $0x3e8] sm:$0xff]
    %v234 = vld [vmem:[#allocation5 + $0x3f0] sm:$0xff]
    %v235 = vld [vmem:[#allocation5 + $0x3f8] sm:$0xff]
    %v236 = vld [vmem:[#allocation5 + $0x400] sm:$0xff]
    %v237 = vld [vmem:[#allocation5 + $0x408] sm:$0xff]
    %v238 = vld [vmem:[#allocation5 + $0x410] sm:$0xff]
    %v239 = vld [vmem:[#allocation5 + $0x418] sm:$0xff]
    %v240 = vld [vmem:[#allocation5 + $0x420] sm:$0xff]
    %v241 = vld [vmem:[#allocation5 + $0x428] sm:$0xff]
    %v242 = vld [vmem:[#allocation5 + $0x430] sm:$0xff]
    %v243 = vld [vmem:[#allocation5 + $0x438] sm:$0xff]
    %v244 = vld [vmem:[#allocation5 + $0x440] sm:$0xff]
    %v245 = vld [vmem:[#allocation5 + $0x448] sm:$0xff]
    %v246 = vld [vmem:[#allocation5 + $0x450] sm:$0xff]
    %v247 = vld [vmem:[#allocation5 + $0x458] sm:$0xff]
    %v248 = vld [vmem:[#allocation5 + $0x460] sm:$0xff]
    %v249 = vld [vmem:[#allocation5 + $0x468] sm:$0xff]
    %v250 = vld [vmem:[#allocation5 + $0x470] sm:$0xff]
    %v251 = vld [vmem:[#allocation5 + $0x478] sm:$0xff]
    %v252 = vld [vmem:[#allocation5 + $0x480] sm:$0xff]
    %v253 = vld [vmem:[#allocation5 + $0x488] sm:$0xff]
    %v254 = vld [vmem:[#allocation5 + $0x490] sm:$0xff]
    %v255 = vld [vmem:[#allocation5 + $0x498] sm:$0xff]
    %v256 = vld [vmem:[#allocation5 + $0x4a0] sm:$0xff]
    %v257 = vld [vmem:[#allocation5 + $0x4a8] sm:$0xff]
    %v258 = vld [vmem:[#allocation5 + $0x4b0] sm:$0xff]
    %v259 = vld [vmem:[#allocation5 + $0x4b8] sm:$0xff]
    %v260 = vld [vmem:[#allocation5 + $0x4c0] sm:$0xff]
    %v261 = vld [vmem:[#allocation5 + $0x4c8] sm:$0xff]
    %v262 = vld [vmem:[#allocation5 + $0x4d0] sm:$0xff]
    %v263 = vld [vmem:[#allocation5 + $0x4d8] sm:$0xff]
    %v264 = vld [vmem:[#allocation5 + $0x4e0] sm:$0xff]
    %v265 = vld [vmem:[#allocation5 + $0x4e8] sm:$0xff]
    %v266 = vld [vmem:[#allocation5 + $0x4f0] sm:$0xff]
    %v267 = vld [vmem:[#allocation5 + $0x4f8] sm:$0xff]
    %v268 = vld [vmem:[#allocation5 + $0x500] sm:$0xff]
    %v269 = vld [vmem:[#allocation5 + $0x508] sm:$0xff]
    %v270 = vld [vmem:[#allocation5 + $0x510] sm:$0xff]
    %v271 = vld [vmem:[#allocation5 + $0x518] sm:$0xff]
    %v272 = vld [vmem:[#allocation5 + $0x520] sm:$0xff]
    %v273 = vld [vmem:[#allocation5 + $0x528] sm:$0xff]
    %v274 = vld [vmem:[#allocation5 + $0x530] sm:$0xff]
    %v275 = vld [vmem:[#allocation5 + $0x538] sm:$0xff]
    %v276 = vld [vmem:[#allocation5 + $0x540] sm:$0xff]
    %v277 = vld [vmem:[#allocation5 + $0x548] sm:$0xff]
    %v278 = vld [vmem:[#allocation5 + $0x550] sm:$0xff]
    %v279 = vld [vmem:[#allocation5 + $0x558] sm:$0xff]
    %v280 = vld [vmem:[#allocation5 + $0x560] sm:$0xff]
    %v281 = vld [vmem:[#allocation5 + $0x568] sm:$0xff]
    %v282 = vld [vmem:[#allocation5 + $0x570] sm:$0xff]
    %v283 = vld [vmem:[#allocation5 + $0x578] sm:$0xff]
    %v284 = vld [vmem:[#allocation5 + $0x580] sm:$0xff]
    %v285 = vld [vmem:[#allocation5 + $0x588] sm:$0xff]
    %v286 = vld [vmem:[#allocation5 + $0x590] sm:$0xff]
    %v287 = vld [vmem:[#allocation5 + $0x598] sm:$0xff]
    %v288 = vld [vmem:[#allocation5 + $0x5a0] sm:$0xff]
    %v289 = vld [vmem:[#allocation5 + $0x5a8] sm:$0xff]
    %v290 = vld [vmem:[#allocation5 + $0x5b0] sm:$0xff]
    %v291 = vld [vmem:[#allocation5 + $0x5b8] sm:$0xff]
    %v292 = vld [vmem:[#allocation5 + $0x5c0] sm:$0xff]
    %v293 = vld [vmem:[#allocation5 + $0x5c8] sm:$0xff]
    %v294 = vld [vmem:[#allocation5 + $0x5d0] sm:$0xff]
    %v295 = vld [vmem:[#allocation5 + $0x5d8] sm:$0xff]
    %v296 = vld [vmem:[#allocation5 + $0x5e0] sm:$0xff]
    %v297 = vld [vmem:[#allocation5 + $0x5e8] sm:$0xff]
    %v298 = vld [vmem:[#allocation5 + $0x5f0] sm:$0xff]
    %v299 = vld [vmem:[#allocation5 + $0x5f8] sm:$0xff]
    %v300 = vld [vmem:[#allocation5 + $0x600] sm:$0xff]
    %v301 = vld [vmem:[#allocation5 + $0x608] sm:$0xff]
    %v302 = vld [vmem:[#allocation5 + $0x610] sm:$0xff]
    %v303 = vld [vmem:[#allocation5 + $0x618] sm:$0xff]
    %v304 = vld [vmem:[#allocation5 + $0x620] sm:$0xff]
    %v305 = vld [vmem:[#allocation5 + $0x628] sm:$0xff]
    %v306 = vld [vmem:[#allocation5 + $0x630] sm:$0xff]
    %v307 = vld [vmem:[#allocation5 + $0x638] sm:$0xff]
    %v308 = vld [vmem:[#allocation5 + $0x640] sm:$0xff]
    %v309 = vld [vmem:[#allocation5 + $0x648] sm:$0xff]
    %v310 = vld [vmem:[#allocation5 + $0x650] sm:$0xff]
    %v311 = vld [vmem:[#allocation5 + $0x658] sm:$0xff]
    %v312 = vld [vmem:[#allocation5 + $0x660] sm:$0xff]
    %v313 = vld [vmem:[#allocation5 + $0x668] sm:$0xff]
    %v314 = vld [vmem:[#allocation5 + $0x670] sm:$0xff]
    %v315 = vld [vmem:[#allocation5 + $0x678] sm:$0xff]
    %v316 = vld [vmem:[#allocation5 + $0x680] sm:$0xff]
    %v317 = vld [vmem:[#allocation5 + $0x688] sm:$0xff]
    %v318 = vld [vmem:[#allocation5 + $0x690] sm:$0xff]
    %v319 = vld [vmem:[#allocation5 + $0x698] sm:$0xff]
    %v320 = vld [vmem:[#allocation5 + $0x6a0] sm:$0xff]
    %v321 = vld [vmem:[#allocation5 + $0x6a8] sm:$0xff]
    %v322 = vld [vmem:[#allocation5 + $0x6b0] sm:$0xff]
    %v323 = vld [vmem:[#allocation5 + $0x6b8] sm:$0xff]
    %v324 = vld [vmem:[#allocation5 + $0x6c0] sm:$0xff]
    %v325 = vld [vmem:[#allocation5 + $0x6c8] sm:$0xff]
    %v326 = vld [vmem:[#allocation5 + $0x6d0] sm:$0xff]
    %v327 = vld [vmem:[#allocation5 + $0x6d8] sm:$0xff]
    %v328 = vld [vmem:[#allocation5 + $0x6e0] sm:$0xff]
    %v329 = vld [vmem:[#allocation5 + $0x6e8] sm:$0xff]
    %v330 = vld [vmem:[#allocation5 + $0x6f0] sm:$0xff]
    %v331 = vld [vmem:[#allocation5 + $0x6f8] sm:$0xff]
    %v332 = vld [vmem:[#allocation5 + $0x700] sm:$0xff]
    %v333 = vld [vmem:[#allocation5 + $0x708] sm:$0xff]
    %v334 = vld [vmem:[#allocation5 + $0x710] sm:$0xff]
    %v335 = vld [vmem:[#allocation5 + $0x718] sm:$0xff]
    %v336 = vld [vmem:[#allocation5 + $0x720] sm:$0xff]
    %v337 = vld [vmem:[#allocation5 + $0x728] sm:$0xff]
    %v338 = vld [vmem:[#allocation5 + $0x730] sm:$0xff]
    %v339 = vld [vmem:[#allocation5 + $0x738] sm:$0xff]
    %v340 = vld [vmem:[#allocation5 + $0x740] sm:$0xff]
    %v341 = vld [vmem:[#allocation5 + $0x748] sm:$0xff]
    %v342 = vld [vmem:[#allocation5 + $0x750] sm:$0xff]
    %v343 = vld [vmem:[#allocation5 + $0x758] sm:$0xff]
    %v344 = vld [vmem:[#allocation5 + $0x760] sm:$0xff]
    %v345 = vld [vmem:[#allocation5 + $0x768] sm:$0xff]
    %v346 = vld [vmem:[#allocation5 + $0x770] sm:$0xff]
    %v347 = vld [vmem:[#allocation5 + $0x778] sm:$0xff]
    %v348 = vld [vmem:[#allocation5 + $0x780] sm:$0xff]
    %v349 = vld [vmem:[#allocation5 + $0x788] sm:$0xff]
    %v350 = vld [vmem:[#allocation5 + $0x790] sm:$0xff]
    %v351 = vld [vmem:[#allocation5 + $0x798] sm:$0xff]
    %v352 = vld [vmem:[#allocation5 + $0x7a0] sm:$0xff]
    %v353 = vld [vmem:[#allocation5 + $0x7a8] sm:$0xff]
    %v354 = vld [vmem:[#allocation5 + $0x7b0] sm:$0xff]
    %v355 = vld [vmem:[#allocation5 + $0x7b8] sm:$0xff]
    %v356 = vld [vmem:[#allocation5 + $0x7c0] sm:$0xff]
    %v357 = vld [vmem:[#allocation5 + $0x7c8] sm:$0xff]
    %v358 = vld [vmem:[#allocation5 + $0x7d0] sm:$0xff]
    %v359 = vld [vmem:[#allocation5 + $0x7d8] sm:$0xff]
    %v360 = vld [vmem:[#allocation5 + $0x7e0] sm:$0xff]
    %v361 = vld [vmem:[#allocation5 + $0x7e8] sm:$0xff]
    %v362 = vld [vmem:[#allocation5 + $0x7f0] sm:$0xff]
    %v363 = vld [vmem:[#allocation5 + $0x7f8] sm:$0xff]
    %v364 = vld [vmem:[#allocation5 + $0x800] sm:$0xff]
    %v365 = vld [vmem:[#allocation5 + $0x808] sm:$0xff]
    %v366 = vld [vmem:[#allocation5 + $0x810] sm:$0xff]
    %v367 = vld [vmem:[#allocation5 + $0x818] sm:$0xff]
    %v368 = vld [vmem:[#allocation5 + $0x820] sm:$0xff]
    %v369 = vld [vmem:[#allocation5 + $0x828] sm:$0xff]
    %v370 = vld [vmem:[#allocation5 + $0x830] sm:$0xff]
    %v371 = vld [vmem:[#allocation5 + $0x838] sm:$0xff]
    %v372 = vld [vmem:[#allocation5 + $0x840] sm:$0xff]
    %v373 = vld [vmem:[#allocation5 + $0x848] sm:$0xff]
    %v374 = vld [vmem:[#allocation5 + $0x850] sm:$0xff]
    %v375 = vld [vmem:[#allocation5 + $0x858] sm:$0xff]
    %v376 = vld [vmem:[#allocation5 + $0x860] sm:$0xff]
    %v377 = vld [vmem:[#allocation5 + $0x868] sm:$0xff]
    %v378 = vld [vmem:[#allocation5 + $0x870] sm:$0xff]
    %v379 = vld [vmem:[#allocation5 + $0x878] sm:$0xff]
    %v380 = vld [vmem:[#allocation5 + $0x880] sm:$0xff]
    %v381 = vld [vmem:[#allocation5 + $0x888] sm:$0xff]
    %v382 = vld [vmem:[#allocation5 + $0x890] sm:$0xff]
    %v383 = vld [vmem:[#allocation5 + $0x898] sm:$0xff]
    %v384 = vld [vmem:[#allocation5 + $0x8a0] sm:$0xff]
    %v385 = vld [vmem:[#allocation5 + $0x8a8] sm:$0xff]
    %v386 = vld [vmem:[#allocation5 + $0x8b0] sm:$0xff]
    %v387 = vld [vmem:[#allocation5 + $0x8b8] sm:$0xff]
    %v388 = vld [vmem:[#allocation5 + $0x8c0] sm:$0xff]
    %v389 = vld [vmem:[#allocation5 + $0x8c8] sm:$0xff]
    %v390 = vld [vmem:[#allocation5 + $0x8d0] sm:$0xff]
    %v391 = vld [vmem:[#allocation5 + $0x8d8] sm:$0xff]
    %v392 = vld [vmem:[#allocation5 + $0x8e0] sm:$0xff]
    %v393 = vld [vmem:[#allocation5 + $0x8e8] sm:$0xff]
    %v394 = vld [vmem:[#allocation5 + $0x8f0] sm:$0xff]
    %v395 = vld [vmem:[#allocation5 + $0x8f8] sm:$0xff]
    %v396 = vld [vmem:[#allocation5 + $0x900] sm:$0xff]
    %v397 = vld [vmem:[#allocation5 + $0x908] sm:$0xff]
    %v398 = vld [vmem:[#allocation5 + $0x910] sm:$0xff]
    %v399 = vld [vmem:[#allocation5 + $0x918] sm:$0xff]
    %v400 = vld [vmem:[#allocation5 + $0x920] sm:$0xff]
    %v401 = vld [vmem:[#allocation5 + $0x928] sm:$0xff]
    %v402 = vld [vmem:[#allocation5 + $0x930] sm:$0xff]
    %v403 = vld [vmem:[#allocation5 + $0x938] sm:$0xff]
    %v404 = vld [vmem:[#allocation5 + $0x940] sm:$0xff]
    %v405 = vld [vmem:[#allocation5 + $0x948] sm:$0xff]
    %v406 = vld [vmem:[#allocation5 + $0x950] sm:$0xff]
    %v407 = vld [vmem:[#allocation5 + $0x958] sm:$0xff]
    %v408 = vld [vmem:[#allocation5 + $0x960] sm:$0xff]
    %v409 = vld [vmem:[#allocation5 + $0x968] sm:$0xff]
    %v410 = vld [vmem:[#allocation5 + $0x970] sm:$0xff]
    %v411 = vld [vmem:[#allocation5 + $0x978] sm:$0xff]
    %v412 = vld [vmem:[#allocation5 + $0x980] sm:$0xff]
    %v413 = vld [vmem:[#allocation5 + $0x988] sm:$0xff]
    %v414 = vld [vmem:[#allocation5 + $0x990] sm:$0xff]
    %v415 = vld [vmem:[#allocation5 + $0x998] sm:$0xff]
    %v416 = vld [vmem:[#allocation5 + $0x9a0] sm:$0xff]
    %v417 = vld [vmem:[#allocation5 + $0x9a8] sm:$0xff]
    %v418 = vld [vmem:[#allocation5 + $0x9b0] sm:$0xff]
    %v419 = vld [vmem:[#allocation5 + $0x9b8] sm:$0xff]
    %v420 = vld [vmem:[#allocation5 + $0x9c0] sm:$0xff]
    %v421 = vld [vmem:[#allocation5 + $0x9c8] sm:$0xff]
    %v422 = vld [vmem:[#allocation5 + $0x9d0] sm:$0xff]
    %v423 = vld [vmem:[#allocation5 + $0x9d8] sm:$0xff]
    %v424 = vld [vmem:[#allocation5 + $0x9e0] sm:$0xff]
    %v425 = vld [vmem:[#allocation5 + $0x9e8] sm:$0xff]
    %v426 = vld [vmem:[#allocation5 + $0x9f0] sm:$0xff]
    %v427 = vld [vmem:[#allocation5 + $0x9f8] sm:$0xff]
    %v428 = vld [vmem:[#allocation5 + $0xa00] sm:$0xff]
    %v429 = vld [vmem:[#allocation5 + $0xa08] sm:$0xff]
    %v430 = vld [vmem:[#allocation5 + $0xa10] sm:$0xff]
    %v431 = vld [vmem:[#allocation5 + $0xa18] sm:$0xff]
    %v432 = vld [vmem:[#allocation5 + $0xa20] sm:$0xff]
    %v433 = vld [vmem:[#allocation5 + $0xa28] sm:$0xff]
    %v434 = vld [vmem:[#allocation5 + $0xa30] sm:$0xff]
    %v435 = vld [vmem:[#allocation5 + $0xa38] sm:$0xff]
    %v436 = vld [vmem:[#allocation5 + $0xa40] sm:$0xff]
    %v437 = vld [vmem:[#allocation5 + $0xa48] sm:$0xff]
    %v438 = vld [vmem:[#allocation5 + $0xa50] sm:$0xff]
    %v439 = vld [vmem:[#allocation5 + $0xa58] sm:$0xff]
    %v440 = vld [vmem:[#allocation5 + $0xa60] sm:$0xff]
    %v441 = vld [vmem:[#allocation5 + $0xa68] sm:$0xff]
    %v442 = vld [vmem:[#allocation5 + $0xa70] sm:$0xff]
    %v443 = vld [vmem:[#allocation5 + $0xa78] sm:$0xff]
    %v444 = vld [vmem:[#allocation5 + $0xa80] sm:$0xff]
    %v445 = vld [vmem:[#allocation5 + $0xa88] sm:$0xff]
    %v446 = vld [vmem:[#allocation5 + $0xa90] sm:$0xff]
    %v447 = vld [vmem:[#allocation5 + $0xa98] sm:$0xff]
    %v448 = vld [vmem:[#allocation5 + $0xaa0] sm:$0xff]
    %v449 = vld [vmem:[#allocation5 + $0xaa8] sm:$0xff]
    %v450 = vld [vmem:[#allocation5 + $0xab0] sm:$0xff]
    %v451 = vld [vmem:[#allocation5 + $0xab8] sm:$0xff]
    %v452 = vld [vmem:[#allocation5 + $0xac0] sm:$0xff]
    %v453 = vld [vmem:[#allocation5 + $0xac8] sm:$0xff]
    %v454 = vld [vmem:[#allocation5 + $0xad0] sm:$0xff]
    %v455 = vld [vmem:[#allocation5 + $0xad8] sm:$0xff]
    %v456 = vld [vmem:[#allocation5 + $0xae0] sm:$0xff]
    %v457 = vld [vmem:[#allocation5 + $0xae8] sm:$0xff]
    %v458 = vld [vmem:[#allocation5 + $0xaf0] sm:$0xff]
    %v459 = vld [vmem:[#allocation5 + $0xaf8] sm:$0xff]
    %v460 = vld [vmem:[#allocation5 + $0xb00] sm:$0xff]
    %v461 = vld [vmem:[#allocation5 + $0xb08] sm:$0xff]
    %v462 = vld [vmem:[#allocation5 + $0xb10] sm:$0xff]
    %v463 = vld [vmem:[#allocation5 + $0xb18] sm:$0xff]
    %v464 = vld [vmem:[#allocation5 + $0xb20] sm:$0xff]
    %v465 = vld [vmem:[#allocation5 + $0xb28] sm:$0xff]
    %v466 = vld [vmem:[#allocation5 + $0xb30] sm:$0xff]
    %v467 = vld [vmem:[#allocation5 + $0xb38] sm:$0xff]
    %v468 = vld [vmem:[#allocation5 + $0xb40] sm:$0xff]
    %v469 = vld [vmem:[#allocation5 + $0xb48] sm:$0xff]
    %v470 = vld [vmem:[#allocation5 + $0xb50] sm:$0xff]
    %v471 = vld [vmem:[#allocation5 + $0xb58] sm:$0xff]
    %v472 = vld [vmem:[#allocation5 + $0xb60] sm:$0xff]
    %v473 = vld [vmem:[#allocation5 + $0xb68] sm:$0xff]
    %v474 = vld [vmem:[#allocation5 + $0xb70] sm:$0xff]
    %v475 = vld [vmem:[#allocation5 + $0xb78] sm:$0xff]
    %v476 = vld [vmem:[#allocation5 + $0xb80] sm:$0xff]
    %v477 = vld [vmem:[#allocation5 + $0xb88] sm:$0xff]
    %v478 = vld [vmem:[#allocation5 + $0xb90] sm:$0xff]
    %v479 = vld [vmem:[#allocation5 + $0xb98] sm:$0xff]
    %v480 = vld [vmem:[#allocation5 + $0xba0] sm:$0xff]
    %v481 = vld [vmem:[#allocation5 + $0xba8] sm:$0xff]
    %v482 = vld [vmem:[#allocation5 + $0xbb0] sm:$0xff]
    %v483 = vld [vmem:[#allocation5 + $0xbb8] sm:$0xff]
    %v484 = vld [vmem:[#allocation5 + $0xbc0] sm:$0xff]
    %v485 = vld [vmem:[#allocation5 + $0xbc8] sm:$0xff]
    %v486 = vld [vmem:[#allocation5 + $0xbd0] sm:$0xff]
    %v487 = vld [vmem:[#allocation5 + $0xbd8] sm:$0xff]
    %v488 = vld [vmem:[#allocation5 + $0xbe0] sm:$0xff]
    %v489 = vld [vmem:[#allocation5 + $0xbe8] sm:$0xff]
    %v490 = vld [vmem:[#allocation5 + $0xbf0] sm:$0xff]
    %v491 = vld [vmem:[#allocation5 + $0xbf8] sm:$0xff]
    %v492 = vld [vmem:[#allocation5 + $0xc00] sm:$0xff]
    %v493 = vld [vmem:[#allocation5 + $0xc08] sm:$0xff]
    %v494 = vld [vmem:[#allocation5 + $0xc10] sm:$0xff]
    %v495 = vld [vmem:[#allocation5 + $0xc18] sm:$0xff]
    %v496 = vld [vmem:[#allocation5 + $0xc20] sm:$0xff]
    %v497 = vld [vmem:[#allocation5 + $0xc28] sm:$0xff]
    %v498 = vld [vmem:[#allocation5 + $0xc30] sm:$0xff]
    %v499 = vld [vmem:[#allocation5 + $0xc38] sm:$0xff]
    %v500 = vld [vmem:[#allocation5 + $0xc40] sm:$0xff]
    %v501 = vld [vmem:[#allocation5 + $0xc48] sm:$0xff]
    %v502 = vld [vmem:[#allocation5 + $0xc50] sm:$0xff]
    %v503 = vld [vmem:[#allocation5 + $0xc58] sm:$0xff]
    %v504 = vld [vmem:[#allocation5 + $0xc60] sm:$0xff]
    %v505 = vld [vmem:[#allocation5 + $0xc68] sm:$0xff]
    %v506 = vld [vmem:[#allocation5 + $0xc70] sm:$0xff]
    %v507 = vld [vmem:[#allocation5 + $0xc78] sm:$0xff]
    %v508 = vld [vmem:[#allocation5 + $0xc80] sm:$0xff]
    %v509 = vld [vmem:[#allocation5 + $0xc88] sm:$0xff]
    %v510 = vld [vmem:[#allocation5 + $0xc90] sm:$0xff]
    %v511 = vld [vmem:[#allocation5 + $0xc98] sm:$0xff]
    %v512 = vld [vmem:[#allocation5 + $0xca0] sm:$0xff]
    %v513 = vld [vmem:[#allocation5 + $0xca8] sm:$0xff]
    %v514 = vld [vmem:[#allocation5 + $0xcb0] sm:$0xff]
    %v515 = vld [vmem:[#allocation5 + $0xcb8] sm:$0xff]
    %v516 = vld [vmem:[#allocation5 + $0xcc0] sm:$0xff]
    %v517 = vld [vmem:[#allocation5 + $0xcc8] sm:$0xff]
    %v518 = vld [vmem:[#allocation5 + $0xcd0] sm:$0xff]
    %v519 = vld [vmem:[#allocation5 + $0xcd8] sm:$0xff]
    %v520 = vld [vmem:[#allocation5 + $0xce0] sm:$0xff]
    %v521 = vld [vmem:[#allocation5 + $0xce8] sm:$0xff]
    %v522 = vld [vmem:[#allocation5 + $0xcf0] sm:$0xff]
    %v523 = vld [vmem:[#allocation5 + $0xcf8] sm:$0xff]
    %v524 = vld [vmem:[#allocation5 + $0xd00] sm:$0xff]
    %v525 = vld [vmem:[#allocation5 + $0xd08] sm:$0xff]
    %v526 = vld [vmem:[#allocation5 + $0xd10] sm:$0xff]
    %v527 = vld [vmem:[#allocation5 + $0xd18] sm:$0xff]
    %v528 = vld [vmem:[#allocation5 + $0xd20] sm:$0xff]
    %v529 = vld [vmem:[#allocation5 + $0xd28] sm:$0xff]
    %v530 = vld [vmem:[#allocation5 + $0xd30] sm:$0xff]
    %v531 = vld [vmem:[#allocation5 + $0xd38] sm:$0xff]
    %v532 = vld [vmem:[#allocation5 + $0xd40] sm:$0xff]
    %v533 = vld [vmem:[#allocation5 + $0xd48] sm:$0xff]
    %v534 = vld [vmem:[#allocation5 + $0xd50] sm:$0xff]
    %v535 = vld [vmem:[#allocation5 + $0xd58] sm:$0xff]
    %v536 = vld [vmem:[#allocation5 + $0xd60] sm:$0xff]
    %v537 = vld [vmem:[#allocation5 + $0xd68] sm:$0xff]
    %v538 = vld [vmem:[#allocation5 + $0xd70] sm:$0xff]
    %v539 = vld [vmem:[#allocation5 + $0xd78] sm:$0xff]
    %v540 = vld [vmem:[#allocation5 + $0xd80] sm:$0xff]
    %v541 = vld [vmem:[#allocation5 + $0xd88] sm:$0xff]
    %v542 = vld [vmem:[#allocation5 + $0xd90] sm:$0xff]
    %v543 = vld [vmem:[#allocation5 + $0xd98] sm:$0xff]
    %v544 = vld [vmem:[#allocation5 + $0xda0] sm:$0xff]
    %v545 = vld [vmem:[#allocation5 + $0xda8] sm:$0xff]
    %v546 = vld [vmem:[#allocation5 + $0xdb0] sm:$0xff]
    %v547 = vld [vmem:[#allocation5 + $0xdb8] sm:$0xff]
    %v548 = vld [vmem:[#allocation5 + $0xdc0] sm:$0xff]
    %v549 = vld [vmem:[#allocation5 + $0xdc8] sm:$0xff]
    %v550 = vld [vmem:[#allocation5 + $0xdd0] sm:$0xff]
    %v551 = vld [vmem:[#allocation5 + $0xdd8] sm:$0xff]
    %v552 = vld [vmem:[#allocation5 + $0xde0] sm:$0xff]
    %v553 = vld [vmem:[#allocation5 + $0xde8] sm:$0xff]
    %v554 = vld [vmem:[#allocation5 + $0xdf0] sm:$0xff]
    %v555 = vld [vmem:[#allocation5 + $0xdf8] sm:$0xff]
    %v556 = vld [vmem:[#allocation5 + $0xe00] sm:$0xff]
    %v557 = vld [vmem:[#allocation5 + $0xe08] sm:$0xff]
    %v558 = vld [vmem:[#allocation5 + $0xe10] sm:$0xff]
    %v559 = vld [vmem:[#allocation5 + $0xe18] sm:$0xff]
    %v560 = vld [vmem:[#allocation5 + $0xe20] sm:$0xff]
    %v561 = vld [vmem:[#allocation5 + $0xe28] sm:$0xff]
    %v562 = vld [vmem:[#allocation5 + $0xe30] sm:$0xff]
    %v563 = vld [vmem:[#allocation5 + $0xe38] sm:$0xff]
    %v564 = vld [vmem:[#allocation5 + $0xe40] sm:$0xff]
    %v565 = vld [vmem:[#allocation5 + $0xe48] sm:$0xff]
    %v566 = vld [vmem:[#allocation5 + $0xe50] sm:$0xff]
    %v567 = vld [vmem:[#allocation5 + $0xe58] sm:$0xff]
    %v568 = vld [vmem:[#allocation5 + $0xe60] sm:$0xff]
    %v569 = vld [vmem:[#allocation5 + $0xe68] sm:$0xff]
    %v570 = vld [vmem:[#allocation5 + $0xe70] sm:$0xff]
    %v571 = vld [vmem:[#allocation5 + $0xe78] sm:$0xff]
    %v572 = vld [vmem:[#allocation5 + $0xe80] sm:$0xff]
    %v573 = vld [vmem:[#allocation5 + $0xe88] sm:$0xff]
    %v574 = vld [vmem:[#allocation5 + $0xe90] sm:$0xff]
    %v575 = vld [vmem:[#allocation5 + $0xe98] sm:$0xff]
    %v576 = vld [vmem:[#allocation5 + $0xea0] sm:$0xff]
    %v577 = vld [vmem:[#allocation5 + $0xea8] sm:$0xff]
    %v578 = vld [vmem:[#allocation5 + $0xeb0] sm:$0xff]
    %v579 = vld [vmem:[#allocation5 + $0xeb8] sm:$0xff]
    %v580 = vld [vmem:[#allocation5 + $0xec0] sm:$0xff]
    %v581 = vld [vmem:[#allocation5 + $0xec8] sm:$0xff]
    %v582 = vld [vmem:[#allocation5 + $0xed0] sm:$0xff]
    %v583 = vld [vmem:[#allocation5 + $0xed8] sm:$0xff]
    %v584 = vld [vmem:[#allocation5 + $0xee0] sm:$0xff]
    %v585 = vld [vmem:[#allocation5 + $0xee8] sm:$0xff]
    %v586 = vld [vmem:[#allocation5 + $0xef0] sm:$0xff]
    %v587 = vld [vmem:[#allocation5 + $0xef8] sm:$0xff]
    %v588 = vld [vmem:[#allocation5 + $0xf00] sm:$0xff]
    %v589 = vld [vmem:[#allocation5 + $0xf08] sm:$0xff]
    %v590 = vld [vmem:[#allocation5 + $0xf10] sm:$0xff]
    %v591 = vld [vmem:[#allocation5 + $0xf18] sm:$0xff]
    %v592 = vld [vmem:[#allocation5 + $0xf20] sm:$0xff]
    %v593 = vld [vmem:[#allocation5 + $0xf28] sm:$0xff]
    %v594 = vld [vmem:[#allocation5 + $0xf30] sm:$0xff]
    %v595 = vld [vmem:[#allocation5 + $0xf38] sm:$0xff]
    %v596 = vld [vmem:[#allocation5 + $0xf40] sm:$0xff]
    %v597 = vld [vmem:[#allocation5 + $0xf48] sm:$0xff]
    %v598 = vld [vmem:[#allocation5 + $0xf50] sm:$0xff]
    %v599 = vld [vmem:[#allocation5 + $0xf58] sm:$0xff]
    %v600 = vld [vmem:[#allocation5 + $0xf60] sm:$0xff]
    %v601 = vld [vmem:[#allocation5 + $0xf68] sm:$0xff]
    %v602 = vld [vmem:[#allocation5 + $0xf70] sm:$0xff]
    %v603 = vld [vmem:[#allocation5 + $0xf78] sm:$0xff]
    %v604 = vld [vmem:[#allocation5 + $0xf80] sm:$0xff]
    %v605 = vld [vmem:[#allocation5 + $0xf88] sm:$0xff]
    %v606 = vld [vmem:[#allocation5 + $0xf90] sm:$0xff]
    %v607 = vld [vmem:[#allocation5 + $0xf98] sm:$0xff]
    %v608 = vld [vmem:[#allocation5 + $0xfa0] sm:$0xff]
    %v609 = vld [vmem:[#allocation5 + $0xfa8] sm:$0xff]
    %v610 = vld [vmem:[#allocation5 + $0xfb0] sm:$0xff]
    %v611 = vld [vmem:[#allocation5 + $0xfb8] sm:$0xff]
    %v612 = vld [vmem:[#allocation5 + $0xfc0] sm:$0xff]
    %v613 = vld [vmem:[#allocation5 + $0xfc8] sm:$0xff]
    %v614 = vld [vmem:[#allocation5 + $0xfd0] sm:$0xff]
    %v615 = vld [vmem:[#allocation5 + $0xfd8] sm:$0xff]
    %v616 = vld [vmem:[#allocation5 + $0xfe0] sm:$0xff]
    %v617 = vld [vmem:[#allocation5 + $0xfe8] sm:$0xff]
    %v618 = vld [vmem:[#allocation5 + $0xff0] sm:$0xff]
    %v619 = vld [vmem:[#allocation5 + $0xff8] sm:$0xff]
    %v620 = vld [vmem:[#allocation5 + $0x1000] sm:$0xff]
    %v621 = vld [vmem:[#allocation5 + $0x1008] sm:$0xff]
    %v622 = vld [vmem:[#allocation5 + $0x1010] sm:$0xff]
    %v623 = vld [vmem:[#allocation5 + $0x1018] sm:$0xff]
    %v624 = vld [vmem:[#allocation5 + $0x1020] sm:$0xff]
    %v625 = vld [vmem:[#allocation5 + $0x1028] sm:$0xff]
    %v626 = vld [vmem:[#allocation5 + $0x1030] sm:$0xff]
    %v627 = vld [vmem:[#allocation5 + $0x1038] sm:$0xff]
    %v628 = vld [vmem:[#allocation5 + $0x1040] sm:$0xff]
    %v629 = vld [vmem:[#allocation5 + $0x1048] sm:$0xff]
    %v630 = vld [vmem:[#allocation5 + $0x1050] sm:$0xff]
    %v631 = vld [vmem:[#allocation5 + $0x1058] sm:$0xff]
    %v632 = vld [vmem:[#allocation5 + $0x1060] sm:$0xff]
    %v633 = vld [vmem:[#allocation5 + $0x1068] sm:$0xff]
    %v634 = vld [vmem:[#allocation5 + $0x1070] sm:$0xff]
    %v635 = vld [vmem:[#allocation5 + $0x1078] sm:$0xff]
    %v636 = vld [vmem:[#allocation5 + $0x1080] sm:$0xff]
    %v637 = vld [vmem:[#allocation5 + $0x1088] sm:$0xff]
    %v638 = vld [vmem:[#allocation5 + $0x1090] sm:$0xff]
    %v639 = vld [vmem:[#allocation5 + $0x1098] sm:$0xff]
    %v640 = vld [vmem:[#allocation5 + $0x10a0] sm:$0xff]
    %v641 = vld [vmem:[#allocation5 + $0x10a8] sm:$0xff]
    %v642 = vld [vmem:[#allocation5 + $0x10b0] sm:$0xff]
    %v643 = vld [vmem:[#allocation5 + $0x10b8] sm:$0xff]
    %v644 = vld [vmem:[#allocation5 + $0x10c0] sm:$0xff]
    %v645 = vld [vmem:[#allocation5 + $0x10c8] sm:$0xff]
    %v646 = vld [vmem:[#allocation5 + $0x10d0] sm:$0xff]
    %v647 = vld [vmem:[#allocation5 + $0x10d8] sm:$0xff]
    %v648 = vld [vmem:[#allocation5 + $0x10e0] sm:$0xff]
    %v649 = vld [vmem:[#allocation5 + $0x10e8] sm:$0xff]
    %v650 = vld [vmem:[#allocation5 + $0x10f0] sm:$0xff]
    %v651 = vld [vmem:[#allocation5 + $0x10f8] sm:$0xff]
    %v652 = vld [vmem:[#allocation5 + $0x1100] sm:$0xff]
    %v653 = vld [vmem:[#allocation5 + $0x1108] sm:$0xff]
    %v654 = vld [vmem:[#allocation5 + $0x1110] sm:$0xff]
    %v655 = vld [vmem:[#allocation5 + $0x1118] sm:$0xff]
    %v656 = vld [vmem:[#allocation5 + $0x1120] sm:$0xff]
    %v657 = vld [vmem:[#allocation5 + $0x1128] sm:$0xff]
    %v658 = vld [vmem:[#allocation5 + $0x1130] sm:$0xff]
    %v659 = vld [vmem:[#allocation5 + $0x1138] sm:$0xff]
    %v660 = vld [vmem:[#allocation5 + $0x1140] sm:$0xff]
    %v661 = vld [vmem:[#allocation5 + $0x1148] sm:$0xff]
    %v662 = vld [vmem:[#allocation5 + $0x1150] sm:$0xff]
    %v663 = vld [vmem:[#allocation5 + $0x1158] sm:$0xff]
    %v664 = vld [vmem:[#allocation5 + $0x1160] sm:$0xff]
    %v665 = vld [vmem:[#allocation5 + $0x1168] sm:$0xff]
    %v666 = vld [vmem:[#allocation5 + $0x1170] sm:$0xff]
    %v667 = vld [vmem:[#allocation5 + $0x1178] sm:$0xff]
    %v668 = vld [vmem:[#allocation5 + $0x1180] sm:$0xff]
    %v669 = vld [vmem:[#allocation5 + $0x1188] sm:$0xff]
    %v670 = vld [vmem:[#allocation5 + $0x1190] sm:$0xff]
    %v671 = vld [vmem:[#allocation5 + $0x1198] sm:$0xff]
    %v672 = vld [vmem:[#allocation5 + $0x11a0] sm:$0xff]
    %v673 = vld [vmem:[#allocation5 + $0x11a8] sm:$0xff]
    %v674 = vld [vmem:[#allocation5 + $0x11b0] sm:$0xff]
    %v675 = vld [vmem:[#allocation5 + $0x11b8] sm:$0xff]
    %v676 = vld [vmem:[#allocation5 + $0x11c0] sm:$0xff]
    %v677 = vld [vmem:[#allocation5 + $0x11c8] sm:$0xff]
    %v678 = vld [vmem:[#allocation5 + $0x11d0] sm:$0xff]
    %v679 = vld [vmem:[#allocation5 + $0x11d8] sm:$0xff]
    %v680 = vld [vmem:[#allocation5 + $0x11e0] sm:$0xff]
    %v681 = vld [vmem:[#allocation5 + $0x11e8] sm:$0xff]
    %v682 = vld [vmem:[#allocation5 + $0x11f0] sm:$0xff]
    %v683 = vld [vmem:[#allocation5 + $0x11f8] sm:$0xff]
    %v684 = vld [vmem:[#allocation5 + $0x1200] sm:$0xff]
    %v685 = vld [vmem:[#allocation5 + $0x1208] sm:$0xff]
    %v686 = vld [vmem:[#allocation5 + $0x1210] sm:$0xff]
    %v687 = vld [vmem:[#allocation5 + $0x1218] sm:$0xff]
    %v688 = vld [vmem:[#allocation5 + $0x1220] sm:$0xff]
    %v689 = vld [vmem:[#allocation5 + $0x1228] sm:$0xff]
    %v690 = vld [vmem:[#allocation5 + $0x1230] sm:$0xff]
    %v691 = vld [vmem:[#allocation5 + $0x1238] sm:$0xff]
    %v692 = vld [vmem:[#allocation5 + $0x1240] sm:$0xff]
    %v693 = vld [vmem:[#allocation5 + $0x1248] sm:$0xff]
    %v694 = vld [vmem:[#allocation5 + $0x1250] sm:$0xff]
    %v695 = vld [vmem:[#allocation5 + $0x1258] sm:$0xff]
    %v696 = vld [vmem:[#allocation5 + $0x1260] sm:$0xff]
    %v697 = vld [vmem:[#allocation5 + $0x1268] sm:$0xff]
    %v698 = vld [vmem:[#allocation5 + $0x1270] sm:$0xff]
    %v699 = vld [vmem:[#allocation5 + $0x1278] sm:$0xff]
    %v700 = vld [vmem:[#allocation5 + $0x1280] sm:$0xff]
    %v701 = vld [vmem:[#allocation5 + $0x1288] sm:$0xff]
    %v702 = vld [vmem:[#allocation5 + $0x1290] sm:$0xff]
    %v703 = vld [vmem:[#allocation5 + $0x1298] sm:$0xff]
    %v704 = vld [vmem:[#allocation5 + $0x12a0] sm:$0xff]
    %v705 = vld [vmem:[#allocation5 + $0x12a8] sm:$0xff]
    %v706 = vld [vmem:[#allocation5 + $0x12b0] sm:$0xff]
    %v707 = vld [vmem:[#allocation5 + $0x12b8] sm:$0xff]
    %v708 = vld [vmem:[#allocation5 + $0x12c0] sm:$0xff]
    %v709 = vld [vmem:[#allocation5 + $0x12c8] sm:$0xff]
    %v710 = vld [vmem:[#allocation5 + $0x12d0] sm:$0xff]
    %v711 = vld [vmem:[#allocation5 + $0x12d8] sm:$0xff]
    %v712 = vld [vmem:[#allocation5 + $0x12e0] sm:$0xff]
    %v713 = vld [vmem:[#allocation5 + $0x12e8] sm:$0xff]
    %v714 = vld [vmem:[#allocation5 + $0x12f0] sm:$0xff]
    %v715 = vld [vmem:[#allocation5 + $0x12f8] sm:$0xff]
    %v716 = vld [vmem:[#allocation5 + $0x1300] sm:$0xff]
    %v717 = vld [vmem:[#allocation5 + $0x1308] sm:$0xff]
    %v718 = vld [vmem:[#allocation5 + $0x1310] sm:$0xff]
    %v719 = vld [vmem:[#allocation5 + $0x1318] sm:$0xff]
    %v720 = vld [vmem:[#allocation5 + $0x1320] sm:$0xff]
    %v721 = vld [vmem:[#allocation5 + $0x1328] sm:$0xff]
    %v722 = vld [vmem:[#allocation5 + $0x1330] sm:$0xff]
    %v723 = vld [vmem:[#allocation5 + $0x1338] sm:$0xff]
    %v724 = vld [vmem:[#allocation5 + $0x1340] sm:$0xff]
    %v725 = vld [vmem:[#allocation5 + $0x1348] sm:$0xff]
    %v726 = vld [vmem:[#allocation5 + $0x1350] sm:$0xff]
    %v727 = vld [vmem:[#allocation5 + $0x1358] sm:$0xff]
    %v728 = vld [vmem:[#allocation5 + $0x1360] sm:$0xff]
    %v729 = vld [vmem:[#allocation5 + $0x1368] sm:$0xff]
    %v730 = vld [vmem:[#allocation5 + $0x1370] sm:$0xff]
    %v731 = vld [vmem:[#allocation5 + $0x1378] sm:$0xff]
    %v732 = vld [vmem:[#allocation5 + $0x1380] sm:$0xff]
    %v733 = vld [vmem:[#allocation5 + $0x1388] sm:$0xff]
    %v734 = vld [vmem:[#allocation5 + $0x1390] sm:$0xff]
    %v735 = vld [vmem:[#allocation5 + $0x1398] sm:$0xff]
    %v736 = vld [vmem:[#allocation5 + $0x13a0] sm:$0xff]
    %v737 = vld [vmem:[#allocation5 + $0x13a8] sm:$0xff]
    %v738 = vld [vmem:[#allocation5 + $0x13b0] sm:$0xff]
    %v739 = vld [vmem:[#allocation5 + $0x13b8] sm:$0xff]
    %v740 = vld [vmem:[#allocation5 + $0x13c0] sm:$0xff]
    %v741 = vld [vmem:[#allocation5 + $0x13c8] sm:$0xff]
    %v742 = vld [vmem:[#allocation5 + $0x13d0] sm:$0xff]
    %v743 = vld [vmem:[#allocation5 + $0x13d8] sm:$0xff]
    %v744 = vld [vmem:[#allocation5 + $0x13e0] sm:$0xff]
    %v745 = vld [vmem:[#allocation5 + $0x13e8] sm:$0xff]
    %v746 = vld [vmem:[#allocation5 + $0x13f0] sm:$0xff]
    %v747 = vld [vmem:[#allocation5 + $0x13f8] sm:$0xff]
    %v748 = vld [vmem:[#allocation5 + $0x1400] sm:$0xff]
    %v749 = vld [vmem:[#allocation5 + $0x1408] sm:$0xff]
    %v750 = vld [vmem:[#allocation5 + $0x1410] sm:$0xff]
    %v751 = vld [vmem:[#allocation5 + $0x1418] sm:$0xff]
    %v752 = vld [vmem:[#allocation5 + $0x1420] sm:$0xff]
    %v753 = vld [vmem:[#allocation5 + $0x1428] sm:$0xff]
    %v754 = vld [vmem:[#allocation5 + $0x1430] sm:$0xff]
    %v755 = vld [vmem:[#allocation5 + $0x1438] sm:$0xff]
    %v756 = vld [vmem:[#allocation5 + $0x1440] sm:$0xff]
    %v757 = vld [vmem:[#allocation5 + $0x1448] sm:$0xff]
    %v758 = vld [vmem:[#allocation5 + $0x1450] sm:$0xff]
    %v759 = vld [vmem:[#allocation5 + $0x1458] sm:$0xff]
    %v760 = vld [vmem:[#allocation5 + $0x1460] sm:$0xff]
    %v761 = vld [vmem:[#allocation5 + $0x1468] sm:$0xff]
    %v762 = vld [vmem:[#allocation5 + $0x1470] sm:$0xff]
    %v763 = vld [vmem:[#allocation5 + $0x1478] sm:$0xff]
    %v764 = vld [vmem:[#allocation5 + $0x1480] sm:$0xff]
    %v765 = vld [vmem:[#allocation5 + $0x1488] sm:$0xff]
    %v766 = vld [vmem:[#allocation5 + $0x1490] sm:$0xff]
    %v767 = vld [vmem:[#allocation5 + $0x1498] sm:$0xff]
    %v768 = vld [vmem:[#allocation5 + $0x14a0] sm:$0xff]
    %v769 = vld [vmem:[#allocation5 + $0x14a8] sm:$0xff]
    %v770 = vld [vmem:[#allocation5 + $0x14b0] sm:$0xff]
    %v771 = vld [vmem:[#allocation5 + $0x14b8] sm:$0xff]
    %v772 = vld [vmem:[#allocation5 + $0x14c0] sm:$0xff]
    %v773 = vld [vmem:[#allocation5 + $0x14c8] sm:$0xff]
    %v774 = vld [vmem:[#allocation5 + $0x14d0] sm:$0xff]
    %v775 = vld [vmem:[#allocation5 + $0x14d8] sm:$0xff]
    %v776 = vld [vmem:[#allocation5 + $0x14e0] sm:$0xff]
    %v777 = vld [vmem:[#allocation5 + $0x14e8] sm:$0xff]
    %v778 = vld [vmem:[#allocation5 + $0x14f0] sm:$0xff]
    %v779 = vld [vmem:[#allocation5 + $0x14f8] sm:$0xff]
    %v780 = vld [vmem:[#allocation5 + $0x1500] sm:$0xff]
    %v781 = vld [vmem:[#allocation5 + $0x1508] sm:$0xff]
    %v782 = vld [vmem:[#allocation5 + $0x1510] sm:$0xff]
    %v783 = vld [vmem:[#allocation5 + $0x1518] sm:$0xff]
    %v784 = vld [vmem:[#allocation5 + $0x1520] sm:$0xff]
    %v785 = vld [vmem:[#allocation5 + $0x1528] sm:$0xff]
    %v786 = vld [vmem:[#allocation5 + $0x1530] sm:$0xff]
    %v787 = vld [vmem:[#allocation5 + $0x1538] sm:$0xff]
    %v788 = vld [vmem:[#allocation5 + $0x1540] sm:$0xff]
    %v789 = vld [vmem:[#allocation5 + $0x1548] sm:$0xff]
    %v790 = vld [vmem:[#allocation5 + $0x1550] sm:$0xff]
    %v791 = vld [vmem:[#allocation5 + $0x1558] sm:$0xff]
    %v792 = vld [vmem:[#allocation5 + $0x1560] sm:$0xff]
    %v793 = vld [vmem:[#allocation5 + $0x1568] sm:$0xff]
    %v794 = vld [vmem:[#allocation5 + $0x1570] sm:$0xff]
    %v795 = vld [vmem:[#allocation5 + $0x1578] sm:$0xff]
    %v796 = vld [vmem:[#allocation5 + $0x1580] sm:$0xff]
    %v797 = vld [vmem:[#allocation5 + $0x1588] sm:$0xff]
    %v798 = vld [vmem:[#allocation5 + $0x1590] sm:$0xff]
    %v799 = vld [vmem:[#allocation5 + $0x1598] sm:$0xff]
    %v800 = vld [vmem:[#allocation5 + $0x15a0] sm:$0xff]
    %v801 = vld [vmem:[#allocation5 + $0x15a8] sm:$0xff]
    %v802 = vld [vmem:[#allocation5 + $0x15b0] sm:$0xff]
    %v803 = vld [vmem:[#allocation5 + $0x15b8] sm:$0xff]
    %v804 = vld [vmem:[#allocation5 + $0x15c0] sm:$0xff]
    %v805 = vld [vmem:[#allocation5 + $0x15c8] sm:$0xff]
    %v806 = vld [vmem:[#allocation5 + $0x15d0] sm:$0xff]
    %v807 = vld [vmem:[#allocation5 + $0x15d8] sm:$0xff]
    %v808 = vld [vmem:[#allocation5 + $0x15e0] sm:$0xff]
    %v809 = vld [vmem:[#allocation5 + $0x15e8] sm:$0xff]
    %v810 = vld [vmem:[#allocation5 + $0x15f0] sm:$0xff]
    %v811 = vld [vmem:[#allocation5 + $0x15f8] sm:$0xff]
    %v812 = vld [vmem:[#allocation5 + $0x1600] sm:$0xff]
    %v813 = vld [vmem:[#allocation5 + $0x1608] sm:$0xff]
    %v814 = vld [vmem:[#allocation5 + $0x1610] sm:$0xff]
    %v815 = vld [vmem:[#allocation5 + $0x1618] sm:$0xff]
    %v816 = vld [vmem:[#allocation5 + $0x1620] sm:$0xff]
    %v817 = vld [vmem:[#allocation5 + $0x1628] sm:$0xff]
    %v818 = vld [vmem:[#allocation5 + $0x1630] sm:$0xff]
    %v819 = vld [vmem:[#allocation5 + $0x1638] sm:$0xff]
    %v820 = vld [vmem:[#allocation5 + $0x1640] sm:$0xff]
    %v821 = vld [vmem:[#allocation5 + $0x1648] sm:$0xff]
    %v822 = vld [vmem:[#allocation5 + $0x1650] sm:$0xff]
    %v823 = vld [vmem:[#allocation5 + $0x1658] sm:$0xff]
    %v824 = vld [vmem:[#allocation5 + $0x1660] sm:$0xff]
    %v825 = vld [vmem:[#allocation5 + $0x1668] sm:$0xff]
    %v826 = vld [vmem:[#allocation5 + $0x1670] sm:$0xff]
    %v827 = vld [vmem:[#allocation5 + $0x1678] sm:$0xff]
    %v828 = vld [vmem:[#allocation5 + $0x1680] sm:$0xff]
    %v829 = vld [vmem:[#allocation5 + $0x1688] sm:$0xff]
    %v830 = vld [vmem:[#allocation5 + $0x1690] sm:$0xff]
    %v831 = vld [vmem:[#allocation5 + $0x1698] sm:$0xff]
    %v832 = vld [vmem:[#allocation5 + $0x16a0] sm:$0xff]
    %v833 = vld [vmem:[#allocation5 + $0x16a8] sm:$0xff]
    %v834 = vld [vmem:[#allocation5 + $0x16b0] sm:$0xff]
    %v835 = vld [vmem:[#allocation5 + $0x16b8] sm:$0xff]
    %v836 = vld [vmem:[#allocation5 + $0x16c0] sm:$0xff]
    %v837 = vld [vmem:[#allocation5 + $0x16c8] sm:$0xff]
    %v838 = vld [vmem:[#allocation5 + $0x16d0] sm:$0xff]
    %v839 = vld [vmem:[#allocation5 + $0x16d8] sm:$0xff]
    %v840 = vld [vmem:[#allocation5 + $0x16e0] sm:$0xff]
    %v841 = vld [vmem:[#allocation5 + $0x16e8] sm:$0xff]
    %v842 = vld [vmem:[#allocation5 + $0x16f0] sm:$0xff]
    %v843 = vld [vmem:[#allocation5 + $0x16f8] sm:$0xff]
    %v844 = vld [vmem:[#allocation5 + $0x1700] sm:$0xff]
    %v845 = vld [vmem:[#allocation5 + $0x1708] sm:$0xff]
    %v846 = vld [vmem:[#allocation5 + $0x1710] sm:$0xff]
    %v847 = vld [vmem:[#allocation5 + $0x1718] sm:$0xff]
    %v848 = vld [vmem:[#allocation5 + $0x1720] sm:$0xff]
    %v849 = vld [vmem:[#allocation5 + $0x1728] sm:$0xff]
    %v850 = vld [vmem:[#allocation5 + $0x1730] sm:$0xff]
    %v851 = vld [vmem:[#allocation5 + $0x1738] sm:$0xff]
    %v852 = vld [vmem:[#allocation5 + $0x1740] sm:$0xff]
    %v853 = vld [vmem:[#allocation5 + $0x1748] sm:$0xff]
    %v854 = vld [vmem:[#allocation5 + $0x1750] sm:$0xff]
    %v855 = vld [vmem:[#allocation5 + $0x1758] sm:$0xff]
    %v856 = vld [vmem:[#allocation5 + $0x1760] sm:$0xff]
    %v857 = vld [vmem:[#allocation5 + $0x1768] sm:$0xff]
    %v858 = vld [vmem:[#allocation5 + $0x1770] sm:$0xff]
    %v859 = vld [vmem:[#allocation5 + $0x1778] sm:$0xff]
    %v860 = vld [vmem:[#allocation5 + $0x1780] sm:$0xff]
    %v861 = vld [vmem:[#allocation5 + $0x1788] sm:$0xff]
    %v862 = vld [vmem:[#allocation5 + $0x1790] sm:$0xff]
    %v863 = vld [vmem:[#allocation5 + $0x1798] sm:$0xff]
    %v864 = vld [vmem:[#allocation5 + $0x17a0] sm:$0xff]
    %v865 = vld [vmem:[#allocation5 + $0x17a8] sm:$0xff]
    %v866 = vld [vmem:[#allocation5 + $0x17b0] sm:$0xff]
    %v867 = vld [vmem:[#allocation5 + $0x17b8] sm:$0xff]
    %v868 = vld [vmem:[#allocation5 + $0x17c0] sm:$0xff]
    %v869 = vld [vmem:[#allocation5 + $0x17c8] sm:$0xff]
    %v870 = vld [vmem:[#allocation5 + $0x17d0] sm:$0xff]
    %v871 = vld [vmem:[#allocation5 + $0x17d8] sm:$0xff]
    %v872 = vld [vmem:[#allocation5 + $0x17e0] sm:$0xff]
    %v873 = vld [vmem:[#allocation5 + $0x17e8] sm:$0xff]
    %v874 = vld [vmem:[#allocation5 + $0x17f0] sm:$0xff]
    %v875 = vld [vmem:[#allocation5 + $0x17f8] sm:$0xff]
    %v876 = vld [vmem:[#allocation5 + $0x1800] sm:$0xff]
    %v877 = vld [vmem:[#allocation5 + $0x1808] sm:$0xff]
    %v878 = vld [vmem:[#allocation5 + $0x1810] sm:$0xff]
    %v879 = vld [vmem:[#allocation5 + $0x1818] sm:$0xff]
    %v880 = vld [vmem:[#allocation5 + $0x1820] sm:$0xff]
    %v881 = vld [vmem:[#allocation5 + $0x1828] sm:$0xff]
    %v882 = vld [vmem:[#allocation5 + $0x1830] sm:$0xff]
    %v883 = vld [vmem:[#allocation5 + $0x1838] sm:$0xff]
    %v884 = vld [vmem:[#allocation5 + $0x1840] sm:$0xff]
    %v885 = vld [vmem:[#allocation5 + $0x1848] sm:$0xff]
    %v886 = vld [vmem:[#allocation5 + $0x1850] sm:$0xff]
    %v887 = vld [vmem:[#allocation5 + $0x1858] sm:$0xff]
    %v888 = vld [vmem:[#allocation5 + $0x1860] sm:$0xff]
    %v889 = vld [vmem:[#allocation5 + $0x1868] sm:$0xff]
    %v890 = vld [vmem:[#allocation5 + $0x1870] sm:$0xff]
    %v891 = vld [vmem:[#allocation5 + $0x1878] sm:$0xff]
    %vm892 = vcmask 130048
    %v894 = vsel %vm892, %v58, 0
    %v897 = vsel %vm892, %v65, 0
    %v900 = vsel %vm892, %v72, 0
    %v903 = vsel %vm892, %v79, 0
    %v906 = vsel %vm892, %v86, 0
    %v909 = vsel %vm892, %v93, 0
    %v912 = vsel %vm892, %v100, 0
    %v915 = vsel %vm892, %v107, 0
    %917 = vmatpush.msra.mxu0 %v228
    %918 = vmatpush.msra.mxu0 %v220
    %919 = vmatpush.msra.mxu0 %v212
    %920 = vmatpush.msra.mxu0 %v204
    %921 = vmatpush.msra.mxu0 %v196
    %922 = vmatpush.msra.mxu0 %v188
    %923 = vmatpush.msra.mxu0 %v180
    %924 = vmatpush.msra.mxu0 %v172
    %925 = vmatpush.msra.mxu0 %v164
    %926 = vmatpush.msra.mxu0 %v156
    %927 = vmatpush.msra.mxu0 %v148
    %928 = vmatpush.msra.mxu0 %v140
    %929 = vmatpush.msra.mxu0 %v132
    %930 = vmatpush.msra.mxu0 %v124
    %931 = vmatpush.msra.mxu0 %v116
    %932 = vmatpush.msra.mxu0 %v108
    %933 = vmatmul.f32.gmra.mxu0 %v52
    %v934 = vpop.f32.mrf.mxu0
    %v935 = vadd.f32 0.0, %v934
    %936 = vmatmul.f32.gmra.mxu0 %v59
    %v937 = vpop.f32.mrf.mxu0
    %v938 = vadd.f32 0.0, %v937
    %939 = vmatmul.f32.gmra.mxu0 %v66
    %v940 = vpop.f32.mrf.mxu0
    %v941 = vadd.f32 0.0, %v940
    %942 = vmatmul.f32.gmra.mxu0 %v73
    %v943 = vpop.f32.mrf.mxu0
    %v944 = vadd.f32 0.0, %v943
    %945 = vmatmul.f32.gmra.mxu0 %v80
    %v946 = vpop.f32.mrf.mxu0
    %v947 = vadd.f32 0.0, %v946
    %948 = vmatmul.f32.gmra.mxu0 %v87
    %v949 = vpop.f32.mrf.mxu0
    %v950 = vadd.f32 0.0, %v949
    %951 = vmatmul.f32.gmra.mxu0 %v94
    %v952 = vpop.f32.mrf.mxu0
    %v953 = vadd.f32 0.0, %v952
    %954 = vmatmul.f32.gmra.mxu0 %v101
    %v955 = vpop.f32.mrf.mxu0
    %v956 = vadd.f32 0.0, %v955
    %957 = vdwg.mxu0
    %958 = vmatpush.msra.mxu0 %v356
    %959 = vmatpush.msra.mxu0 %v348
    %960 = vmatpush.msra.mxu0 %v340
    %961 = vmatpush.msra.mxu0 %v332
    %962 = vmatpush.msra.mxu0 %v324
    %963 = vmatpush.msra.mxu0 %v316
    %964 = vmatpush.msra.mxu0 %v308
    %965 = vmatpush.msra.mxu0 %v300
    %966 = vmatpush.msra.mxu0 %v292
    %967 = vmatpush.msra.mxu0 %v284
    %968 = vmatpush.msra.mxu0 %v276
    %969 = vmatpush.msra.mxu0 %v268
    %970 = vmatpush.msra.mxu0 %v260
    %971 = vmatpush.msra.mxu0 %v252
    %972 = vmatpush.msra.mxu0 %v244
    %973 = vmatpush.msra.mxu0 %v236
    %974 = vmatmul.f32.gmra.mxu0 %v53
    %v975 = vpop.f32.mrf.mxu0
    %v976 = vadd.f32 %v935, %v975
    %977 = vmatmul.f32.gmra.mxu0 %v60
    %v978 = vpop.f32.mrf.mxu0
    %v979 = vadd.f32 %v938, %v978
    %980 = vmatmul.f32.gmra.mxu0 %v67
    %v981 = vpop.f32.mrf.mxu0
    %v982 = vadd.f32 %v941, %v981
    %983 = vmatmul.f32.gmra.mxu0 %v74
    %v984 = vpop.f32.mrf.mxu0
    %v985 = vadd.f32 %v944, %v984
    %986 = vmatmul.f32.gmra.mxu0 %v81
    %v987 = vpop.f32.mrf.mxu0
    %v988 = vadd.f32 %v947, %v987
    %989 = vmatmul.f32.gmra.mxu0 %v88
    %v990 = vpop.f32.mrf.mxu0
    %v991 = vadd.f32 %v950, %v990
    %992 = vmatmul.f32.gmra.mxu0 %v95
    %v993 = vpop.f32.mrf.mxu0
    %v994 = vadd.f32 %v953, %v993
    %995 = vmatmul.f32.gmra.mxu0 %v102
    %v996 = vpop.f32.mrf.mxu0
    %v997 = vadd.f32 %v956, %v996
    %998 = vdwg.mxu0
    %999 = vmatpush.msra.mxu0 %v484
    %1000 = vmatpush.msra.mxu0 %v476
    %1001 = vmatpush.msra.mxu0 %v468
    %1002 = vmatpush.msra.mxu0 %v460
    %1003 = vmatpush.msra.mxu0 %v452
    %1004 = vmatpush.msra.mxu0 %v444
    %1005 = vmatpush.msra.mxu0 %v436
    %1006 = vmatpush.msra.mxu0 %v428
    %1007 = vmatpush.msra.mxu0 %v420
    %1008 = vmatpush.msra.mxu0 %v412
    %1009 = vmatpush.msra.mxu0 %v404
    %1010 = vmatpush.msra.mxu0 %v396
    %1011 = vmatpush.msra.mxu0 %v388
    %1012 = vmatpush.msra.mxu0 %v380
    %1013 = vmatpush.msra.mxu0 %v372
    %1014 = vmatpush.msra.mxu0 %v364
    %1015 = vmatmul.f32.gmra.mxu0 %v54
    %v1016 = vpop.f32.mrf.mxu0
    %v1017 = vadd.f32 %v976, %v1016
    %1018 = vmatmul.f32.gmra.mxu0 %v61
    %v1019 = vpop.f32.mrf.mxu0
    %v1020 = vadd.f32 %v979, %v1019
    %1021 = vmatmul.f32.gmra.mxu0 %v68
    %v1022 = vpop.f32.mrf.mxu0
    %v1023 = vadd.f32 %v982, %v1022
    %1024 = vmatmul.f32.gmra.mxu0 %v75
    %v1025 = vpop.f32.mrf.mxu0
    %v1026 = vadd.f32 %v985, %v1025
    %1027 = vmatmul.f32.gmra.mxu0 %v82
    %v1028 = vpop.f32.mrf.mxu0
    %v1029 = vadd.f32 %v988, %v1028
    %1030 = vmatmul.f32.gmra.mxu0 %v89
    %v1031 = vpop.f32.mrf.mxu0
    %v1032 = vadd.f32 %v991, %v1031
    %1033 = vmatmul.f32.gmra.mxu0 %v96
    %v1034 = vpop.f32.mrf.mxu0
    %v1035 = vadd.f32 %v994, %v1034
    %1036 = vmatmul.f32.gmra.mxu0 %v103
    %v1037 = vpop.f32.mrf.mxu0
    %v1038 = vadd.f32 %v997, %v1037
    %1039 = vdwg.mxu0
    %1040 = vmatpush.msra.mxu0 %v612
    %1041 = vmatpush.msra.mxu0 %v604
    %1042 = vmatpush.msra.mxu0 %v596
    %1043 = vmatpush.msra.mxu0 %v588
    %1044 = vmatpush.msra.mxu0 %v580
    %1045 = vmatpush.msra.mxu0 %v572
    %1046 = vmatpush.msra.mxu0 %v564
    %1047 = vmatpush.msra.mxu0 %v556
    %1048 = vmatpush.msra.mxu0 %v548
    %1049 = vmatpush.msra.mxu0 %v540
    %1050 = vmatpush.msra.mxu0 %v532
    %1051 = vmatpush.msra.mxu0 %v524
    %1052 = vmatpush.msra.mxu0 %v516
    %1053 = vmatpush.msra.mxu0 %v508
    %1054 = vmatpush.msra.mxu0 %v500
    %1055 = vmatpush.msra.mxu0 %v492
    %1056 = vmatmul.f32.gmra.mxu0 %v55
    %v1057 = vpop.f32.mrf.mxu0
    %v1058 = vadd.f32 %v1017, %v1057
    %1059 = vmatmul.f32.gmra.mxu0 %v62
    %v1060 = vpop.f32.mrf.mxu0
    %v1061 = vadd.f32 %v1020, %v1060
    %1062 = vmatmul.f32.gmra.mxu0 %v69
    %v1063 = vpop.f32.mrf.mxu0
    %v1064 = vadd.f32 %v1023, %v1063
    %1065 = vmatmul.f32.gmra.mxu0 %v76
    %v1066 = vpop.f32.mrf.mxu0
    %v1067 = vadd.f32 %v1026, %v1066
    %1068 = vmatmul.f32.gmra.mxu0 %v83
    %v1069 = vpop.f32.mrf.mxu0
    %v1070 = vadd.f32 %v1029, %v1069
    %1071 = vmatmul.f32.gmra.mxu0 %v90
    %v1072 = vpop.f32.mrf.mxu0
    %v1073 = vadd.f32 %v1032, %v1072
    %1074 = vmatmul.f32.gmra.mxu0 %v97
    %v1075 = vpop.f32.mrf.mxu0
    %v1076 = vadd.f32 %v1035, %v1075
    %1077 = vmatmul.f32.gmra.mxu0 %v104
    %v1078 = vpop.f32.mrf.mxu0
    %v1079 = vadd.f32 %v1038, %v1078
    %1080 = vdwg.mxu0
    %1081 = vmatpush.msra.mxu0 %v740
    %1082 = vmatpush.msra.mxu0 %v732
    %1083 = vmatpush.msra.mxu0 %v724
    %1084 = vmatpush.msra.mxu0 %v716
    %1085 = vmatpush.msra.mxu0 %v708
    %1086 = vmatpush.msra.mxu0 %v700
    %1087 = vmatpush.msra.mxu0 %v692
    %1088 = vmatpush.msra.mxu0 %v684
    %1089 = vmatpush.msra.mxu0 %v676
    %1090 = vmatpush.msra.mxu0 %v668
    %1091 = vmatpush.msra.mxu0 %v660
    %1092 = vmatpush.msra.mxu0 %v652
    %1093 = vmatpush.msra.mxu0 %v644
    %1094 = vmatpush.msra.mxu0 %v636
    %1095 = vmatpush.msra.mxu0 %v628
    %1096 = vmatpush.msra.mxu0 %v620
    %1097 = vmatmul.f32.gmra.mxu0 %v56
    %v1098 = vpop.f32.mrf.mxu0
    %v1099 = vadd.f32 %v1058, %v1098
    %1100 = vmatmul.f32.gmra.mxu0 %v63
    %v1101 = vpop.f32.mrf.mxu0
    %v1102 = vadd.f32 %v1061, %v1101
    %1103 = vmatmul.f32.gmra.mxu0 %v70
    %v1104 = vpop.f32.mrf.mxu0
    %v1105 = vadd.f32 %v1064, %v1104
    %1106 = vmatmul.f32.gmra.mxu0 %v77
    %v1107 = vpop.f32.mrf.mxu0
    %v1108 = vadd.f32 %v1067, %v1107
    %1109 = vmatmul.f32.gmra.mxu0 %v84
    %v1110 = vpop.f32.mrf.mxu0
    %v1111 = vadd.f32 %v1070, %v1110
    %1112 = vmatmul.f32.gmra.mxu0 %v91
    %v1113 = vpop.f32.mrf.mxu0
    %v1114 = vadd.f32 %v1073, %v1113
    %1115 = vmatmul.f32.gmra.mxu0 %v98
    %v1116 = vpop.f32.mrf.mxu0
    %v1117 = vadd.f32 %v1076, %v1116
    %1118 = vmatmul.f32.gmra.mxu0 %v105
    %v1119 = vpop.f32.mrf.mxu0
    %v1120 = vadd.f32 %v1079, %v1119
    %1121 = vdwg.mxu0
    %1122 = vmatpush.msra.mxu0 %v868
    %1123 = vmatpush.msra.mxu0 %v860
    %1124 = vmatpush.msra.mxu0 %v852
    %1125 = vmatpush.msra.mxu0 %v844
    %1126 = vmatpush.msra.mxu0 %v836
    %1127 = vmatpush.msra.mxu0 %v828
    %1128 = vmatpush.msra.mxu0 %v820
    %1129 = vmatpush.msra.mxu0 %v812
    %1130 = vmatpush.msra.mxu0 %v804
    %1131 = vmatpush.msra.mxu0 %v796
    %1132 = vmatpush.msra.mxu0 %v788
    %1133 = vmatpush.msra.mxu0 %v780
    %1134 = vmatpush.msra.mxu0 %v772
    %1135 = vmatpush.msra.mxu0 %v764
    %1136 = vmatpush.msra.mxu0 %v756
    %1137 = vmatpush.msra.mxu0 %v748
    %1138 = vmatmul.f32.gmra.mxu0 %v57
    %v1139 = vpop.f32.mrf.mxu0
    %v1140 = vadd.f32 %v1099, %v1139
    %1141 = vmatmul.f32.gmra.mxu0 %v64
    %v1142 = vpop.f32.mrf.mxu0
    %v1143 = vadd.f32 %v1102, %v1142
    %1144 = vmatmul.f32.gmra.mxu0 %v71
    %v1145 = vpop.f32.mrf.mxu0
    %v1146 = vadd.f32 %v1105, %v1145
    %1147 = vmatmul.f32.gmra.mxu0 %v78
    %v1148 = vpop.f32.mrf.mxu0
    %v1149 = vadd.f32 %v1108, %v1148
    %1150 = vmatmul.f32.gmra.mxu0 %v85
    %v1151 = vpop.f32.mrf.mxu0
    %v1152 = vadd.f32 %v1111, %v1151
    %1153 = vmatmul.f32.gmra.mxu0 %v92
    %v1154 = vpop.f32.mrf.mxu0
    %v1155 = vadd.f32 %v1114, %v1154
    %1156 = vmatmul.f32.gmra.mxu0 %v99
    %v1157 = vpop.f32.mrf.mxu0
    %v1158 = vadd.f32 %v1117, %v1157
    %1159 = vmatmul.f32.gmra.mxu0 %v106
    %v1160 = vpop.f32.mrf.mxu0
    %v1161 = vadd.f32 %v1120, %v1160
    %1162 = vdwg.mxu0
    %1163 = vmatpush.msra.mxu0 0.0
    %1164 = vmatpush.msra.mxu0 0.0
    %1165 = vmatpush.msra.mxu0 0.0
    %1166 = vmatpush.msra.mxu0 0.0
    %1167 = vmatpush.msra.mxu0 0.0
    %1168 = vmatpush.msra.mxu0 0.0
    %1169 = vmatpush.msra.mxu0 0.0
    %1170 = vmatpush.msra.mxu0 0.0
    %1171 = vmatpush.msra.mxu0 0.0
    %1172 = vmatpush.msra.mxu0 0.0
    %1173 = vmatpush.msra.mxu0 0.0
    %1174 = vmatpush.msra.mxu0 0.0
    %1175 = vmatpush.msra.mxu0 0.0
    %1176 = vmatpush.msra.mxu0 0.0
    %1177 = vmatpush.msra.mxu0 %v884
    %1178 = vmatpush.msra.mxu0 %v876
    %1179 = vmatmul.f32.gmra.mxu0 %v894
    %v1180 = vpop.f32.mrf.mxu0
    %v1181 = vadd.f32 %v1140, %v1180
    %1182 = vmatmul.f32.gmra.mxu0 %v897
    %v1183 = vpop.f32.mrf.mxu0
    %v1184 = vadd.f32 %v1143, %v1183
    %1185 = vmatmul.f32.gmra.mxu0 %v900
    %v1186 = vpop.f32.mrf.mxu0
    %v1187 = vadd.f32 %v1146, %v1186
    %1188 = vmatmul.f32.gmra.mxu0 %v903
    %v1189 = vpop.f32.mrf.mxu0
    %v1190 = vadd.f32 %v1149, %v1189
    %1191 = vmatmul.f32.gmra.mxu0 %v906
    %v1192 = vpop.f32.mrf.mxu0
    %v1193 = vadd.f32 %v1152, %v1192
    %1194 = vmatmul.f32.gmra.mxu0 %v909
    %v1195 = vpop.f32.mrf.mxu0
    %v1196 = vadd.f32 %v1155, %v1195
    %1197 = vmatmul.f32.gmra.mxu0 %v912
    %v1198 = vpop.f32.mrf.mxu0
    %v1199 = vadd.f32 %v1158, %v1198
    %1200 = vmatmul.f32.gmra.mxu0 %v915
    %v1201 = vpop.f32.mrf.mxu0
    %v1202 = vadd.f32 %v1161, %v1201
    %1203 = vdwg.mxu0
    %1204 = vmatpush.msra.mxu0 %v229
    %1205 = vmatpush.msra.mxu0 %v221
    %1206 = vmatpush.msra.mxu0 %v213
    %1207 = vmatpush.msra.mxu0 %v205
    %1208 = vmatpush.msra.mxu0 %v197
    %1209 = vmatpush.msra.mxu0 %v189
    %1210 = vmatpush.msra.mxu0 %v181
    %1211 = vmatpush.msra.mxu0 %v173
    %1212 = vmatpush.msra.mxu0 %v165
    %1213 = vmatpush.msra.mxu0 %v157
    %1214 = vmatpush.msra.mxu0 %v149
    %1215 = vmatpush.msra.mxu0 %v141
    %1216 = vmatpush.msra.mxu0 %v133
    %1217 = vmatpush.msra.mxu0 %v125
    %1218 = vmatpush.msra.mxu0 %v117
    %1219 = vmatpush.msra.mxu0 %v109
    %1220 = vmatmul.f32.gmra.mxu0 %v52
    %v1221 = vpop.f32.mrf.mxu0
    %v1222 = vadd.f32 0.0, %v1221
    %1223 = vmatmul.f32.gmra.mxu0 %v59
    %v1224 = vpop.f32.mrf.mxu0
    %v1225 = vadd.f32 0.0, %v1224
    %1226 = vmatmul.f32.gmra.mxu0 %v66
    %v1227 = vpop.f32.mrf.mxu0
    %v1228 = vadd.f32 0.0, %v1227
    %1229 = vmatmul.f32.gmra.mxu0 %v73
    %v1230 = vpop.f32.mrf.mxu0
    %v1231 = vadd.f32 0.0, %v1230
    %1232 = vmatmul.f32.gmra.mxu0 %v80
    %v1233 = vpop.f32.mrf.mxu0
    %v1234 = vadd.f32 0.0, %v1233
    %1235 = vmatmul.f32.gmra.mxu0 %v87
    %v1236 = vpop.f32.mrf.mxu0
    %v1237 = vadd.f32 0.0, %v1236
    %1238 = vmatmul.f32.gmra.mxu0 %v94
    %v1239 = vpop.f32.mrf.mxu0
    %v1240 = vadd.f32 0.0, %v1239
    %1241 = vmatmul.f32.gmra.mxu0 %v101
    %v1242 = vpop.f32.mrf.mxu0
    %v1243 = vadd.f32 0.0, %v1242
    %1244 = vdwg.mxu0
    %1245 = vmatpush.msra.mxu0 %v357
    %1246 = vmatpush.msra.mxu0 %v349
    %1247 = vmatpush.msra.mxu0 %v341
    %1248 = vmatpush.msra.mxu0 %v333
    %1249 = vmatpush.msra.mxu0 %v325
    %1250 = vmatpush.msra.mxu0 %v317
    %1251 = vmatpush.msra.mxu0 %v309
    %1252 = vmatpush.msra.mxu0 %v301
    %1253 = vmatpush.msra.mxu0 %v293
    %1254 = vmatpush.msra.mxu0 %v285
    %1255 = vmatpush.msra.mxu0 %v277
    %1256 = vmatpush.msra.mxu0 %v269
    %1257 = vmatpush.msra.mxu0 %v261
    %1258 = vmatpush.msra.mxu0 %v253
    %1259 = vmatpush.msra.mxu0 %v245
    %1260 = vmatpush.msra.mxu0 %v237
    %1261 = vmatmul.f32.gmra.mxu0 %v53
    %v1262 = vpop.f32.mrf.mxu0
    %v1263 = vadd.f32 %v1222, %v1262
    %1264 = vmatmul.f32.gmra.mxu0 %v60
    %v1265 = vpop.f32.mrf.mxu0
    %v1266 = vadd.f32 %v1225, %v1265
    %1267 = vmatmul.f32.gmra.mxu0 %v67
    %v1268 = vpop.f32.mrf.mxu0
    %v1269 = vadd.f32 %v1228, %v1268
    %1270 = vmatmul.f32.gmra.mxu0 %v74
    %v1271 = vpop.f32.mrf.mxu0
    %v1272 = vadd.f32 %v1231, %v1271
    %1273 = vmatmul.f32.gmra.mxu0 %v81
    %v1274 = vpop.f32.mrf.mxu0
    %v1275 = vadd.f32 %v1234, %v1274
    %1276 = vmatmul.f32.gmra.mxu0 %v88
    %v1277 = vpop.f32.mrf.mxu0
    %v1278 = vadd.f32 %v1237, %v1277
    %1279 = vmatmul.f32.gmra.mxu0 %v95
    %v1280 = vpop.f32.mrf.mxu0
    %v1281 = vadd.f32 %v1240, %v1280
    %1282 = vmatmul.f32.gmra.mxu0 %v102
    %v1283 = vpop.f32.mrf.mxu0
    %v1284 = vadd.f32 %v1243, %v1283
    %1285 = vdwg.mxu0
    %1286 = vmatpush.msra.mxu0 %v485
    %1287 = vmatpush.msra.mxu0 %v477
    %1288 = vmatpush.msra.mxu0 %v469
    %1289 = vmatpush.msra.mxu0 %v461
    %1290 = vmatpush.msra.mxu0 %v453
    %1291 = vmatpush.msra.mxu0 %v445
    %1292 = vmatpush.msra.mxu0 %v437
    %1293 = vmatpush.msra.mxu0 %v429
    %1294 = vmatpush.msra.mxu0 %v421
    %1295 = vmatpush.msra.mxu0 %v413
    %1296 = vmatpush.msra.mxu0 %v405
    %1297 = vmatpush.msra.mxu0 %v397
    %1298 = vmatpush.msra.mxu0 %v389
    %1299 = vmatpush.msra.mxu0 %v381
    %1300 = vmatpush.msra.mxu0 %v373
    %1301 = vmatpush.msra.mxu0 %v365
    %1302 = vmatmul.f32.gmra.mxu0 %v54
    %v1303 = vpop.f32.mrf.mxu0
    %v1304 = vadd.f32 %v1263, %v1303
    %1305 = vmatmul.f32.gmra.mxu0 %v61
    %v1306 = vpop.f32.mrf.mxu0
    %v1307 = vadd.f32 %v1266, %v1306
    %1308 = vmatmul.f32.gmra.mxu0 %v68
    %v1309 = vpop.f32.mrf.mxu0
    %v1310 = vadd.f32 %v1269, %v1309
    %1311 = vmatmul.f32.gmra.mxu0 %v75
    %v1312 = vpop.f32.mrf.mxu0
    %v1313 = vadd.f32 %v1272, %v1312
    %1314 = vmatmul.f32.gmra.mxu0 %v82
    %v1315 = vpop.f32.mrf.mxu0
    %v1316 = vadd.f32 %v1275, %v1315
    %1317 = vmatmul.f32.gmra.mxu0 %v89
    %v1318 = vpop.f32.mrf.mxu0
    %v1319 = vadd.f32 %v1278, %v1318
    %1320 = vmatmul.f32.gmra.mxu0 %v96
    %v1321 = vpop.f32.mrf.mxu0
    %v1322 = vadd.f32 %v1281, %v1321
    %1323 = vmatmul.f32.gmra.mxu0 %v103
    %v1324 = vpop.f32.mrf.mxu0
    %v1325 = vadd.f32 %v1284, %v1324
    %1326 = vdwg.mxu0
    %1327 = vmatpush.msra.mxu0 %v613
    %1328 = vmatpush.msra.mxu0 %v605
    %1329 = vmatpush.msra.mxu0 %v597
    %1330 = vmatpush.msra.mxu0 %v589
    %1331 = vmatpush.msra.mxu0 %v581
    %1332 = vmatpush.msra.mxu0 %v573
    %1333 = vmatpush.msra.mxu0 %v565
    %1334 = vmatpush.msra.mxu0 %v557
    %1335 = vmatpush.msra.mxu0 %v549
    %1336 = vmatpush.msra.mxu0 %v541
    %1337 = vmatpush.msra.mxu0 %v533
    %1338 = vmatpush.msra.mxu0 %v525
    %1339 = vmatpush.msra.mxu0 %v517
    %1340 = vmatpush.msra.mxu0 %v509
    %1341 = vmatpush.msra.mxu0 %v501
    %1342 = vmatpush.msra.mxu0 %v493
    %1343 = vmatmul.f32.gmra.mxu0 %v55
    %v1344 = vpop.f32.mrf.mxu0
    %v1345 = vadd.f32 %v1304, %v1344
    %1346 = vmatmul.f32.gmra.mxu0 %v62
    %v1347 = vpop.f32.mrf.mxu0
    %v1348 = vadd.f32 %v1307, %v1347
    %1349 = vmatmul.f32.gmra.mxu0 %v69
    %v1350 = vpop.f32.mrf.mxu0
    %v1351 = vadd.f32 %v1310, %v1350
    %1352 = vmatmul.f32.gmra.mxu0 %v76
    %v1353 = vpop.f32.mrf.mxu0
    %v1354 = vadd.f32 %v1313, %v1353
    %1355 = vmatmul.f32.gmra.mxu0 %v83
    %v1356 = vpop.f32.mrf.mxu0
    %v1357 = vadd.f32 %v1316, %v1356
    %1358 = vmatmul.f32.gmra.mxu0 %v90
    %v1359 = vpop.f32.mrf.mxu0
    %v1360 = vadd.f32 %v1319, %v1359
    %1361 = vmatmul.f32.gmra.mxu0 %v97
    %v1362 = vpop.f32.mrf.mxu0
    %v1363 = vadd.f32 %v1322, %v1362
    %1364 = vmatmul.f32.gmra.mxu0 %v104
    %v1365 = vpop.f32.mrf.mxu0
    %v1366 = vadd.f32 %v1325, %v1365
    %1367 = vdwg.mxu0
    %1368 = vmatpush.msra.mxu0 %v741
    %1369 = vmatpush.msra.mxu0 %v733
    %1370 = vmatpush.msra.mxu0 %v725
    %1371 = vmatpush.msra.mxu0 %v717
    %1372 = vmatpush.msra.mxu0 %v709
    %1373 = vmatpush.msra.mxu0 %v701
    %1374 = vmatpush.msra.mxu0 %v693
    %1375 = vmatpush.msra.mxu0 %v685
    %1376 = vmatpush.msra.mxu0 %v677
    %1377 = vmatpush.msra.mxu0 %v669
    %1378 = vmatpush.msra.mxu0 %v661
    %1379 = vmatpush.msra.mxu0 %v653
    %1380 = vmatpush.msra.mxu0 %v645
    %1381 = vmatpush.msra.mxu0 %v637
    %1382 = vmatpush.msra.mxu0 %v629
    %1383 = vmatpush.msra.mxu0 %v621
    %1384 = vmatmul.f32.gmra.mxu0 %v56
    %v1385 = vpop.f32.mrf.mxu0
    %v1386 = vadd.f32 %v1345, %v1385
    %1387 = vmatmul.f32.gmra.mxu0 %v63
    %v1388 = vpop.f32.mrf.mxu0
    %v1389 = vadd.f32 %v1348, %v1388
    %1390 = vmatmul.f32.gmra.mxu0 %v70
    %v1391 = vpop.f32.mrf.mxu0
    %v1392 = vadd.f32 %v1351, %v1391
    %1393 = vmatmul.f32.gmra.mxu0 %v77
    %v1394 = vpop.f32.mrf.mxu0
    %v1395 = vadd.f32 %v1354, %v1394
    %1396 = vmatmul.f32.gmra.mxu0 %v84
    %v1397 = vpop.f32.mrf.mxu0
    %v1398 = vadd.f32 %v1357, %v1397
    %1399 = vmatmul.f32.gmra.mxu0 %v91
    %v1400 = vpop.f32.mrf.mxu0
    %v1401 = vadd.f32 %v1360, %v1400
    %1402 = vmatmul.f32.gmra.mxu0 %v98
    %v1403 = vpop.f32.mrf.mxu0
    %v1404 = vadd.f32 %v1363, %v1403
    %1405 = vmatmul.f32.gmra.mxu0 %v105
    %v1406 = vpop.f32.mrf.mxu0
    %v1407 = vadd.f32 %v1366, %v1406
    %1408 = vdwg.mxu0
    %1409 = vmatpush.msra.mxu0 %v869
    %1410 = vmatpush.msra.mxu0 %v861
    %1411 = vmatpush.msra.mxu0 %v853
    %1412 = vmatpush.msra.mxu0 %v845
    %1413 = vmatpush.msra.mxu0 %v837
    %1414 = vmatpush.msra.mxu0 %v829
    %1415 = vmatpush.msra.mxu0 %v821
    %1416 = vmatpush.msra.mxu0 %v813
    %1417 = vmatpush.msra.mxu0 %v805
    %1418 = vmatpush.msra.mxu0 %v797
    %1419 = vmatpush.msra.mxu0 %v789
    %1420 = vmatpush.msra.mxu0 %v781
    %1421 = vmatpush.msra.mxu0 %v773
    %1422 = vmatpush.msra.mxu0 %v765
    %1423 = vmatpush.msra.mxu0 %v757
    %1424 = vmatpush.msra.mxu0 %v749
    %1425 = vmatmul.f32.gmra.mxu0 %v57
    %v1426 = vpop.f32.mrf.mxu0
    %v1427 = vadd.f32 %v1386, %v1426
    %1428 = vmatmul.f32.gmra.mxu0 %v64
    %v1429 = vpop.f32.mrf.mxu0
    %v1430 = vadd.f32 %v1389, %v1429
    %1431 = vmatmul.f32.gmra.mxu0 %v71
    %v1432 = vpop.f32.mrf.mxu0
    %v1433 = vadd.f32 %v1392, %v1432
    %1434 = vmatmul.f32.gmra.mxu0 %v78
    %v1435 = vpop.f32.mrf.mxu0
    %v1436 = vadd.f32 %v1395, %v1435
    %1437 = vmatmul.f32.gmra.mxu0 %v85
    %v1438 = vpop.f32.mrf.mxu0
    %v1439 = vadd.f32 %v1398, %v1438
    %1440 = vmatmul.f32.gmra.mxu0 %v92
    %v1441 = vpop.f32.mrf.mxu0
    %v1442 = vadd.f32 %v1401, %v1441
    %1443 = vmatmul.f32.gmra.mxu0 %v99
    %v1444 = vpop.f32.mrf.mxu0
    %v1445 = vadd.f32 %v1404, %v1444
    %1446 = vmatmul.f32.gmra.mxu0 %v106
    %v1447 = vpop.f32.mrf.mxu0
    %v1448 = vadd.f32 %v1407, %v1447
    %1449 = vdwg.mxu0
    %1450 = vmatpush.msra.mxu0 0.0
    %1451 = vmatpush.msra.mxu0 0.0
    %1452 = vmatpush.msra.mxu0 0.0
    %1453 = vmatpush.msra.mxu0 0.0
    %1454 = vmatpush.msra.mxu0 0.0
    %1455 = vmatpush.msra.mxu0 0.0
    %1456 = vmatpush.msra.mxu0 0.0
    %1457 = vmatpush.msra.mxu0 0.0
    %1458 = vmatpush.msra.mxu0 0.0
    %1459 = vmatpush.msra.mxu0 0.0
    %1460 = vmatpush.msra.mxu0 0.0
    %1461 = vmatpush.msra.mxu0 0.0
    %1462 = vmatpush.msra.mxu0 0.0
    %1463 = vmatpush.msra.mxu0 0.0
    %1464 = vmatpush.msra.mxu0 %v885
    %1465 = vmatpush.msra.mxu0 %v877
    %1466 = vmatmul.f32.gmra.mxu0 %v894
    %v1467 = vpop.f32.mrf.mxu0
    %v1468 = vadd.f32 %v1427, %v1467
    %1469 = vmatmul.f32.gmra.mxu0 %v897
    %v1470 = vpop.f32.mrf.mxu0
    %v1471 = vadd.f32 %v1430, %v1470
    %1472 = vmatmul.f32.gmra.mxu0 %v900
    %v1473 = vpop.f32.mrf.mxu0
    %v1474 = vadd.f32 %v1433, %v1473
    %1475 = vmatmul.f32.gmra.mxu0 %v903
    %v1476 = vpop.f32.mrf.mxu0
    %v1477 = vadd.f32 %v1436, %v1476
    %1478 = vmatmul.f32.gmra.mxu0 %v906
    %v1479 = vpop.f32.mrf.mxu0
    %v1480 = vadd.f32 %v1439, %v1479
    %1481 = vmatmul.f32.gmra.mxu0 %v909
    %v1482 = vpop.f32.mrf.mxu0
    %v1483 = vadd.f32 %v1442, %v1482
    %1484 = vmatmul.f32.gmra.mxu0 %v912
    %v1485 = vpop.f32.mrf.mxu0
    %v1486 = vadd.f32 %v1445, %v1485
    %1487 = vmatmul.f32.gmra.mxu0 %v915
    %v1488 = vpop.f32.mrf.mxu0
    %v1489 = vadd.f32 %v1448, %v1488
    %1490 = vdwg.mxu0
    %1491 = vmatpush.msra.mxu0 %v230
    %1492 = vmatpush.msra.mxu0 %v222
    %1493 = vmatpush.msra.mxu0 %v214
    %1494 = vmatpush.msra.mxu0 %v206
    %1495 = vmatpush.msra.mxu0 %v198
    %1496 = vmatpush.msra.mxu0 %v190
    %1497 = vmatpush.msra.mxu0 %v182
    %1498 = vmatpush.msra.mxu0 %v174
    %1499 = vmatpush.msra.mxu0 %v166
    %1500 = vmatpush.msra.mxu0 %v158
    %1501 = vmatpush.msra.mxu0 %v150
    %1502 = vmatpush.msra.mxu0 %v142
    %1503 = vmatpush.msra.mxu0 %v134
    %1504 = vmatpush.msra.mxu0 %v126
    %1505 = vmatpush.msra.mxu0 %v118
    %1506 = vmatpush.msra.mxu0 %v110
    %1507 = vmatmul.f32.gmra.mxu0 %v52
    %v1508 = vpop.f32.mrf.mxu0
    %v1509 = vadd.f32 0.0, %v1508
    %1510 = vmatmul.f32.gmra.mxu0 %v59
    %v1511 = vpop.f32.mrf.mxu0
    %v1512 = vadd.f32 0.0, %v1511
    %1513 = vmatmul.f32.gmra.mxu0 %v66
    %v1514 = vpop.f32.mrf.mxu0
    %v1515 = vadd.f32 0.0, %v1514
    %1516 = vmatmul.f32.gmra.mxu0 %v73
    %v1517 = vpop.f32.mrf.mxu0
    %v1518 = vadd.f32 0.0, %v1517
    %1519 = vmatmul.f32.gmra.mxu0 %v80
    %v1520 = vpop.f32.mrf.mxu0
    %v1521 = vadd.f32 0.0, %v1520
    %1522 = vmatmul.f32.gmra.mxu0 %v87
    %v1523 = vpop.f32.mrf.mxu0
    %v1524 = vadd.f32 0.0, %v1523
    %1525 = vmatmul.f32.gmra.mxu0 %v94
    %v1526 = vpop.f32.mrf.mxu0
    %v1527 = vadd.f32 0.0, %v1526
    %1528 = vmatmul.f32.gmra.mxu0 %v101
    %v1529 = vpop.f32.mrf.mxu0
    %v1530 = vadd.f32 0.0, %v1529
    %1531 = vdwg.mxu0
    %1532 = vmatpush.msra.mxu0 %v358
    %1533 = vmatpush.msra.mxu0 %v350
    %1534 = vmatpush.msra.mxu0 %v342
    %1535 = vmatpush.msra.mxu0 %v334
    %1536 = vmatpush.msra.mxu0 %v326
    %1537 = vmatpush.msra.mxu0 %v318
    %1538 = vmatpush.msra.mxu0 %v310
    %1539 = vmatpush.msra.mxu0 %v302
    %1540 = vmatpush.msra.mxu0 %v294
    %1541 = vmatpush.msra.mxu0 %v286
    %1542 = vmatpush.msra.mxu0 %v278
    %1543 = vmatpush.msra.mxu0 %v270
    %1544 = vmatpush.msra.mxu0 %v262
    %1545 = vmatpush.msra.mxu0 %v254
    %1546 = vmatpush.msra.mxu0 %v246
    %1547 = vmatpush.msra.mxu0 %v238
    %1548 = vmatmul.f32.gmra.mxu0 %v53
    %v1549 = vpop.f32.mrf.mxu0
    %v1550 = vadd.f32 %v1509, %v1549
    %1551 = vmatmul.f32.gmra.mxu0 %v60
    %v1552 = vpop.f32.mrf.mxu0
    %v1553 = vadd.f32 %v1512, %v1552
    %1554 = vmatmul.f32.gmra.mxu0 %v67
    %v1555 = vpop.f32.mrf.mxu0
    %v1556 = vadd.f32 %v1515, %v1555
    %1557 = vmatmul.f32.gmra.mxu0 %v74
    %v1558 = vpop.f32.mrf.mxu0
    %v1559 = vadd.f32 %v1518, %v1558
    %1560 = vmatmul.f32.gmra.mxu0 %v81
    %v1561 = vpop.f32.mrf.mxu0
    %v1562 = vadd.f32 %v1521, %v1561
    %1563 = vmatmul.f32.gmra.mxu0 %v88
    %v1564 = vpop.f32.mrf.mxu0
    %v1565 = vadd.f32 %v1524, %v1564
    %1566 = vmatmul.f32.gmra.mxu0 %v95
    %v1567 = vpop.f32.mrf.mxu0
    %v1568 = vadd.f32 %v1527, %v1567
    %1569 = vmatmul.f32.gmra.mxu0 %v102
    %v1570 = vpop.f32.mrf.mxu0
    %v1571 = vadd.f32 %v1530, %v1570
    %1572 = vdwg.mxu0
    %1573 = vmatpush.msra.mxu0 %v486
    %1574 = vmatpush.msra.mxu0 %v478
    %1575 = vmatpush.msra.mxu0 %v470
    %1576 = vmatpush.msra.mxu0 %v462
    %1577 = vmatpush.msra.mxu0 %v454
    %1578 = vmatpush.msra.mxu0 %v446
    %1579 = vmatpush.msra.mxu0 %v438
    %1580 = vmatpush.msra.mxu0 %v430
    %1581 = vmatpush.msra.mxu0 %v422
    %1582 = vmatpush.msra.mxu0 %v414
    %1583 = vmatpush.msra.mxu0 %v406
    %1584 = vmatpush.msra.mxu0 %v398
    %1585 = vmatpush.msra.mxu0 %v390
    %1586 = vmatpush.msra.mxu0 %v382
    %1587 = vmatpush.msra.mxu0 %v374
    %1588 = vmatpush.msra.mxu0 %v366
    %1589 = vmatmul.f32.gmra.mxu0 %v54
    %v1590 = vpop.f32.mrf.mxu0
    %v1591 = vadd.f32 %v1550, %v1590
    %1592 = vmatmul.f32.gmra.mxu0 %v61
    %v1593 = vpop.f32.mrf.mxu0
    %v1594 = vadd.f32 %v1553, %v1593
    %1595 = vmatmul.f32.gmra.mxu0 %v68
    %v1596 = vpop.f32.mrf.mxu0
    %v1597 = vadd.f32 %v1556, %v1596
    %1598 = vmatmul.f32.gmra.mxu0 %v75
    %v1599 = vpop.f32.mrf.mxu0
    %v1600 = vadd.f32 %v1559, %v1599
    %1601 = vmatmul.f32.gmra.mxu0 %v82
    %v1602 = vpop.f32.mrf.mxu0
    %v1603 = vadd.f32 %v1562, %v1602
    %1604 = vmatmul.f32.gmra.mxu0 %v89
    %v1605 = vpop.f32.mrf.mxu0
    %v1606 = vadd.f32 %v1565, %v1605
    %1607 = vmatmul.f32.gmra.mxu0 %v96
    %v1608 = vpop.f32.mrf.mxu0
    %v1609 = vadd.f32 %v1568, %v1608
    %1610 = vmatmul.f32.gmra.mxu0 %v103
    %v1611 = vpop.f32.mrf.mxu0
    %v1612 = vadd.f32 %v1571, %v1611
    %1613 = vdwg.mxu0
    %1614 = vmatpush.msra.mxu0 %v614
    %1615 = vmatpush.msra.mxu0 %v606
    %1616 = vmatpush.msra.mxu0 %v598
    %1617 = vmatpush.msra.mxu0 %v590
    %1618 = vmatpush.msra.mxu0 %v582
    %1619 = vmatpush.msra.mxu0 %v574
    %1620 = vmatpush.msra.mxu0 %v566
    %1621 = vmatpush.msra.mxu0 %v558
    %1622 = vmatpush.msra.mxu0 %v550
    %1623 = vmatpush.msra.mxu0 %v542
    %1624 = vmatpush.msra.mxu0 %v534
    %1625 = vmatpush.msra.mxu0 %v526
    %1626 = vmatpush.msra.mxu0 %v518
    %1627 = vmatpush.msra.mxu0 %v510
    %1628 = vmatpush.msra.mxu0 %v502
    %1629 = vmatpush.msra.mxu0 %v494
    %1630 = vmatmul.f32.gmra.mxu0 %v55
    %v1631 = vpop.f32.mrf.mxu0
    %v1632 = vadd.f32 %v1591, %v1631
    %1633 = vmatmul.f32.gmra.mxu0 %v62
    %v1634 = vpop.f32.mrf.mxu0
    %v1635 = vadd.f32 %v1594, %v1634
    %1636 = vmatmul.f32.gmra.mxu0 %v69
    %v1637 = vpop.f32.mrf.mxu0
    %v1638 = vadd.f32 %v1597, %v1637
    %1639 = vmatmul.f32.gmra.mxu0 %v76
    %v1640 = vpop.f32.mrf.mxu0
    %v1641 = vadd.f32 %v1600, %v1640
    %1642 = vmatmul.f32.gmra.mxu0 %v83
    %v1643 = vpop.f32.mrf.mxu0
    %v1644 = vadd.f32 %v1603, %v1643
    %1645 = vmatmul.f32.gmra.mxu0 %v90
    %v1646 = vpop.f32.mrf.mxu0
    %v1647 = vadd.f32 %v1606, %v1646
    %1648 = vmatmul.f32.gmra.mxu0 %v97
    %v1649 = vpop.f32.mrf.mxu0
    %v1650 = vadd.f32 %v1609, %v1649
    %1651 = vmatmul.f32.gmra.mxu0 %v104
    %v1652 = vpop.f32.mrf.mxu0
    %v1653 = vadd.f32 %v1612, %v1652
    %1654 = vdwg.mxu0
    %1655 = vmatpush.msra.mxu0 %v742
    %1656 = vmatpush.msra.mxu0 %v734
    %1657 = vmatpush.msra.mxu0 %v726
    %1658 = vmatpush.msra.mxu0 %v718
    %1659 = vmatpush.msra.mxu0 %v710
    %1660 = vmatpush.msra.mxu0 %v702
    %1661 = vmatpush.msra.mxu0 %v694
    %1662 = vmatpush.msra.mxu0 %v686
    %1663 = vmatpush.msra.mxu0 %v678
    %1664 = vmatpush.msra.mxu0 %v670
    %1665 = vmatpush.msra.mxu0 %v662
    %1666 = vmatpush.msra.mxu0 %v654
    %1667 = vmatpush.msra.mxu0 %v646
    %1668 = vmatpush.msra.mxu0 %v638
    %1669 = vmatpush.msra.mxu0 %v630
    %1670 = vmatpush.msra.mxu0 %v622
    %1671 = vmatmul.f32.gmra.mxu0 %v56
    %v1672 = vpop.f32.mrf.mxu0
    %v1673 = vadd.f32 %v1632, %v1672
    %1674 = vmatmul.f32.gmra.mxu0 %v63
    %v1675 = vpop.f32.mrf.mxu0
    %v1676 = vadd.f32 %v1635, %v1675
    %1677 = vmatmul.f32.gmra.mxu0 %v70
    %v1678 = vpop.f32.mrf.mxu0
    %v1679 = vadd.f32 %v1638, %v1678
    %1680 = vmatmul.f32.gmra.mxu0 %v77
    %v1681 = vpop.f32.mrf.mxu0
    %v1682 = vadd.f32 %v1641, %v1681
    %1683 = vmatmul.f32.gmra.mxu0 %v84
    %v1684 = vpop.f32.mrf.mxu0
    %v1685 = vadd.f32 %v1644, %v1684
    %1686 = vmatmul.f32.gmra.mxu0 %v91
    %v1687 = vpop.f32.mrf.mxu0
    %v1688 = vadd.f32 %v1647, %v1687
    %1689 = vmatmul.f32.gmra.mxu0 %v98
    %v1690 = vpop.f32.mrf.mxu0
    %v1691 = vadd.f32 %v1650, %v1690
    %1692 = vmatmul.f32.gmra.mxu0 %v105
    %v1693 = vpop.f32.mrf.mxu0
    %v1694 = vadd.f32 %v1653, %v1693
    %1695 = vdwg.mxu0
    %1696 = vmatpush.msra.mxu0 %v870
    %1697 = vmatpush.msra.mxu0 %v862
    %1698 = vmatpush.msra.mxu0 %v854
    %1699 = vmatpush.msra.mxu0 %v846
    %1700 = vmatpush.msra.mxu0 %v838
    %1701 = vmatpush.msra.mxu0 %v830
    %1702 = vmatpush.msra.mxu0 %v822
    %1703 = vmatpush.msra.mxu0 %v814
    %1704 = vmatpush.msra.mxu0 %v806
    %1705 = vmatpush.msra.mxu0 %v798
    %1706 = vmatpush.msra.mxu0 %v790
    %1707 = vmatpush.msra.mxu0 %v782
    %1708 = vmatpush.msra.mxu0 %v774
    %1709 = vmatpush.msra.mxu0 %v766
    %1710 = vmatpush.msra.mxu0 %v758
    %1711 = vmatpush.msra.mxu0 %v750
    %1712 = vmatmul.f32.gmra.mxu0 %v57
    %v1713 = vpop.f32.mrf.mxu0
    %v1714 = vadd.f32 %v1673, %v1713
    %1715 = vmatmul.f32.gmra.mxu0 %v64
    %v1716 = vpop.f32.mrf.mxu0
    %v1717 = vadd.f32 %v1676, %v1716
    %1718 = vmatmul.f32.gmra.mxu0 %v71
    %v1719 = vpop.f32.mrf.mxu0
    %v1720 = vadd.f32 %v1679, %v1719
    %1721 = vmatmul.f32.gmra.mxu0 %v78
    %v1722 = vpop.f32.mrf.mxu0
    %v1723 = vadd.f32 %v1682, %v1722
    %1724 = vmatmul.f32.gmra.mxu0 %v85
    %v1725 = vpop.f32.mrf.mxu0
    %v1726 = vadd.f32 %v1685, %v1725
    %1727 = vmatmul.f32.gmra.mxu0 %v92
    %v1728 = vpop.f32.mrf.mxu0
    %v1729 = vadd.f32 %v1688, %v1728
    %1730 = vmatmul.f32.gmra.mxu0 %v99
    %v1731 = vpop.f32.mrf.mxu0
    %v1732 = vadd.f32 %v1691, %v1731
    %1733 = vmatmul.f32.gmra.mxu0 %v106
    %v1734 = vpop.f32.mrf.mxu0
    %v1735 = vadd.f32 %v1694, %v1734
    %1736 = vdwg.mxu0
    %1737 = vmatpush.msra.mxu0 0.0
    %1738 = vmatpush.msra.mxu0 0.0
    %1739 = vmatpush.msra.mxu0 0.0
    %1740 = vmatpush.msra.mxu0 0.0
    %1741 = vmatpush.msra.mxu0 0.0
    %1742 = vmatpush.msra.mxu0 0.0
    %1743 = vmatpush.msra.mxu0 0.0
    %1744 = vmatpush.msra.mxu0 0.0
    %1745 = vmatpush.msra.mxu0 0.0
    %1746 = vmatpush.msra.mxu0 0.0
    %1747 = vmatpush.msra.mxu0 0.0
    %1748 = vmatpush.msra.mxu0 0.0
    %1749 = vmatpush.msra.mxu0 0.0
    %1750 = vmatpush.msra.mxu0 0.0
    %1751 = vmatpush.msra.mxu0 %v886
    %1752 = vmatpush.msra.mxu0 %v878
    %1753 = vmatmul.f32.gmra.mxu0 %v894
    %v1754 = vpop.f32.mrf.mxu0
    %v1755 = vadd.f32 %v1714, %v1754
    %1756 = vmatmul.f32.gmra.mxu0 %v897
    %v1757 = vpop.f32.mrf.mxu0
    %v1758 = vadd.f32 %v1717, %v1757
    %1759 = vmatmul.f32.gmra.mxu0 %v900
    %v1760 = vpop.f32.mrf.mxu0
    %v1761 = vadd.f32 %v1720, %v1760
    %1762 = vmatmul.f32.gmra.mxu0 %v903
    %v1763 = vpop.f32.mrf.mxu0
    %v1764 = vadd.f32 %v1723, %v1763
    %1765 = vmatmul.f32.gmra.mxu0 %v906
    %v1766 = vpop.f32.mrf.mxu0
    %v1767 = vadd.f32 %v1726, %v1766
    %1768 = vmatmul.f32.gmra.mxu0 %v909
    %v1769 = vpop.f32.mrf.mxu0
    %v1770 = vadd.f32 %v1729, %v1769
    %1771 = vmatmul.f32.gmra.mxu0 %v912
    %v1772 = vpop.f32.mrf.mxu0
    %v1773 = vadd.f32 %v1732, %v1772
    %1774 = vmatmul.f32.gmra.mxu0 %v915
    %v1775 = vpop.f32.mrf.mxu0
    %v1776 = vadd.f32 %v1735, %v1775
    %1777 = vdwg.mxu0
    %1778 = vmatpush.msra.mxu0 %v231
    %1779 = vmatpush.msra.mxu0 %v223
    %1780 = vmatpush.msra.mxu0 %v215
    %1781 = vmatpush.msra.mxu0 %v207
    %1782 = vmatpush.msra.mxu0 %v199
    %1783 = vmatpush.msra.mxu0 %v191
    %1784 = vmatpush.msra.mxu0 %v183
    %1785 = vmatpush.msra.mxu0 %v175
    %1786 = vmatpush.msra.mxu0 %v167
    %1787 = vmatpush.msra.mxu0 %v159
    %1788 = vmatpush.msra.mxu0 %v151
    %1789 = vmatpush.msra.mxu0 %v143
    %1790 = vmatpush.msra.mxu0 %v135
    %1791 = vmatpush.msra.mxu0 %v127
    %1792 = vmatpush.msra.mxu0 %v119
    %1793 = vmatpush.msra.mxu0 %v111
    %1794 = vmatmul.f32.gmra.mxu0 %v52
    %v1795 = vpop.f32.mrf.mxu0
    %v1796 = vadd.f32 0.0, %v1795
    %1797 = vmatmul.f32.gmra.mxu0 %v59
    %v1798 = vpop.f32.mrf.mxu0
    %v1799 = vadd.f32 0.0, %v1798
    %1800 = vmatmul.f32.gmra.mxu0 %v66
    %v1801 = vpop.f32.mrf.mxu0
    %v1802 = vadd.f32 0.0, %v1801
    %1803 = vmatmul.f32.gmra.mxu0 %v73
    %v1804 = vpop.f32.mrf.mxu0
    %v1805 = vadd.f32 0.0, %v1804
    %1806 = vmatmul.f32.gmra.mxu0 %v80
    %v1807 = vpop.f32.mrf.mxu0
    %v1808 = vadd.f32 0.0, %v1807
    %1809 = vmatmul.f32.gmra.mxu0 %v87
    %v1810 = vpop.f32.mrf.mxu0
    %v1811 = vadd.f32 0.0, %v1810
    %1812 = vmatmul.f32.gmra.mxu0 %v94
    %v1813 = vpop.f32.mrf.mxu0
    %v1814 = vadd.f32 0.0, %v1813
    %1815 = vmatmul.f32.gmra.mxu0 %v101
    %v1816 = vpop.f32.mrf.mxu0
    %v1817 = vadd.f32 0.0, %v1816
    %1818 = vdwg.mxu0
    %1819 = vmatpush.msra.mxu0 %v359
    %1820 = vmatpush.msra.mxu0 %v351
    %1821 = vmatpush.msra.mxu0 %v343
    %1822 = vmatpush.msra.mxu0 %v335
    %1823 = vmatpush.msra.mxu0 %v327
    %1824 = vmatpush.msra.mxu0 %v319
    %1825 = vmatpush.msra.mxu0 %v311
    %1826 = vmatpush.msra.mxu0 %v303
    %1827 = vmatpush.msra.mxu0 %v295
    %1828 = vmatpush.msra.mxu0 %v287
    %1829 = vmatpush.msra.mxu0 %v279
    %1830 = vmatpush.msra.mxu0 %v271
    %1831 = vmatpush.msra.mxu0 %v263
    %1832 = vmatpush.msra.mxu0 %v255
    %1833 = vmatpush.msra.mxu0 %v247
    %1834 = vmatpush.msra.mxu0 %v239
    %1835 = vmatmul.f32.gmra.mxu0 %v53
    %v1836 = vpop.f32.mrf.mxu0
    %v1837 = vadd.f32 %v1796, %v1836
    %1838 = vmatmul.f32.gmra.mxu0 %v60
    %v1839 = vpop.f32.mrf.mxu0
    %v1840 = vadd.f32 %v1799, %v1839
    %1841 = vmatmul.f32.gmra.mxu0 %v67
    %v1842 = vpop.f32.mrf.mxu0
    %v1843 = vadd.f32 %v1802, %v1842
    %1844 = vmatmul.f32.gmra.mxu0 %v74
    %v1845 = vpop.f32.mrf.mxu0
    %v1846 = vadd.f32 %v1805, %v1845
    %1847 = vmatmul.f32.gmra.mxu0 %v81
    %v1848 = vpop.f32.mrf.mxu0
    %v1849 = vadd.f32 %v1808, %v1848
    %1850 = vmatmul.f32.gmra.mxu0 %v88
    %v1851 = vpop.f32.mrf.mxu0
    %v1852 = vadd.f32 %v1811, %v1851
    %1853 = vmatmul.f32.gmra.mxu0 %v95
    %v1854 = vpop.f32.mrf.mxu0
    %v1855 = vadd.f32 %v1814, %v1854
    %1856 = vmatmul.f32.gmra.mxu0 %v102
    %v1857 = vpop.f32.mrf.mxu0
    %v1858 = vadd.f32 %v1817, %v1857
    %1859 = vdwg.mxu0
    %1860 = vmatpush.msra.mxu0 %v487
    %1861 = vmatpush.msra.mxu0 %v479
    %1862 = vmatpush.msra.mxu0 %v471
    %1863 = vmatpush.msra.mxu0 %v463
    %1864 = vmatpush.msra.mxu0 %v455
    %1865 = vmatpush.msra.mxu0 %v447
    %1866 = vmatpush.msra.mxu0 %v439
    %1867 = vmatpush.msra.mxu0 %v431
    %1868 = vmatpush.msra.mxu0 %v423
    %1869 = vmatpush.msra.mxu0 %v415
    %1870 = vmatpush.msra.mxu0 %v407
    %1871 = vmatpush.msra.mxu0 %v399
    %1872 = vmatpush.msra.mxu0 %v391
    %1873 = vmatpush.msra.mxu0 %v383
    %1874 = vmatpush.msra.mxu0 %v375
    %1875 = vmatpush.msra.mxu0 %v367
    %1876 = vmatmul.f32.gmra.mxu0 %v54
    %v1877 = vpop.f32.mrf.mxu0
    %v1878 = vadd.f32 %v1837, %v1877
    %1879 = vmatmul.f32.gmra.mxu0 %v61
    %v1880 = vpop.f32.mrf.mxu0
    %v1881 = vadd.f32 %v1840, %v1880
    %1882 = vmatmul.f32.gmra.mxu0 %v68
    %v1883 = vpop.f32.mrf.mxu0
    %v1884 = vadd.f32 %v1843, %v1883
    %1885 = vmatmul.f32.gmra.mxu0 %v75
    %v1886 = vpop.f32.mrf.mxu0
    %v1887 = vadd.f32 %v1846, %v1886
    %1888 = vmatmul.f32.gmra.mxu0 %v82
    %v1889 = vpop.f32.mrf.mxu0
    %v1890 = vadd.f32 %v1849, %v1889
    %1891 = vmatmul.f32.gmra.mxu0 %v89
    %v1892 = vpop.f32.mrf.mxu0
    %v1893 = vadd.f32 %v1852, %v1892
    %1894 = vmatmul.f32.gmra.mxu0 %v96
    %v1895 = vpop.f32.mrf.mxu0
    %v1896 = vadd.f32 %v1855, %v1895
    %1897 = vmatmul.f32.gmra.mxu0 %v103
    %v1898 = vpop.f32.mrf.mxu0
    %v1899 = vadd.f32 %v1858, %v1898
    %1900 = vdwg.mxu0
    %1901 = vmatpush.msra.mxu0 %v615
    %1902 = vmatpush.msra.mxu0 %v607
    %1903 = vmatpush.msra.mxu0 %v599
    %1904 = vmatpush.msra.mxu0 %v591
    %1905 = vmatpush.msra.mxu0 %v583
    %1906 = vmatpush.msra.mxu0 %v575
    %1907 = vmatpush.msra.mxu0 %v567
    %1908 = vmatpush.msra.mxu0 %v559
    %1909 = vmatpush.msra.mxu0 %v551
    %1910 = vmatpush.msra.mxu0 %v543
    %1911 = vmatpush.msra.mxu0 %v535
    %1912 = vmatpush.msra.mxu0 %v527
    %1913 = vmatpush.msra.mxu0 %v519
    %1914 = vmatpush.msra.mxu0 %v511
    %1915 = vmatpush.msra.mxu0 %v503
    %1916 = vmatpush.msra.mxu0 %v495
    %1917 = vmatmul.f32.gmra.mxu0 %v55
    %v1918 = vpop.f32.mrf.mxu0
    %v1919 = vadd.f32 %v1878, %v1918
    %1920 = vmatmul.f32.gmra.mxu0 %v62
    %v1921 = vpop.f32.mrf.mxu0
    %v1922 = vadd.f32 %v1881, %v1921
    %1923 = vmatmul.f32.gmra.mxu0 %v69
    %v1924 = vpop.f32.mrf.mxu0
    %v1925 = vadd.f32 %v1884, %v1924
    %1926 = vmatmul.f32.gmra.mxu0 %v76
    %v1927 = vpop.f32.mrf.mxu0
    %v1928 = vadd.f32 %v1887, %v1927
    %1929 = vmatmul.f32.gmra.mxu0 %v83
    %v1930 = vpop.f32.mrf.mxu0
    %v1931 = vadd.f32 %v1890, %v1930
    %1932 = vmatmul.f32.gmra.mxu0 %v90
    %v1933 = vpop.f32.mrf.mxu0
    %v1934 = vadd.f32 %v1893, %v1933
    %1935 = vmatmul.f32.gmra.mxu0 %v97
    %v1936 = vpop.f32.mrf.mxu0
    %v1937 = vadd.f32 %v1896, %v1936
    %1938 = vmatmul.f32.gmra.mxu0 %v104
    %v1939 = vpop.f32.mrf.mxu0
    %v1940 = vadd.f32 %v1899, %v1939
    %1941 = vdwg.mxu0
    %1942 = vmatpush.msra.mxu0 %v743
    %1943 = vmatpush.msra.mxu0 %v735
    %1944 = vmatpush.msra.mxu0 %v727
    %1945 = vmatpush.msra.mxu0 %v719
    %1946 = vmatpush.msra.mxu0 %v711
    %1947 = vmatpush.msra.mxu0 %v703
    %1948 = vmatpush.msra.mxu0 %v695
    %1949 = vmatpush.msra.mxu0 %v687
    %1950 = vmatpush.msra.mxu0 %v679
    %1951 = vmatpush.msra.mxu0 %v671
    %1952 = vmatpush.msra.mxu0 %v663
    %1953 = vmatpush.msra.mxu0 %v655
    %1954 = vmatpush.msra.mxu0 %v647
    %1955 = vmatpush.msra.mxu0 %v639
    %1956 = vmatpush.msra.mxu0 %v631
    %1957 = vmatpush.msra.mxu0 %v623
    %1958 = vmatmul.f32.gmra.mxu0 %v56
    %v1959 = vpop.f32.mrf.mxu0
    %v1960 = vadd.f32 %v1919, %v1959
    %1961 = vmatmul.f32.gmra.mxu0 %v63
    %v1962 = vpop.f32.mrf.mxu0
    %v1963 = vadd.f32 %v1922, %v1962
    %1964 = vmatmul.f32.gmra.mxu0 %v70
    %v1965 = vpop.f32.mrf.mxu0
    %v1966 = vadd.f32 %v1925, %v1965
    %1967 = vmatmul.f32.gmra.mxu0 %v77
    %v1968 = vpop.f32.mrf.mxu0
    %v1969 = vadd.f32 %v1928, %v1968
    %1970 = vmatmul.f32.gmra.mxu0 %v84
    %v1971 = vpop.f32.mrf.mxu0
    %v1972 = vadd.f32 %v1931, %v1971
    %1973 = vmatmul.f32.gmra.mxu0 %v91
    %v1974 = vpop.f32.mrf.mxu0
    %v1975 = vadd.f32 %v1934, %v1974
    %1976 = vmatmul.f32.gmra.mxu0 %v98
    %v1977 = vpop.f32.mrf.mxu0
    %v1978 = vadd.f32 %v1937, %v1977
    %1979 = vmatmul.f32.gmra.mxu0 %v105
    %v1980 = vpop.f32.mrf.mxu0
    %v1981 = vadd.f32 %v1940, %v1980
    %1982 = vdwg.mxu0
    %1983 = vmatpush.msra.mxu0 %v871
    %1984 = vmatpush.msra.mxu0 %v863
    %1985 = vmatpush.msra.mxu0 %v855
    %1986 = vmatpush.msra.mxu0 %v847
    %1987 = vmatpush.msra.mxu0 %v839
    %1988 = vmatpush.msra.mxu0 %v831
    %1989 = vmatpush.msra.mxu0 %v823
    %1990 = vmatpush.msra.mxu0 %v815
    %1991 = vmatpush.msra.mxu0 %v807
    %1992 = vmatpush.msra.mxu0 %v799
    %1993 = vmatpush.msra.mxu0 %v791
    %1994 = vmatpush.msra.mxu0 %v783
    %1995 = vmatpush.msra.mxu0 %v775
    %1996 = vmatpush.msra.mxu0 %v767
    %1997 = vmatpush.msra.mxu0 %v759
    %1998 = vmatpush.msra.mxu0 %v751
    %1999 = vmatmul.f32.gmra.mxu0 %v57
    %v2000 = vpop.f32.mrf.mxu0
    %v2001 = vadd.f32 %v1960, %v2000
    %2002 = vmatmul.f32.gmra.mxu0 %v64
    %v2003 = vpop.f32.mrf.mxu0
    %v2004 = vadd.f32 %v1963, %v2003
    %2005 = vmatmul.f32.gmra.mxu0 %v71
    %v2006 = vpop.f32.mrf.mxu0
    %v2007 = vadd.f32 %v1966, %v2006
    %2008 = vmatmul.f32.gmra.mxu0 %v78
    %v2009 = vpop.f32.mrf.mxu0
    %v2010 = vadd.f32 %v1969, %v2009
    %2011 = vmatmul.f32.gmra.mxu0 %v85
    %v2012 = vpop.f32.mrf.mxu0
    %v2013 = vadd.f32 %v1972, %v2012
    %2014 = vmatmul.f32.gmra.mxu0 %v92
    %v2015 = vpop.f32.mrf.mxu0
    %v2016 = vadd.f32 %v1975, %v2015
    %2017 = vmatmul.f32.gmra.mxu0 %v99
    %v2018 = vpop.f32.mrf.mxu0
    %v2019 = vadd.f32 %v1978, %v2018
    %2020 = vmatmul.f32.gmra.mxu0 %v106
    %v2021 = vpop.f32.mrf.mxu0
    %v2022 = vadd.f32 %v1981, %v2021
    %2023 = vdwg.mxu0
    %2024 = vmatpush.msra.mxu0 0.0
    %2025 = vmatpush.msra.mxu0 0.0
    %2026 = vmatpush.msra.mxu0 0.0
    %2027 = vmatpush.msra.mxu0 0.0
    %2028 = vmatpush.msra.mxu0 0.0
    %2029 = vmatpush.msra.mxu0 0.0
    %2030 = vmatpush.msra.mxu0 0.0
    %2031 = vmatpush.msra.mxu0 0.0
    %2032 = vmatpush.msra.mxu0 0.0
    %2033 = vmatpush.msra.mxu0 0.0
    %2034 = vmatpush.msra.mxu0 0.0
    %2035 = vmatpush.msra.mxu0 0.0
    %2036 = vmatpush.msra.mxu0 0.0
    %2037 = vmatpush.msra.mxu0 0.0
    %2038 = vmatpush.msra.mxu0 %v887
    %2039 = vmatpush.msra.mxu0 %v879
    %2040 = vmatmul.f32.gmra.mxu0 %v894
    %v2041 = vpop.f32.mrf.mxu0
    %v2042 = vadd.f32 %v2001, %v2041
    %2043 = vmatmul.f32.gmra.mxu0 %v897
    %v2044 = vpop.f32.mrf.mxu0
    %v2045 = vadd.f32 %v2004, %v2044
    %2046 = vmatmul.f32.gmra.mxu0 %v900
    %v2047 = vpop.f32.mrf.mxu0
    %v2048 = vadd.f32 %v2007, %v2047
    %2049 = vmatmul.f32.gmra.mxu0 %v903
    %v2050 = vpop.f32.mrf.mxu0
    %v2051 = vadd.f32 %v2010, %v2050
    %2052 = vmatmul.f32.gmra.mxu0 %v906
    %v2053 = vpop.f32.mrf.mxu0
    %v2054 = vadd.f32 %v2013, %v2053
    %2055 = vmatmul.f32.gmra.mxu0 %v909
    %v2056 = vpop.f32.mrf.mxu0
    %v2057 = vadd.f32 %v2016, %v2056
    %2058 = vmatmul.f32.gmra.mxu0 %v912
    %v2059 = vpop.f32.mrf.mxu0
    %v2060 = vadd.f32 %v2019, %v2059
    %2061 = vmatmul.f32.gmra.mxu0 %v915
    %v2062 = vpop.f32.mrf.mxu0
    %v2063 = vadd.f32 %v2022, %v2062
    %2064 = vdwg.mxu0
    %2065 = vmatpush.msra.mxu0 %v232
    %2066 = vmatpush.msra.mxu0 %v224
    %2067 = vmatpush.msra.mxu0 %v216
    %2068 = vmatpush.msra.mxu0 %v208
    %2069 = vmatpush.msra.mxu0 %v200
    %2070 = vmatpush.msra.mxu0 %v192
    %2071 = vmatpush.msra.mxu0 %v184
    %2072 = vmatpush.msra.mxu0 %v176
    %2073 = vmatpush.msra.mxu0 %v168
    %2074 = vmatpush.msra.mxu0 %v160
    %2075 = vmatpush.msra.mxu0 %v152
    %2076 = vmatpush.msra.mxu0 %v144
    %2077 = vmatpush.msra.mxu0 %v136
    %2078 = vmatpush.msra.mxu0 %v128
    %2079 = vmatpush.msra.mxu0 %v120
    %2080 = vmatpush.msra.mxu0 %v112
    %2081 = vmatmul.f32.gmra.mxu0 %v52
    %v2082 = vpop.f32.mrf.mxu0
    %v2083 = vadd.f32 0.0, %v2082
    %2084 = vmatmul.f32.gmra.mxu0 %v59
    %v2085 = vpop.f32.mrf.mxu0
    %v2086 = vadd.f32 0.0, %v2085
    %2087 = vmatmul.f32.gmra.mxu0 %v66
    %v2088 = vpop.f32.mrf.mxu0
    %v2089 = vadd.f32 0.0, %v2088
    %2090 = vmatmul.f32.gmra.mxu0 %v73
    %v2091 = vpop.f32.mrf.mxu0
    %v2092 = vadd.f32 0.0, %v2091
    %2093 = vmatmul.f32.gmra.mxu0 %v80
    %v2094 = vpop.f32.mrf.mxu0
    %v2095 = vadd.f32 0.0, %v2094
    %2096 = vmatmul.f32.gmra.mxu0 %v87
    %v2097 = vpop.f32.mrf.mxu0
    %v2098 = vadd.f32 0.0, %v2097
    %2099 = vmatmul.f32.gmra.mxu0 %v94
    %v2100 = vpop.f32.mrf.mxu0
    %v2101 = vadd.f32 0.0, %v2100
    %2102 = vmatmul.f32.gmra.mxu0 %v101
    %v2103 = vpop.f32.mrf.mxu0
    %v2104 = vadd.f32 0.0, %v2103
    %2105 = vdwg.mxu0
    %2106 = vmatpush.msra.mxu0 %v360
    %2107 = vmatpush.msra.mxu0 %v352
    %2108 = vmatpush.msra.mxu0 %v344
    %2109 = vmatpush.msra.mxu0 %v336
    %2110 = vmatpush.msra.mxu0 %v328
    %2111 = vmatpush.msra.mxu0 %v320
    %2112 = vmatpush.msra.mxu0 %v312
    %2113 = vmatpush.msra.mxu0 %v304
    %2114 = vmatpush.msra.mxu0 %v296
    %2115 = vmatpush.msra.mxu0 %v288
    %2116 = vmatpush.msra.mxu0 %v280
    %2117 = vmatpush.msra.mxu0 %v272
    %2118 = vmatpush.msra.mxu0 %v264
    %2119 = vmatpush.msra.mxu0 %v256
    %2120 = vmatpush.msra.mxu0 %v248
    %2121 = vmatpush.msra.mxu0 %v240
    %2122 = vmatmul.f32.gmra.mxu0 %v53
    %v2123 = vpop.f32.mrf.mxu0
    %v2124 = vadd.f32 %v2083, %v2123
    %2125 = vmatmul.f32.gmra.mxu0 %v60
    %v2126 = vpop.f32.mrf.mxu0
    %v2127 = vadd.f32 %v2086, %v2126
    %2128 = vmatmul.f32.gmra.mxu0 %v67
    %v2129 = vpop.f32.mrf.mxu0
    %v2130 = vadd.f32 %v2089, %v2129
    %2131 = vmatmul.f32.gmra.mxu0 %v74
    %v2132 = vpop.f32.mrf.mxu0
    %v2133 = vadd.f32 %v2092, %v2132
    %2134 = vmatmul.f32.gmra.mxu0 %v81
    %v2135 = vpop.f32.mrf.mxu0
    %v2136 = vadd.f32 %v2095, %v2135
    %2137 = vmatmul.f32.gmra.mxu0 %v88
    %v2138 = vpop.f32.mrf.mxu0
    %v2139 = vadd.f32 %v2098, %v2138
    %2140 = vmatmul.f32.gmra.mxu0 %v95
    %v2141 = vpop.f32.mrf.mxu0
    %v2142 = vadd.f32 %v2101, %v2141
    %2143 = vmatmul.f32.gmra.mxu0 %v102
    %v2144 = vpop.f32.mrf.mxu0
    %v2145 = vadd.f32 %v2104, %v2144
    %2146 = vdwg.mxu0
    %2147 = vmatpush.msra.mxu0 %v488
    %2148 = vmatpush.msra.mxu0 %v480
    %2149 = vmatpush.msra.mxu0 %v472
    %2150 = vmatpush.msra.mxu0 %v464
    %2151 = vmatpush.msra.mxu0 %v456
    %2152 = vmatpush.msra.mxu0 %v448
    %2153 = vmatpush.msra.mxu0 %v440
    %2154 = vmatpush.msra.mxu0 %v432
    %2155 = vmatpush.msra.mxu0 %v424
    %2156 = vmatpush.msra.mxu0 %v416
    %2157 = vmatpush.msra.mxu0 %v408
    %2158 = vmatpush.msra.mxu0 %v400
    %2159 = vmatpush.msra.mxu0 %v392
    %2160 = vmatpush.msra.mxu0 %v384
    %2161 = vmatpush.msra.mxu0 %v376
    %2162 = vmatpush.msra.mxu0 %v368
    %2163 = vmatmul.f32.gmra.mxu0 %v54
    %v2164 = vpop.f32.mrf.mxu0
    %v2165 = vadd.f32 %v2124, %v2164
    %2166 = vmatmul.f32.gmra.mxu0 %v61
    %v2167 = vpop.f32.mrf.mxu0
    %v2168 = vadd.f32 %v2127, %v2167
    %2169 = vmatmul.f32.gmra.mxu0 %v68
    %v2170 = vpop.f32.mrf.mxu0
    %v2171 = vadd.f32 %v2130, %v2170
    %2172 = vmatmul.f32.gmra.mxu0 %v75
    %v2173 = vpop.f32.mrf.mxu0
    %v2174 = vadd.f32 %v2133, %v2173
    %2175 = vmatmul.f32.gmra.mxu0 %v82
    %v2176 = vpop.f32.mrf.mxu0
    %v2177 = vadd.f32 %v2136, %v2176
    %2178 = vmatmul.f32.gmra.mxu0 %v89
    %v2179 = vpop.f32.mrf.mxu0
    %v2180 = vadd.f32 %v2139, %v2179
    %2181 = vmatmul.f32.gmra.mxu0 %v96
    %v2182 = vpop.f32.mrf.mxu0
    %v2183 = vadd.f32 %v2142, %v2182
    %2184 = vmatmul.f32.gmra.mxu0 %v103
    %v2185 = vpop.f32.mrf.mxu0
    %v2186 = vadd.f32 %v2145, %v2185
    %2187 = vdwg.mxu0
    %2188 = vmatpush.msra.mxu0 %v616
    %2189 = vmatpush.msra.mxu0 %v608
    %2190 = vmatpush.msra.mxu0 %v600
    %2191 = vmatpush.msra.mxu0 %v592
    %2192 = vmatpush.msra.mxu0 %v584
    %2193 = vmatpush.msra.mxu0 %v576
    %2194 = vmatpush.msra.mxu0 %v568
    %2195 = vmatpush.msra.mxu0 %v560
    %2196 = vmatpush.msra.mxu0 %v552
    %2197 = vmatpush.msra.mxu0 %v544
    %2198 = vmatpush.msra.mxu0 %v536
    %2199 = vmatpush.msra.mxu0 %v528
    %2200 = vmatpush.msra.mxu0 %v520
    %2201 = vmatpush.msra.mxu0 %v512
    %2202 = vmatpush.msra.mxu0 %v504
    %2203 = vmatpush.msra.mxu0 %v496
    %2204 = vmatmul.f32.gmra.mxu0 %v55
    %v2205 = vpop.f32.mrf.mxu0
    %v2206 = vadd.f32 %v2165, %v2205
    %2207 = vmatmul.f32.gmra.mxu0 %v62
    %v2208 = vpop.f32.mrf.mxu0
    %v2209 = vadd.f32 %v2168, %v2208
    %2210 = vmatmul.f32.gmra.mxu0 %v69
    %v2211 = vpop.f32.mrf.mxu0
    %v2212 = vadd.f32 %v2171, %v2211
    %2213 = vmatmul.f32.gmra.mxu0 %v76
    %v2214 = vpop.f32.mrf.mxu0
    %v2215 = vadd.f32 %v2174, %v2214
    %2216 = vmatmul.f32.gmra.mxu0 %v83
    %v2217 = vpop.f32.mrf.mxu0
    %v2218 = vadd.f32 %v2177, %v2217
    %2219 = vmatmul.f32.gmra.mxu0 %v90
    %v2220 = vpop.f32.mrf.mxu0
    %v2221 = vadd.f32 %v2180, %v2220
    %2222 = vmatmul.f32.gmra.mxu0 %v97
    %v2223 = vpop.f32.mrf.mxu0
    %v2224 = vadd.f32 %v2183, %v2223
    %2225 = vmatmul.f32.gmra.mxu0 %v104
    %v2226 = vpop.f32.mrf.mxu0
    %v2227 = vadd.f32 %v2186, %v2226
    %2228 = vdwg.mxu0
    %2229 = vmatpush.msra.mxu0 %v744
    %2230 = vmatpush.msra.mxu0 %v736
    %2231 = vmatpush.msra.mxu0 %v728
    %2232 = vmatpush.msra.mxu0 %v720
    %2233 = vmatpush.msra.mxu0 %v712
    %2234 = vmatpush.msra.mxu0 %v704
    %2235 = vmatpush.msra.mxu0 %v696
    %2236 = vmatpush.msra.mxu0 %v688
    %2237 = vmatpush.msra.mxu0 %v680
    %2238 = vmatpush.msra.mxu0 %v672
    %2239 = vmatpush.msra.mxu0 %v664
    %2240 = vmatpush.msra.mxu0 %v656
    %2241 = vmatpush.msra.mxu0 %v648
    %2242 = vmatpush.msra.mxu0 %v640
    %2243 = vmatpush.msra.mxu0 %v632
    %2244 = vmatpush.msra.mxu0 %v624
    %2245 = vmatmul.f32.gmra.mxu0 %v56
    %v2246 = vpop.f32.mrf.mxu0
    %v2247 = vadd.f32 %v2206, %v2246
    %2248 = vmatmul.f32.gmra.mxu0 %v63
    %v2249 = vpop.f32.mrf.mxu0
    %v2250 = vadd.f32 %v2209, %v2249
    %2251 = vmatmul.f32.gmra.mxu0 %v70
    %v2252 = vpop.f32.mrf.mxu0
    %v2253 = vadd.f32 %v2212, %v2252
    %2254 = vmatmul.f32.gmra.mxu0 %v77
    %v2255 = vpop.f32.mrf.mxu0
    %v2256 = vadd.f32 %v2215, %v2255
    %2257 = vmatmul.f32.gmra.mxu0 %v84
    %v2258 = vpop.f32.mrf.mxu0
    %v2259 = vadd.f32 %v2218, %v2258
    %2260 = vmatmul.f32.gmra.mxu0 %v91
    %v2261 = vpop.f32.mrf.mxu0
    %v2262 = vadd.f32 %v2221, %v2261
    %2263 = vmatmul.f32.gmra.mxu0 %v98
    %v2264 = vpop.f32.mrf.mxu0
    %v2265 = vadd.f32 %v2224, %v2264
    %2266 = vmatmul.f32.gmra.mxu0 %v105
    %v2267 = vpop.f32.mrf.mxu0
    %v2268 = vadd.f32 %v2227, %v2267
    %2269 = vdwg.mxu0
    %2270 = vmatpush.msra.mxu0 %v872
    %2271 = vmatpush.msra.mxu0 %v864
    %2272 = vmatpush.msra.mxu0 %v856
    %2273 = vmatpush.msra.mxu0 %v848
    %2274 = vmatpush.msra.mxu0 %v840
    %2275 = vmatpush.msra.mxu0 %v832
    %2276 = vmatpush.msra.mxu0 %v824
    %2277 = vmatpush.msra.mxu0 %v816
    %2278 = vmatpush.msra.mxu0 %v808
    %2279 = vmatpush.msra.mxu0 %v800
    %2280 = vmatpush.msra.mxu0 %v792
    %2281 = vmatpush.msra.mxu0 %v784
    %2282 = vmatpush.msra.mxu0 %v776
    %2283 = vmatpush.msra.mxu0 %v768
    %2284 = vmatpush.msra.mxu0 %v760
    %2285 = vmatpush.msra.mxu0 %v752
    %2286 = vmatmul.f32.gmra.mxu0 %v57
    %v2287 = vpop.f32.mrf.mxu0
    %v2288 = vadd.f32 %v2247, %v2287
    %2289 = vmatmul.f32.gmra.mxu0 %v64
    %v2290 = vpop.f32.mrf.mxu0
    %v2291 = vadd.f32 %v2250, %v2290
    %2292 = vmatmul.f32.gmra.mxu0 %v71
    %v2293 = vpop.f32.mrf.mxu0
    %v2294 = vadd.f32 %v2253, %v2293
    %2295 = vmatmul.f32.gmra.mxu0 %v78
    %v2296 = vpop.f32.mrf.mxu0
    %v2297 = vadd.f32 %v2256, %v2296
    %2298 = vmatmul.f32.gmra.mxu0 %v85
    %v2299 = vpop.f32.mrf.mxu0
    %v2300 = vadd.f32 %v2259, %v2299
    %2301 = vmatmul.f32.gmra.mxu0 %v92
    %v2302 = vpop.f32.mrf.mxu0
    %v2303 = vadd.f32 %v2262, %v2302
    %2304 = vmatmul.f32.gmra.mxu0 %v99
    %v2305 = vpop.f32.mrf.mxu0
    %v2306 = vadd.f32 %v2265, %v2305
    %2307 = vmatmul.f32.gmra.mxu0 %v106
    %v2308 = vpop.f32.mrf.mxu0
    %v2309 = vadd.f32 %v2268, %v2308
    %2310 = vdwg.mxu0
    %2311 = vmatpush.msra.mxu0 0.0
    %2312 = vmatpush.msra.mxu0 0.0
    %2313 = vmatpush.msra.mxu0 0.0
    %2314 = vmatpush.msra.mxu0 0.0
    %2315 = vmatpush.msra.mxu0 0.0
    %2316 = vmatpush.msra.mxu0 0.0
    %2317 = vmatpush.msra.mxu0 0.0
    %2318 = vmatpush.msra.mxu0 0.0
    %2319 = vmatpush.msra.mxu0 0.0
    %2320 = vmatpush.msra.mxu0 0.0
    %2321 = vmatpush.msra.mxu0 0.0
    %2322 = vmatpush.msra.mxu0 0.0
    %2323 = vmatpush.msra.mxu0 0.0
    %2324 = vmatpush.msra.mxu0 0.0
    %2325 = vmatpush.msra.mxu0 %v888
    %2326 = vmatpush.msra.mxu0 %v880
    %2327 = vmatmul.f32.gmra.mxu0 %v894
    %v2328 = vpop.f32.mrf.mxu0
    %v2329 = vadd.f32 %v2288, %v2328
    %2330 = vmatmul.f32.gmra.mxu0 %v897
    %v2331 = vpop.f32.mrf.mxu0
    %v2332 = vadd.f32 %v2291, %v2331
    %2333 = vmatmul.f32.gmra.mxu0 %v900
    %v2334 = vpop.f32.mrf.mxu0
    %v2335 = vadd.f32 %v2294, %v2334
    %2336 = vmatmul.f32.gmra.mxu0 %v903
    %v2337 = vpop.f32.mrf.mxu0
    %v2338 = vadd.f32 %v2297, %v2337
    %2339 = vmatmul.f32.gmra.mxu0 %v906
    %v2340 = vpop.f32.mrf.mxu0
    %v2341 = vadd.f32 %v2300, %v2340
    %2342 = vmatmul.f32.gmra.mxu0 %v909
    %v2343 = vpop.f32.mrf.mxu0
    %v2344 = vadd.f32 %v2303, %v2343
    %2345 = vmatmul.f32.gmra.mxu0 %v912
    %v2346 = vpop.f32.mrf.mxu0
    %v2347 = vadd.f32 %v2306, %v2346
    %2348 = vmatmul.f32.gmra.mxu0 %v915
    %v2349 = vpop.f32.mrf.mxu0
    %v2350 = vadd.f32 %v2309, %v2349
    %2351 = vdwg.mxu0
    %2352 = vmatpush.msra.mxu0 %v233
    %2353 = vmatpush.msra.mxu0 %v225
    %2354 = vmatpush.msra.mxu0 %v217
    %2355 = vmatpush.msra.mxu0 %v209
    %2356 = vmatpush.msra.mxu0 %v201
    %2357 = vmatpush.msra.mxu0 %v193
    %2358 = vmatpush.msra.mxu0 %v185
    %2359 = vmatpush.msra.mxu0 %v177
    %2360 = vmatpush.msra.mxu0 %v169
    %2361 = vmatpush.msra.mxu0 %v161
    %2362 = vmatpush.msra.mxu0 %v153
    %2363 = vmatpush.msra.mxu0 %v145
    %2364 = vmatpush.msra.mxu0 %v137
    %2365 = vmatpush.msra.mxu0 %v129
    %2366 = vmatpush.msra.mxu0 %v121
    %2367 = vmatpush.msra.mxu0 %v113
    %2368 = vmatmul.f32.gmra.mxu0 %v52
    %v2369 = vpop.f32.mrf.mxu0
    %v2370 = vadd.f32 0.0, %v2369
    %2371 = vmatmul.f32.gmra.mxu0 %v59
    %v2372 = vpop.f32.mrf.mxu0
    %v2373 = vadd.f32 0.0, %v2372
    %2374 = vmatmul.f32.gmra.mxu0 %v66
    %v2375 = vpop.f32.mrf.mxu0
    %v2376 = vadd.f32 0.0, %v2375
    %2377 = vmatmul.f32.gmra.mxu0 %v73
    %v2378 = vpop.f32.mrf.mxu0
    %v2379 = vadd.f32 0.0, %v2378
    %2380 = vmatmul.f32.gmra.mxu0 %v80
    %v2381 = vpop.f32.mrf.mxu0
    %v2382 = vadd.f32 0.0, %v2381
    %2383 = vmatmul.f32.gmra.mxu0 %v87
    %v2384 = vpop.f32.mrf.mxu0
    %v2385 = vadd.f32 0.0, %v2384
    %2386 = vmatmul.f32.gmra.mxu0 %v94
    %v2387 = vpop.f32.mrf.mxu0
    %v2388 = vadd.f32 0.0, %v2387
    %2389 = vmatmul.f32.gmra.mxu0 %v101
    %v2390 = vpop.f32.mrf.mxu0
    %v2391 = vadd.f32 0.0, %v2390
    %2392 = vdwg.mxu0
    %2393 = vmatpush.msra.mxu0 %v361
    %2394 = vmatpush.msra.mxu0 %v353
    %2395 = vmatpush.msra.mxu0 %v345
    %2396 = vmatpush.msra.mxu0 %v337
    %2397 = vmatpush.msra.mxu0 %v329
    %2398 = vmatpush.msra.mxu0 %v321
    %2399 = vmatpush.msra.mxu0 %v313
    %2400 = vmatpush.msra.mxu0 %v305
    %2401 = vmatpush.msra.mxu0 %v297
    %2402 = vmatpush.msra.mxu0 %v289
    %2403 = vmatpush.msra.mxu0 %v281
    %2404 = vmatpush.msra.mxu0 %v273
    %2405 = vmatpush.msra.mxu0 %v265
    %2406 = vmatpush.msra.mxu0 %v257
    %2407 = vmatpush.msra.mxu0 %v249
    %2408 = vmatpush.msra.mxu0 %v241
    %2409 = vmatmul.f32.gmra.mxu0 %v53
    %v2410 = vpop.f32.mrf.mxu0
    %v2411 = vadd.f32 %v2370, %v2410
    %2412 = vmatmul.f32.gmra.mxu0 %v60
    %v2413 = vpop.f32.mrf.mxu0
    %v2414 = vadd.f32 %v2373, %v2413
    %2415 = vmatmul.f32.gmra.mxu0 %v67
    %v2416 = vpop.f32.mrf.mxu0
    %v2417 = vadd.f32 %v2376, %v2416
    %2418 = vmatmul.f32.gmra.mxu0 %v74
    %v2419 = vpop.f32.mrf.mxu0
    %v2420 = vadd.f32 %v2379, %v2419
    %2421 = vmatmul.f32.gmra.mxu0 %v81
    %v2422 = vpop.f32.mrf.mxu0
    %v2423 = vadd.f32 %v2382, %v2422
    %2424 = vmatmul.f32.gmra.mxu0 %v88
    %v2425 = vpop.f32.mrf.mxu0
    %v2426 = vadd.f32 %v2385, %v2425
    %2427 = vmatmul.f32.gmra.mxu0 %v95
    %v2428 = vpop.f32.mrf.mxu0
    %v2429 = vadd.f32 %v2388, %v2428
    %2430 = vmatmul.f32.gmra.mxu0 %v102
    %v2431 = vpop.f32.mrf.mxu0
    %v2432 = vadd.f32 %v2391, %v2431
    %2433 = vdwg.mxu0
    %2434 = vmatpush.msra.mxu0 %v489
    %2435 = vmatpush.msra.mxu0 %v481
    %2436 = vmatpush.msra.mxu0 %v473
    %2437 = vmatpush.msra.mxu0 %v465
    %2438 = vmatpush.msra.mxu0 %v457
    %2439 = vmatpush.msra.mxu0 %v449
    %2440 = vmatpush.msra.mxu0 %v441
    %2441 = vmatpush.msra.mxu0 %v433
    %2442 = vmatpush.msra.mxu0 %v425
    %2443 = vmatpush.msra.mxu0 %v417
    %2444 = vmatpush.msra.mxu0 %v409
    %2445 = vmatpush.msra.mxu0 %v401
    %2446 = vmatpush.msra.mxu0 %v393
    %2447 = vmatpush.msra.mxu0 %v385
    %2448 = vmatpush.msra.mxu0 %v377
    %2449 = vmatpush.msra.mxu0 %v369
    %2450 = vmatmul.f32.gmra.mxu0 %v54
    %v2451 = vpop.f32.mrf.mxu0
    %v2452 = vadd.f32 %v2411, %v2451
    %2453 = vmatmul.f32.gmra.mxu0 %v61
    %v2454 = vpop.f32.mrf.mxu0
    %v2455 = vadd.f32 %v2414, %v2454
    %2456 = vmatmul.f32.gmra.mxu0 %v68
    %v2457 = vpop.f32.mrf.mxu0
    %v2458 = vadd.f32 %v2417, %v2457
    %2459 = vmatmul.f32.gmra.mxu0 %v75
    %v2460 = vpop.f32.mrf.mxu0
    %v2461 = vadd.f32 %v2420, %v2460
    %2462 = vmatmul.f32.gmra.mxu0 %v82
    %v2463 = vpop.f32.mrf.mxu0
    %v2464 = vadd.f32 %v2423, %v2463
    %2465 = vmatmul.f32.gmra.mxu0 %v89
    %v2466 = vpop.f32.mrf.mxu0
    %v2467 = vadd.f32 %v2426, %v2466
    %2468 = vmatmul.f32.gmra.mxu0 %v96
    %v2469 = vpop.f32.mrf.mxu0
    %v2470 = vadd.f32 %v2429, %v2469
    %2471 = vmatmul.f32.gmra.mxu0 %v103
    %v2472 = vpop.f32.mrf.mxu0
    %v2473 = vadd.f32 %v2432, %v2472
    %2474 = vdwg.mxu0
    %2475 = vmatpush.msra.mxu0 %v617
    %2476 = vmatpush.msra.mxu0 %v609
    %2477 = vmatpush.msra.mxu0 %v601
    %2478 = vmatpush.msra.mxu0 %v593
    %2479 = vmatpush.msra.mxu0 %v585
    %2480 = vmatpush.msra.mxu0 %v577
    %2481 = vmatpush.msra.mxu0 %v569
    %2482 = vmatpush.msra.mxu0 %v561
    %2483 = vmatpush.msra.mxu0 %v553
    %2484 = vmatpush.msra.mxu0 %v545
    %2485 = vmatpush.msra.mxu0 %v537
    %2486 = vmatpush.msra.mxu0 %v529
    %2487 = vmatpush.msra.mxu0 %v521
    %2488 = vmatpush.msra.mxu0 %v513
    %2489 = vmatpush.msra.mxu0 %v505
    %2490 = vmatpush.msra.mxu0 %v497
    %2491 = vmatmul.f32.gmra.mxu0 %v55
    %v2492 = vpop.f32.mrf.mxu0
    %v2493 = vadd.f32 %v2452, %v2492
    %2494 = vmatmul.f32.gmra.mxu0 %v62
    %v2495 = vpop.f32.mrf.mxu0
    %v2496 = vadd.f32 %v2455, %v2495
    %2497 = vmatmul.f32.gmra.mxu0 %v69
    %v2498 = vpop.f32.mrf.mxu0
    %v2499 = vadd.f32 %v2458, %v2498
    %2500 = vmatmul.f32.gmra.mxu0 %v76
    %v2501 = vpop.f32.mrf.mxu0
    %v2502 = vadd.f32 %v2461, %v2501
    %2503 = vmatmul.f32.gmra.mxu0 %v83
    %v2504 = vpop.f32.mrf.mxu0
    %v2505 = vadd.f32 %v2464, %v2504
    %2506 = vmatmul.f32.gmra.mxu0 %v90
    %v2507 = vpop.f32.mrf.mxu0
    %v2508 = vadd.f32 %v2467, %v2507
    %2509 = vmatmul.f32.gmra.mxu0 %v97
    %v2510 = vpop.f32.mrf.mxu0
    %v2511 = vadd.f32 %v2470, %v2510
    %2512 = vmatmul.f32.gmra.mxu0 %v104
    %v2513 = vpop.f32.mrf.mxu0
    %v2514 = vadd.f32 %v2473, %v2513
    %2515 = vdwg.mxu0
    %2516 = vmatpush.msra.mxu0 %v745
    %2517 = vmatpush.msra.mxu0 %v737
    %2518 = vmatpush.msra.mxu0 %v729
    %2519 = vmatpush.msra.mxu0 %v721
    %2520 = vmatpush.msra.mxu0 %v713
    %2521 = vmatpush.msra.mxu0 %v705
    %2522 = vmatpush.msra.mxu0 %v697
    %2523 = vmatpush.msra.mxu0 %v689
    %2524 = vmatpush.msra.mxu0 %v681
    %2525 = vmatpush.msra.mxu0 %v673
    %2526 = vmatpush.msra.mxu0 %v665
    %2527 = vmatpush.msra.mxu0 %v657
    %2528 = vmatpush.msra.mxu0 %v649
    %2529 = vmatpush.msra.mxu0 %v641
    %2530 = vmatpush.msra.mxu0 %v633
    %2531 = vmatpush.msra.mxu0 %v625
    %2532 = vmatmul.f32.gmra.mxu0 %v56
    %v2533 = vpop.f32.mrf.mxu0
    %v2534 = vadd.f32 %v2493, %v2533
    %2535 = vmatmul.f32.gmra.mxu0 %v63
    %v2536 = vpop.f32.mrf.mxu0
    %v2537 = vadd.f32 %v2496, %v2536
    %2538 = vmatmul.f32.gmra.mxu0 %v70
    %v2539 = vpop.f32.mrf.mxu0
    %v2540 = vadd.f32 %v2499, %v2539
    %2541 = vmatmul.f32.gmra.mxu0 %v77
    %v2542 = vpop.f32.mrf.mxu0
    %v2543 = vadd.f32 %v2502, %v2542
    %2544 = vmatmul.f32.gmra.mxu0 %v84
    %v2545 = vpop.f32.mrf.mxu0
    %v2546 = vadd.f32 %v2505, %v2545
    %2547 = vmatmul.f32.gmra.mxu0 %v91
    %v2548 = vpop.f32.mrf.mxu0
    %v2549 = vadd.f32 %v2508, %v2548
    %2550 = vmatmul.f32.gmra.mxu0 %v98
    %v2551 = vpop.f32.mrf.mxu0
    %v2552 = vadd.f32 %v2511, %v2551
    %2553 = vmatmul.f32.gmra.mxu0 %v105
    %v2554 = vpop.f32.mrf.mxu0
    %v2555 = vadd.f32 %v2514, %v2554
    %2556 = vdwg.mxu0
    %2557 = vmatpush.msra.mxu0 %v873
    %2558 = vmatpush.msra.mxu0 %v865
    %2559 = vmatpush.msra.mxu0 %v857
    %2560 = vmatpush.msra.mxu0 %v849
    %2561 = vmatpush.msra.mxu0 %v841
    %2562 = vmatpush.msra.mxu0 %v833
    %2563 = vmatpush.msra.mxu0 %v825
    %2564 = vmatpush.msra.mxu0 %v817
    %2565 = vmatpush.msra.mxu0 %v809
    %2566 = vmatpush.msra.mxu0 %v801
    %2567 = vmatpush.msra.mxu0 %v793
    %2568 = vmatpush.msra.mxu0 %v785
    %2569 = vmatpush.msra.mxu0 %v777
    %2570 = vmatpush.msra.mxu0 %v769
    %2571 = vmatpush.msra.mxu0 %v761
    %2572 = vmatpush.msra.mxu0 %v753
    %2573 = vmatmul.f32.gmra.mxu0 %v57
    %v2574 = vpop.f32.mrf.mxu0
    %v2575 = vadd.f32 %v2534, %v2574
    %2576 = vmatmul.f32.gmra.mxu0 %v64
    %v2577 = vpop.f32.mrf.mxu0
    %v2578 = vadd.f32 %v2537, %v2577
    %2579 = vmatmul.f32.gmra.mxu0 %v71
    %v2580 = vpop.f32.mrf.mxu0
    %v2581 = vadd.f32 %v2540, %v2580
    %2582 = vmatmul.f32.gmra.mxu0 %v78
    %v2583 = vpop.f32.mrf.mxu0
    %v2584 = vadd.f32 %v2543, %v2583
    %2585 = vmatmul.f32.gmra.mxu0 %v85
    %v2586 = vpop.f32.mrf.mxu0
    %v2587 = vadd.f32 %v2546, %v2586
    %2588 = vmatmul.f32.gmra.mxu0 %v92
    %v2589 = vpop.f32.mrf.mxu0
    %v2590 = vadd.f32 %v2549, %v2589
    %2591 = vmatmul.f32.gmra.mxu0 %v99
    %v2592 = vpop.f32.mrf.mxu0
    %v2593 = vadd.f32 %v2552, %v2592
    %2594 = vmatmul.f32.gmra.mxu0 %v106
    %v2595 = vpop.f32.mrf.mxu0
    %v2596 = vadd.f32 %v2555, %v2595
    %2597 = vdwg.mxu0
    %2598 = vmatpush.msra.mxu0 0.0
    %2599 = vmatpush.msra.mxu0 0.0
    %2600 = vmatpush.msra.mxu0 0.0
    %2601 = vmatpush.msra.mxu0 0.0
    %2602 = vmatpush.msra.mxu0 0.0
    %2603 = vmatpush.msra.mxu0 0.0
    %2604 = vmatpush.msra.mxu0 0.0
    %2605 = vmatpush.msra.mxu0 0.0
    %2606 = vmatpush.msra.mxu0 0.0
    %2607 = vmatpush.msra.mxu0 0.0
    %2608 = vmatpush.msra.mxu0 0.0
    %2609 = vmatpush.msra.mxu0 0.0
    %2610 = vmatpush.msra.mxu0 0.0
    %2611 = vmatpush.msra.mxu0 0.0
    %2612 = vmatpush.msra.mxu0 %v889
    %2613 = vmatpush.msra.mxu0 %v881
    %2614 = vmatmul.f32.gmra.mxu0 %v894
    %v2615 = vpop.f32.mrf.mxu0
    %v2616 = vadd.f32 %v2575, %v2615
    %2617 = vmatmul.f32.gmra.mxu0 %v897
    %v2618 = vpop.f32.mrf.mxu0
    %v2619 = vadd.f32 %v2578, %v2618
    %2620 = vmatmul.f32.gmra.mxu0 %v900
    %v2621 = vpop.f32.mrf.mxu0
    %v2622 = vadd.f32 %v2581, %v2621
    %2623 = vmatmul.f32.gmra.mxu0 %v903
    %v2624 = vpop.f32.mrf.mxu0
    %v2625 = vadd.f32 %v2584, %v2624
    %2626 = vmatmul.f32.gmra.mxu0 %v906
    %v2627 = vpop.f32.mrf.mxu0
    %v2628 = vadd.f32 %v2587, %v2627
    %2629 = vmatmul.f32.gmra.mxu0 %v909
    %v2630 = vpop.f32.mrf.mxu0
    %v2631 = vadd.f32 %v2590, %v2630
    %2632 = vmatmul.f32.gmra.mxu0 %v912
    %v2633 = vpop.f32.mrf.mxu0
    %v2634 = vadd.f32 %v2593, %v2633
    %2635 = vmatmul.f32.gmra.mxu0 %v915
    %v2636 = vpop.f32.mrf.mxu0
    %v2637 = vadd.f32 %v2596, %v2636
    %2638 = vdwg.mxu0
    %2639 = vmatpush.msra.mxu0 %v234
    %2640 = vmatpush.msra.mxu0 %v226
    %2641 = vmatpush.msra.mxu0 %v218
    %2642 = vmatpush.msra.mxu0 %v210
    %2643 = vmatpush.msra.mxu0 %v202
    %2644 = vmatpush.msra.mxu0 %v194
    %2645 = vmatpush.msra.mxu0 %v186
    %2646 = vmatpush.msra.mxu0 %v178
    %2647 = vmatpush.msra.mxu0 %v170
    %2648 = vmatpush.msra.mxu0 %v162
    %2649 = vmatpush.msra.mxu0 %v154
    %2650 = vmatpush.msra.mxu0 %v146
    %2651 = vmatpush.msra.mxu0 %v138
    %2652 = vmatpush.msra.mxu0 %v130
    %2653 = vmatpush.msra.mxu0 %v122
    %2654 = vmatpush.msra.mxu0 %v114
    %2655 = vmatmul.f32.gmra.mxu0 %v52
    %v2656 = vpop.f32.mrf.mxu0
    %v2657 = vadd.f32 0.0, %v2656
    %2658 = vmatmul.f32.gmra.mxu0 %v59
    %v2659 = vpop.f32.mrf.mxu0
    %v2660 = vadd.f32 0.0, %v2659
    %2661 = vmatmul.f32.gmra.mxu0 %v66
    %v2662 = vpop.f32.mrf.mxu0
    %v2663 = vadd.f32 0.0, %v2662
    %2664 = vmatmul.f32.gmra.mxu0 %v73
    %v2665 = vpop.f32.mrf.mxu0
    %v2666 = vadd.f32 0.0, %v2665
    %2667 = vmatmul.f32.gmra.mxu0 %v80
    %v2668 = vpop.f32.mrf.mxu0
    %v2669 = vadd.f32 0.0, %v2668
    %2670 = vmatmul.f32.gmra.mxu0 %v87
    %v2671 = vpop.f32.mrf.mxu0
    %v2672 = vadd.f32 0.0, %v2671
    %2673 = vmatmul.f32.gmra.mxu0 %v94
    %v2674 = vpop.f32.mrf.mxu0
    %v2675 = vadd.f32 0.0, %v2674
    %2676 = vmatmul.f32.gmra.mxu0 %v101
    %v2677 = vpop.f32.mrf.mxu0
    %v2678 = vadd.f32 0.0, %v2677
    %2679 = vdwg.mxu0
    %2680 = vmatpush.msra.mxu0 %v362
    %2681 = vmatpush.msra.mxu0 %v354
    %2682 = vmatpush.msra.mxu0 %v346
    %2683 = vmatpush.msra.mxu0 %v338
    %2684 = vmatpush.msra.mxu0 %v330
    %2685 = vmatpush.msra.mxu0 %v322
    %2686 = vmatpush.msra.mxu0 %v314
    %2687 = vmatpush.msra.mxu0 %v306
    %2688 = vmatpush.msra.mxu0 %v298
    %2689 = vmatpush.msra.mxu0 %v290
    %2690 = vmatpush.msra.mxu0 %v282
    %2691 = vmatpush.msra.mxu0 %v274
    %2692 = vmatpush.msra.mxu0 %v266
    %2693 = vmatpush.msra.mxu0 %v258
    %2694 = vmatpush.msra.mxu0 %v250
    %2695 = vmatpush.msra.mxu0 %v242
    %2696 = vmatmul.f32.gmra.mxu0 %v53
    %v2697 = vpop.f32.mrf.mxu0
    %v2698 = vadd.f32 %v2657, %v2697
    %2699 = vmatmul.f32.gmra.mxu0 %v60
    %v2700 = vpop.f32.mrf.mxu0
    %v2701 = vadd.f32 %v2660, %v2700
    %2702 = vmatmul.f32.gmra.mxu0 %v67
    %v2703 = vpop.f32.mrf.mxu0
    %v2704 = vadd.f32 %v2663, %v2703
    %2705 = vmatmul.f32.gmra.mxu0 %v74
    %v2706 = vpop.f32.mrf.mxu0
    %v2707 = vadd.f32 %v2666, %v2706
    %2708 = vmatmul.f32.gmra.mxu0 %v81
    %v2709 = vpop.f32.mrf.mxu0
    %v2710 = vadd.f32 %v2669, %v2709
    %2711 = vmatmul.f32.gmra.mxu0 %v88
    %v2712 = vpop.f32.mrf.mxu0
    %v2713 = vadd.f32 %v2672, %v2712
    %2714 = vmatmul.f32.gmra.mxu0 %v95
    %v2715 = vpop.f32.mrf.mxu0
    %v2716 = vadd.f32 %v2675, %v2715
    %2717 = vmatmul.f32.gmra.mxu0 %v102
    %v2718 = vpop.f32.mrf.mxu0
    %v2719 = vadd.f32 %v2678, %v2718
    %2720 = vdwg.mxu0
    %2721 = vmatpush.msra.mxu0 %v490
    %2722 = vmatpush.msra.mxu0 %v482
    %2723 = vmatpush.msra.mxu0 %v474
    %2724 = vmatpush.msra.mxu0 %v466
    %2725 = vmatpush.msra.mxu0 %v458
    %2726 = vmatpush.msra.mxu0 %v450
    %2727 = vmatpush.msra.mxu0 %v442
    %2728 = vmatpush.msra.mxu0 %v434
    %2729 = vmatpush.msra.mxu0 %v426
    %2730 = vmatpush.msra.mxu0 %v418
    %2731 = vmatpush.msra.mxu0 %v410
    %2732 = vmatpush.msra.mxu0 %v402
    %2733 = vmatpush.msra.mxu0 %v394
    %2734 = vmatpush.msra.mxu0 %v386
    %2735 = vmatpush.msra.mxu0 %v378
    %2736 = vmatpush.msra.mxu0 %v370
    %2737 = vmatmul.f32.gmra.mxu0 %v54
    %v2738 = vpop.f32.mrf.mxu0
    %v2739 = vadd.f32 %v2698, %v2738
    %2740 = vmatmul.f32.gmra.mxu0 %v61
    %v2741 = vpop.f32.mrf.mxu0
    %v2742 = vadd.f32 %v2701, %v2741
    %2743 = vmatmul.f32.gmra.mxu0 %v68
    %v2744 = vpop.f32.mrf.mxu0
    %v2745 = vadd.f32 %v2704, %v2744
    %2746 = vmatmul.f32.gmra.mxu0 %v75
    %v2747 = vpop.f32.mrf.mxu0
    %v2748 = vadd.f32 %v2707, %v2747
    %2749 = vmatmul.f32.gmra.mxu0 %v82
    %v2750 = vpop.f32.mrf.mxu0
    %v2751 = vadd.f32 %v2710, %v2750
    %2752 = vmatmul.f32.gmra.mxu0 %v89
    %v2753 = vpop.f32.mrf.mxu0
    %v2754 = vadd.f32 %v2713, %v2753
    %2755 = vmatmul.f32.gmra.mxu0 %v96
    %v2756 = vpop.f32.mrf.mxu0
    %v2757 = vadd.f32 %v2716, %v2756
    %2758 = vmatmul.f32.gmra.mxu0 %v103
    %v2759 = vpop.f32.mrf.mxu0
    %v2760 = vadd.f32 %v2719, %v2759
    %2761 = vdwg.mxu0
    %2762 = vmatpush.msra.mxu0 %v618
    %2763 = vmatpush.msra.mxu0 %v610
    %2764 = vmatpush.msra.mxu0 %v602
    %2765 = vmatpush.msra.mxu0 %v594
    %2766 = vmatpush.msra.mxu0 %v586
    %2767 = vmatpush.msra.mxu0 %v578
    %2768 = vmatpush.msra.mxu0 %v570
    %2769 = vmatpush.msra.mxu0 %v562
    %2770 = vmatpush.msra.mxu0 %v554
    %2771 = vmatpush.msra.mxu0 %v546
    %2772 = vmatpush.msra.mxu0 %v538
    %2773 = vmatpush.msra.mxu0 %v530
    %2774 = vmatpush.msra.mxu0 %v522
    %2775 = vmatpush.msra.mxu0 %v514
    %2776 = vmatpush.msra.mxu0 %v506
    %2777 = vmatpush.msra.mxu0 %v498
    %2778 = vmatmul.f32.gmra.mxu0 %v55
    %v2779 = vpop.f32.mrf.mxu0
    %v2780 = vadd.f32 %v2739, %v2779
    %2781 = vmatmul.f32.gmra.mxu0 %v62
    %v2782 = vpop.f32.mrf.mxu0
    %v2783 = vadd.f32 %v2742, %v2782
    %2784 = vmatmul.f32.gmra.mxu0 %v69
    %v2785 = vpop.f32.mrf.mxu0
    %v2786 = vadd.f32 %v2745, %v2785
    %2787 = vmatmul.f32.gmra.mxu0 %v76
    %v2788 = vpop.f32.mrf.mxu0
    %v2789 = vadd.f32 %v2748, %v2788
    %2790 = vmatmul.f32.gmra.mxu0 %v83
    %v2791 = vpop.f32.mrf.mxu0
    %v2792 = vadd.f32 %v2751, %v2791
    %2793 = vmatmul.f32.gmra.mxu0 %v90
    %v2794 = vpop.f32.mrf.mxu0
    %v2795 = vadd.f32 %v2754, %v2794
    %2796 = vmatmul.f32.gmra.mxu0 %v97
    %v2797 = vpop.f32.mrf.mxu0
    %v2798 = vadd.f32 %v2757, %v2797
    %2799 = vmatmul.f32.gmra.mxu0 %v104
    %v2800 = vpop.f32.mrf.mxu0
    %v2801 = vadd.f32 %v2760, %v2800
    %2802 = vdwg.mxu0
    %2803 = vmatpush.msra.mxu0 %v746
    %2804 = vmatpush.msra.mxu0 %v738
    %2805 = vmatpush.msra.mxu0 %v730
    %2806 = vmatpush.msra.mxu0 %v722
    %2807 = vmatpush.msra.mxu0 %v714
    %2808 = vmatpush.msra.mxu0 %v706
    %2809 = vmatpush.msra.mxu0 %v698
    %2810 = vmatpush.msra.mxu0 %v690
    %2811 = vmatpush.msra.mxu0 %v682
    %2812 = vmatpush.msra.mxu0 %v674
    %2813 = vmatpush.msra.mxu0 %v666
    %2814 = vmatpush.msra.mxu0 %v658
    %2815 = vmatpush.msra.mxu0 %v650
    %2816 = vmatpush.msra.mxu0 %v642
    %2817 = vmatpush.msra.mxu0 %v634
    %2818 = vmatpush.msra.mxu0 %v626
    %2819 = vmatmul.f32.gmra.mxu0 %v56
    %v2820 = vpop.f32.mrf.mxu0
    %v2821 = vadd.f32 %v2780, %v2820
    %2822 = vmatmul.f32.gmra.mxu0 %v63
    %v2823 = vpop.f32.mrf.mxu0
    %v2824 = vadd.f32 %v2783, %v2823
    %2825 = vmatmul.f32.gmra.mxu0 %v70
    %v2826 = vpop.f32.mrf.mxu0
    %v2827 = vadd.f32 %v2786, %v2826
    %2828 = vmatmul.f32.gmra.mxu0 %v77
    %v2829 = vpop.f32.mrf.mxu0
    %v2830 = vadd.f32 %v2789, %v2829
    %2831 = vmatmul.f32.gmra.mxu0 %v84
    %v2832 = vpop.f32.mrf.mxu0
    %v2833 = vadd.f32 %v2792, %v2832
    %2834 = vmatmul.f32.gmra.mxu0 %v91
    %v2835 = vpop.f32.mrf.mxu0
    %v2836 = vadd.f32 %v2795, %v2835
    %2837 = vmatmul.f32.gmra.mxu0 %v98
    %v2838 = vpop.f32.mrf.mxu0
    %v2839 = vadd.f32 %v2798, %v2838
    %2840 = vmatmul.f32.gmra.mxu0 %v105
    %v2841 = vpop.f32.mrf.mxu0
    %v2842 = vadd.f32 %v2801, %v2841
    %2843 = vdwg.mxu0
    %2844 = vmatpush.msra.mxu0 %v874
    %2845 = vmatpush.msra.mxu0 %v866
    %2846 = vmatpush.msra.mxu0 %v858
    %2847 = vmatpush.msra.mxu0 %v850
    %2848 = vmatpush.msra.mxu0 %v842
    %2849 = vmatpush.msra.mxu0 %v834
    %2850 = vmatpush.msra.mxu0 %v826
    %2851 = vmatpush.msra.mxu0 %v818
    %2852 = vmatpush.msra.mxu0 %v810
    %2853 = vmatpush.msra.mxu0 %v802
    %2854 = vmatpush.msra.mxu0 %v794
    %2855 = vmatpush.msra.mxu0 %v786
    %2856 = vmatpush.msra.mxu0 %v778
    %2857 = vmatpush.msra.mxu0 %v770
    %2858 = vmatpush.msra.mxu0 %v762
    %2859 = vmatpush.msra.mxu0 %v754
    %2860 = vmatmul.f32.gmra.mxu0 %v57
    %v2861 = vpop.f32.mrf.mxu0
    %v2862 = vadd.f32 %v2821, %v2861
    %2863 = vmatmul.f32.gmra.mxu0 %v64
    %v2864 = vpop.f32.mrf.mxu0
    %v2865 = vadd.f32 %v2824, %v2864
    %2866 = vmatmul.f32.gmra.mxu0 %v71
    %v2867 = vpop.f32.mrf.mxu0
    %v2868 = vadd.f32 %v2827, %v2867
    %2869 = vmatmul.f32.gmra.mxu0 %v78
    %v2870 = vpop.f32.mrf.mxu0
    %v2871 = vadd.f32 %v2830, %v2870
    %2872 = vmatmul.f32.gmra.mxu0 %v85
    %v2873 = vpop.f32.mrf.mxu0
    %v2874 = vadd.f32 %v2833, %v2873
    %2875 = vmatmul.f32.gmra.mxu0 %v92
    %v2876 = vpop.f32.mrf.mxu0
    %v2877 = vadd.f32 %v2836, %v2876
    %2878 = vmatmul.f32.gmra.mxu0 %v99
    %v2879 = vpop.f32.mrf.mxu0
    %v2880 = vadd.f32 %v2839, %v2879
    %2881 = vmatmul.f32.gmra.mxu0 %v106
    %v2882 = vpop.f32.mrf.mxu0
    %v2883 = vadd.f32 %v2842, %v2882
    %2884 = vdwg.mxu0
    %2885 = vmatpush.msra.mxu0 0.0
    %2886 = vmatpush.msra.mxu0 0.0
    %2887 = vmatpush.msra.mxu0 0.0
    %2888 = vmatpush.msra.mxu0 0.0
    %2889 = vmatpush.msra.mxu0 0.0
    %2890 = vmatpush.msra.mxu0 0.0
    %2891 = vmatpush.msra.mxu0 0.0
    %2892 = vmatpush.msra.mxu0 0.0
    %2893 = vmatpush.msra.mxu0 0.0
    %2894 = vmatpush.msra.mxu0 0.0
    %2895 = vmatpush.msra.mxu0 0.0
    %2896 = vmatpush.msra.mxu0 0.0
    %2897 = vmatpush.msra.mxu0 0.0
    %2898 = vmatpush.msra.mxu0 0.0
    %2899 = vmatpush.msra.mxu0 %v890
    %2900 = vmatpush.msra.mxu0 %v882
    %2901 = vmatmul.f32.gmra.mxu0 %v894
    %v2902 = vpop.f32.mrf.mxu0
    %v2903 = vadd.f32 %v2862, %v2902
    %2904 = vmatmul.f32.gmra.mxu0 %v897
    %v2905 = vpop.f32.mrf.mxu0
    %v2906 = vadd.f32 %v2865, %v2905
    %2907 = vmatmul.f32.gmra.mxu0 %v900
    %v2908 = vpop.f32.mrf.mxu0
    %v2909 = vadd.f32 %v2868, %v2908
    %2910 = vmatmul.f32.gmra.mxu0 %v903
    %v2911 = vpop.f32.mrf.mxu0
    %v2912 = vadd.f32 %v2871, %v2911
    %2913 = vmatmul.f32.gmra.mxu0 %v906
    %v2914 = vpop.f32.mrf.mxu0
    %v2915 = vadd.f32 %v2874, %v2914
    %2916 = vmatmul.f32.gmra.mxu0 %v909
    %v2917 = vpop.f32.mrf.mxu0
    %v2918 = vadd.f32 %v2877, %v2917
    %2919 = vmatmul.f32.gmra.mxu0 %v912
    %v2920 = vpop.f32.mrf.mxu0
    %v2921 = vadd.f32 %v2880, %v2920
    %2922 = vmatmul.f32.gmra.mxu0 %v915
    %v2923 = vpop.f32.mrf.mxu0
    %v2924 = vadd.f32 %v2883, %v2923
    %2925 = vdwg.mxu0
    %2926 = vmatpush.msra.mxu0 %v235
    %2927 = vmatpush.msra.mxu0 %v227
    %2928 = vmatpush.msra.mxu0 %v219
    %2929 = vmatpush.msra.mxu0 %v211
    %2930 = vmatpush.msra.mxu0 %v203
    %2931 = vmatpush.msra.mxu0 %v195
    %2932 = vmatpush.msra.mxu0 %v187
    %2933 = vmatpush.msra.mxu0 %v179
    %2934 = vmatpush.msra.mxu0 %v171
    %2935 = vmatpush.msra.mxu0 %v163
    %2936 = vmatpush.msra.mxu0 %v155
    %2937 = vmatpush.msra.mxu0 %v147
    %2938 = vmatpush.msra.mxu0 %v139
    %2939 = vmatpush.msra.mxu0 %v131
    %2940 = vmatpush.msra.mxu0 %v123
    %2941 = vmatpush.msra.mxu0 %v115
    %2942 = vmatmul.f32.gmra.mxu0 %v52
    %v2943 = vpop.f32.mrf.mxu0
    %v2944 = vadd.f32 0.0, %v2943
    %2945 = vmatmul.f32.gmra.mxu0 %v59
    %v2946 = vpop.f32.mrf.mxu0
    %v2947 = vadd.f32 0.0, %v2946
    %2948 = vmatmul.f32.gmra.mxu0 %v66
    %v2949 = vpop.f32.mrf.mxu0
    %v2950 = vadd.f32 0.0, %v2949
    %2951 = vmatmul.f32.gmra.mxu0 %v73
    %v2952 = vpop.f32.mrf.mxu0
    %v2953 = vadd.f32 0.0, %v2952
    %2954 = vmatmul.f32.gmra.mxu0 %v80
    %v2955 = vpop.f32.mrf.mxu0
    %v2956 = vadd.f32 0.0, %v2955
    %2957 = vmatmul.f32.gmra.mxu0 %v87
    %v2958 = vpop.f32.mrf.mxu0
    %v2959 = vadd.f32 0.0, %v2958
    %2960 = vmatmul.f32.gmra.mxu0 %v94
    %v2961 = vpop.f32.mrf.mxu0
    %v2962 = vadd.f32 0.0, %v2961
    %2963 = vmatmul.f32.gmra.mxu0 %v101
    %v2964 = vpop.f32.mrf.mxu0
    %v2965 = vadd.f32 0.0, %v2964
    %2966 = vdwg.mxu0
    %2967 = vmatpush.msra.mxu0 %v363
    %2968 = vmatpush.msra.mxu0 %v355
    %2969 = vmatpush.msra.mxu0 %v347
    %2970 = vmatpush.msra.mxu0 %v339
    %2971 = vmatpush.msra.mxu0 %v331
    %2972 = vmatpush.msra.mxu0 %v323
    %2973 = vmatpush.msra.mxu0 %v315
    %2974 = vmatpush.msra.mxu0 %v307
    %2975 = vmatpush.msra.mxu0 %v299
    %2976 = vmatpush.msra.mxu0 %v291
    %2977 = vmatpush.msra.mxu0 %v283
    %2978 = vmatpush.msra.mxu0 %v275
    %2979 = vmatpush.msra.mxu0 %v267
    %2980 = vmatpush.msra.mxu0 %v259
    %2981 = vmatpush.msra.mxu0 %v251
    %2982 = vmatpush.msra.mxu0 %v243
    %2983 = vmatmul.f32.gmra.mxu0 %v53
    %v2984 = vpop.f32.mrf.mxu0
    %v2985 = vadd.f32 %v2944, %v2984
    %2986 = vmatmul.f32.gmra.mxu0 %v60
    %v2987 = vpop.f32.mrf.mxu0
    %v2988 = vadd.f32 %v2947, %v2987
    %2989 = vmatmul.f32.gmra.mxu0 %v67
    %v2990 = vpop.f32.mrf.mxu0
    %v2991 = vadd.f32 %v2950, %v2990
    %2992 = vmatmul.f32.gmra.mxu0 %v74
    %v2993 = vpop.f32.mrf.mxu0
    %v2994 = vadd.f32 %v2953, %v2993
    %2995 = vmatmul.f32.gmra.mxu0 %v81
    %v2996 = vpop.f32.mrf.mxu0
    %v2997 = vadd.f32 %v2956, %v2996
    %2998 = vmatmul.f32.gmra.mxu0 %v88
    %v2999 = vpop.f32.mrf.mxu0
    %v3000 = vadd.f32 %v2959, %v2999
    %3001 = vmatmul.f32.gmra.mxu0 %v95
    %v3002 = vpop.f32.mrf.mxu0
    %v3003 = vadd.f32 %v2962, %v3002
    %3004 = vmatmul.f32.gmra.mxu0 %v102
    %v3005 = vpop.f32.mrf.mxu0
    %v3006 = vadd.f32 %v2965, %v3005
    %3007 = vdwg.mxu0
    %3008 = vmatpush.msra.mxu0 %v491
    %3009 = vmatpush.msra.mxu0 %v483
    %3010 = vmatpush.msra.mxu0 %v475
    %3011 = vmatpush.msra.mxu0 %v467
    %3012 = vmatpush.msra.mxu0 %v459
    %3013 = vmatpush.msra.mxu0 %v451
    %3014 = vmatpush.msra.mxu0 %v443
    %3015 = vmatpush.msra.mxu0 %v435
    %3016 = vmatpush.msra.mxu0 %v427
    %3017 = vmatpush.msra.mxu0 %v419
    %3018 = vmatpush.msra.mxu0 %v411
    %3019 = vmatpush.msra.mxu0 %v403
    %3020 = vmatpush.msra.mxu0 %v395
    %3021 = vmatpush.msra.mxu0 %v387
    %3022 = vmatpush.msra.mxu0 %v379
    %3023 = vmatpush.msra.mxu0 %v371
    %3024 = vmatmul.f32.gmra.mxu0 %v54
    %v3025 = vpop.f32.mrf.mxu0
    %v3026 = vadd.f32 %v2985, %v3025
    %3027 = vmatmul.f32.gmra.mxu0 %v61
    %v3028 = vpop.f32.mrf.mxu0
    %v3029 = vadd.f32 %v2988, %v3028
    %3030 = vmatmul.f32.gmra.mxu0 %v68
    %v3031 = vpop.f32.mrf.mxu0
    %v3032 = vadd.f32 %v2991, %v3031
    %3033 = vmatmul.f32.gmra.mxu0 %v75
    %v3034 = vpop.f32.mrf.mxu0
    %v3035 = vadd.f32 %v2994, %v3034
    %3036 = vmatmul.f32.gmra.mxu0 %v82
    %v3037 = vpop.f32.mrf.mxu0
    %v3038 = vadd.f32 %v2997, %v3037
    %3039 = vmatmul.f32.gmra.mxu0 %v89
    %v3040 = vpop.f32.mrf.mxu0
    %v3041 = vadd.f32 %v3000, %v3040
    %3042 = vmatmul.f32.gmra.mxu0 %v96
    %v3043 = vpop.f32.mrf.mxu0
    %v3044 = vadd.f32 %v3003, %v3043
    %3045 = vmatmul.f32.gmra.mxu0 %v103
    %v3046 = vpop.f32.mrf.mxu0
    %v3047 = vadd.f32 %v3006, %v3046
    %3048 = vdwg.mxu0
    %3049 = vmatpush.msra.mxu0 %v619
    %3050 = vmatpush.msra.mxu0 %v611
    %3051 = vmatpush.msra.mxu0 %v603
    %3052 = vmatpush.msra.mxu0 %v595
    %3053 = vmatpush.msra.mxu0 %v587
    %3054 = vmatpush.msra.mxu0 %v579
    %3055 = vmatpush.msra.mxu0 %v571
    %3056 = vmatpush.msra.mxu0 %v563
    %3057 = vmatpush.msra.mxu0 %v555
    %3058 = vmatpush.msra.mxu0 %v547
    %3059 = vmatpush.msra.mxu0 %v539
    %3060 = vmatpush.msra.mxu0 %v531
    %3061 = vmatpush.msra.mxu0 %v523
    %3062 = vmatpush.msra.mxu0 %v515
    %3063 = vmatpush.msra.mxu0 %v507
    %3064 = vmatpush.msra.mxu0 %v499
    %3065 = vmatmul.f32.gmra.mxu0 %v55
    %v3066 = vpop.f32.mrf.mxu0
    %v3067 = vadd.f32 %v3026, %v3066
    %3068 = vmatmul.f32.gmra.mxu0 %v62
    %v3069 = vpop.f32.mrf.mxu0
    %v3070 = vadd.f32 %v3029, %v3069
    %3071 = vmatmul.f32.gmra.mxu0 %v69
    %v3072 = vpop.f32.mrf.mxu0
    %v3073 = vadd.f32 %v3032, %v3072
    %3074 = vmatmul.f32.gmra.mxu0 %v76
    %v3075 = vpop.f32.mrf.mxu0
    %v3076 = vadd.f32 %v3035, %v3075
    %3077 = vmatmul.f32.gmra.mxu0 %v83
    %v3078 = vpop.f32.mrf.mxu0
    %v3079 = vadd.f32 %v3038, %v3078
    %3080 = vmatmul.f32.gmra.mxu0 %v90
    %v3081 = vpop.f32.mrf.mxu0
    %v3082 = vadd.f32 %v3041, %v3081
    %3083 = vmatmul.f32.gmra.mxu0 %v97
    %v3084 = vpop.f32.mrf.mxu0
    %v3085 = vadd.f32 %v3044, %v3084
    %3086 = vmatmul.f32.gmra.mxu0 %v104
    %v3087 = vpop.f32.mrf.mxu0
    %v3088 = vadd.f32 %v3047, %v3087
    %3089 = vdwg.mxu0
    %3090 = vmatpush.msra.mxu0 %v747
    %3091 = vmatpush.msra.mxu0 %v739
    %3092 = vmatpush.msra.mxu0 %v731
    %3093 = vmatpush.msra.mxu0 %v723
    %3094 = vmatpush.msra.mxu0 %v715
    %3095 = vmatpush.msra.mxu0 %v707
    %3096 = vmatpush.msra.mxu0 %v699
    %3097 = vmatpush.msra.mxu0 %v691
    %3098 = vmatpush.msra.mxu0 %v683
    %3099 = vmatpush.msra.mxu0 %v675
    %3100 = vmatpush.msra.mxu0 %v667
    %3101 = vmatpush.msra.mxu0 %v659
    %3102 = vmatpush.msra.mxu0 %v651
    %3103 = vmatpush.msra.mxu0 %v643
    %3104 = vmatpush.msra.mxu0 %v635
    %3105 = vmatpush.msra.mxu0 %v627
    %3106 = vmatmul.f32.gmra.mxu0 %v56
    %v3107 = vpop.f32.mrf.mxu0
    %v3108 = vadd.f32 %v3067, %v3107
    %3109 = vmatmul.f32.gmra.mxu0 %v63
    %v3110 = vpop.f32.mrf.mxu0
    %v3111 = vadd.f32 %v3070, %v3110
    %3112 = vmatmul.f32.gmra.mxu0 %v70
    %v3113 = vpop.f32.mrf.mxu0
    %v3114 = vadd.f32 %v3073, %v3113
    %3115 = vmatmul.f32.gmra.mxu0 %v77
    %v3116 = vpop.f32.mrf.mxu0
    %v3117 = vadd.f32 %v3076, %v3116
    %3118 = vmatmul.f32.gmra.mxu0 %v84
    %v3119 = vpop.f32.mrf.mxu0
    %v3120 = vadd.f32 %v3079, %v3119
    %3121 = vmatmul.f32.gmra.mxu0 %v91
    %v3122 = vpop.f32.mrf.mxu0
    %v3123 = vadd.f32 %v3082, %v3122
    %3124 = vmatmul.f32.gmra.mxu0 %v98
    %v3125 = vpop.f32.mrf.mxu0
    %v3126 = vadd.f32 %v3085, %v3125
    %3127 = vmatmul.f32.gmra.mxu0 %v105
    %v3128 = vpop.f32.mrf.mxu0
    %v3129 = vadd.f32 %v3088, %v3128
    %3130 = vdwg.mxu0
    %3131 = vmatpush.msra.mxu0 %v875
    %3132 = vmatpush.msra.mxu0 %v867
    %3133 = vmatpush.msra.mxu0 %v859
    %3134 = vmatpush.msra.mxu0 %v851
    %3135 = vmatpush.msra.mxu0 %v843
    %3136 = vmatpush.msra.mxu0 %v835
    %3137 = vmatpush.msra.mxu0 %v827
    %3138 = vmatpush.msra.mxu0 %v819
    %3139 = vmatpush.msra.mxu0 %v811
    %3140 = vmatpush.msra.mxu0 %v803
    %3141 = vmatpush.msra.mxu0 %v795
    %3142 = vmatpush.msra.mxu0 %v787
    %3143 = vmatpush.msra.mxu0 %v779
    %3144 = vmatpush.msra.mxu0 %v771
    %3145 = vmatpush.msra.mxu0 %v763
    %3146 = vmatpush.msra.mxu0 %v755
    %3147 = vmatmul.f32.gmra.mxu0 %v57
    %v3148 = vpop.f32.mrf.mxu0
    %v3149 = vadd.f32 %v3108, %v3148
    %3150 = vmatmul.f32.gmra.mxu0 %v64
    %v3151 = vpop.f32.mrf.mxu0
    %v3152 = vadd.f32 %v3111, %v3151
    %3153 = vmatmul.f32.gmra.mxu0 %v71
    %v3154 = vpop.f32.mrf.mxu0
    %v3155 = vadd.f32 %v3114, %v3154
    %3156 = vmatmul.f32.gmra.mxu0 %v78
    %v3157 = vpop.f32.mrf.mxu0
    %v3158 = vadd.f32 %v3117, %v3157
    %3159 = vmatmul.f32.gmra.mxu0 %v85
    %v3160 = vpop.f32.mrf.mxu0
    %v3161 = vadd.f32 %v3120, %v3160
    %3162 = vmatmul.f32.gmra.mxu0 %v92
    %v3163 = vpop.f32.mrf.mxu0
    %v3164 = vadd.f32 %v3123, %v3163
    %3165 = vmatmul.f32.gmra.mxu0 %v99
    %v3166 = vpop.f32.mrf.mxu0
    %v3167 = vadd.f32 %v3126, %v3166
    %3168 = vmatmul.f32.gmra.mxu0 %v106
    %v3169 = vpop.f32.mrf.mxu0
    %v3170 = vadd.f32 %v3129, %v3169
    %3171 = vdwg.mxu0
    %3172 = vmatpush.msra.mxu0 0.0
    %3173 = vmatpush.msra.mxu0 0.0
    %3174 = vmatpush.msra.mxu0 0.0
    %3175 = vmatpush.msra.mxu0 0.0
    %3176 = vmatpush.msra.mxu0 0.0
    %3177 = vmatpush.msra.mxu0 0.0
    %3178 = vmatpush.msra.mxu0 0.0
    %3179 = vmatpush.msra.mxu0 0.0
    %3180 = vmatpush.msra.mxu0 0.0
    %3181 = vmatpush.msra.mxu0 0.0
    %3182 = vmatpush.msra.mxu0 0.0
    %3183 = vmatpush.msra.mxu0 0.0
    %3184 = vmatpush.msra.mxu0 0.0
    %3185 = vmatpush.msra.mxu0 0.0
    %3186 = vmatpush.msra.mxu0 %v891
    %3187 = vmatpush.msra.mxu0 %v883
    %3188 = vmatmul.f32.gmra.mxu0 %v894
    %v3189 = vpop.f32.mrf.mxu0
    %v3190 = vadd.f32 %v3149, %v3189
    %3191 = vmatmul.f32.gmra.mxu0 %v897
    %v3192 = vpop.f32.mrf.mxu0
    %v3193 = vadd.f32 %v3152, %v3192
    %3194 = vmatmul.f32.gmra.mxu0 %v900
    %v3195 = vpop.f32.mrf.mxu0
    %v3196 = vadd.f32 %v3155, %v3195
    %3197 = vmatmul.f32.gmra.mxu0 %v903
    %v3198 = vpop.f32.mrf.mxu0
    %v3199 = vadd.f32 %v3158, %v3198
    %3200 = vmatmul.f32.gmra.mxu0 %v906
    %v3201 = vpop.f32.mrf.mxu0
    %v3202 = vadd.f32 %v3161, %v3201
    %3203 = vmatmul.f32.gmra.mxu0 %v909
    %v3204 = vpop.f32.mrf.mxu0
    %v3205 = vadd.f32 %v3164, %v3204
    %3206 = vmatmul.f32.gmra.mxu0 %v912
    %v3207 = vpop.f32.mrf.mxu0
    %v3208 = vadd.f32 %v3167, %v3207
    %3209 = vmatmul.f32.gmra.mxu0 %v915
    %v3210 = vpop.f32.mrf.mxu0
    %v3211 = vadd.f32 %v3170, %v3210
    %3212 = vdwg.mxu0
    %3213 = vst [vmem:[#allocation2] sm:$0xff] %v1181
    %3214 = vst [vmem:[#allocation2 + $0x8] sm:$0xff] %v1468
    %3215 = vst [vmem:[#allocation2 + $0x10] sm:$0xff] %v1755
    %3216 = vst [vmem:[#allocation2 + $0x18] sm:$0xff] %v2042
    %3217 = vst [vmem:[#allocation2 + $0x20] sm:$0xff] %v2329
    %3218 = vst [vmem:[#allocation2 + $0x28] sm:$0xff] %v2616
    %3219 = vst [vmem:[#allocation2 + $0x30] sm:$0xff] %v2903
    %3220 = vst [vmem:[#allocation2 + $0x38] sm:$0xff] %v3190
    %3221 = vst [vmem:[#allocation2 + $0x40] sm:$0xff] %v1184
    %3222 = vst [vmem:[#allocation2 + $0x48] sm:$0xff] %v1471
    %3223 = vst [vmem:[#allocation2 + $0x50] sm:$0xff] %v1758
    %3224 = vst [vmem:[#allocation2 + $0x58] sm:$0xff] %v2045
    %3225 = vst [vmem:[#allocation2 + $0x60] sm:$0xff] %v2332
    %3226 = vst [vmem:[#allocation2 + $0x68] sm:$0xff] %v2619
    %3227 = vst [vmem:[#allocation2 + $0x70] sm:$0xff] %v2906
    %3228 = vst [vmem:[#allocation2 + $0x78] sm:$0xff] %v3193
    %3229 = vst [vmem:[#allocation2 + $0x80] sm:$0xff] %v1187
    %3230 = vst [vmem:[#allocation2 + $0x88] sm:$0xff] %v1474
    %3231 = vst [vmem:[#allocation2 + $0x90] sm:$0xff] %v1761
    %3232 = vst [vmem:[#allocation2 + $0x98] sm:$0xff] %v2048
    %3233 = vst [vmem:[#allocation2 + $0xa0] sm:$0xff] %v2335
    %3234 = vst [vmem:[#allocation2 + $0xa8] sm:$0xff] %v2622
    %3235 = vst [vmem:[#allocation2 + $0xb0] sm:$0xff] %v2909
    %3236 = vst [vmem:[#allocation2 + $0xb8] sm:$0xff] %v3196
    %3237 = vst [vmem:[#allocation2 + $0xc0] sm:$0xff] %v1190
    %3238 = vst [vmem:[#allocation2 + $0xc8] sm:$0xff] %v1477
    %3239 = vst [vmem:[#allocation2 + $0xd0] sm:$0xff] %v1764
    %3240 = vst [vmem:[#allocation2 + $0xd8] sm:$0xff] %v2051
    %3241 = vst [vmem:[#allocation2 + $0xe0] sm:$0xff] %v2338
    %3242 = vst [vmem:[#allocation2 + $0xe8] sm:$0xff] %v2625
    %3243 = vst [vmem:[#allocation2 + $0xf0] sm:$0xff] %v2912
    %3244 = vst [vmem:[#allocation2 + $0xf8] sm:$0xff] %v3199
    %3245 = vst [vmem:[#allocation2 + $0x100] sm:$0xff] %v1193
    %3246 = vst [vmem:[#allocation2 + $0x108] sm:$0xff] %v1480
    %3247 = vst [vmem:[#allocation2 + $0x110] sm:$0xff] %v1767
    %3248 = vst [vmem:[#allocation2 + $0x118] sm:$0xff] %v2054
    %3249 = vst [vmem:[#allocation2 + $0x120] sm:$0xff] %v2341
    %3250 = vst [vmem:[#allocation2 + $0x128] sm:$0xff] %v2628
    %3251 = vst [vmem:[#allocation2 + $0x130] sm:$0xff] %v2915
    %3252 = vst [vmem:[#allocation2 + $0x138] sm:$0xff] %v3202
    %3253 = vst [vmem:[#allocation2 + $0x140] sm:$0xff] %v1196
    %3254 = vst [vmem:[#allocation2 + $0x148] sm:$0xff] %v1483
    %3255 = vst [vmem:[#allocation2 + $0x150] sm:$0xff] %v1770
    %3256 = vst [vmem:[#allocation2 + $0x158] sm:$0xff] %v2057
    %3257 = vst [vmem:[#allocation2 + $0x160] sm:$0xff] %v2344
    %3258 = vst [vmem:[#allocation2 + $0x168] sm:$0xff] %v2631
    %3259 = vst [vmem:[#allocation2 + $0x170] sm:$0xff] %v2918
    %3260 = vst [vmem:[#allocation2 + $0x178] sm:$0xff] %v3205
    %3261 = vst [vmem:[#allocation2 + $0x180] sm:$0xff] %v1199
    %3262 = vst [vmem:[#allocation2 + $0x188] sm:$0xff] %v1486
    %3263 = vst [vmem:[#allocation2 + $0x190] sm:$0xff] %v1773
    %3264 = vst [vmem:[#allocation2 + $0x198] sm:$0xff] %v2060
    %3265 = vst [vmem:[#allocation2 + $0x1a0] sm:$0xff] %v2347
    %3266 = vst [vmem:[#allocation2 + $0x1a8] sm:$0xff] %v2634
    %3267 = vst [vmem:[#allocation2 + $0x1b0] sm:$0xff] %v2921
    %3268 = vst [vmem:[#allocation2 + $0x1b8] sm:$0xff] %v3208
    %3269 = vst [vmem:[#allocation2 + $0x1c0] sm:$0xff] %v1202
    %3270 = vst [vmem:[#allocation2 + $0x1c8] sm:$0xff] %v1489
    %3271 = vst [vmem:[#allocation2 + $0x1d0] sm:$0xff] %v1776
    %3272 = vst [vmem:[#allocation2 + $0x1d8] sm:$0xff] %v2063
    %3273 = vst [vmem:[#allocation2 + $0x1e0] sm:$0xff] %v2350
    %3274 = vst [vmem:[#allocation2 + $0x1e8] sm:$0xff] %v2637
    %3275 = vst [vmem:[#allocation2 + $0x1f0] sm:$0xff] %v2924
    %3276 = vst [vmem:[#allocation2 + $0x1f8] sm:$0xff] %v3211
    %v3277 = vld [vmem:[#allocation3] sm:$0xff]
    %v3278 = vld [vmem:[#allocation3 + $0x8] sm:$0xff]
    %v3279 = vld [vmem:[#allocation3 + $0x10] sm:$0xff]
    %v3280 = vld [vmem:[#allocation3 + $0x18] sm:$0xff]
    %v3281 = vld [vmem:[#allocation3 + $0x20] sm:$0xff]
    %v3282 = vld [vmem:[#allocation3 + $0x28] sm:$0xff]
    %v3283 = vld [vmem:[#allocation3 + $0x30] sm:$0xff]
    %v3284 = vld [vmem:[#allocation3 + $0x38] sm:$0xff]
    %v3285 = vld [vmem:[#allocation2] sm:$0xff]
    %v3286 = vld [vmem:[#allocation2 + $0x8] sm:$0xff]
    %v3287 = vld [vmem:[#allocation2 + $0x10] sm:$0xff]
    %v3288 = vld [vmem:[#allocation2 + $0x18] sm:$0xff]
    %v3289 = vld [vmem:[#allocation2 + $0x20] sm:$0xff]
    %v3290 = vld [vmem:[#allocation2 + $0x28] sm:$0xff]
    %v3291 = vld [vmem:[#allocation2 + $0x30] sm:$0xff]
    %v3292 = vld [vmem:[#allocation2 + $0x38] sm:$0xff]
    %v3293 = vld [vmem:[#allocation2 + $0x40] sm:$0xff]
    %v3294 = vld [vmem:[#allocation2 + $0x48] sm:$0xff]
    %v3295 = vld [vmem:[#allocation2 + $0x50] sm:$0xff]
    %v3296 = vld [vmem:[#allocation2 + $0x58] sm:$0xff]
    %v3297 = vld [vmem:[#allocation2 + $0x60] sm:$0xff]
    %v3298 = vld [vmem:[#allocation2 + $0x68] sm:$0xff]
    %v3299 = vld [vmem:[#allocation2 + $0x70] sm:$0xff]
    %v3300 = vld [vmem:[#allocation2 + $0x78] sm:$0xff]
    %v3301 = vld [vmem:[#allocation2 + $0x80] sm:$0xff]
    %v3302 = vld [vmem:[#allocation2 + $0x88] sm:$0xff]
    %v3303 = vld [vmem:[#allocation2 + $0x90] sm:$0xff]
    %v3304 = vld [vmem:[#allocation2 + $0x98] sm:$0xff]
    %v3305 = vld [vmem:[#allocation2 + $0xa0] sm:$0xff]
    %v3306 = vld [vmem:[#allocation2 + $0xa8] sm:$0xff]
    %v3307 = vld [vmem:[#allocation2 + $0xb0] sm:$0xff]
    %v3308 = vld [vmem:[#allocation2 + $0xb8] sm:$0xff]
    %v3309 = vld [vmem:[#allocation2 + $0xc0] sm:$0xff]
    %v3310 = vld [vmem:[#allocation2 + $0xc8] sm:$0xff]
    %v3311 = vld [vmem:[#allocation2 + $0xd0] sm:$0xff]
    %v3312 = vld [vmem:[#allocation2 + $0xd8] sm:$0xff]
    %v3313 = vld [vmem:[#allocation2 + $0xe0] sm:$0xff]
    %v3314 = vld [vmem:[#allocation2 + $0xe8] sm:$0xff]
    %v3315 = vld [vmem:[#allocation2 + $0xf0] sm:$0xff]
    %v3316 = vld [vmem:[#allocation2 + $0xf8] sm:$0xff]
    %v3317 = vld [vmem:[#allocation2 + $0x100] sm:$0xff]
    %v3318 = vld [vmem:[#allocation2 + $0x108] sm:$0xff]
    %v3319 = vld [vmem:[#allocation2 + $0x110] sm:$0xff]
    %v3320 = vld [vmem:[#allocation2 + $0x118] sm:$0xff]
    %v3321 = vld [vmem:[#allocation2 + $0x120] sm:$0xff]
    %v3322 = vld [vmem:[#allocation2 + $0x128] sm:$0xff]
    %v3323 = vld [vmem:[#allocation2 + $0x130] sm:$0xff]
    %v3324 = vld [vmem:[#allocation2 + $0x138] sm:$0xff]
    %v3325 = vld [vmem:[#allocation2 + $0x140] sm:$0xff]
    %v3326 = vld [vmem:[#allocation2 + $0x148] sm:$0xff]
    %v3327 = vld [vmem:[#allocation2 + $0x150] sm:$0xff]
    %v3328 = vld [vmem:[#allocation2 + $0x158] sm:$0xff]
    %v3329 = vld [vmem:[#allocation2 + $0x160] sm:$0xff]
    %v3330 = vld [vmem:[#allocation2 + $0x168] sm:$0xff]
    %v3331 = vld [vmem:[#allocation2 + $0x170] sm:$0xff]
    %v3332 = vld [vmem:[#allocation2 + $0x178] sm:$0xff]
    %v3333 = vld [vmem:[#allocation2 + $0x180] sm:$0xff]
    %v3334 = vld [vmem:[#allocation2 + $0x188] sm:$0xff]
    %v3335 = vld [vmem:[#allocation2 + $0x190] sm:$0xff]
    %v3336 = vld [vmem:[#allocation2 + $0x198] sm:$0xff]
    %v3337 = vld [vmem:[#allocation2 + $0x1a0] sm:$0xff]
    %v3338 = vld [vmem:[#allocation2 + $0x1a8] sm:$0xff]
    %v3339 = vld [vmem:[#allocation2 + $0x1b0] sm:$0xff]
    %v3340 = vld [vmem:[#allocation2 + $0x1b8] sm:$0xff]
    %v3341 = vld [vmem:[#allocation2 + $0x1c0] sm:$0xff]
    %v3342 = vld [vmem:[#allocation2 + $0x1c8] sm:$0xff]
    %v3343 = vld [vmem:[#allocation2 + $0x1d0] sm:$0xff]
    %v3344 = vld [vmem:[#allocation2 + $0x1d8] sm:$0xff]
    %v3345 = vld [vmem:[#allocation2 + $0x1e0] sm:$0xff]
    %v3346 = vld [vmem:[#allocation2 + $0x1e8] sm:$0xff]
    %v3347 = vld [vmem:[#allocation2 + $0x1f0] sm:$0xff]
    %v3348 = vld [vmem:[#allocation2 + $0x1f8] sm:$0xff]
    %vm3349 = vcmask 523264
    %v3351 = vsel %vm3349, %v3277, 0
    %v3354 = vsel %vm3349, %v3278, 0
    %v3357 = vsel %vm3349, %v3279, 0
    %v3360 = vsel %vm3349, %v3280, 0
    %v3363 = vsel %vm3349, %v3281, 0
    %v3366 = vsel %vm3349, %v3282, 0
    %v3369 = vsel %vm3349, %v3283, 0
    %v3372 = vsel %vm3349, %v3284, 0
    %3374 = vmatpush.msra.mxu0 0.0
    %3375 = vmatpush.msra.mxu0 0.0
    %3376 = vmatpush.msra.mxu0 0.0
    %3377 = vmatpush.msra.mxu0 0.0
    %3378 = vmatpush.msra.mxu0 0.0
    %3379 = vmatpush.msra.mxu0 0.0
    %3380 = vmatpush.msra.mxu0 0.0
    %3381 = vmatpush.msra.mxu0 0.0
    %3382 = vmatpush.msra.mxu0 %v3341
    %3383 = vmatpush.msra.mxu0 %v3333
    %3384 = vmatpush.msra.mxu0 %v3325
    %3385 = vmatpush.msra.mxu0 %v3317
    %3386 = vmatpush.msra.mxu0 %v3309
    %3387 = vmatpush.msra.mxu0 %v3301
    %3388 = vmatpush.msra.mxu0 %v3293
    %3389 = vmatpush.msra.mxu0 %v3285
    %3390 = vmatmul.f32.gmra.mxu0 %v3351
    %v3391 = vpop.f32.mrf.mxu0
    %v3392 = vadd.f32 0.0, %v3391
    %3393 = vmatmul.f32.gmra.mxu0 %v3354
    %v3394 = vpop.f32.mrf.mxu0
    %v3395 = vadd.f32 0.0, %v3394
    %3396 = vmatmul.f32.gmra.mxu0 %v3357
    %v3397 = vpop.f32.mrf.mxu0
    %v3398 = vadd.f32 0.0, %v3397
    %3399 = vmatmul.f32.gmra.mxu0 %v3360
    %v3400 = vpop.f32.mrf.mxu0
    %v3401 = vadd.f32 0.0, %v3400
    %3402 = vmatmul.f32.gmra.mxu0 %v3363
    %v3403 = vpop.f32.mrf.mxu0
    %v3404 = vadd.f32 0.0, %v3403
    %3405 = vmatmul.f32.gmra.mxu0 %v3366
    %v3406 = vpop.f32.mrf.mxu0
    %v3407 = vadd.f32 0.0, %v3406
    %3408 = vmatmul.f32.gmra.mxu0 %v3369
    %v3409 = vpop.f32.mrf.mxu0
    %v3410 = vadd.f32 0.0, %v3409
    %3411 = vmatmul.f32.gmra.mxu0 %v3372
    %v3412 = vpop.f32.mrf.mxu0
    %v3413 = vadd.f32 0.0, %v3412
    %3414 = vdwg.mxu0
    %3415 = vmatpush.msra.mxu0 0.0
    %3416 = vmatpush.msra.mxu0 0.0
    %3417 = vmatpush.msra.mxu0 0.0
    %3418 = vmatpush.msra.mxu0 0.0
    %3419 = vmatpush.msra.mxu0 0.0
    %3420 = vmatpush.msra.mxu0 0.0
    %3421 = vmatpush.msra.mxu0 0.0
    %3422 = vmatpush.msra.mxu0 0.0
    %3423 = vmatpush.msra.mxu0 %v3342
    %3424 = vmatpush.msra.mxu0 %v3334
    %3425 = vmatpush.msra.mxu0 %v3326
    %3426 = vmatpush.msra.mxu0 %v3318
    %3427 = vmatpush.msra.mxu0 %v3310
    %3428 = vmatpush.msra.mxu0 %v3302
    %3429 = vmatpush.msra.mxu0 %v3294
    %3430 = vmatpush.msra.mxu0 %v3286
    %3431 = vmatmul.f32.gmra.mxu0 %v3351
    %v3432 = vpop.f32.mrf.mxu0
    %v3433 = vadd.f32 0.0, %v3432
    %3434 = vmatmul.f32.gmra.mxu0 %v3354
    %v3435 = vpop.f32.mrf.mxu0
    %v3436 = vadd.f32 0.0, %v3435
    %3437 = vmatmul.f32.gmra.mxu0 %v3357
    %v3438 = vpop.f32.mrf.mxu0
    %v3439 = vadd.f32 0.0, %v3438
    %3440 = vmatmul.f32.gmra.mxu0 %v3360
    %v3441 = vpop.f32.mrf.mxu0
    %v3442 = vadd.f32 0.0, %v3441
    %3443 = vmatmul.f32.gmra.mxu0 %v3363
    %v3444 = vpop.f32.mrf.mxu0
    %v3445 = vadd.f32 0.0, %v3444
    %3446 = vmatmul.f32.gmra.mxu0 %v3366
    %v3447 = vpop.f32.mrf.mxu0
    %v3448 = vadd.f32 0.0, %v3447
    %3449 = vmatmul.f32.gmra.mxu0 %v3369
    %v3450 = vpop.f32.mrf.mxu0
    %v3451 = vadd.f32 0.0, %v3450
    %3452 = vmatmul.f32.gmra.mxu0 %v3372
    %v3453 = vpop.f32.mrf.mxu0
    %v3454 = vadd.f32 0.0, %v3453
    %3455 = vdwg.mxu0
    %3456 = vmatpush.msra.mxu0 0.0
    %3457 = vmatpush.msra.mxu0 0.0
    %3458 = vmatpush.msra.mxu0 0.0
    %3459 = vmatpush.msra.mxu0 0.0
    %3460 = vmatpush.msra.mxu0 0.0
    %3461 = vmatpush.msra.mxu0 0.0
    %3462 = vmatpush.msra.mxu0 0.0
    %3463 = vmatpush.msra.mxu0 0.0
    %3464 = vmatpush.msra.mxu0 %v3343
    %3465 = vmatpush.msra.mxu0 %v3335
    %3466 = vmatpush.msra.mxu0 %v3327
    %3467 = vmatpush.msra.mxu0 %v3319
    %3468 = vmatpush.msra.mxu0 %v3311
    %3469 = vmatpush.msra.mxu0 %v3303
    %3470 = vmatpush.msra.mxu0 %v3295
    %3471 = vmatpush.msra.mxu0 %v3287
    %3472 = vmatmul.f32.gmra.mxu0 %v3351
    %v3473 = vpop.f32.mrf.mxu0
    %v3474 = vadd.f32 0.0, %v3473
    %3475 = vmatmul.f32.gmra.mxu0 %v3354
    %v3476 = vpop.f32.mrf.mxu0
    %v3477 = vadd.f32 0.0, %v3476
    %3478 = vmatmul.f32.gmra.mxu0 %v3357
    %v3479 = vpop.f32.mrf.mxu0
    %v3480 = vadd.f32 0.0, %v3479
    %3481 = vmatmul.f32.gmra.mxu0 %v3360
    %v3482 = vpop.f32.mrf.mxu0
    %v3483 = vadd.f32 0.0, %v3482
    %3484 = vmatmul.f32.gmra.mxu0 %v3363
    %v3485 = vpop.f32.mrf.mxu0
    %v3486 = vadd.f32 0.0, %v3485
    %3487 = vmatmul.f32.gmra.mxu0 %v3366
    %v3488 = vpop.f32.mrf.mxu0
    %v3489 = vadd.f32 0.0, %v3488
    %3490 = vmatmul.f32.gmra.mxu0 %v3369
    %v3491 = vpop.f32.mrf.mxu0
    %v3492 = vadd.f32 0.0, %v3491
    %3493 = vmatmul.f32.gmra.mxu0 %v3372
    %v3494 = vpop.f32.mrf.mxu0
    %v3495 = vadd.f32 0.0, %v3494
    %3496 = vdwg.mxu0
    %3497 = vmatpush.msra.mxu0 0.0
    %3498 = vmatpush.msra.mxu0 0.0
    %3499 = vmatpush.msra.mxu0 0.0
    %3500 = vmatpush.msra.mxu0 0.0
    %3501 = vmatpush.msra.mxu0 0.0
    %3502 = vmatpush.msra.mxu0 0.0
    %3503 = vmatpush.msra.mxu0 0.0
    %3504 = vmatpush.msra.mxu0 0.0
    %3505 = vmatpush.msra.mxu0 %v3344
    %3506 = vmatpush.msra.mxu0 %v3336
    %3507 = vmatpush.msra.mxu0 %v3328
    %3508 = vmatpush.msra.mxu0 %v3320
    %3509 = vmatpush.msra.mxu0 %v3312
    %3510 = vmatpush.msra.mxu0 %v3304
    %3511 = vmatpush.msra.mxu0 %v3296
    %3512 = vmatpush.msra.mxu0 %v3288
    %3513 = vmatmul.f32.gmra.mxu0 %v3351
    %v3514 = vpop.f32.mrf.mxu0
    %v3515 = vadd.f32 0.0, %v3514
    %3516 = vmatmul.f32.gmra.mxu0 %v3354
    %v3517 = vpop.f32.mrf.mxu0
    %v3518 = vadd.f32 0.0, %v3517
    %3519 = vmatmul.f32.gmra.mxu0 %v3357
    %v3520 = vpop.f32.mrf.mxu0
    %v3521 = vadd.f32 0.0, %v3520
    %3522 = vmatmul.f32.gmra.mxu0 %v3360
    %v3523 = vpop.f32.mrf.mxu0
    %v3524 = vadd.f32 0.0, %v3523
    %3525 = vmatmul.f32.gmra.mxu0 %v3363
    %v3526 = vpop.f32.mrf.mxu0
    %v3527 = vadd.f32 0.0, %v3526
    %3528 = vmatmul.f32.gmra.mxu0 %v3366
    %v3529 = vpop.f32.mrf.mxu0
    %v3530 = vadd.f32 0.0, %v3529
    %3531 = vmatmul.f32.gmra.mxu0 %v3369
    %v3532 = vpop.f32.mrf.mxu0
    %v3533 = vadd.f32 0.0, %v3532
    %3534 = vmatmul.f32.gmra.mxu0 %v3372
    %v3535 = vpop.f32.mrf.mxu0
    %v3536 = vadd.f32 0.0, %v3535
    %3537 = vdwg.mxu0
    %3538 = vmatpush.msra.mxu0 0.0
    %3539 = vmatpush.msra.mxu0 0.0
    %3540 = vmatpush.msra.mxu0 0.0
    %3541 = vmatpush.msra.mxu0 0.0
    %3542 = vmatpush.msra.mxu0 0.0
    %3543 = vmatpush.msra.mxu0 0.0
    %3544 = vmatpush.msra.mxu0 0.0
    %3545 = vmatpush.msra.mxu0 0.0
    %3546 = vmatpush.msra.mxu0 %v3345
    %3547 = vmatpush.msra.mxu0 %v3337
    %3548 = vmatpush.msra.mxu0 %v3329
    %3549 = vmatpush.msra.mxu0 %v3321
    %3550 = vmatpush.msra.mxu0 %v3313
    %3551 = vmatpush.msra.mxu0 %v3305
    %3552 = vmatpush.msra.mxu0 %v3297
    %3553 = vmatpush.msra.mxu0 %v3289
    %3554 = vmatmul.f32.gmra.mxu0 %v3351
    %v3555 = vpop.f32.mrf.mxu0
    %v3556 = vadd.f32 0.0, %v3555
    %3557 = vmatmul.f32.gmra.mxu0 %v3354
    %v3558 = vpop.f32.mrf.mxu0
    %v3559 = vadd.f32 0.0, %v3558
    %3560 = vmatmul.f32.gmra.mxu0 %v3357
    %v3561 = vpop.f32.mrf.mxu0
    %v3562 = vadd.f32 0.0, %v3561
    %3563 = vmatmul.f32.gmra.mxu0 %v3360
    %v3564 = vpop.f32.mrf.mxu0
    %v3565 = vadd.f32 0.0, %v3564
    %3566 = vmatmul.f32.gmra.mxu0 %v3363
    %v3567 = vpop.f32.mrf.mxu0
    %v3568 = vadd.f32 0.0, %v3567
    %3569 = vmatmul.f32.gmra.mxu0 %v3366
    %v3570 = vpop.f32.mrf.mxu0
    %v3571 = vadd.f32 0.0, %v3570
    %3572 = vmatmul.f32.gmra.mxu0 %v3369
    %v3573 = vpop.f32.mrf.mxu0
    %v3574 = vadd.f32 0.0, %v3573
    %3575 = vmatmul.f32.gmra.mxu0 %v3372
    %v3576 = vpop.f32.mrf.mxu0
    %v3577 = vadd.f32 0.0, %v3576
    %3578 = vdwg.mxu0
    %3579 = vmatpush.msra.mxu0 0.0
    %3580 = vmatpush.msra.mxu0 0.0
    %3581 = vmatpush.msra.mxu0 0.0
    %3582 = vmatpush.msra.mxu0 0.0
    %3583 = vmatpush.msra.mxu0 0.0
    %3584 = vmatpush.msra.mxu0 0.0
    %3585 = vmatpush.msra.mxu0 0.0
    %3586 = vmatpush.msra.mxu0 0.0
    %3587 = vmatpush.msra.mxu0 %v3346
    %3588 = vmatpush.msra.mxu0 %v3338
    %3589 = vmatpush.msra.mxu0 %v3330
    %3590 = vmatpush.msra.mxu0 %v3322
    %3591 = vmatpush.msra.mxu0 %v3314
    %3592 = vmatpush.msra.mxu0 %v3306
    %3593 = vmatpush.msra.mxu0 %v3298
    %3594 = vmatpush.msra.mxu0 %v3290
    %3595 = vmatmul.f32.gmra.mxu0 %v3351
    %v3596 = vpop.f32.mrf.mxu0
    %v3597 = vadd.f32 0.0, %v3596
    %3598 = vmatmul.f32.gmra.mxu0 %v3354
    %v3599 = vpop.f32.mrf.mxu0
    %v3600 = vadd.f32 0.0, %v3599
    %3601 = vmatmul.f32.gmra.mxu0 %v3357
    %v3602 = vpop.f32.mrf.mxu0
    %v3603 = vadd.f32 0.0, %v3602
    %3604 = vmatmul.f32.gmra.mxu0 %v3360
    %v3605 = vpop.f32.mrf.mxu0
    %v3606 = vadd.f32 0.0, %v3605
    %3607 = vmatmul.f32.gmra.mxu0 %v3363
    %v3608 = vpop.f32.mrf.mxu0
    %v3609 = vadd.f32 0.0, %v3608
    %3610 = vmatmul.f32.gmra.mxu0 %v3366
    %v3611 = vpop.f32.mrf.mxu0
    %v3612 = vadd.f32 0.0, %v3611
    %3613 = vmatmul.f32.gmra.mxu0 %v3369
    %v3614 = vpop.f32.mrf.mxu0
    %v3615 = vadd.f32 0.0, %v3614
    %3616 = vmatmul.f32.gmra.mxu0 %v3372
    %v3617 = vpop.f32.mrf.mxu0
    %v3618 = vadd.f32 0.0, %v3617
    %3619 = vdwg.mxu0
    %3620 = vmatpush.msra.mxu0 0.0
    %3621 = vmatpush.msra.mxu0 0.0
    %3622 = vmatpush.msra.mxu0 0.0
    %3623 = vmatpush.msra.mxu0 0.0
    %3624 = vmatpush.msra.mxu0 0.0
    %3625 = vmatpush.msra.mxu0 0.0
    %3626 = vmatpush.msra.mxu0 0.0
    %3627 = vmatpush.msra.mxu0 0.0
    %3628 = vmatpush.msra.mxu0 %v3347
    %3629 = vmatpush.msra.mxu0 %v3339
    %3630 = vmatpush.msra.mxu0 %v3331
    %3631 = vmatpush.msra.mxu0 %v3323
    %3632 = vmatpush.msra.mxu0 %v3315
    %3633 = vmatpush.msra.mxu0 %v3307
    %3634 = vmatpush.msra.mxu0 %v3299
    %3635 = vmatpush.msra.mxu0 %v3291
    %3636 = vmatmul.f32.gmra.mxu0 %v3351
    %v3637 = vpop.f32.mrf.mxu0
    %v3638 = vadd.f32 0.0, %v3637
    %3639 = vmatmul.f32.gmra.mxu0 %v3354
    %v3640 = vpop.f32.mrf.mxu0
    %v3641 = vadd.f32 0.0, %v3640
    %3642 = vmatmul.f32.gmra.mxu0 %v3357
    %v3643 = vpop.f32.mrf.mxu0
    %v3644 = vadd.f32 0.0, %v3643
    %3645 = vmatmul.f32.gmra.mxu0 %v3360
    %v3646 = vpop.f32.mrf.mxu0
    %v3647 = vadd.f32 0.0, %v3646
    %3648 = vmatmul.f32.gmra.mxu0 %v3363
    %v3649 = vpop.f32.mrf.mxu0
    %v3650 = vadd.f32 0.0, %v3649
    %3651 = vmatmul.f32.gmra.mxu0 %v3366
    %v3652 = vpop.f32.mrf.mxu0
    %v3653 = vadd.f32 0.0, %v3652
    %3654 = vmatmul.f32.gmra.mxu0 %v3369
    %v3655 = vpop.f32.mrf.mxu0
    %v3656 = vadd.f32 0.0, %v3655
    %3657 = vmatmul.f32.gmra.mxu0 %v3372
    %v3658 = vpop.f32.mrf.mxu0
    %v3659 = vadd.f32 0.0, %v3658
    %3660 = vdwg.mxu0
    %3661 = vmatpush.msra.mxu0 0.0
    %3662 = vmatpush.msra.mxu0 0.0
    %3663 = vmatpush.msra.mxu0 0.0
    %3664 = vmatpush.msra.mxu0 0.0
    %3665 = vmatpush.msra.mxu0 0.0
    %3666 = vmatpush.msra.mxu0 0.0
    %3667 = vmatpush.msra.mxu0 0.0
    %3668 = vmatpush.msra.mxu0 0.0
    %3669 = vmatpush.msra.mxu0 %v3348
    %3670 = vmatpush.msra.mxu0 %v3340
    %3671 = vmatpush.msra.mxu0 %v3332
    %3672 = vmatpush.msra.mxu0 %v3324
    %3673 = vmatpush.msra.mxu0 %v3316
    %3674 = vmatpush.msra.mxu0 %v3308
    %3675 = vmatpush.msra.mxu0 %v3300
    %3676 = vmatpush.msra.mxu0 %v3292
    %3677 = vmatmul.f32.gmra.mxu0 %v3351
    %v3678 = vpop.f32.mrf.mxu0
    %v3679 = vadd.f32 0.0, %v3678
    %3680 = vmatmul.f32.gmra.mxu0 %v3354
    %v3681 = vpop.f32.mrf.mxu0
    %v3682 = vadd.f32 0.0, %v3681
    %3683 = vmatmul.f32.gmra.mxu0 %v3357
    %v3684 = vpop.f32.mrf.mxu0
    %v3685 = vadd.f32 0.0, %v3684
    %3686 = vmatmul.f32.gmra.mxu0 %v3360
    %v3687 = vpop.f32.mrf.mxu0
    %v3688 = vadd.f32 0.0, %v3687
    %3689 = vmatmul.f32.gmra.mxu0 %v3363
    %v3690 = vpop.f32.mrf.mxu0
    %v3691 = vadd.f32 0.0, %v3690
    %3692 = vmatmul.f32.gmra.mxu0 %v3366
    %v3693 = vpop.f32.mrf.mxu0
    %v3694 = vadd.f32 0.0, %v3693
    %3695 = vmatmul.f32.gmra.mxu0 %v3369
    %v3696 = vpop.f32.mrf.mxu0
    %v3697 = vadd.f32 0.0, %v3696
    %3698 = vmatmul.f32.gmra.mxu0 %v3372
    %v3699 = vpop.f32.mrf.mxu0
    %v3700 = vadd.f32 0.0, %v3699
    %3701 = vdwg.mxu0
    %v3702 = vld [vmem:[%s3] sm:$0xff]
    %v3704 = vperm.slane %v3702, 0
    %v3705 = vperm.slane %v3702, 1
    %v3706 = vperm.slane %v3702, 2
    %v3707 = vperm.slane %v3702, 3
    %v3708 = vperm.slane %v3702, 4
    %v3709 = vperm.slane %v3702, 5
    %v3710 = vperm.slane %v3702, 6
    %v3711 = vperm.slane %v3702, 7
    %v3720 = vmul.f32 %v3392, %v3704
    %v3721 = vmul.f32 %v3433, %v3705
    %v3722 = vmul.f32 %v3474, %v3706
    %v3723 = vmul.f32 %v3515, %v3707
    %v3724 = vmul.f32 %v3556, %v3708
    %v3725 = vmul.f32 %v3597, %v3709
    %v3726 = vmul.f32 %v3638, %v3710
    %v3727 = vmul.f32 %v3679, %v3711
    %v3728 = vmul.f32 %v3395, %v3704
    %v3729 = vmul.f32 %v3436, %v3705
    %v3730 = vmul.f32 %v3477, %v3706
    %v3731 = vmul.f32 %v3518, %v3707
    %v3732 = vmul.f32 %v3559, %v3708
    %v3733 = vmul.f32 %v3600, %v3709
    %v3734 = vmul.f32 %v3641, %v3710
    %v3735 = vmul.f32 %v3682, %v3711
    %v3736 = vmul.f32 %v3398, %v3704
    %v3737 = vmul.f32 %v3439, %v3705
    %v3738 = vmul.f32 %v3480, %v3706
    %v3739 = vmul.f32 %v3521, %v3707
    %v3740 = vmul.f32 %v3562, %v3708
    %v3741 = vmul.f32 %v3603, %v3709
    %v3742 = vmul.f32 %v3644, %v3710
    %v3743 = vmul.f32 %v3685, %v3711
    %v3744 = vmul.f32 %v3401, %v3704
    %v3745 = vmul.f32 %v3442, %v3705
    %v3746 = vmul.f32 %v3483, %v3706
    %v3747 = vmul.f32 %v3524, %v3707
    %v3748 = vmul.f32 %v3565, %v3708
    %v3749 = vmul.f32 %v3606, %v3709
    %v3750 = vmul.f32 %v3647, %v3710
    %v3751 = vmul.f32 %v3688, %v3711
    %v3752 = vmul.f32 %v3404, %v3704
    %v3753 = vmul.f32 %v3445, %v3705
    %v3754 = vmul.f32 %v3486, %v3706
    %v3755 = vmul.f32 %v3527, %v3707
    %v3756 = vmul.f32 %v3568, %v3708
    %v3757 = vmul.f32 %v3609, %v3709
    %v3758 = vmul.f32 %v3650, %v3710
    %v3759 = vmul.f32 %v3691, %v3711
    %v3760 = vmul.f32 %v3407, %v3704
    %v3761 = vmul.f32 %v3448, %v3705
    %v3762 = vmul.f32 %v3489, %v3706
    %v3763 = vmul.f32 %v3530, %v3707
    %v3764 = vmul.f32 %v3571, %v3708
    %v3765 = vmul.f32 %v3612, %v3709
    %v3766 = vmul.f32 %v3653, %v3710
    %v3767 = vmul.f32 %v3694, %v3711
    %v3768 = vmul.f32 %v3410, %v3704
    %v3769 = vmul.f32 %v3451, %v3705
    %v3770 = vmul.f32 %v3492, %v3706
    %v3771 = vmul.f32 %v3533, %v3707
    %v3772 = vmul.f32 %v3574, %v3708
    %v3773 = vmul.f32 %v3615, %v3709
    %v3774 = vmul.f32 %v3656, %v3710
    %v3775 = vmul.f32 %v3697, %v3711
    %v3776 = vmul.f32 %v3413, %v3704
    %v3777 = vmul.f32 %v3454, %v3705
    %v3778 = vmul.f32 %v3495, %v3706
    %v3779 = vmul.f32 %v3536, %v3707
    %v3780 = vmul.f32 %v3577, %v3708
    %v3781 = vmul.f32 %v3618, %v3709
    %v3782 = vmul.f32 %v3659, %v3710
    %v3783 = vmul.f32 %v3700, %v3711
    %v3784 = vld [vmem:[%s4] sm:$0xff]
    %v3786 = vperm.slane %v3784, 0
    %v3787 = vperm.slane %v3784, 1
    %v3788 = vperm.slane %v3784, 2
    %v3789 = vperm.slane %v3784, 3
    %v3790 = vperm.slane %v3784, 4
    %v3791 = vperm.slane %v3784, 5
    %v3792 = vperm.slane %v3784, 6
    %v3793 = vperm.slane %v3784, 7
    %v3802 = vadd.f32 %v3720, %v3786
    %v3803 = vadd.f32 %v3721, %v3787
    %v3804 = vadd.f32 %v3722, %v3788
    %v3805 = vadd.f32 %v3723, %v3789
    %v3806 = vadd.f32 %v3724, %v3790
    %v3807 = vadd.f32 %v3725, %v3791
    %v3808 = vadd.f32 %v3726, %v3792
    %v3809 = vadd.f32 %v3727, %v3793
    %v3810 = vadd.f32 %v3728, %v3786
    %v3811 = vadd.f32 %v3729, %v3787
    %v3812 = vadd.f32 %v3730, %v3788
    %v3813 = vadd.f32 %v3731, %v3789
    %v3814 = vadd.f32 %v3732, %v3790
    %v3815 = vadd.f32 %v3733, %v3791
    %v3816 = vadd.f32 %v3734, %v3792
    %v3817 = vadd.f32 %v3735, %v3793
    %v3818 = vadd.f32 %v3736, %v3786
    %v3819 = vadd.f32 %v3737, %v3787
    %v3820 = vadd.f32 %v3738, %v3788
    %v3821 = vadd.f32 %v3739, %v3789
    %v3822 = vadd.f32 %v3740, %v3790
    %v3823 = vadd.f32 %v3741, %v3791
    %v3824 = vadd.f32 %v3742, %v3792
    %v3825 = vadd.f32 %v3743, %v3793
    %v3826 = vadd.f32 %v3744, %v3786
    %v3827 = vadd.f32 %v3745, %v3787
    %v3828 = vadd.f32 %v3746, %v3788
    %v3829 = vadd.f32 %v3747, %v3789
    %v3830 = vadd.f32 %v3748, %v3790
    %v3831 = vadd.f32 %v3749, %v3791
    %v3832 = vadd.f32 %v3750, %v3792
    %v3833 = vadd.f32 %v3751, %v3793
    %v3834 = vadd.f32 %v3752, %v3786
    %v3835 = vadd.f32 %v3753, %v3787
    %v3836 = vadd.f32 %v3754, %v3788
    %v3837 = vadd.f32 %v3755, %v3789
    %v3838 = vadd.f32 %v3756, %v3790
    %v3839 = vadd.f32 %v3757, %v3791
    %v3840 = vadd.f32 %v3758, %v3792
    %v3841 = vadd.f32 %v3759, %v3793
    %v3842 = vadd.f32 %v3760, %v3786
    %v3843 = vadd.f32 %v3761, %v3787
    %v3844 = vadd.f32 %v3762, %v3788
    %v3845 = vadd.f32 %v3763, %v3789
    %v3846 = vadd.f32 %v3764, %v3790
    %v3847 = vadd.f32 %v3765, %v3791
    %v3848 = vadd.f32 %v3766, %v3792
    %v3849 = vadd.f32 %v3767, %v3793
    %v3850 = vadd.f32 %v3768, %v3786
    %v3851 = vadd.f32 %v3769, %v3787
    %v3852 = vadd.f32 %v3770, %v3788
    %v3853 = vadd.f32 %v3771, %v3789
    %v3854 = vadd.f32 %v3772, %v3790
    %v3855 = vadd.f32 %v3773, %v3791
    %v3856 = vadd.f32 %v3774, %v3792
    %v3857 = vadd.f32 %v3775, %v3793
    %v3858 = vadd.f32 %v3776, %v3786
    %v3859 = vadd.f32 %v3777, %v3787
    %v3860 = vadd.f32 %v3778, %v3788
    %v3861 = vadd.f32 %v3779, %v3789
    %v3862 = vadd.f32 %v3780, %v3790
    %v3863 = vadd.f32 %v3781, %v3791
    %v3864 = vadd.f32 %v3782, %v3792
    %v3865 = vadd.f32 %v3783, %v3793
    %v3866 = vmax.f32 %v3802, 0.0
    %v3867 = vmax.f32 %v3803, 0.0
    %v3868 = vmax.f32 %v3804, 0.0
    %v3869 = vmax.f32 %v3805, 0.0
    %v3870 = vmax.f32 %v3806, 0.0
    %v3871 = vmax.f32 %v3807, 0.0
    %v3872 = vmax.f32 %v3808, 0.0
    %v3873 = vmax.f32 %v3809, 0.0
    %v3874 = vmax.f32 %v3810, 0.0
    %v3875 = vmax.f32 %v3811, 0.0
    %v3876 = vmax.f32 %v3812, 0.0
    %v3877 = vmax.f32 %v3813, 0.0
    %v3878 = vmax.f32 %v3814, 0.0
    %v3879 = vmax.f32 %v3815, 0.0
    %v3880 = vmax.f32 %v3816, 0.0
    %v3881 = vmax.f32 %v3817, 0.0
    %v3882 = vmax.f32 %v3818, 0.0
    %v3883 = vmax.f32 %v3819, 0.0
    %v3884 = vmax.f32 %v3820, 0.0
    %v3885 = vmax.f32 %v3821, 0.0
    %v3886 = vmax.f32 %v3822, 0.0
    %v3887 = vmax.f32 %v3823, 0.0
    %v3888 = vmax.f32 %v3824, 0.0
    %v3889 = vmax.f32 %v3825, 0.0
    %v3890 = vmax.f32 %v3826, 0.0
    %v3891 = vmax.f32 %v3827, 0.0
    %v3892 = vmax.f32 %v3828, 0.0
    %v3893 = vmax.f32 %v3829, 0.0
    %v3894 = vmax.f32 %v3830, 0.0
    %v3895 = vmax.f32 %v3831, 0.0
    %v3896 = vmax.f32 %v3832, 0.0
    %v3897 = vmax.f32 %v3833, 0.0
    %v3898 = vmax.f32 %v3834, 0.0
    %v3899 = vmax.f32 %v3835, 0.0
    %v3900 = vmax.f32 %v3836, 0.0
    %v3901 = vmax.f32 %v3837, 0.0
    %v3902 = vmax.f32 %v3838, 0.0
    %v3903 = vmax.f32 %v3839, 0.0
    %v3904 = vmax.f32 %v3840, 0.0
    %v3905 = vmax.f32 %v3841, 0.0
    %v3906 = vmax.f32 %v3842, 0.0
    %v3907 = vmax.f32 %v3843, 0.0
    %v3908 = vmax.f32 %v3844, 0.0
    %v3909 = vmax.f32 %v3845, 0.0
    %v3910 = vmax.f32 %v3846, 0.0
    %v3911 = vmax.f32 %v3847, 0.0
    %v3912 = vmax.f32 %v3848, 0.0
    %v3913 = vmax.f32 %v3849, 0.0
    %v3914 = vmax.f32 %v3850, 0.0
    %v3915 = vmax.f32 %v3851, 0.0
    %v3916 = vmax.f32 %v3852, 0.0
    %v3917 = vmax.f32 %v3853, 0.0
    %v3918 = vmax.f32 %v3854, 0.0
    %v3919 = vmax.f32 %v3855, 0.0
    %v3920 = vmax.f32 %v3856, 0.0
    %v3921 = vmax.f32 %v3857, 0.0
    %v3922 = vmax.f32 %v3858, 0.0
    %v3923 = vmax.f32 %v3859, 0.0
    %v3924 = vmax.f32 %v3860, 0.0
    %v3925 = vmax.f32 %v3861, 0.0
    %v3926 = vmax.f32 %v3862, 0.0
    %v3927 = vmax.f32 %v3863, 0.0
    %v3928 = vmax.f32 %v3864, 0.0
    %v3929 = vmax.f32 %v3865, 0.0
    %3930 = vst [vmem:[%s5] sm:$0xff] %v3866
    %3931 = vst [vmem:[%s5 + $0x8] sm:$0xff] %v3867
    %3932 = vst [vmem:[%s5 + $0x10] sm:$0xff] %v3868
    %3933 = vst [vmem:[%s5 + $0x18] sm:$0xff] %v3869
    %3934 = vst [vmem:[%s5 + $0x20] sm:$0xff] %v3870
    %3935 = vst [vmem:[%s5 + $0x28] sm:$0xff] %v3871
    %3936 = vst [vmem:[%s5 + $0x30] sm:$0xff] %v3872
    %3937 = vst [vmem:[%s5 + $0x38] sm:$0xff] %v3873
    %3938 = vst [vmem:[%s5 + $0x40] sm:$0xff] %v3874
    %3939 = vst [vmem:[%s5 + $0x48] sm:$0xff] %v3875
    %3940 = vst [vmem:[%s5 + $0x50] sm:$0xff] %v3876
    %3941 = vst [vmem:[%s5 + $0x58] sm:$0xff] %v3877
    %3942 = vst [vmem:[%s5 + $0x60] sm:$0xff] %v3878
    %3943 = vst [vmem:[%s5 + $0x68] sm:$0xff] %v3879
    %3944 = vst [vmem:[%s5 + $0x70] sm:$0xff] %v3880
    %3945 = vst [vmem:[%s5 + $0x78] sm:$0xff] %v3881
    %3946 = vst [vmem:[%s5 + $0x80] sm:$0xff] %v3882
    %3947 = vst [vmem:[%s5 + $0x88] sm:$0xff] %v3883
    %3948 = vst [vmem:[%s5 + $0x90] sm:$0xff] %v3884
    %3949 = vst [vmem:[%s5 + $0x98] sm:$0xff] %v3885
    %3950 = vst [vmem:[%s5 + $0xa0] sm:$0xff] %v3886
    %3951 = vst [vmem:[%s5 + $0xa8] sm:$0xff] %v3887
    %3952 = vst [vmem:[%s5 + $0xb0] sm:$0xff] %v3888
    %3953 = vst [vmem:[%s5 + $0xb8] sm:$0xff] %v3889
    %3954 = vst [vmem:[%s5 + $0xc0] sm:$0xff] %v3890
    %3955 = vst [vmem:[%s5 + $0xc8] sm:$0xff] %v3891
    %3956 = vst [vmem:[%s5 + $0xd0] sm:$0xff] %v3892
    %3957 = vst [vmem:[%s5 + $0xd8] sm:$0xff] %v3893
    %3958 = vst [vmem:[%s5 + $0xe0] sm:$0xff] %v3894
    %3959 = vst [vmem:[%s5 + $0xe8] sm:$0xff] %v3895
    %3960 = vst [vmem:[%s5 + $0xf0] sm:$0xff] %v3896
    %3961 = vst [vmem:[%s5 + $0xf8] sm:$0xff] %v3897
    %3962 = vst [vmem:[%s5 + $0x100] sm:$0xff] %v3898
    %3963 = vst [vmem:[%s5 + $0x108] sm:$0xff] %v3899
    %3964 = vst [vmem:[%s5 + $0x110] sm:$0xff] %v3900
    %3965 = vst [vmem:[%s5 + $0x118] sm:$0xff] %v3901
    %3966 = vst [vmem:[%s5 + $0x120] sm:$0xff] %v3902
    %3967 = vst [vmem:[%s5 + $0x128] sm:$0xff] %v3903
    %3968 = vst [vmem:[%s5 + $0x130] sm:$0xff] %v3904
    %3969 = vst [vmem:[%s5 + $0x138] sm:$0xff] %v3905
    %3970 = vst [vmem:[%s5 + $0x140] sm:$0xff] %v3906
    %3971 = vst [vmem:[%s5 + $0x148] sm:$0xff] %v3907
    %3972 = vst [vmem:[%s5 + $0x150] sm:$0xff] %v3908
    %3973 = vst [vmem:[%s5 + $0x158] sm:$0xff] %v3909
    %3974 = vst [vmem:[%s5 + $0x160] sm:$0xff] %v3910
    %3975 = vst [vmem:[%s5 + $0x168] sm:$0xff] %v3911
    %3976 = vst [vmem:[%s5 + $0x170] sm:$0xff] %v3912
    %3977 = vst [vmem:[%s5 + $0x178] sm:$0xff] %v3913
    %3978 = vst [vmem:[%s5 + $0x180] sm:$0xff] %v3914
    %3979 = vst [vmem:[%s5 + $0x188] sm:$0xff] %v3915
    %3980 = vst [vmem:[%s5 + $0x190] sm:$0xff] %v3916
    %3981 = vst [vmem:[%s5 + $0x198] sm:$0xff] %v3917
    %3982 = vst [vmem:[%s5 + $0x1a0] sm:$0xff] %v3918
    %3983 = vst [vmem:[%s5 + $0x1a8] sm:$0xff] %v3919
    %3984 = vst [vmem:[%s5 + $0x1b0] sm:$0xff] %v3920
    %3985 = vst [vmem:[%s5 + $0x1b8] sm:$0xff] %v3921
    %3986 = vst [vmem:[%s5 + $0x1c0] sm:$0xff] %v3922
    %3987 = vst [vmem:[%s5 + $0x1c8] sm:$0xff] %v3923
    %3988 = vst [vmem:[%s5 + $0x1d0] sm:$0xff] %v3924
    %3989 = vst [vmem:[%s5 + $0x1d8] sm:$0xff] %v3925
    %3990 = vst [vmem:[%s5 + $0x1e0] sm:$0xff] %v3926
    %3991 = vst [vmem:[%s5 + $0x1e8] sm:$0xff] %v3927
    %3992 = vst [vmem:[%s5 + $0x1f0] sm:$0xff] %v3928
    %3993 = vst [vmem:[%s5 + $0x1f8] sm:$0xff] %v3929
    // Predicated region
    $region30: #{forward.8} parent=1 // pred_check
      _
    $region31: #{forward.8} parent=1 // pred_check_branch
      %3995 = sbr.rel (0) target = $region33
    $region32: #{forward.8} parent=1 // pred_region
      _
    $region33: #{forward.8} parent=1 // pred_fallthru
      _
    // Predicated region
    $region34: #{forward.8} parent=1 // pred_check
      _
    $region35: #{forward.8} parent=1 // pred_check_branch
      %3997 = sbr.rel (0) target = $region37
    $region36: #{forward.8} parent=1 // pred_region
      _
    $region37: #{forward.8} parent=1 // pred_fallthru
      _
    %3998 = vsyncpa [#allocation4], 1
    %3999 = vsyncpa [#allocation6], 1

// kernel: forward.9
$region0: #{forward.9}
  #allocation0 [shape = 'u32[]', space=smem, size = 0x4, offset = 0x4, fixed_abs, tag = 'smem constant byte address 0x4 - core index']
  #allocation1 [shape = 'u32[72,128]{1,0:T(1,128)}', space=vmem, size = 0x9000, scoped, tag = 'internal scratch']
  %s0 = inlined_call_operand.vmem [shape: f32[2,1808], index: 0, kind: input, shape index: {}]
  %s1 = inlined_call_operand.hbm [shape: f32[1808,512], index: 1, kind: input, shape index: {}]
  %s2 = inlined_call_operand.vmem [shape: f32[1,512], index: 2, kind: input, shape index: {}]
  %s3 = inlined_call_operand.vmem [shape: f32[1,512], index: 3, kind: input, shape index: {}]
  %s4 = inlined_call_operand.hbm [shape: f32[512,128], index: 4, kind: input, shape index: {}]
  %s5 = inlined_call_operand.vmem [shape: f32[1,128], index: 5, kind: input, shape index: {}]
  %s6 = inlined_call_operand.vmem [shape: f32[1,128], index: 6, kind: input, shape index: {}]
  %s7 = inlined_call_operand.vmem [shape: f32[128,10], index: 7, kind: input, shape index: {}]
  %s8 = inlined_call_operand.hbm [shape: f32[1,10], index: 8, kind: input, shape index: {}]
  %s9 = inlined_call_operand.hbm [shape: f32[2,10], index: 9, kind: output, shape index: {}]
  %s10 = sld [smem:[#allocation0]]
  $region58: #{forward.9} parent=0
    _
  %s12 = ssub.s32 1, %s10
  %s13 = scalar_select 0, %s12, %s10
  $region1: #{forward.9} parent=0
    #allocation2 [shape = 'u8[3702784]{0}', space=vmem, size = 0x388000, scoped, tag = 'input window, operand 1, single buffered']
    #allocation3 [shape = 's32[1]{0}', space=sflag, size = 0x4, scoped, tag = 'scoped memory for forward.9']
    #allocation4 [shape = 's32[1]{0}', space=sflag, size = 0x4, scoped, tag = 'scoped memory for forward.9']
    #allocation5 [shape = 'u8[262144]{0}', space=vmem, size = 0x40000, scoped, tag = 'input window, operand 4, single buffered']
    #allocation6 [shape = 's32[1]{0}', space=sflag, size = 0x4, scoped, tag = 'scoped memory for forward.9']
    #allocation7 [shape = 'u8[512]{0}', space=vmem, size = 0x400, scoped, tag = 'input window, operand 8, single buffered']
    #allocation8 [shape = 'u8[1024]{0}', space=vmem, size = 0x400, scoped, tag = 'output window, operand 0, single buffered']
    %14 = vsyncpa [#allocation3], 0
    %15 = vsyncpa [#allocation6], 0
    %16 = vsyncpa [#allocation4], 0
    // Predicated region
    $region2: #{forward.9} parent=1 // pred_check
      _
    $region3: #{forward.9} parent=1 // pred_check_branch
      %18 = sbr.rel (0) target = $region5
    $region4: #{forward.9} parent=1 // pred_region
      _
    $region5: #{forward.9} parent=1 // pred_fallthru
      _
    // Predicated region
    $region6: #{forward.9} parent=1 // pred_check
      _
    $region7: #{forward.9} parent=1 // pred_check_branch
      %20 = sbr.rel (0) target = $region9
    $region8: #{forward.9} parent=1 // pred_region
      %22 = vsyncadd [#allocation3], 0
      %s23 = sshll.u32 %s1, 4
      %s24 = int_to_ptr.hbm [resolvable:$true] %s23
      %s25 = sshll.u32 [#allocation2], 4
      %s26 = int_to_ptr.vmem [resolvable:$true] %s25
      %31 = dma.hbm_to_vmem [thread:$0]  %s24, 115712, %s26, [#allocation3], 512, 512, 32
    $region9: #{forward.9} parent=1 // pred_fallthru
      _
    // Predicated region
    $region10: #{forward.9} parent=1 // pred_check
      _
    $region11: #{forward.9} parent=1 // pred_check_branch
      %33 = sbr.rel (0) target = $region13
    $region12: #{forward.9} parent=1 // pred_region
      _
    $region13: #{forward.9} parent=1 // pred_fallthru
      _
    // Predicated region
    $region14: #{forward.9} parent=1 // pred_check
      _
    $region15: #{forward.9} parent=1 // pred_check_branch
      %35 = sbr.rel (0) target = $region17
    $region16: #{forward.9} parent=1 // pred_region
      _
    $region17: #{forward.9} parent=1 // pred_fallthru
      _
    // Predicated region
    $region18: #{forward.9} parent=1 // pred_check
      _
    $region19: #{forward.9} parent=1 // pred_check_branch
      %37 = sbr.rel (0) target = $region21
    $region20: #{forward.9} parent=1 // pred_region
      %39 = vsyncadd [#allocation6], 0
      %s40 = sshll.u32 %s4, 4
      %s41 = int_to_ptr.hbm [resolvable:$true] %s40
      %s42 = sshll.u32 [#allocation5], 4
      %s43 = int_to_ptr.vmem [resolvable:$true] %s42
      %48 = dma.hbm_to_vmem [thread:$0]  %s41, 8192, %s43, [#allocation6], 128, 128, 8
    $region21: #{forward.9} parent=1 // pred_fallthru
      _
    // Predicated region
    $region22: #{forward.9} parent=1 // pred_check
      _
    $region23: #{forward.9} parent=1 // pred_check_branch
      %50 = sbr.rel (0) target = $region25
    $region24: #{forward.9} parent=1 // pred_region
      _
    $region25: #{forward.9} parent=1 // pred_fallthru
      _
    // Predicated region
    $region26: #{forward.9} parent=1 // pred_check
      _
    $region27: #{forward.9} parent=1 // pred_check_branch
      %52 = sbr.rel (0) target = $region29
    $region28: #{forward.9} parent=1 // pred_region
      _
    $region29: #{forward.9} parent=1 // pred_fallthru
      _
    // Predicated region
    $region30: #{forward.9} parent=1 // pred_check
      _
    $region31: #{forward.9} parent=1 // pred_check_branch
      %54 = sbr.rel (0) target = $region33
    $region32: #{forward.9} parent=1 // pred_region
      _
    $region33: #{forward.9} parent=1 // pred_fallthru
      _
    // Predicated region
    $region34: #{forward.9} parent=1 // pred_check
      _
    $region35: #{forward.9} parent=1 // pred_check_branch
      %56 = sbr.rel (0) target = $region37
    $region36: #{forward.9} parent=1 // pred_region
      %58 = vsyncadd [#allocation6], 0
      %s60 = sshll.u32 %s8, 4
      %s61 = int_to_ptr.hbm [resolvable:$true] %s60
      %s62 = sshll.u32 [#allocation7], 4
      %s63 = int_to_ptr.vmem [resolvable:$true] %s62
      %65 = dma.hbm_to_vmem [thread:$0]  %s61, 16, %s63, [#allocation6]
    $region37: #{forward.9} parent=1 // pred_fallthru
      _
    // Predicated region
    $region38: #{forward.9} parent=1 // pred_check
      _
    $region39: #{forward.9} parent=1 // pred_check_branch
      %67 = sbr.rel (0) target = $region41
    $region40: #{forward.9} parent=1 // pred_region
      %69 = dma.done [#allocation3], 115712
    $region41: #{forward.9} parent=1 // pred_fallthru
      _
    // Predicated region
    $region42: #{forward.9} parent=1 // pred_check
      _
    $region43: #{forward.9} parent=1 // pred_check_branch
      %71 = sbr.rel (0) target = $region45
    $region44: #{forward.9} parent=1 // pred_region
      %73 = dma.done [#allocation6], 8192
    $region45: #{forward.9} parent=1 // pred_fallthru
      _
    // Predicated region
    $region46: #{forward.9} parent=1 // pred_check
      _
    $region47: #{forward.9} parent=1 // pred_check_branch
      %75 = sbr.rel (0) target = $region49
    $region48: #{forward.9} parent=1 // pred_region
      %77 = dma.done [#allocation6], 16
    $region49: #{forward.9} parent=1 // pred_fallthru
      _
    %v78 = vld [vmem:[%s0] sm:$0xff]
    %v79 = vld [vmem:[%s0 + $0x8] sm:$0xff]
    %v80 = vld [vmem:[%s0 + $0x10] sm:$0xff]
    %v81 = vld [vmem:[%s0 + $0x18] sm:$0x3f]
    %v82 = vld [vmem:[#allocation2] sm:$0xff]
    %v83 = vld [vmem:[#allocation2 + $0x8] sm:$0xff]
    %v84 = vld [vmem:[#allocation2 + $0x10] sm:$0xff]
    %v85 = vld [vmem:[#allocation2 + $0x18] sm:$0xff]
    %v86 = vld [vmem:[#allocation2 + $0x20] sm:$0xff]
    %v87 = vld [vmem:[#allocation2 + $0x28] sm:$0xff]
    %v88 = vld [vmem:[#allocation2 + $0x30] sm:$0xff]
    %v89 = vld [vmem:[#allocation2 + $0x38] sm:$0xff]
    %v90 = vld [vmem:[#allocation2 + $0x40] sm:$0xff]
    %v91 = vld [vmem:[#allocation2 + $0x48] sm:$0xff]
    %v92 = vld [vmem:[#allocation2 + $0x50] sm:$0xff]
    %v93 = vld [vmem:[#allocation2 + $0x58] sm:$0xff]
    %v94 = vld [vmem:[#allocation2 + $0x60] sm:$0xff]
    %v95 = vld [vmem:[#allocation2 + $0x68] sm:$0xff]
    %v96 = vld [vmem:[#allocation2 + $0x70] sm:$0xff]
    %v97 = vld [vmem:[#allocation2 + $0x78] sm:$0xff]
    %v98 = vld [vmem:[#allocation2 + $0x80] sm:$0xff]
    %v99 = vld [vmem:[#allocation2 + $0x88] sm:$0xff]
    %v100 = vld [vmem:[#allocation2 + $0x90] sm:$0xff]
    %v101 = vld [vmem:[#allocation2 + $0x98] sm:$0xff]
    %v102 = vld [vmem:[#allocation2 + $0xa0] sm:$0xff]
    %v103 = vld [vmem:[#allocation2 + $0xa8] sm:$0xff]
    %v104 = vld [vmem:[#allocation2 + $0xb0] sm:$0xff]
    %v105 = vld [vmem:[#allocation2 + $0xb8] sm:$0xff]
    %v106 = vld [vmem:[#allocation2 + $0xc0] sm:$0xff]
    %v107 = vld [vmem:[#allocation2 + $0xc8] sm:$0xff]
    %v108 = vld [vmem:[#allocation2 + $0xd0] sm:$0xff]
    %v109 = vld [vmem:[#allocation2 + $0xd8] sm:$0xff]
    %v110 = vld [vmem:[#allocation2 + $0xe0] sm:$0xff]
    %v111 = vld [vmem:[#allocation2 + $0xe8] sm:$0xff]
    %v112 = vld [vmem:[#allocation2 + $0xf0] sm:$0xff]
    %v113 = vld [vmem:[#allocation2 + $0xf8] sm:$0xff]
    %v114 = vld [vmem:[#allocation2 + $0x100] sm:$0xff]
    %v115 = vld [vmem:[#allocation2 + $0x108] sm:$0xff]
    %v116 = vld [vmem:[#allocation2 + $0x110] sm:$0xff]
    %v117 = vld [vmem:[#allocation2 + $0x118] sm:$0xff]
    %v118 = vld [vmem:[#allocation2 + $0x120] sm:$0xff]
    %v119 = vld [vmem:[#allocation2 + $0x128] sm:$0xff]
    %v120 = vld [vmem:[#allocation2 + $0x130] sm:$0xff]
    %v121 = vld [vmem:[#allocation2 + $0x138] sm:$0xff]
    %v122 = vld [vmem:[#allocation2 + $0x140] sm:$0xff]
    %v123 = vld [vmem:[#allocation2 + $0x148] sm:$0xff]
    %v124 = vld [vmem:[#allocation2 + $0x150] sm:$0xff]
    %v125 = vld [vmem:[#allocation2 + $0x158] sm:$0xff]
    %v126 = vld [vmem:[#allocation2 + $0x160] sm:$0xff]
    %v127 = vld [vmem:[#allocation2 + $0x168] sm:$0xff]
    %v128 = vld [vmem:[#allocation2 + $0x170] sm:$0xff]
    %v129 = vld [vmem:[#allocation2 + $0x178] sm:$0xff]
    %v130 = vld [vmem:[#allocation2 + $0x180] sm:$0xff]
    %v131 = vld [vmem:[#allocation2 + $0x188] sm:$0xff]
    %v132 = vld [vmem:[#allocation2 + $0x190] sm:$0xff]
    %v133 = vld [vmem:[#allocation2 + $0x198] sm:$0xff]
    %v134 = vld [vmem:[#allocation2 + $0x1a0] sm:$0xff]
    %v135 = vld [vmem:[#allocation2 + $0x1a8] sm:$0xff]
    %v136 = vld [vmem:[#allocation2 + $0x1b0] sm:$0xff]
    %v137 = vld [vmem:[#allocation2 + $0x1b8] sm:$0xff]
    %v138 = vld [vmem:[#allocation2 + $0x1c0] sm:$0xff]
    %v139 = vld [vmem:[#allocation2 + $0x1c8] sm:$0xff]
    %v140 = vld [vmem:[#allocation2 + $0x1d0] sm:$0xff]
    %v141 = vld [vmem:[#allocation2 + $0x1d8] sm:$0xff]
    %v142 = vld [vmem:[#allocation2 + $0x1e0] sm:$0xff]
    %v143 = vld [vmem:[#allocation2 + $0x1e8] sm:$0xff]
    %v144 = vld [vmem:[#allocation2 + $0x1f0] sm:$0xff]
    %v145 = vld [vmem:[#allocation2 + $0x1f8] sm:$0xff]
    %v146 = vld [vmem:[#allocation2 + $0x200] sm:$0xff]
    %v147 = vld [vmem:[#allocation2 + $0x208] sm:$0xff]
    %v148 = vld [vmem:[#allocation2 + $0x210] sm:$0xff]
    %v149 = vld [vmem:[#allocation2 + $0x218] sm:$0xff]
    %v150 = vld [vmem:[#allocation2 + $0x220] sm:$0xff]
    %v151 = vld [vmem:[#allocation2 + $0x228] sm:$0xff]
    %v152 = vld [vmem:[#allocation2 + $0x230] sm:$0xff]
    %v153 = vld [vmem:[#allocation2 + $0x238] sm:$0xff]
    %v154 = vld [vmem:[#allocation2 + $0x240] sm:$0xff]
    %v155 = vld [vmem:[#allocation2 + $0x248] sm:$0xff]
    %v156 = vld [vmem:[#allocation2 + $0x250] sm:$0xff]
    %v157 = vld [vmem:[#allocation2 + $0x258] sm:$0xff]
    %v158 = vld [vmem:[#allocation2 + $0x260] sm:$0xff]
    %v159 = vld [vmem:[#allocation2 + $0x268] sm:$0xff]
    %v160 = vld [vmem:[#allocation2 + $0x270] sm:$0xff]
    %v161 = vld [vmem:[#allocation2 + $0x278] sm:$0xff]
    %v162 = vld [vmem:[#allocation2 + $0x280] sm:$0xff]
    %v163 = vld [vmem:[#allocation2 + $0x288] sm:$0xff]
    %v164 = vld [vmem:[#allocation2 + $0x290] sm:$0xff]
    %v165 = vld [vmem:[#allocation2 + $0x298] sm:$0xff]
    %v166 = vld [vmem:[#allocation2 + $0x2a0] sm:$0xff]
    %v167 = vld [vmem:[#allocation2 + $0x2a8] sm:$0xff]
    %v168 = vld [vmem:[#allocation2 + $0x2b0] sm:$0xff]
    %v169 = vld [vmem:[#allocation2 + $0x2b8] sm:$0xff]
    %v170 = vld [vmem:[#allocation2 + $0x2c0] sm:$0xff]
    %v171 = vld [vmem:[#allocation2 + $0x2c8] sm:$0xff]
    %v172 = vld [vmem:[#allocation2 + $0x2d0] sm:$0xff]
    %v173 = vld [vmem:[#allocation2 + $0x2d8] sm:$0xff]
    %v174 = vld [vmem:[#allocation2 + $0x2e0] sm:$0xff]
    %v175 = vld [vmem:[#allocation2 + $0x2e8] sm:$0xff]
    %v176 = vld [vmem:[#allocation2 + $0x2f0] sm:$0xff]
    %v177 = vld [vmem:[#allocation2 + $0x2f8] sm:$0xff]
    %v178 = vld [vmem:[#allocation2 + $0x300] sm:$0xff]
    %v179 = vld [vmem:[#allocation2 + $0x308] sm:$0xff]
    %v180 = vld [vmem:[#allocation2 + $0x310] sm:$0xff]
    %v181 = vld [vmem:[#allocation2 + $0x318] sm:$0xff]
    %v182 = vld [vmem:[#allocation2 + $0x320] sm:$0xff]
    %v183 = vld [vmem:[#allocation2 + $0x328] sm:$0xff]
    %v184 = vld [vmem:[#allocation2 + $0x330] sm:$0xff]
    %v185 = vld [vmem:[#allocation2 + $0x338] sm:$0xff]
    %v186 = vld [vmem:[#allocation2 + $0x340] sm:$0xff]
    %v187 = vld [vmem:[#allocation2 + $0x348] sm:$0xff]
    %v188 = vld [vmem:[#allocation2 + $0x350] sm:$0xff]
    %v189 = vld [vmem:[#allocation2 + $0x358] sm:$0xff]
    %v190 = vld [vmem:[#allocation2 + $0x360] sm:$0xff]
    %v191 = vld [vmem:[#allocation2 + $0x368] sm:$0xff]
    %v192 = vld [vmem:[#allocation2 + $0x370] sm:$0xff]
    %v193 = vld [vmem:[#allocation2 + $0x378] sm:$0xff]
    %v194 = vld [vmem:[#allocation2 + $0x380] sm:$0xff]
    %v195 = vld [vmem:[#allocation2 + $0x388] sm:$0xff]
    %v196 = vld [vmem:[#allocation2 + $0x390] sm:$0xff]
    %v197 = vld [vmem:[#allocation2 + $0x398] sm:$0xff]
    %v198 = vld [vmem:[#allocation2 + $0x3a0] sm:$0xff]
    %v199 = vld [vmem:[#allocation2 + $0x3a8] sm:$0xff]
    %v200 = vld [vmem:[#allocation2 + $0x3b0] sm:$0xff]
    %v201 = vld [vmem:[#allocation2 + $0x3b8] sm:$0xff]
    %v202 = vld [vmem:[#allocation2 + $0x3c0] sm:$0xff]
    %v203 = vld [vmem:[#allocation2 + $0x3c8] sm:$0xff]
    %v204 = vld [vmem:[#allocation2 + $0x3d0] sm:$0xff]
    %v205 = vld [vmem:[#allocation2 + $0x3d8] sm:$0xff]
    %v206 = vld [vmem:[#allocation2 + $0x3e0] sm:$0xff]
    %v207 = vld [vmem:[#allocation2 + $0x3e8] sm:$0xff]
    %v208 = vld [vmem:[#allocation2 + $0x3f0] sm:$0xff]
    %v209 = vld [vmem:[#allocation2 + $0x3f8] sm:$0xff]
    %v210 = vld [vmem:[#allocation2 + $0x400] sm:$0xff]
    %v211 = vld [vmem:[#allocation2 + $0x408] sm:$0xff]
    %v212 = vld [vmem:[#allocation2 + $0x410] sm:$0xff]
    %v213 = vld [vmem:[#allocation2 + $0x418] sm:$0xff]
    %v214 = vld [vmem:[#allocation2 + $0x420] sm:$0xff]
    %v215 = vld [vmem:[#allocation2 + $0x428] sm:$0xff]
    %v216 = vld [vmem:[#allocation2 + $0x430] sm:$0xff]
    %v217 = vld [vmem:[#allocation2 + $0x438] sm:$0xff]
    %v218 = vld [vmem:[#allocation2 + $0x440] sm:$0xff]
    %v219 = vld [vmem:[#allocation2 + $0x448] sm:$0xff]
    %v220 = vld [vmem:[#allocation2 + $0x450] sm:$0xff]
    %v221 = vld [vmem:[#allocation2 + $0x458] sm:$0xff]
    %v222 = vld [vmem:[#allocation2 + $0x460] sm:$0xff]
    %v223 = vld [vmem:[#allocation2 + $0x468] sm:$0xff]
    %v224 = vld [vmem:[#allocation2 + $0x470] sm:$0xff]
    %v225 = vld [vmem:[#allocation2 + $0x478] sm:$0xff]
    %v226 = vld [vmem:[#allocation2 + $0x480] sm:$0xff]
    %v227 = vld [vmem:[#allocation2 + $0x488] sm:$0xff]
    %v228 = vld [vmem:[#allocation2 + $0x490] sm:$0xff]
    %v229 = vld [vmem:[#allocation2 + $0x498] sm:$0xff]
    %v230 = vld [vmem:[#allocation2 + $0x4a0] sm:$0xff]
    %v231 = vld [vmem:[#allocation2 + $0x4a8] sm:$0xff]
    %v232 = vld [vmem:[#allocation2 + $0x4b0] sm:$0xff]
    %v233 = vld [vmem:[#allocation2 + $0x4b8] sm:$0xff]
    %v234 = vld [vmem:[#allocation2 + $0x4c0] sm:$0xff]
    %v235 = vld [vmem:[#allocation2 + $0x4c8] sm:$0xff]
    %v236 = vld [vmem:[#allocation2 + $0x4d0] sm:$0xff]
    %v237 = vld [vmem:[#allocation2 + $0x4d8] sm:$0xff]
    %v238 = vld [vmem:[#allocation2 + $0x4e0] sm:$0xff]
    %v239 = vld [vmem:[#allocation2 + $0x4e8] sm:$0xff]
    %v240 = vld [vmem:[#allocation2 + $0x4f0] sm:$0xff]
    %v241 = vld [vmem:[#allocation2 + $0x4f8] sm:$0xff]
    %v242 = vld [vmem:[#allocation2 + $0x500] sm:$0xff]
    %v243 = vld [vmem:[#allocation2 + $0x508] sm:$0xff]
    %v244 = vld [vmem:[#allocation2 + $0x510] sm:$0xff]
    %v245 = vld [vmem:[#allocation2 + $0x518] sm:$0xff]
    %v246 = vld [vmem:[#allocation2 + $0x520] sm:$0xff]
    %v247 = vld [vmem:[#allocation2 + $0x528] sm:$0xff]
    %v248 = vld [vmem:[#allocation2 + $0x530] sm:$0xff]
    %v249 = vld [vmem:[#allocation2 + $0x538] sm:$0xff]
    %v250 = vld [vmem:[#allocation2 + $0x540] sm:$0xff]
    %v251 = vld [vmem:[#allocation2 + $0x548] sm:$0xff]
    %v252 = vld [vmem:[#allocation2 + $0x550] sm:$0xff]
    %v253 = vld [vmem:[#allocation2 + $0x558] sm:$0xff]
    %v254 = vld [vmem:[#allocation2 + $0x560] sm:$0xff]
    %v255 = vld [vmem:[#allocation2 + $0x568] sm:$0xff]
    %v256 = vld [vmem:[#allocation2 + $0x570] sm:$0xff]
    %v257 = vld [vmem:[#allocation2 + $0x578] sm:$0xff]
    %v258 = vld [vmem:[#allocation2 + $0x580] sm:$0xff]
    %v259 = vld [vmem:[#allocation2 + $0x588] sm:$0xff]
    %v260 = vld [vmem:[#allocation2 + $0x590] sm:$0xff]
    %v261 = vld [vmem:[#allocation2 + $0x598] sm:$0xff]
    %v262 = vld [vmem:[#allocation2 + $0x5a0] sm:$0xff]
    %v263 = vld [vmem:[#allocation2 + $0x5a8] sm:$0xff]
    %v264 = vld [vmem:[#allocation2 + $0x5b0] sm:$0xff]
    %v265 = vld [vmem:[#allocation2 + $0x5b8] sm:$0xff]
    %v266 = vld [vmem:[#allocation2 + $0x5c0] sm:$0xff]
    %v267 = vld [vmem:[#allocation2 + $0x5c8] sm:$0xff]
    %v268 = vld [vmem:[#allocation2 + $0x5d0] sm:$0xff]
    %v269 = vld [vmem:[#allocation2 + $0x5d8] sm:$0xff]
    %v270 = vld [vmem:[#allocation2 + $0x5e0] sm:$0xff]
    %v271 = vld [vmem:[#allocation2 + $0x5e8] sm:$0xff]
    %v272 = vld [vmem:[#allocation2 + $0x5f0] sm:$0xff]
    %v273 = vld [vmem:[#allocation2 + $0x5f8] sm:$0xff]
    %v274 = vld [vmem:[#allocation2 + $0x600] sm:$0xff]
    %v275 = vld [vmem:[#allocation2 + $0x608] sm:$0xff]
    %v276 = vld [vmem:[#allocation2 + $0x610] sm:$0xff]
    %v277 = vld [vmem:[#allocation2 + $0x618] sm:$0xff]
    %v278 = vld [vmem:[#allocation2 + $0x620] sm:$0xff]
    %v279 = vld [vmem:[#allocation2 + $0x628] sm:$0xff]
    %v280 = vld [vmem:[#allocation2 + $0x630] sm:$0xff]
    %v281 = vld [vmem:[#allocation2 + $0x638] sm:$0xff]
    %v282 = vld [vmem:[#allocation2 + $0x640] sm:$0xff]
    %v283 = vld [vmem:[#allocation2 + $0x648] sm:$0xff]
    %v284 = vld [vmem:[#allocation2 + $0x650] sm:$0xff]
    %v285 = vld [vmem:[#allocation2 + $0x658] sm:$0xff]
    %v286 = vld [vmem:[#allocation2 + $0x660] sm:$0xff]
    %v287 = vld [vmem:[#allocation2 + $0x668] sm:$0xff]
    %v288 = vld [vmem:[#allocation2 + $0x670] sm:$0xff]
    %v289 = vld [vmem:[#allocation2 + $0x678] sm:$0xff]
    %v290 = vld [vmem:[#allocation2 + $0x680] sm:$0xff]
    %v291 = vld [vmem:[#allocation2 + $0x688] sm:$0xff]
    %v292 = vld [vmem:[#allocation2 + $0x690] sm:$0xff]
    %v293 = vld [vmem:[#allocation2 + $0x698] sm:$0xff]
    %v294 = vld [vmem:[#allocation2 + $0x6a0] sm:$0xff]
    %v295 = vld [vmem:[#allocation2 + $0x6a8] sm:$0xff]
    %v296 = vld [vmem:[#allocation2 + $0x6b0] sm:$0xff]
    %v297 = vld [vmem:[#allocation2 + $0x6b8] sm:$0xff]
    %v298 = vld [vmem:[#allocation2 + $0x6c0] sm:$0xff]
    %v299 = vld [vmem:[#allocation2 + $0x6c8] sm:$0xff]
    %v300 = vld [vmem:[#allocation2 + $0x6d0] sm:$0xff]
    %v301 = vld [vmem:[#allocation2 + $0x6d8] sm:$0xff]
    %v302 = vld [vmem:[#allocation2 + $0x6e0] sm:$0xff]
    %v303 = vld [vmem:[#allocation2 + $0x6e8] sm:$0xff]
    %v304 = vld [vmem:[#allocation2 + $0x6f0] sm:$0xff]
    %v305 = vld [vmem:[#allocation2 + $0x6f8] sm:$0xff]
    %v306 = vld [vmem:[#allocation2 + $0x700] sm:$0xff]
    %v307 = vld [vmem:[#allocation2 + $0x708] sm:$0xff]
    %v308 = vld [vmem:[#allocation2 + $0x710] sm:$0xff]
    %v309 = vld [vmem:[#allocation2 + $0x718] sm:$0xff]
    %v310 = vld [vmem:[#allocation2 + $0x720] sm:$0xff]
    %v311 = vld [vmem:[#allocation2 + $0x728] sm:$0xff]
    %v312 = vld [vmem:[#allocation2 + $0x730] sm:$0xff]
    %v313 = vld [vmem:[#allocation2 + $0x738] sm:$0xff]
    %v314 = vld [vmem:[#allocation2 + $0x740] sm:$0xff]
    %v315 = vld [vmem:[#allocation2 + $0x748] sm:$0xff]
    %v316 = vld [vmem:[#allocation2 + $0x750] sm:$0xff]
    %v317 = vld [vmem:[#allocation2 + $0x758] sm:$0xff]
    %v318 = vld [vmem:[#allocation2 + $0x760] sm:$0xff]
    %v319 = vld [vmem:[#allocation2 + $0x768] sm:$0xff]
    %v320 = vld [vmem:[#allocation2 + $0x770] sm:$0xff]
    %v321 = vld [vmem:[#allocation2 + $0x778] sm:$0xff]
    %v322 = vld [vmem:[#allocation2 + $0x780] sm:$0xff]
    %v323 = vld [vmem:[#allocation2 + $0x788] sm:$0xff]
    %v324 = vld [vmem:[#allocation2 + $0x790] sm:$0xff]
    %v325 = vld [vmem:[#allocation2 + $0x798] sm:$0xff]
    %v326 = vld [vmem:[#allocation2 + $0x7a0] sm:$0xff]
    %v327 = vld [vmem:[#allocation2 + $0x7a8] sm:$0xff]
    %v328 = vld [vmem:[#allocation2 + $0x7b0] sm:$0xff]
    %v329 = vld [vmem:[#allocation2 + $0x7b8] sm:$0xff]
    %v330 = vld [vmem:[#allocation2 + $0x7c0] sm:$0xff]
    %v331 = vld [vmem:[#allocation2 + $0x7c8] sm:$0xff]
    %v332 = vld [vmem:[#allocation2 + $0x7d0] sm:$0xff]
    %v333 = vld [vmem:[#allocation2 + $0x7d8] sm:$0xff]
    %v334 = vld [vmem:[#allocation2 + $0x7e0] sm:$0xff]
    %v335 = vld [vmem:[#allocation2 + $0x7e8] sm:$0xff]
    %v336 = vld [vmem:[#allocation2 + $0x7f0] sm:$0xff]
    %v337 = vld [vmem:[#allocation2 + $0x7f8] sm:$0xff]
    %v338 = vld [vmem:[#allocation2 + $0x800] sm:$0xff]
    %v339 = vld [vmem:[#allocation2 + $0x808] sm:$0xff]
    %v340 = vld [vmem:[#allocation2 + $0x810] sm:$0xff]
    %v341 = vld [vmem:[#allocation2 + $0x818] sm:$0xff]
    %v342 = vld [vmem:[#allocation2 + $0x820] sm:$0xff]
    %v343 = vld [vmem:[#allocation2 + $0x828] sm:$0xff]
    %v344 = vld [vmem:[#allocation2 + $0x830] sm:$0xff]
    %v345 = vld [vmem:[#allocation2 + $0x838] sm:$0xff]
    %v346 = vld [vmem:[#allocation2 + $0x840] sm:$0xff]
    %v347 = vld [vmem:[#allocation2 + $0x848] sm:$0xff]
    %v348 = vld [vmem:[#allocation2 + $0x850] sm:$0xff]
    %v349 = vld [vmem:[#allocation2 + $0x858] sm:$0xff]
    %v350 = vld [vmem:[#allocation2 + $0x860] sm:$0xff]
    %v351 = vld [vmem:[#allocation2 + $0x868] sm:$0xff]
    %v352 = vld [vmem:[#allocation2 + $0x870] sm:$0xff]
    %v353 = vld [vmem:[#allocation2 + $0x878] sm:$0xff]
    %v354 = vld [vmem:[#allocation2 + $0x880] sm:$0xff]
    %v355 = vld [vmem:[#allocation2 + $0x888] sm:$0xff]
    %v356 = vld [vmem:[#allocation2 + $0x890] sm:$0xff]
    %v357 = vld [vmem:[#allocation2 + $0x898] sm:$0xff]
    %v358 = vld [vmem:[#allocation2 + $0x8a0] sm:$0xff]
    %v359 = vld [vmem:[#allocation2 + $0x8a8] sm:$0xff]
    %v360 = vld [vmem:[#allocation2 + $0x8b0] sm:$0xff]
    %v361 = vld [vmem:[#allocation2 + $0x8b8] sm:$0xff]
    %v362 = vld [vmem:[#allocation2 + $0x8c0] sm:$0xff]
    %v363 = vld [vmem:[#allocation2 + $0x8c8] sm:$0xff]
    %v364 = vld [vmem:[#allocation2 + $0x8d0] sm:$0xff]
    %v365 = vld [vmem:[#allocation2 + $0x8d8] sm:$0xff]
    %v366 = vld [vmem:[#allocation2 + $0x8e0] sm:$0xff]
    %v367 = vld [vmem:[#allocation2 + $0x8e8] sm:$0xff]
    %v368 = vld [vmem:[#allocation2 + $0x8f0] sm:$0xff]
    %v369 = vld [vmem:[#allocation2 + $0x8f8] sm:$0xff]
    %v370 = vld [vmem:[#allocation2 + $0x900] sm:$0xff]
    %v371 = vld [vmem:[#allocation2 + $0x908] sm:$0xff]
    %v372 = vld [vmem:[#allocation2 + $0x910] sm:$0xff]
    %v373 = vld [vmem:[#allocation2 + $0x918] sm:$0xff]
    %v374 = vld [vmem:[#allocation2 + $0x920] sm:$0xff]
    %v375 = vld [vmem:[#allocation2 + $0x928] sm:$0xff]
    %v376 = vld [vmem:[#allocation2 + $0x930] sm:$0xff]
    %v377 = vld [vmem:[#allocation2 + $0x938] sm:$0xff]
    %v378 = vld [vmem:[#allocation2 + $0x940] sm:$0xff]
    %v379 = vld [vmem:[#allocation2 + $0x948] sm:$0xff]
    %v380 = vld [vmem:[#allocation2 + $0x950] sm:$0xff]
    %v381 = vld [vmem:[#allocation2 + $0x958] sm:$0xff]
    %v382 = vld [vmem:[#allocation2 + $0x960] sm:$0xff]
    %v383 = vld [vmem:[#allocation2 + $0x968] sm:$0xff]
    %v384 = vld [vmem:[#allocation2 + $0x970] sm:$0xff]
    %v385 = vld [vmem:[#allocation2 + $0x978] sm:$0xff]
    %v386 = vld [vmem:[#allocation2 + $0x980] sm:$0xff]
    %v387 = vld [vmem:[#allocation2 + $0x988] sm:$0xff]
    %v388 = vld [vmem:[#allocation2 + $0x990] sm:$0xff]
    %v389 = vld [vmem:[#allocation2 + $0x998] sm:$0xff]
    %v390 = vld [vmem:[#allocation2 + $0x9a0] sm:$0xff]
    %v391 = vld [vmem:[#allocation2 + $0x9a8] sm:$0xff]
    %v392 = vld [vmem:[#allocation2 + $0x9b0] sm:$0xff]
    %v393 = vld [vmem:[#allocation2 + $0x9b8] sm:$0xff]
    %v394 = vld [vmem:[#allocation2 + $0x9c0] sm:$0xff]
    %v395 = vld [vmem:[#allocation2 + $0x9c8] sm:$0xff]
    %v396 = vld [vmem:[#allocation2 + $0x9d0] sm:$0xff]
    %v397 = vld [vmem:[#allocation2 + $0x9d8] sm:$0xff]
    %v398 = vld [vmem:[#allocation2 + $0x9e0] sm:$0xff]
    %v399 = vld [vmem:[#allocation2 + $0x9e8] sm:$0xff]
    %v400 = vld [vmem:[#allocation2 + $0x9f0] sm:$0xff]
    %v401 = vld [vmem:[#allocation2 + $0x9f8] sm:$0xff]
    %v402 = vld [vmem:[#allocation2 + $0xa00] sm:$0xff]
    %v403 = vld [vmem:[#allocation2 + $0xa08] sm:$0xff]
    %v404 = vld [vmem:[#allocation2 + $0xa10] sm:$0xff]
    %v405 = vld [vmem:[#allocation2 + $0xa18] sm:$0xff]
    %v406 = vld [vmem:[#allocation2 + $0xa20] sm:$0xff]
    %v407 = vld [vmem:[#allocation2 + $0xa28] sm:$0xff]
    %v408 = vld [vmem:[#allocation2 + $0xa30] sm:$0xff]
    %v409 = vld [vmem:[#allocation2 + $0xa38] sm:$0xff]
    %v410 = vld [vmem:[#allocation2 + $0xa40] sm:$0xff]
    %v411 = vld [vmem:[#allocation2 + $0xa48] sm:$0xff]
    %v412 = vld [vmem:[#allocation2 + $0xa50] sm:$0xff]
    %v413 = vld [vmem:[#allocation2 + $0xa58] sm:$0xff]
    %v414 = vld [vmem:[#allocation2 + $0xa60] sm:$0xff]
    %v415 = vld [vmem:[#allocation2 + $0xa68] sm:$0xff]
    %v416 = vld [vmem:[#allocation2 + $0xa70] sm:$0xff]
    %v417 = vld [vmem:[#allocation2 + $0xa78] sm:$0xff]
    %v418 = vld [vmem:[#allocation2 + $0xa80] sm:$0xff]
    %v419 = vld [vmem:[#allocation2 + $0xa88] sm:$0xff]
    %v420 = vld [vmem:[#allocation2 + $0xa90] sm:$0xff]
    %v421 = vld [vmem:[#allocation2 + $0xa98] sm:$0xff]
    %v422 = vld [vmem:[#allocation2 + $0xaa0] sm:$0xff]
    %v423 = vld [vmem:[#allocation2 + $0xaa8] sm:$0xff]
    %v424 = vld [vmem:[#allocation2 + $0xab0] sm:$0xff]
    %v425 = vld [vmem:[#allocation2 + $0xab8] sm:$0xff]
    %v426 = vld [vmem:[#allocation2 + $0xac0] sm:$0xff]
    %v427 = vld [vmem:[#allocation2 + $0xac8] sm:$0xff]
    %v428 = vld [vmem:[#allocation2 + $0xad0] sm:$0xff]
    %v429 = vld [vmem:[#allocation2 + $0xad8] sm:$0xff]
    %v430 = vld [vmem:[#allocation2 + $0xae0] sm:$0xff]
    %v431 = vld [vmem:[#allocation2 + $0xae8] sm:$0xff]
    %v432 = vld [vmem:[#allocation2 + $0xaf0] sm:$0xff]
    %v433 = vld [vmem:[#allocation2 + $0xaf8] sm:$0xff]
    %v434 = vld [vmem:[#allocation2 + $0xb00] sm:$0xff]
    %v435 = vld [vmem:[#allocation2 + $0xb08] sm:$0xff]
    %v436 = vld [vmem:[#allocation2 + $0xb10] sm:$0xff]
    %v437 = vld [vmem:[#allocation2 + $0xb18] sm:$0xff]
    %v438 = vld [vmem:[#allocation2 + $0xb20] sm:$0xff]
    %v439 = vld [vmem:[#allocation2 + $0xb28] sm:$0xff]
    %v440 = vld [vmem:[#allocation2 + $0xb30] sm:$0xff]
    %v441 = vld [vmem:[#allocation2 + $0xb38] sm:$0xff]
    %v442 = vld [vmem:[#allocation2 + $0xb40] sm:$0xff]
    %v443 = vld [vmem:[#allocation2 + $0xb48] sm:$0xff]
    %v444 = vld [vmem:[#allocation2 + $0xb50] sm:$0xff]
    %v445 = vld [vmem:[#allocation2 + $0xb58] sm:$0xff]
    %v446 = vld [vmem:[#allocation2 + $0xb60] sm:$0xff]
    %v447 = vld [vmem:[#allocation2 + $0xb68] sm:$0xff]
    %v448 = vld [vmem:[#allocation2 + $0xb70] sm:$0xff]
    %v449 = vld [vmem:[#allocation2 + $0xb78] sm:$0xff]
    %v450 = vld [vmem:[#allocation2 + $0xb80] sm:$0xff]
    %v451 = vld [vmem:[#allocation2 + $0xb88] sm:$0xff]
    %v452 = vld [vmem:[#allocation2 + $0xb90] sm:$0xff]
    %v453 = vld [vmem:[#allocation2 + $0xb98] sm:$0xff]
    %v454 = vld [vmem:[#allocation2 + $0xba0] sm:$0xff]
    %v455 = vld [vmem:[#allocation2 + $0xba8] sm:$0xff]
    %v456 = vld [vmem:[#allocation2 + $0xbb0] sm:$0xff]
    %v457 = vld [vmem:[#allocation2 + $0xbb8] sm:$0xff]
    %v458 = vld [vmem:[#allocation2 + $0xbc0] sm:$0xff]
    %v459 = vld [vmem:[#allocation2 + $0xbc8] sm:$0xff]
    %v460 = vld [vmem:[#allocation2 + $0xbd0] sm:$0xff]
    %v461 = vld [vmem:[#allocation2 + $0xbd8] sm:$0xff]
    %v462 = vld [vmem:[#allocation2 + $0xbe0] sm:$0xff]
    %v463 = vld [vmem:[#allocation2 + $0xbe8] sm:$0xff]
    %v464 = vld [vmem:[#allocation2 + $0xbf0] sm:$0xff]
    %v465 = vld [vmem:[#allocation2 + $0xbf8] sm:$0xff]
    %v466 = vld [vmem:[#allocation2 + $0xc00] sm:$0xff]
    %v467 = vld [vmem:[#allocation2 + $0xc08] sm:$0xff]
    %v468 = vld [vmem:[#allocation2 + $0xc10] sm:$0xff]
    %v469 = vld [vmem:[#allocation2 + $0xc18] sm:$0xff]
    %v470 = vld [vmem:[#allocation2 + $0xc20] sm:$0xff]
    %v471 = vld [vmem:[#allocation2 + $0xc28] sm:$0xff]
    %v472 = vld [vmem:[#allocation2 + $0xc30] sm:$0xff]
    %v473 = vld [vmem:[#allocation2 + $0xc38] sm:$0xff]
    %v474 = vld [vmem:[#allocation2 + $0xc40] sm:$0xff]
    %v475 = vld [vmem:[#allocation2 + $0xc48] sm:$0xff]
    %v476 = vld [vmem:[#allocation2 + $0xc50] sm:$0xff]
    %v477 = vld [vmem:[#allocation2 + $0xc58] sm:$0xff]
    %v478 = vld [vmem:[#allocation2 + $0xc60] sm:$0xff]
    %v479 = vld [vmem:[#allocation2 + $0xc68] sm:$0xff]
    %v480 = vld [vmem:[#allocation2 + $0xc70] sm:$0xff]
    %v481 = vld [vmem:[#allocation2 + $0xc78] sm:$0xff]
    %v482 = vld [vmem:[#allocation2 + $0xc80] sm:$0xff]
    %v483 = vld [vmem:[#allocation2 + $0xc88] sm:$0xff]
    %v484 = vld [vmem:[#allocation2 + $0xc90] sm:$0xff]
    %v485 = vld [vmem:[#allocation2 + $0xc98] sm:$0xff]
    %v486 = vld [vmem:[#allocation2 + $0xca0] sm:$0xff]
    %v487 = vld [vmem:[#allocation2 + $0xca8] sm:$0xff]
    %v488 = vld [vmem:[#allocation2 + $0xcb0] sm:$0xff]
    %v489 = vld [vmem:[#allocation2 + $0xcb8] sm:$0xff]
    %v490 = vld [vmem:[#allocation2 + $0xcc0] sm:$0xff]
    %v491 = vld [vmem:[#allocation2 + $0xcc8] sm:$0xff]
    %v492 = vld [vmem:[#allocation2 + $0xcd0] sm:$0xff]
    %v493 = vld [vmem:[#allocation2 + $0xcd8] sm:$0xff]
    %v494 = vld [vmem:[#allocation2 + $0xce0] sm:$0xff]
    %v495 = vld [vmem:[#allocation2 + $0xce8] sm:$0xff]
    %v496 = vld [vmem:[#allocation2 + $0xcf0] sm:$0xff]
    %v497 = vld [vmem:[#allocation2 + $0xcf8] sm:$0xff]
    %v498 = vld [vmem:[#allocation2 + $0xd00] sm:$0xff]
    %v499 = vld [vmem:[#allocation2 + $0xd08] sm:$0xff]
    %v500 = vld [vmem:[#allocation2 + $0xd10] sm:$0xff]
    %v501 = vld [vmem:[#allocation2 + $0xd18] sm:$0xff]
    %v502 = vld [vmem:[#allocation2 + $0xd20] sm:$0xff]
    %v503 = vld [vmem:[#allocation2 + $0xd28] sm:$0xff]
    %v504 = vld [vmem:[#allocation2 + $0xd30] sm:$0xff]
    %v505 = vld [vmem:[#allocation2 + $0xd38] sm:$0xff]
    %v506 = vld [vmem:[#allocation2 + $0xd40] sm:$0xff]
    %v507 = vld [vmem:[#allocation2 + $0xd48] sm:$0xff]
    %v508 = vld [vmem:[#allocation2 + $0xd50] sm:$0xff]
    %v509 = vld [vmem:[#allocation2 + $0xd58] sm:$0xff]
    %v510 = vld [vmem:[#allocation2 + $0xd60] sm:$0xff]
    %v511 = vld [vmem:[#allocation2 + $0xd68] sm:$0xff]
    %v512 = vld [vmem:[#allocation2 + $0xd70] sm:$0xff]
    %v513 = vld [vmem:[#allocation2 + $0xd78] sm:$0xff]
    %v514 = vld [vmem:[#allocation2 + $0xd80] sm:$0xff]
    %v515 = vld [vmem:[#allocation2 + $0xd88] sm:$0xff]
    %v516 = vld [vmem:[#allocation2 + $0xd90] sm:$0xff]
    %v517 = vld [vmem:[#allocation2 + $0xd98] sm:$0xff]
    %v518 = vld [vmem:[#allocation2 + $0xda0] sm:$0xff]
    %v519 = vld [vmem:[#allocation2 + $0xda8] sm:$0xff]
    %v520 = vld [vmem:[#allocation2 + $0xdb0] sm:$0xff]
    %v521 = vld [vmem:[#allocation2 + $0xdb8] sm:$0xff]
    %v522 = vld [vmem:[#allocation2 + $0xdc0] sm:$0xff]
    %v523 = vld [vmem:[#allocation2 + $0xdc8] sm:$0xff]
    %v524 = vld [vmem:[#allocation2 + $0xdd0] sm:$0xff]
    %v525 = vld [vmem:[#allocation2 + $0xdd8] sm:$0xff]
    %v526 = vld [vmem:[#allocation2 + $0xde0] sm:$0xff]
    %v527 = vld [vmem:[#allocation2 + $0xde8] sm:$0xff]
    %v528 = vld [vmem:[#allocation2 + $0xdf0] sm:$0xff]
    %v529 = vld [vmem:[#allocation2 + $0xdf8] sm:$0xff]
    %v530 = vld [vmem:[#allocation2 + $0xe00] sm:$0xff]
    %v531 = vld [vmem:[#allocation2 + $0xe08] sm:$0xff]
    %v532 = vld [vmem:[#allocation2 + $0xe10] sm:$0xff]
    %v533 = vld [vmem:[#allocation2 + $0xe18] sm:$0xff]
    %v534 = vld [vmem:[#allocation2 + $0xe20] sm:$0xff]
    %v535 = vld [vmem:[#allocation2 + $0xe28] sm:$0xff]
    %v536 = vld [vmem:[#allocation2 + $0xe30] sm:$0xff]
    %v537 = vld [vmem:[#allocation2 + $0xe38] sm:$0xff]
    %v538 = vld [vmem:[#allocation2 + $0xe40] sm:$0xff]
    %v539 = vld [vmem:[#allocation2 + $0xe48] sm:$0xff]
    %v540 = vld [vmem:[#allocation2 + $0xe50] sm:$0xff]
    %v541 = vld [vmem:[#allocation2 + $0xe58] sm:$0xff]
    %v542 = vld [vmem:[#allocation2 + $0xe60] sm:$0xff]
    %v543 = vld [vmem:[#allocation2 + $0xe68] sm:$0xff]
    %v544 = vld [vmem:[#allocation2 + $0xe70] sm:$0xff]
    %v545 = vld [vmem:[#allocation2 + $0xe78] sm:$0xff]
    %v546 = vld [vmem:[#allocation2 + $0xe80] sm:$0xff]
    %v547 = vld [vmem:[#allocation2 + $0xe88] sm:$0xff]
    %v548 = vld [vmem:[#allocation2 + $0xe90] sm:$0xff]
    %v549 = vld [vmem:[#allocation2 + $0xe98] sm:$0xff]
    %v550 = vld [vmem:[#allocation2 + $0xea0] sm:$0xff]
    %v551 = vld [vmem:[#allocation2 + $0xea8] sm:$0xff]
    %v552 = vld [vmem:[#allocation2 + $0xeb0] sm:$0xff]
    %v553 = vld [vmem:[#allocation2 + $0xeb8] sm:$0xff]
    %v554 = vld [vmem:[#allocation2 + $0xec0] sm:$0xff]
    %v555 = vld [vmem:[#allocation2 + $0xec8] sm:$0xff]
    %v556 = vld [vmem:[#allocation2 + $0xed0] sm:$0xff]
    %v557 = vld [vmem:[#allocation2 + $0xed8] sm:$0xff]
    %v558 = vld [vmem:[#allocation2 + $0xee0] sm:$0xff]
    %v559 = vld [vmem:[#allocation2 + $0xee8] sm:$0xff]
    %v560 = vld [vmem:[#allocation2 + $0xef0] sm:$0xff]
    %v561 = vld [vmem:[#allocation2 + $0xef8] sm:$0xff]
    %v562 = vld [vmem:[#allocation2 + $0xf00] sm:$0xff]
    %v563 = vld [vmem:[#allocation2 + $0xf08] sm:$0xff]
    %v564 = vld [vmem:[#allocation2 + $0xf10] sm:$0xff]
    %v565 = vld [vmem:[#allocation2 + $0xf18] sm:$0xff]
    %v566 = vld [vmem:[#allocation2 + $0xf20] sm:$0xff]
    %v567 = vld [vmem:[#allocation2 + $0xf28] sm:$0xff]
    %v568 = vld [vmem:[#allocation2 + $0xf30] sm:$0xff]
    %v569 = vld [vmem:[#allocation2 + $0xf38] sm:$0xff]
    %v570 = vld [vmem:[#allocation2 + $0xf40] sm:$0xff]
    %v571 = vld [vmem:[#allocation2 + $0xf48] sm:$0xff]
    %v572 = vld [vmem:[#allocation2 + $0xf50] sm:$0xff]
    %v573 = vld [vmem:[#allocation2 + $0xf58] sm:$0xff]
    %v574 = vld [vmem:[#allocation2 + $0xf60] sm:$0xff]
    %v575 = vld [vmem:[#allocation2 + $0xf68] sm:$0xff]
    %v576 = vld [vmem:[#allocation2 + $0xf70] sm:$0xff]
    %v577 = vld [vmem:[#allocation2 + $0xf78] sm:$0xff]
    %v578 = vld [vmem:[#allocation2 + $0xf80] sm:$0xff]
    %v579 = vld [vmem:[#allocation2 + $0xf88] sm:$0xff]
    %v580 = vld [vmem:[#allocation2 + $0xf90] sm:$0xff]
    %v581 = vld [vmem:[#allocation2 + $0xf98] sm:$0xff]
    %v582 = vld [vmem:[#allocation2 + $0xfa0] sm:$0xff]
    %v583 = vld [vmem:[#allocation2 + $0xfa8] sm:$0xff]
    %v584 = vld [vmem:[#allocation2 + $0xfb0] sm:$0xff]
    %v585 = vld [vmem:[#allocation2 + $0xfb8] sm:$0xff]
    %v586 = vld [vmem:[#allocation2 + $0xfc0] sm:$0xff]
    %v587 = vld [vmem:[#allocation2 + $0xfc8] sm:$0xff]
    %v588 = vld [vmem:[#allocation2 + $0xfd0] sm:$0xff]
    %v589 = vld [vmem:[#allocation2 + $0xfd8] sm:$0xff]
    %v590 = vld [vmem:[#allocation2 + $0xfe0] sm:$0xff]
    %v591 = vld [vmem:[#allocation2 + $0xfe8] sm:$0xff]
    %v592 = vld [vmem:[#allocation2 + $0xff0] sm:$0xff]
    %v593 = vld [vmem:[#allocation2 + $0xff8] sm:$0xff]
    %v594 = vld [vmem:[#allocation2 + $0x1000] sm:$0xff]
    %v595 = vld [vmem:[#allocation2 + $0x1008] sm:$0xff]
    %v596 = vld [vmem:[#allocation2 + $0x1010] sm:$0xff]
    %v597 = vld [vmem:[#allocation2 + $0x1018] sm:$0xff]
    %v598 = vld [vmem:[#allocation2 + $0x1020] sm:$0xff]
    %v599 = vld [vmem:[#allocation2 + $0x1028] sm:$0xff]
    %v600 = vld [vmem:[#allocation2 + $0x1030] sm:$0xff]
    %v601 = vld [vmem:[#allocation2 + $0x1038] sm:$0xff]
    %v602 = vld [vmem:[#allocation2 + $0x1040] sm:$0xff]
    %v603 = vld [vmem:[#allocation2 + $0x1048] sm:$0xff]
    %v604 = vld [vmem:[#allocation2 + $0x1050] sm:$0xff]
    %v605 = vld [vmem:[#allocation2 + $0x1058] sm:$0xff]
    %v606 = vld [vmem:[#allocation2 + $0x1060] sm:$0xff]
    %v607 = vld [vmem:[#allocation2 + $0x1068] sm:$0xff]
    %v608 = vld [vmem:[#allocation2 + $0x1070] sm:$0xff]
    %v609 = vld [vmem:[#allocation2 + $0x1078] sm:$0xff]
    %v610 = vld [vmem:[#allocation2 + $0x1080] sm:$0xff]
    %v611 = vld [vmem:[#allocation2 + $0x1088] sm:$0xff]
    %v612 = vld [vmem:[#allocation2 + $0x1090] sm:$0xff]
    %v613 = vld [vmem:[#allocation2 + $0x1098] sm:$0xff]
    %v614 = vld [vmem:[#allocation2 + $0x10a0] sm:$0xff]
    %v615 = vld [vmem:[#allocation2 + $0x10a8] sm:$0xff]
    %v616 = vld [vmem:[#allocation2 + $0x10b0] sm:$0xff]
    %v617 = vld [vmem:[#allocation2 + $0x10b8] sm:$0xff]
    %v618 = vld [vmem:[#allocation2 + $0x10c0] sm:$0xff]
    %v619 = vld [vmem:[#allocation2 + $0x10c8] sm:$0xff]
    %v620 = vld [vmem:[#allocation2 + $0x10d0] sm:$0xff]
    %v621 = vld [vmem:[#allocation2 + $0x10d8] sm:$0xff]
    %v622 = vld [vmem:[#allocation2 + $0x10e0] sm:$0xff]
    %v623 = vld [vmem:[#allocation2 + $0x10e8] sm:$0xff]
    %v624 = vld [vmem:[#allocation2 + $0x10f0] sm:$0xff]
    %v625 = vld [vmem:[#allocation2 + $0x10f8] sm:$0xff]
    %v626 = vld [vmem:[#allocation2 + $0x1100] sm:$0xff]
    %v627 = vld [vmem:[#allocation2 + $0x1108] sm:$0xff]
    %v628 = vld [vmem:[#allocation2 + $0x1110] sm:$0xff]
    %v629 = vld [vmem:[#allocation2 + $0x1118] sm:$0xff]
    %v630 = vld [vmem:[#allocation2 + $0x1120] sm:$0xff]
    %v631 = vld [vmem:[#allocation2 + $0x1128] sm:$0xff]
    %v632 = vld [vmem:[#allocation2 + $0x1130] sm:$0xff]
    %v633 = vld [vmem:[#allocation2 + $0x1138] sm:$0xff]
    %v634 = vld [vmem:[#allocation2 + $0x1140] sm:$0xff]
    %v635 = vld [vmem:[#allocation2 + $0x1148] sm:$0xff]
    %v636 = vld [vmem:[#allocation2 + $0x1150] sm:$0xff]
    %v637 = vld [vmem:[#allocation2 + $0x1158] sm:$0xff]
    %v638 = vld [vmem:[#allocation2 + $0x1160] sm:$0xff]
    %v639 = vld [vmem:[#allocation2 + $0x1168] sm:$0xff]
    %v640 = vld [vmem:[#allocation2 + $0x1170] sm:$0xff]
    %v641 = vld [vmem:[#allocation2 + $0x1178] sm:$0xff]
    %v642 = vld [vmem:[#allocation2 + $0x1180] sm:$0xff]
    %v643 = vld [vmem:[#allocation2 + $0x1188] sm:$0xff]
    %v644 = vld [vmem:[#allocation2 + $0x1190] sm:$0xff]
    %v645 = vld [vmem:[#allocation2 + $0x1198] sm:$0xff]
    %v646 = vld [vmem:[#allocation2 + $0x11a0] sm:$0xff]
    %v647 = vld [vmem:[#allocation2 + $0x11a8] sm:$0xff]
    %v648 = vld [vmem:[#allocation2 + $0x11b0] sm:$0xff]
    %v649 = vld [vmem:[#allocation2 + $0x11b8] sm:$0xff]
    %v650 = vld [vmem:[#allocation2 + $0x11c0] sm:$0xff]
    %v651 = vld [vmem:[#allocation2 + $0x11c8] sm:$0xff]
    %v652 = vld [vmem:[#allocation2 + $0x11d0] sm:$0xff]
    %v653 = vld [vmem:[#allocation2 + $0x11d8] sm:$0xff]
    %v654 = vld [vmem:[#allocation2 + $0x11e0] sm:$0xff]
    %v655 = vld [vmem:[#allocation2 + $0x11e8] sm:$0xff]
    %v656 = vld [vmem:[#allocation2 + $0x11f0] sm:$0xff]
    %v657 = vld [vmem:[#allocation2 + $0x11f8] sm:$0xff]
    %v658 = vld [vmem:[#allocation2 + $0x1200] sm:$0xff]
    %v659 = vld [vmem:[#allocation2 + $0x1208] sm:$0xff]
    %v660 = vld [vmem:[#allocation2 + $0x1210] sm:$0xff]
    %v661 = vld [vmem:[#allocation2 + $0x1218] sm:$0xff]
    %v662 = vld [vmem:[#allocation2 + $0x1220] sm:$0xff]
    %v663 = vld [vmem:[#allocation2 + $0x1228] sm:$0xff]
    %v664 = vld [vmem:[#allocation2 + $0x1230] sm:$0xff]
    %v665 = vld [vmem:[#allocation2 + $0x1238] sm:$0xff]
    %v666 = vld [vmem:[#allocation2 + $0x1240] sm:$0xff]
    %v667 = vld [vmem:[#allocation2 + $0x1248] sm:$0xff]
    %v668 = vld [vmem:[#allocation2 + $0x1250] sm:$0xff]
    %v669 = vld [vmem:[#allocation2 + $0x1258] sm:$0xff]
    %v670 = vld [vmem:[#allocation2 + $0x1260] sm:$0xff]
    %v671 = vld [vmem:[#allocation2 + $0x1268] sm:$0xff]
    %v672 = vld [vmem:[#allocation2 + $0x1270] sm:$0xff]
    %v673 = vld [vmem:[#allocation2 + $0x1278] sm:$0xff]
    %v674 = vld [vmem:[#allocation2 + $0x1280] sm:$0xff]
    %v675 = vld [vmem:[#allocation2 + $0x1288] sm:$0xff]
    %v676 = vld [vmem:[#allocation2 + $0x1290] sm:$0xff]
    %v677 = vld [vmem:[#allocation2 + $0x1298] sm:$0xff]
    %v678 = vld [vmem:[#allocation2 + $0x12a0] sm:$0xff]
    %v679 = vld [vmem:[#allocation2 + $0x12a8] sm:$0xff]
    %v680 = vld [vmem:[#allocation2 + $0x12b0] sm:$0xff]
    %v681 = vld [vmem:[#allocation2 + $0x12b8] sm:$0xff]
    %v682 = vld [vmem:[#allocation2 + $0x12c0] sm:$0xff]
    %v683 = vld [vmem:[#allocation2 + $0x12c8] sm:$0xff]
    %v684 = vld [vmem:[#allocation2 + $0x12d0] sm:$0xff]
    %v685 = vld [vmem:[#allocation2 + $0x12d8] sm:$0xff]
    %v686 = vld [vmem:[#allocation2 + $0x12e0] sm:$0xff]
    %v687 = vld [vmem:[#allocation2 + $0x12e8] sm:$0xff]
    %v688 = vld [vmem:[#allocation2 + $0x12f0] sm:$0xff]
    %v689 = vld [vmem:[#allocation2 + $0x12f8] sm:$0xff]
    %v690 = vld [vmem:[#allocation2 + $0x1300] sm:$0xff]
    %v691 = vld [vmem:[#allocation2 + $0x1308] sm:$0xff]
    %v692 = vld [vmem:[#allocation2 + $0x1310] sm:$0xff]
    %v693 = vld [vmem:[#allocation2 + $0x1318] sm:$0xff]
    %v694 = vld [vmem:[#allocation2 + $0x1320] sm:$0xff]
    %v695 = vld [vmem:[#allocation2 + $0x1328] sm:$0xff]
    %v696 = vld [vmem:[#allocation2 + $0x1330] sm:$0xff]
    %v697 = vld [vmem:[#allocation2 + $0x1338] sm:$0xff]
    %v698 = vld [vmem:[#allocation2 + $0x1340] sm:$0xff]
    %v699 = vld [vmem:[#allocation2 + $0x1348] sm:$0xff]
    %v700 = vld [vmem:[#allocation2 + $0x1350] sm:$0xff]
    %v701 = vld [vmem:[#allocation2 + $0x1358] sm:$0xff]
    %v702 = vld [vmem:[#allocation2 + $0x1360] sm:$0xff]
    %v703 = vld [vmem:[#allocation2 + $0x1368] sm:$0xff]
    %v704 = vld [vmem:[#allocation2 + $0x1370] sm:$0xff]
    %v705 = vld [vmem:[#allocation2 + $0x1378] sm:$0xff]
    %v706 = vld [vmem:[#allocation2 + $0x1380] sm:$0xff]
    %v707 = vld [vmem:[#allocation2 + $0x1388] sm:$0xff]
    %v708 = vld [vmem:[#allocation2 + $0x1390] sm:$0xff]
    %v709 = vld [vmem:[#allocation2 + $0x1398] sm:$0xff]
    %v710 = vld [vmem:[#allocation2 + $0x13a0] sm:$0xff]
    %v711 = vld [vmem:[#allocation2 + $0x13a8] sm:$0xff]
    %v712 = vld [vmem:[#allocation2 + $0x13b0] sm:$0xff]
    %v713 = vld [vmem:[#allocation2 + $0x13b8] sm:$0xff]
    %v714 = vld [vmem:[#allocation2 + $0x13c0] sm:$0xff]
    %v715 = vld [vmem:[#allocation2 + $0x13c8] sm:$0xff]
    %v716 = vld [vmem:[#allocation2 + $0x13d0] sm:$0xff]
    %v717 = vld [vmem:[#allocation2 + $0x13d8] sm:$0xff]
    %v718 = vld [vmem:[#allocation2 + $0x13e0] sm:$0xff]
    %v719 = vld [vmem:[#allocation2 + $0x13e8] sm:$0xff]
    %v720 = vld [vmem:[#allocation2 + $0x13f0] sm:$0xff]
    %v721 = vld [vmem:[#allocation2 + $0x13f8] sm:$0xff]
    %v722 = vld [vmem:[#allocation2 + $0x1400] sm:$0xff]
    %v723 = vld [vmem:[#allocation2 + $0x1408] sm:$0xff]
    %v724 = vld [vmem:[#allocation2 + $0x1410] sm:$0xff]
    %v725 = vld [vmem:[#allocation2 + $0x1418] sm:$0xff]
    %v726 = vld [vmem:[#allocation2 + $0x1420] sm:$0xff]
    %v727 = vld [vmem:[#allocation2 + $0x1428] sm:$0xff]
    %v728 = vld [vmem:[#allocation2 + $0x1430] sm:$0xff]
    %v729 = vld [vmem:[#allocation2 + $0x1438] sm:$0xff]
    %v730 = vld [vmem:[#allocation2 + $0x1440] sm:$0xff]
    %v731 = vld [vmem:[#allocation2 + $0x1448] sm:$0xff]
    %v732 = vld [vmem:[#allocation2 + $0x1450] sm:$0xff]
    %v733 = vld [vmem:[#allocation2 + $0x1458] sm:$0xff]
    %v734 = vld [vmem:[#allocation2 + $0x1460] sm:$0xff]
    %v735 = vld [vmem:[#allocation2 + $0x1468] sm:$0xff]
    %v736 = vld [vmem:[#allocation2 + $0x1470] sm:$0xff]
    %v737 = vld [vmem:[#allocation2 + $0x1478] sm:$0xff]
    %v738 = vld [vmem:[#allocation2 + $0x1480] sm:$0xff]
    %v739 = vld [vmem:[#allocation2 + $0x1488] sm:$0xff]
    %v740 = vld [vmem:[#allocation2 + $0x1490] sm:$0xff]
    %v741 = vld [vmem:[#allocation2 + $0x1498] sm:$0xff]
    %v742 = vld [vmem:[#allocation2 + $0x14a0] sm:$0xff]
    %v743 = vld [vmem:[#allocation2 + $0x14a8] sm:$0xff]
    %v744 = vld [vmem:[#allocation2 + $0x14b0] sm:$0xff]
    %v745 = vld [vmem:[#allocation2 + $0x14b8] sm:$0xff]
    %v746 = vld [vmem:[#allocation2 + $0x14c0] sm:$0xff]
    %v747 = vld [vmem:[#allocation2 + $0x14c8] sm:$0xff]
    %v748 = vld [vmem:[#allocation2 + $0x14d0] sm:$0xff]
    %v749 = vld [vmem:[#allocation2 + $0x14d8] sm:$0xff]
    %v750 = vld [vmem:[#allocation2 + $0x14e0] sm:$0xff]
    %v751 = vld [vmem:[#allocation2 + $0x14e8] sm:$0xff]
    %v752 = vld [vmem:[#allocation2 + $0x14f0] sm:$0xff]
    %v753 = vld [vmem:[#allocation2 + $0x14f8] sm:$0xff]
    %v754 = vld [vmem:[#allocation2 + $0x1500] sm:$0xff]
    %v755 = vld [vmem:[#allocation2 + $0x1508] sm:$0xff]
    %v756 = vld [vmem:[#allocation2 + $0x1510] sm:$0xff]
    %v757 = vld [vmem:[#allocation2 + $0x1518] sm:$0xff]
    %v758 = vld [vmem:[#allocation2 + $0x1520] sm:$0xff]
    %v759 = vld [vmem:[#allocation2 + $0x1528] sm:$0xff]
    %v760 = vld [vmem:[#allocation2 + $0x1530] sm:$0xff]
    %v761 = vld [vmem:[#allocation2 + $0x1538] sm:$0xff]
    %v762 = vld [vmem:[#allocation2 + $0x1540] sm:$0xff]
    %v763 = vld [vmem:[#allocation2 + $0x1548] sm:$0xff]
    %v764 = vld [vmem:[#allocation2 + $0x1550] sm:$0xff]
    %v765 = vld [vmem:[#allocation2 + $0x1558] sm:$0xff]
    %v766 = vld [vmem:[#allocation2 + $0x1560] sm:$0xff]
    %v767 = vld [vmem:[#allocation2 + $0x1568] sm:$0xff]
    %v768 = vld [vmem:[#allocation2 + $0x1570] sm:$0xff]
    %v769 = vld [vmem:[#allocation2 + $0x1578] sm:$0xff]
    %v770 = vld [vmem:[#allocation2 + $0x1580] sm:$0xff]
    %v771 = vld [vmem:[#allocation2 + $0x1588] sm:$0xff]
    %v772 = vld [vmem:[#allocation2 + $0x1590] sm:$0xff]
    %v773 = vld [vmem:[#allocation2 + $0x1598] sm:$0xff]
    %v774 = vld [vmem:[#allocation2 + $0x15a0] sm:$0xff]
    %v775 = vld [vmem:[#allocation2 + $0x15a8] sm:$0xff]
    %v776 = vld [vmem:[#allocation2 + $0x15b0] sm:$0xff]
    %v777 = vld [vmem:[#allocation2 + $0x15b8] sm:$0xff]
    %v778 = vld [vmem:[#allocation2 + $0x15c0] sm:$0xff]
    %v779 = vld [vmem:[#allocation2 + $0x15c8] sm:$0xff]
    %v780 = vld [vmem:[#allocation2 + $0x15d0] sm:$0xff]
    %v781 = vld [vmem:[#allocation2 + $0x15d8] sm:$0xff]
    %v782 = vld [vmem:[#allocation2 + $0x15e0] sm:$0xff]
    %v783 = vld [vmem:[#allocation2 + $0x15e8] sm:$0xff]
    %v784 = vld [vmem:[#allocation2 + $0x15f0] sm:$0xff]
    %v785 = vld [vmem:[#allocation2 + $0x15f8] sm:$0xff]
    %v786 = vld [vmem:[#allocation2 + $0x1600] sm:$0xff]
    %v787 = vld [vmem:[#allocation2 + $0x1608] sm:$0xff]
    %v788 = vld [vmem:[#allocation2 + $0x1610] sm:$0xff]
    %v789 = vld [vmem:[#allocation2 + $0x1618] sm:$0xff]
    %v790 = vld [vmem:[#allocation2 + $0x1620] sm:$0xff]
    %v791 = vld [vmem:[#allocation2 + $0x1628] sm:$0xff]
    %v792 = vld [vmem:[#allocation2 + $0x1630] sm:$0xff]
    %v793 = vld [vmem:[#allocation2 + $0x1638] sm:$0xff]
    %v794 = vld [vmem:[#allocation2 + $0x1640] sm:$0xff]
    %v795 = vld [vmem:[#allocation2 + $0x1648] sm:$0xff]
    %v796 = vld [vmem:[#allocation2 + $0x1650] sm:$0xff]
    %v797 = vld [vmem:[#allocation2 + $0x1658] sm:$0xff]
    %v798 = vld [vmem:[#allocation2 + $0x1660] sm:$0xff]
    %v799 = vld [vmem:[#allocation2 + $0x1668] sm:$0xff]
    %v800 = vld [vmem:[#allocation2 + $0x1670] sm:$0xff]
    %v801 = vld [vmem:[#allocation2 + $0x1678] sm:$0xff]
    %v802 = vld [vmem:[#allocation2 + $0x1680] sm:$0xff]
    %v803 = vld [vmem:[#allocation2 + $0x1688] sm:$0xff]
    %v804 = vld [vmem:[#allocation2 + $0x1690] sm:$0xff]
    %v805 = vld [vmem:[#allocation2 + $0x1698] sm:$0xff]
    %v806 = vld [vmem:[#allocation2 + $0x16a0] sm:$0xff]
    %v807 = vld [vmem:[#allocation2 + $0x16a8] sm:$0xff]
    %v808 = vld [vmem:[#allocation2 + $0x16b0] sm:$0xff]
    %v809 = vld [vmem:[#allocation2 + $0x16b8] sm:$0xff]
    %v810 = vld [vmem:[#allocation2 + $0x16c0] sm:$0xff]
    %v811 = vld [vmem:[#allocation2 + $0x16c8] sm:$0xff]
    %v812 = vld [vmem:[#allocation2 + $0x16d0] sm:$0xff]
    %v813 = vld [vmem:[#allocation2 + $0x16d8] sm:$0xff]
    %v814 = vld [vmem:[#allocation2 + $0x16e0] sm:$0xff]
    %v815 = vld [vmem:[#allocation2 + $0x16e8] sm:$0xff]
    %v816 = vld [vmem:[#allocation2 + $0x16f0] sm:$0xff]
    %v817 = vld [vmem:[#allocation2 + $0x16f8] sm:$0xff]
    %v818 = vld [vmem:[#allocation2 + $0x1700] sm:$0xff]
    %v819 = vld [vmem:[#allocation2 + $0x1708] sm:$0xff]
    %v820 = vld [vmem:[#allocation2 + $0x1710] sm:$0xff]
    %v821 = vld [vmem:[#allocation2 + $0x1718] sm:$0xff]
    %v822 = vld [vmem:[#allocation2 + $0x1720] sm:$0xff]
    %v823 = vld [vmem:[#allocation2 + $0x1728] sm:$0xff]
    %v824 = vld [vmem:[#allocation2 + $0x1730] sm:$0xff]
    %v825 = vld [vmem:[#allocation2 + $0x1738] sm:$0xff]
    %v826 = vld [vmem:[#allocation2 + $0x1740] sm:$0xff]
    %v827 = vld [vmem:[#allocation2 + $0x1748] sm:$0xff]
    %v828 = vld [vmem:[#allocation2 + $0x1750] sm:$0xff]
    %v829 = vld [vmem:[#allocation2 + $0x1758] sm:$0xff]
    %v830 = vld [vmem:[#allocation2 + $0x1760] sm:$0xff]
    %v831 = vld [vmem:[#allocation2 + $0x1768] sm:$0xff]
    %v832 = vld [vmem:[#allocation2 + $0x1770] sm:$0xff]
    %v833 = vld [vmem:[#allocation2 + $0x1778] sm:$0xff]
    %v834 = vld [vmem:[#allocation2 + $0x1780] sm:$0xff]
    %v835 = vld [vmem:[#allocation2 + $0x1788] sm:$0xff]
    %v836 = vld [vmem:[#allocation2 + $0x1790] sm:$0xff]
    %v837 = vld [vmem:[#allocation2 + $0x1798] sm:$0xff]
    %v838 = vld [vmem:[#allocation2 + $0x17a0] sm:$0xff]
    %v839 = vld [vmem:[#allocation2 + $0x17a8] sm:$0xff]
    %v840 = vld [vmem:[#allocation2 + $0x17b0] sm:$0xff]
    %v841 = vld [vmem:[#allocation2 + $0x17b8] sm:$0xff]
    %v842 = vld [vmem:[#allocation2 + $0x17c0] sm:$0xff]
    %v843 = vld [vmem:[#allocation2 + $0x17c8] sm:$0xff]
    %v844 = vld [vmem:[#allocation2 + $0x17d0] sm:$0xff]
    %v845 = vld [vmem:[#allocation2 + $0x17d8] sm:$0xff]
    %v846 = vld [vmem:[#allocation2 + $0x17e0] sm:$0xff]
    %v847 = vld [vmem:[#allocation2 + $0x17e8] sm:$0xff]
    %v848 = vld [vmem:[#allocation2 + $0x17f0] sm:$0xff]
    %v849 = vld [vmem:[#allocation2 + $0x17f8] sm:$0xff]
    %v850 = vld [vmem:[#allocation2 + $0x1800] sm:$0xff]
    %v851 = vld [vmem:[#allocation2 + $0x1808] sm:$0xff]
    %v852 = vld [vmem:[#allocation2 + $0x1810] sm:$0xff]
    %v853 = vld [vmem:[#allocation2 + $0x1818] sm:$0xff]
    %v854 = vld [vmem:[#allocation2 + $0x1820] sm:$0xff]
    %v855 = vld [vmem:[#allocation2 + $0x1828] sm:$0xff]
    %v856 = vld [vmem:[#allocation2 + $0x1830] sm:$0xff]
    %v857 = vld [vmem:[#allocation2 + $0x1838] sm:$0xff]
    %v858 = vld [vmem:[#allocation2 + $0x1840] sm:$0xff]
    %v859 = vld [vmem:[#allocation2 + $0x1848] sm:$0xff]
    %v860 = vld [vmem:[#allocation2 + $0x1850] sm:$0xff]
    %v861 = vld [vmem:[#allocation2 + $0x1858] sm:$0xff]
    %v862 = vld [vmem:[#allocation2 + $0x1860] sm:$0xff]
    %v863 = vld [vmem:[#allocation2 + $0x1868] sm:$0xff]
    %v864 = vld [vmem:[#allocation2 + $0x1870] sm:$0xff]
    %v865 = vld [vmem:[#allocation2 + $0x1878] sm:$0xff]
    %v866 = vld [vmem:[#allocation2 + $0x1880] sm:$0xff]
    %v867 = vld [vmem:[#allocation2 + $0x1888] sm:$0xff]
    %v868 = vld [vmem:[#allocation2 + $0x1890] sm:$0xff]
    %v869 = vld [vmem:[#allocation2 + $0x1898] sm:$0xff]
    %v870 = vld [vmem:[#allocation2 + $0x18a0] sm:$0xff]
    %v871 = vld [vmem:[#allocation2 + $0x18a8] sm:$0xff]
    %v872 = vld [vmem:[#allocation2 + $0x18b0] sm:$0xff]
    %v873 = vld [vmem:[#allocation2 + $0x18b8] sm:$0xff]
    %v874 = vld [vmem:[#allocation2 + $0x18c0] sm:$0xff]
    %v875 = vld [vmem:[#allocation2 + $0x18c8] sm:$0xff]
    %v876 = vld [vmem:[#allocation2 + $0x18d0] sm:$0xff]
    %v877 = vld [vmem:[#allocation2 + $0x18d8] sm:$0xff]
    %v878 = vld [vmem:[#allocation2 + $0x18e0] sm:$0xff]
    %v879 = vld [vmem:[#allocation2 + $0x18e8] sm:$0xff]
    %v880 = vld [vmem:[#allocation2 + $0x18f0] sm:$0xff]
    %v881 = vld [vmem:[#allocation2 + $0x18f8] sm:$0xff]
    %v882 = vld [vmem:[#allocation2 + $0x1900] sm:$0xff]
    %v883 = vld [vmem:[#allocation2 + $0x1908] sm:$0xff]
    %v884 = vld [vmem:[#allocation2 + $0x1910] sm:$0xff]
    %v885 = vld [vmem:[#allocation2 + $0x1918] sm:$0xff]
    %v886 = vld [vmem:[#allocation2 + $0x1920] sm:$0xff]
    %v887 = vld [vmem:[#allocation2 + $0x1928] sm:$0xff]
    %v888 = vld [vmem:[#allocation2 + $0x1930] sm:$0xff]
    %v889 = vld [vmem:[#allocation2 + $0x1938] sm:$0xff]
    %v890 = vld [vmem:[#allocation2 + $0x1940] sm:$0xff]
    %v891 = vld [vmem:[#allocation2 + $0x1948] sm:$0xff]
    %v892 = vld [vmem:[#allocation2 + $0x1950] sm:$0xff]
    %v893 = vld [vmem:[#allocation2 + $0x1958] sm:$0xff]
    %v894 = vld [vmem:[#allocation2 + $0x1960] sm:$0xff]
    %v895 = vld [vmem:[#allocation2 + $0x1968] sm:$0xff]
    %v896 = vld [vmem:[#allocation2 + $0x1970] sm:$0xff]
    %v897 = vld [vmem:[#allocation2 + $0x1978] sm:$0xff]
    %v898 = vld [vmem:[#allocation2 + $0x1980] sm:$0xff]
    %v899 = vld [vmem:[#allocation2 + $0x1988] sm:$0xff]
    %v900 = vld [vmem:[#allocation2 + $0x1990] sm:$0xff]
    %v901 = vld [vmem:[#allocation2 + $0x1998] sm:$0xff]
    %v902 = vld [vmem:[#allocation2 + $0x19a0] sm:$0xff]
    %v903 = vld [vmem:[#allocation2 + $0x19a8] sm:$0xff]
    %v904 = vld [vmem:[#allocation2 + $0x19b0] sm:$0xff]
    %v905 = vld [vmem:[#allocation2 + $0x19b8] sm:$0xff]
    %v906 = vld [vmem:[#allocation2 + $0x19c0] sm:$0xff]
    %v907 = vld [vmem:[#allocation2 + $0x19c8] sm:$0xff]
    %v908 = vld [vmem:[#allocation2 + $0x19d0] sm:$0xff]
    %v909 = vld [vmem:[#allocation2 + $0x19d8] sm:$0xff]
    %v910 = vld [vmem:[#allocation2 + $0x19e0] sm:$0xff]
    %v911 = vld [vmem:[#allocation2 + $0x19e8] sm:$0xff]
    %v912 = vld [vmem:[#allocation2 + $0x19f0] sm:$0xff]
    %v913 = vld [vmem:[#allocation2 + $0x19f8] sm:$0xff]
    %v914 = vld [vmem:[#allocation2 + $0x1a00] sm:$0xff]
    %v915 = vld [vmem:[#allocation2 + $0x1a08] sm:$0xff]
    %v916 = vld [vmem:[#allocation2 + $0x1a10] sm:$0xff]
    %v917 = vld [vmem:[#allocation2 + $0x1a18] sm:$0xff]
    %v918 = vld [vmem:[#allocation2 + $0x1a20] sm:$0xff]
    %v919 = vld [vmem:[#allocation2 + $0x1a28] sm:$0xff]
    %v920 = vld [vmem:[#allocation2 + $0x1a30] sm:$0xff]
    %v921 = vld [vmem:[#allocation2 + $0x1a38] sm:$0xff]
    %v922 = vld [vmem:[#allocation2 + $0x1a40] sm:$0xff]
    %v923 = vld [vmem:[#allocation2 + $0x1a48] sm:$0xff]
    %v924 = vld [vmem:[#allocation2 + $0x1a50] sm:$0xff]
    %v925 = vld [vmem:[#allocation2 + $0x1a58] sm:$0xff]
    %v926 = vld [vmem:[#allocation2 + $0x1a60] sm:$0xff]
    %v927 = vld [vmem:[#allocation2 + $0x1a68] sm:$0xff]
    %v928 = vld [vmem:[#allocation2 + $0x1a70] sm:$0xff]
    %v929 = vld [vmem:[#allocation2 + $0x1a78] sm:$0xff]
    %v930 = vld [vmem:[#allocation2 + $0x1a80] sm:$0xff]
    %v931 = vld [vmem:[#allocation2 + $0x1a88] sm:$0xff]
    %v932 = vld [vmem:[#allocation2 + $0x1a90] sm:$0xff]
    %v933 = vld [vmem:[#allocation2 + $0x1a98] sm:$0xff]
    %v934 = vld [vmem:[#allocation2 + $0x1aa0] sm:$0xff]
    %v935 = vld [vmem:[#allocation2 + $0x1aa8] sm:$0xff]
    %v936 = vld [vmem:[#allocation2 + $0x1ab0] sm:$0xff]
    %v937 = vld [vmem:[#allocation2 + $0x1ab8] sm:$0xff]
    %v938 = vld [vmem:[#allocation2 + $0x1ac0] sm:$0xff]
    %v939 = vld [vmem:[#allocation2 + $0x1ac8] sm:$0xff]
    %v940 = vld [vmem:[#allocation2 + $0x1ad0] sm:$0xff]
    %v941 = vld [vmem:[#allocation2 + $0x1ad8] sm:$0xff]
    %v942 = vld [vmem:[#allocation2 + $0x1ae0] sm:$0xff]
    %v943 = vld [vmem:[#allocation2 + $0x1ae8] sm:$0xff]
    %v944 = vld [vmem:[#allocation2 + $0x1af0] sm:$0xff]
    %v945 = vld [vmem:[#allocation2 + $0x1af8] sm:$0xff]
    %v946 = vld [vmem:[#allocation2 + $0x1b00] sm:$0xff]
    %v947 = vld [vmem:[#allocation2 + $0x1b08] sm:$0xff]
    %v948 = vld [vmem:[#allocation2 + $0x1b10] sm:$0xff]
    %v949 = vld [vmem:[#allocation2 + $0x1b18] sm:$0xff]
    %v950 = vld [vmem:[#allocation2 + $0x1b20] sm:$0xff]
    %v951 = vld [vmem:[#allocation2 + $0x1b28] sm:$0xff]
    %v952 = vld [vmem:[#allocation2 + $0x1b30] sm:$0xff]
    %v953 = vld [vmem:[#allocation2 + $0x1b38] sm:$0xff]
    %v954 = vld [vmem:[#allocation2 + $0x1b40] sm:$0xff]
    %v955 = vld [vmem:[#allocation2 + $0x1b48] sm:$0xff]
    %v956 = vld [vmem:[#allocation2 + $0x1b50] sm:$0xff]
    %v957 = vld [vmem:[#allocation2 + $0x1b58] sm:$0xff]
    %v958 = vld [vmem:[#allocation2 + $0x1b60] sm:$0xff]
    %v959 = vld [vmem:[#allocation2 + $0x1b68] sm:$0xff]
    %v960 = vld [vmem:[#allocation2 + $0x1b70] sm:$0xff]
    %v961 = vld [vmem:[#allocation2 + $0x1b78] sm:$0xff]
    %v962 = vld [vmem:[#allocation2 + $0x1b80] sm:$0xff]
    %v963 = vld [vmem:[#allocation2 + $0x1b88] sm:$0xff]
    %v964 = vld [vmem:[#allocation2 + $0x1b90] sm:$0xff]
    %v965 = vld [vmem:[#allocation2 + $0x1b98] sm:$0xff]
    %v966 = vld [vmem:[#allocation2 + $0x1ba0] sm:$0xff]
    %v967 = vld [vmem:[#allocation2 + $0x1ba8] sm:$0xff]
    %v968 = vld [vmem:[#allocation2 + $0x1bb0] sm:$0xff]
    %v969 = vld [vmem:[#allocation2 + $0x1bb8] sm:$0xff]
    %v970 = vld [vmem:[#allocation2 + $0x1bc0] sm:$0xff]
    %v971 = vld [vmem:[#allocation2 + $0x1bc8] sm:$0xff]
    %v972 = vld [vmem:[#allocation2 + $0x1bd0] sm:$0xff]
    %v973 = vld [vmem:[#allocation2 + $0x1bd8] sm:$0xff]
    %v974 = vld [vmem:[#allocation2 + $0x1be0] sm:$0xff]
    %v975 = vld [vmem:[#allocation2 + $0x1be8] sm:$0xff]
    %v976 = vld [vmem:[#allocation2 + $0x1bf0] sm:$0xff]
    %v977 = vld [vmem:[#allocation2 + $0x1bf8] sm:$0xff]
    %v978 = vld [vmem:[#allocation2 + $0x1c00] sm:$0xff]
    %v979 = vld [vmem:[#allocation2 + $0x1c08] sm:$0xff]
    %v980 = vld [vmem:[#allocation2 + $0x1c10] sm:$0xff]
    %v981 = vld [vmem:[#allocation2 + $0x1c18] sm:$0xff]
    %v982 = vld [vmem:[#allocation2 + $0x1c20] sm:$0xff]
    %v983 = vld [vmem:[#allocation2 + $0x1c28] sm:$0xff]
    %v984 = vld [vmem:[#allocation2 + $0x1c30] sm:$0xff]
    %v985 = vld [vmem:[#allocation2 + $0x1c38] sm:$0xff]
    %990 = vst [vmem:[#allocation1] ss:$4 sm:$0xff] %v78
    %s991 = scalar_lea.vmem [#allocation1], 32
    %992 = vst [vmem:[%s991] ss:$4 sm:$0xff] %v79
    %v993 = vld.sshfl [vmem:[#allocation1] sm:$0xff pattern:$0x73625140]
    %v994 = vld.sshfl [vmem:[#allocation1 + $0x8] sm:$0xff pattern:$0x73625140]
    %v995 = vld.sshfl [vmem:[#allocation1 + $0x10] sm:$0xff pattern:$0x73625140]
    %v996 = vld.sshfl [vmem:[#allocation1 + $0x18] sm:$0xff pattern:$0x73625140]
    %v997 = vld.sshfl [vmem:[#allocation1 + $0x20] sm:$0xff pattern:$0x73625140]
    %v998 = vld.sshfl [vmem:[#allocation1 + $0x28] sm:$0xff pattern:$0x73625140]
    %v999 = vld.sshfl [vmem:[#allocation1 + $0x30] sm:$0xff pattern:$0x73625140]
    %v1000 = vld.sshfl [vmem:[#allocation1 + $0x38] sm:$0xff pattern:$0x73625140]
    %1001 = vst [vmem:[#allocation1] ss:$4 sm:$0xff] %v80
    %1002 = vst [vmem:[%s991] ss:$4 sm:$0xff] %v81
    %v1003 = vld.sshfl [vmem:[#allocation1] sm:$0xff pattern:$0x73625140]
    %v1004 = vld.sshfl [vmem:[#allocation1 + $0x8] sm:$0xff pattern:$0x73625140]
    %v1005 = vld.sshfl [vmem:[#allocation1 + $0x10] sm:$0xff pattern:$0x73625140]
    %v1006 = vld.sshfl [vmem:[#allocation1 + $0x18] sm:$0xff pattern:$0x73625140]
    %v1007 = vld.sshfl [vmem:[#allocation1 + $0x20] sm:$0xff pattern:$0x73625140]
    %v1008 = vld.sshfl [vmem:[#allocation1 + $0x28] sm:$0xff pattern:$0x73625140]
    %v1009 = vld.sshfl [vmem:[#allocation1 + $0x30] sm:$0xff pattern:$0x73625140]
    %vm1024 = vcmask 130048
    %v1025 = vsel %vm1024, %v1009, 0
    %1027 = vmatpush.msra.mxu0 %v142
    %1028 = vmatpush.msra.mxu0 %v138
    %1029 = vmatpush.msra.mxu0 %v134
    %1030 = vmatpush.msra.mxu0 %v130
    %1031 = vmatpush.msra.mxu0 %v126
    %1032 = vmatpush.msra.mxu0 %v122
    %1033 = vmatpush.msra.mxu0 %v118
    %1034 = vmatpush.msra.mxu0 %v114
    %1035 = vmatpush.msra.mxu0 %v110
    %1036 = vmatpush.msra.mxu0 %v106
    %1037 = vmatpush.msra.mxu0 %v102
    %1038 = vmatpush.msra.mxu0 %v98
    %1039 = vmatpush.msra.mxu0 %v94
    %1040 = vmatpush.msra.mxu0 %v90
    %1041 = vmatpush.msra.mxu0 %v86
    %1042 = vmatpush.msra.mxu0 %v82
    %1043 = vmatmul.f32.gmra.mxu0 %v993
    %v1044 = vpop.f32.mrf.mxu0
    %v1045 = vadd.f32 0.0, %v1044
    %1046 = vdwg.mxu0
    %1047 = vmatpush.msra.mxu0 %v206
    %1048 = vmatpush.msra.mxu0 %v202
    %1049 = vmatpush.msra.mxu0 %v198
    %1050 = vmatpush.msra.mxu0 %v194
    %1051 = vmatpush.msra.mxu0 %v190
    %1052 = vmatpush.msra.mxu0 %v186
    %1053 = vmatpush.msra.mxu0 %v182
    %1054 = vmatpush.msra.mxu0 %v178
    %1055 = vmatpush.msra.mxu0 %v174
    %1056 = vmatpush.msra.mxu0 %v170
    %1057 = vmatpush.msra.mxu0 %v166
    %1058 = vmatpush.msra.mxu0 %v162
    %1059 = vmatpush.msra.mxu0 %v158
    %1060 = vmatpush.msra.mxu0 %v154
    %1061 = vmatpush.msra.mxu0 %v150
    %1062 = vmatpush.msra.mxu0 %v146
    %1063 = vmatmul.f32.gmra.mxu0 %v994
    %v1064 = vpop.f32.mrf.mxu0
    %v1065 = vadd.f32 %v1045, %v1064
    %1066 = vdwg.mxu0
    %1067 = vmatpush.msra.mxu0 %v270
    %1068 = vmatpush.msra.mxu0 %v266
    %1069 = vmatpush.msra.mxu0 %v262
    %1070 = vmatpush.msra.mxu0 %v258
    %1071 = vmatpush.msra.mxu0 %v254
    %1072 = vmatpush.msra.mxu0 %v250
    %1073 = vmatpush.msra.mxu0 %v246
    %1074 = vmatpush.msra.mxu0 %v242
    %1075 = vmatpush.msra.mxu0 %v238
    %1076 = vmatpush.msra.mxu0 %v234
    %1077 = vmatpush.msra.mxu0 %v230
    %1078 = vmatpush.msra.mxu0 %v226
    %1079 = vmatpush.msra.mxu0 %v222
    %1080 = vmatpush.msra.mxu0 %v218
    %1081 = vmatpush.msra.mxu0 %v214
    %1082 = vmatpush.msra.mxu0 %v210
    %1083 = vmatmul.f32.gmra.mxu0 %v995
    %v1084 = vpop.f32.mrf.mxu0
    %v1085 = vadd.f32 %v1065, %v1084
    %1086 = vdwg.mxu0
    %1087 = vmatpush.msra.mxu0 %v334
    %1088 = vmatpush.msra.mxu0 %v330
    %1089 = vmatpush.msra.mxu0 %v326
    %1090 = vmatpush.msra.mxu0 %v322
    %1091 = vmatpush.msra.mxu0 %v318
    %1092 = vmatpush.msra.mxu0 %v314
    %1093 = vmatpush.msra.mxu0 %v310
    %1094 = vmatpush.msra.mxu0 %v306
    %1095 = vmatpush.msra.mxu0 %v302
    %1096 = vmatpush.msra.mxu0 %v298
    %1097 = vmatpush.msra.mxu0 %v294
    %1098 = vmatpush.msra.mxu0 %v290
    %1099 = vmatpush.msra.mxu0 %v286
    %1100 = vmatpush.msra.mxu0 %v282
    %1101 = vmatpush.msra.mxu0 %v278
    %1102 = vmatpush.msra.mxu0 %v274
    %1103 = vmatmul.f32.gmra.mxu0 %v996
    %v1104 = vpop.f32.mrf.mxu0
    %v1105 = vadd.f32 %v1085, %v1104
    %1106 = vdwg.mxu0
    %1107 = vmatpush.msra.mxu0 %v398
    %1108 = vmatpush.msra.mxu0 %v394
    %1109 = vmatpush.msra.mxu0 %v390
    %1110 = vmatpush.msra.mxu0 %v386
    %1111 = vmatpush.msra.mxu0 %v382
    %1112 = vmatpush.msra.mxu0 %v378
    %1113 = vmatpush.msra.mxu0 %v374
    %1114 = vmatpush.msra.mxu0 %v370
    %1115 = vmatpush.msra.mxu0 %v366
    %1116 = vmatpush.msra.mxu0 %v362
    %1117 = vmatpush.msra.mxu0 %v358
    %1118 = vmatpush.msra.mxu0 %v354
    %1119 = vmatpush.msra.mxu0 %v350
    %1120 = vmatpush.msra.mxu0 %v346
    %1121 = vmatpush.msra.mxu0 %v342
    %1122 = vmatpush.msra.mxu0 %v338
    %1123 = vmatmul.f32.gmra.mxu0 %v997
    %v1124 = vpop.f32.mrf.mxu0
    %v1125 = vadd.f32 %v1105, %v1124
    %1126 = vdwg.mxu0
    %1127 = vmatpush.msra.mxu0 %v462
    %1128 = vmatpush.msra.mxu0 %v458
    %1129 = vmatpush.msra.mxu0 %v454
    %1130 = vmatpush.msra.mxu0 %v450
    %1131 = vmatpush.msra.mxu0 %v446
    %1132 = vmatpush.msra.mxu0 %v442
    %1133 = vmatpush.msra.mxu0 %v438
    %1134 = vmatpush.msra.mxu0 %v434
    %1135 = vmatpush.msra.mxu0 %v430
    %1136 = vmatpush.msra.mxu0 %v426
    %1137 = vmatpush.msra.mxu0 %v422
    %1138 = vmatpush.msra.mxu0 %v418
    %1139 = vmatpush.msra.mxu0 %v414
    %1140 = vmatpush.msra.mxu0 %v410
    %1141 = vmatpush.msra.mxu0 %v406
    %1142 = vmatpush.msra.mxu0 %v402
    %1143 = vmatmul.f32.gmra.mxu0 %v998
    %v1144 = vpop.f32.mrf.mxu0
    %v1145 = vadd.f32 %v1125, %v1144
    %1146 = vdwg.mxu0
    %1147 = vmatpush.msra.mxu0 %v526
    %1148 = vmatpush.msra.mxu0 %v522
    %1149 = vmatpush.msra.mxu0 %v518
    %1150 = vmatpush.msra.mxu0 %v514
    %1151 = vmatpush.msra.mxu0 %v510
    %1152 = vmatpush.msra.mxu0 %v506
    %1153 = vmatpush.msra.mxu0 %v502
    %1154 = vmatpush.msra.mxu0 %v498
    %1155 = vmatpush.msra.mxu0 %v494
    %1156 = vmatpush.msra.mxu0 %v490
    %1157 = vmatpush.msra.mxu0 %v486
    %1158 = vmatpush.msra.mxu0 %v482
    %1159 = vmatpush.msra.mxu0 %v478
    %1160 = vmatpush.msra.mxu0 %v474
    %1161 = vmatpush.msra.mxu0 %v470
    %1162 = vmatpush.msra.mxu0 %v466
    %1163 = vmatmul.f32.gmra.mxu0 %v999
    %v1164 = vpop.f32.mrf.mxu0
    %v1165 = vadd.f32 %v1145, %v1164
    %1166 = vdwg.mxu0
    %1167 = vmatpush.msra.mxu0 %v590
    %1168 = vmatpush.msra.mxu0 %v586
    %1169 = vmatpush.msra.mxu0 %v582
    %1170 = vmatpush.msra.mxu0 %v578
    %1171 = vmatpush.msra.mxu0 %v574
    %1172 = vmatpush.msra.mxu0 %v570
    %1173 = vmatpush.msra.mxu0 %v566
    %1174 = vmatpush.msra.mxu0 %v562
    %1175 = vmatpush.msra.mxu0 %v558
    %1176 = vmatpush.msra.mxu0 %v554
    %1177 = vmatpush.msra.mxu0 %v550
    %1178 = vmatpush.msra.mxu0 %v546
    %1179 = vmatpush.msra.mxu0 %v542
    %1180 = vmatpush.msra.mxu0 %v538
    %1181 = vmatpush.msra.mxu0 %v534
    %1182 = vmatpush.msra.mxu0 %v530
    %1183 = vmatmul.f32.gmra.mxu0 %v1000
    %v1184 = vpop.f32.mrf.mxu0
    %v1185 = vadd.f32 %v1165, %v1184
    %1186 = vdwg.mxu0
    %1187 = vmatpush.msra.mxu0 %v654
    %1188 = vmatpush.msra.mxu0 %v650
    %1189 = vmatpush.msra.mxu0 %v646
    %1190 = vmatpush.msra.mxu0 %v642
    %1191 = vmatpush.msra.mxu0 %v638
    %1192 = vmatpush.msra.mxu0 %v634
    %1193 = vmatpush.msra.mxu0 %v630
    %1194 = vmatpush.msra.mxu0 %v626
    %1195 = vmatpush.msra.mxu0 %v622
    %1196 = vmatpush.msra.mxu0 %v618
    %1197 = vmatpush.msra.mxu0 %v614
    %1198 = vmatpush.msra.mxu0 %v610
    %1199 = vmatpush.msra.mxu0 %v606
    %1200 = vmatpush.msra.mxu0 %v602
    %1201 = vmatpush.msra.mxu0 %v598
    %1202 = vmatpush.msra.mxu0 %v594
    %1203 = vmatmul.f32.gmra.mxu0 %v1003
    %v1204 = vpop.f32.mrf.mxu0
    %v1205 = vadd.f32 %v1185, %v1204
    %1206 = vdwg.mxu0
    %1207 = vmatpush.msra.mxu0 %v718
    %1208 = vmatpush.msra.mxu0 %v714
    %1209 = vmatpush.msra.mxu0 %v710
    %1210 = vmatpush.msra.mxu0 %v706
    %1211 = vmatpush.msra.mxu0 %v702
    %1212 = vmatpush.msra.mxu0 %v698
    %1213 = vmatpush.msra.mxu0 %v694
    %1214 = vmatpush.msra.mxu0 %v690
    %1215 = vmatpush.msra.mxu0 %v686
    %1216 = vmatpush.msra.mxu0 %v682
    %1217 = vmatpush.msra.mxu0 %v678
    %1218 = vmatpush.msra.mxu0 %v674
    %1219 = vmatpush.msra.mxu0 %v670
    %1220 = vmatpush.msra.mxu0 %v666
    %1221 = vmatpush.msra.mxu0 %v662
    %1222 = vmatpush.msra.mxu0 %v658
    %1223 = vmatmul.f32.gmra.mxu0 %v1004
    %v1224 = vpop.f32.mrf.mxu0
    %v1225 = vadd.f32 %v1205, %v1224
    %1226 = vdwg.mxu0
    %1227 = vmatpush.msra.mxu0 %v782
    %1228 = vmatpush.msra.mxu0 %v778
    %1229 = vmatpush.msra.mxu0 %v774
    %1230 = vmatpush.msra.mxu0 %v770
    %1231 = vmatpush.msra.mxu0 %v766
    %1232 = vmatpush.msra.mxu0 %v762
    %1233 = vmatpush.msra.mxu0 %v758
    %1234 = vmatpush.msra.mxu0 %v754
    %1235 = vmatpush.msra.mxu0 %v750
    %1236 = vmatpush.msra.mxu0 %v746
    %1237 = vmatpush.msra.mxu0 %v742
    %1238 = vmatpush.msra.mxu0 %v738
    %1239 = vmatpush.msra.mxu0 %v734
    %1240 = vmatpush.msra.mxu0 %v730
    %1241 = vmatpush.msra.mxu0 %v726
    %1242 = vmatpush.msra.mxu0 %v722
    %1243 = vmatmul.f32.gmra.mxu0 %v1005
    %v1244 = vpop.f32.mrf.mxu0
    %v1245 = vadd.f32 %v1225, %v1244
    %1246 = vdwg.mxu0
    %1247 = vmatpush.msra.mxu0 %v846
    %1248 = vmatpush.msra.mxu0 %v842
    %1249 = vmatpush.msra.mxu0 %v838
    %1250 = vmatpush.msra.mxu0 %v834
    %1251 = vmatpush.msra.mxu0 %v830
    %1252 = vmatpush.msra.mxu0 %v826
    %1253 = vmatpush.msra.mxu0 %v822
    %1254 = vmatpush.msra.mxu0 %v818
    %1255 = vmatpush.msra.mxu0 %v814
    %1256 = vmatpush.msra.mxu0 %v810
    %1257 = vmatpush.msra.mxu0 %v806
    %1258 = vmatpush.msra.mxu0 %v802
    %1259 = vmatpush.msra.mxu0 %v798
    %1260 = vmatpush.msra.mxu0 %v794
    %1261 = vmatpush.msra.mxu0 %v790
    %1262 = vmatpush.msra.mxu0 %v786
    %1263 = vmatmul.f32.gmra.mxu0 %v1006
    %v1264 = vpop.f32.mrf.mxu0
    %v1265 = vadd.f32 %v1245, %v1264
    %1266 = vdwg.mxu0
    %1267 = vmatpush.msra.mxu0 %v910
    %1268 = vmatpush.msra.mxu0 %v906
    %1269 = vmatpush.msra.mxu0 %v902
    %1270 = vmatpush.msra.mxu0 %v898
    %1271 = vmatpush.msra.mxu0 %v894
    %1272 = vmatpush.msra.mxu0 %v890
    %1273 = vmatpush.msra.mxu0 %v886
    %1274 = vmatpush.msra.mxu0 %v882
    %1275 = vmatpush.msra.mxu0 %v878
    %1276 = vmatpush.msra.mxu0 %v874
    %1277 = vmatpush.msra.mxu0 %v870
    %1278 = vmatpush.msra.mxu0 %v866
    %1279 = vmatpush.msra.mxu0 %v862
    %1280 = vmatpush.msra.mxu0 %v858
    %1281 = vmatpush.msra.mxu0 %v854
    %1282 = vmatpush.msra.mxu0 %v850
    %1283 = vmatmul.f32.gmra.mxu0 %v1007
    %v1284 = vpop.f32.mrf.mxu0
    %v1285 = vadd.f32 %v1265, %v1284
    %1286 = vdwg.mxu0
    %1287 = vmatpush.msra.mxu0 %v974
    %1288 = vmatpush.msra.mxu0 %v970
    %1289 = vmatpush.msra.mxu0 %v966
    %1290 = vmatpush.msra.mxu0 %v962
    %1291 = vmatpush.msra.mxu0 %v958
    %1292 = vmatpush.msra.mxu0 %v954
    %1293 = vmatpush.msra.mxu0 %v950
    %1294 = vmatpush.msra.mxu0 %v946
    %1295 = vmatpush.msra.mxu0 %v942
    %1296 = vmatpush.msra.mxu0 %v938
    %1297 = vmatpush.msra.mxu0 %v934
    %1298 = vmatpush.msra.mxu0 %v930
    %1299 = vmatpush.msra.mxu0 %v926
    %1300 = vmatpush.msra.mxu0 %v922
    %1301 = vmatpush.msra.mxu0 %v918
    %1302 = vmatpush.msra.mxu0 %v914
    %1303 = vmatmul.f32.gmra.mxu0 %v1008
    %v1304 = vpop.f32.mrf.mxu0
    %v1305 = vadd.f32 %v1285, %v1304
    %1306 = vdwg.mxu0
    %1307 = vmatpush.msra.mxu0 0.0
    %1308 = vmatpush.msra.mxu0 0.0
    %1309 = vmatpush.msra.mxu0 0.0
    %1310 = vmatpush.msra.mxu0 0.0
    %1311 = vmatpush.msra.mxu0 0.0
    %1312 = vmatpush.msra.mxu0 0.0
    %1313 = vmatpush.msra.mxu0 0.0
    %1314 = vmatpush.msra.mxu0 0.0
    %1315 = vmatpush.msra.mxu0 0.0
    %1316 = vmatpush.msra.mxu0 0.0
    %1317 = vmatpush.msra.mxu0 0.0
    %1318 = vmatpush.msra.mxu0 0.0
    %1319 = vmatpush.msra.mxu0 0.0
    %1320 = vmatpush.msra.mxu0 0.0
    %1321 = vmatpush.msra.mxu0 %v982
    %1322 = vmatpush.msra.mxu0 %v978
    %1323 = vmatmul.f32.gmra.mxu0 %v1025
    %v1324 = vpop.f32.mrf.mxu0
    %v1325 = vadd.f32 %v1305, %v1324
    %1326 = vdwg.mxu0
    %1327 = vmatpush.msra.mxu0 %v143
    %1328 = vmatpush.msra.mxu0 %v139
    %1329 = vmatpush.msra.mxu0 %v135
    %1330 = vmatpush.msra.mxu0 %v131
    %1331 = vmatpush.msra.mxu0 %v127
    %1332 = vmatpush.msra.mxu0 %v123
    %1333 = vmatpush.msra.mxu0 %v119
    %1334 = vmatpush.msra.mxu0 %v115
    %1335 = vmatpush.msra.mxu0 %v111
    %1336 = vmatpush.msra.mxu0 %v107
    %1337 = vmatpush.msra.mxu0 %v103
    %1338 = vmatpush.msra.mxu0 %v99
    %1339 = vmatpush.msra.mxu0 %v95
    %1340 = vmatpush.msra.mxu0 %v91
    %1341 = vmatpush.msra.mxu0 %v87
    %1342 = vmatpush.msra.mxu0 %v83
    %1343 = vmatmul.f32.gmra.mxu0 %v993
    %v1344 = vpop.f32.mrf.mxu0
    %v1345 = vadd.f32 0.0, %v1344
    %1346 = vdwg.mxu0
    %1347 = vmatpush.msra.mxu0 %v207
    %1348 = vmatpush.msra.mxu0 %v203
    %1349 = vmatpush.msra.mxu0 %v199
    %1350 = vmatpush.msra.mxu0 %v195
    %1351 = vmatpush.msra.mxu0 %v191
    %1352 = vmatpush.msra.mxu0 %v187
    %1353 = vmatpush.msra.mxu0 %v183
    %1354 = vmatpush.msra.mxu0 %v179
    %1355 = vmatpush.msra.mxu0 %v175
    %1356 = vmatpush.msra.mxu0 %v171
    %1357 = vmatpush.msra.mxu0 %v167
    %1358 = vmatpush.msra.mxu0 %v163
    %1359 = vmatpush.msra.mxu0 %v159
    %1360 = vmatpush.msra.mxu0 %v155
    %1361 = vmatpush.msra.mxu0 %v151
    %1362 = vmatpush.msra.mxu0 %v147
    %1363 = vmatmul.f32.gmra.mxu0 %v994
    %v1364 = vpop.f32.mrf.mxu0
    %v1365 = vadd.f32 %v1345, %v1364
    %1366 = vdwg.mxu0
    %1367 = vmatpush.msra.mxu0 %v271
    %1368 = vmatpush.msra.mxu0 %v267
    %1369 = vmatpush.msra.mxu0 %v263
    %1370 = vmatpush.msra.mxu0 %v259
    %1371 = vmatpush.msra.mxu0 %v255
    %1372 = vmatpush.msra.mxu0 %v251
    %1373 = vmatpush.msra.mxu0 %v247
    %1374 = vmatpush.msra.mxu0 %v243
    %1375 = vmatpush.msra.mxu0 %v239
    %1376 = vmatpush.msra.mxu0 %v235
    %1377 = vmatpush.msra.mxu0 %v231
    %1378 = vmatpush.msra.mxu0 %v227
    %1379 = vmatpush.msra.mxu0 %v223
    %1380 = vmatpush.msra.mxu0 %v219
    %1381 = vmatpush.msra.mxu0 %v215
    %1382 = vmatpush.msra.mxu0 %v211
    %1383 = vmatmul.f32.gmra.mxu0 %v995
    %v1384 = vpop.f32.mrf.mxu0
    %v1385 = vadd.f32 %v1365, %v1384
    %1386 = vdwg.mxu0
    %1387 = vmatpush.msra.mxu0 %v335
    %1388 = vmatpush.msra.mxu0 %v331
    %1389 = vmatpush.msra.mxu0 %v327
    %1390 = vmatpush.msra.mxu0 %v323
    %1391 = vmatpush.msra.mxu0 %v319
    %1392 = vmatpush.msra.mxu0 %v315
    %1393 = vmatpush.msra.mxu0 %v311
    %1394 = vmatpush.msra.mxu0 %v307
    %1395 = vmatpush.msra.mxu0 %v303
    %1396 = vmatpush.msra.mxu0 %v299
    %1397 = vmatpush.msra.mxu0 %v295
    %1398 = vmatpush.msra.mxu0 %v291
    %1399 = vmatpush.msra.mxu0 %v287
    %1400 = vmatpush.msra.mxu0 %v283
    %1401 = vmatpush.msra.mxu0 %v279
    %1402 = vmatpush.msra.mxu0 %v275
    %1403 = vmatmul.f32.gmra.mxu0 %v996
    %v1404 = vpop.f32.mrf.mxu0
    %v1405 = vadd.f32 %v1385, %v1404
    %1406 = vdwg.mxu0
    %1407 = vmatpush.msra.mxu0 %v399
    %1408 = vmatpush.msra.mxu0 %v395
    %1409 = vmatpush.msra.mxu0 %v391
    %1410 = vmatpush.msra.mxu0 %v387
    %1411 = vmatpush.msra.mxu0 %v383
    %1412 = vmatpush.msra.mxu0 %v379
    %1413 = vmatpush.msra.mxu0 %v375
    %1414 = vmatpush.msra.mxu0 %v371
    %1415 = vmatpush.msra.mxu0 %v367
    %1416 = vmatpush.msra.mxu0 %v363
    %1417 = vmatpush.msra.mxu0 %v359
    %1418 = vmatpush.msra.mxu0 %v355
    %1419 = vmatpush.msra.mxu0 %v351
    %1420 = vmatpush.msra.mxu0 %v347
    %1421 = vmatpush.msra.mxu0 %v343
    %1422 = vmatpush.msra.mxu0 %v339
    %1423 = vmatmul.f32.gmra.mxu0 %v997
    %v1424 = vpop.f32.mrf.mxu0
    %v1425 = vadd.f32 %v1405, %v1424
    %1426 = vdwg.mxu0
    %1427 = vmatpush.msra.mxu0 %v463
    %1428 = vmatpush.msra.mxu0 %v459
    %1429 = vmatpush.msra.mxu0 %v455
    %1430 = vmatpush.msra.mxu0 %v451
    %1431 = vmatpush.msra.mxu0 %v447
    %1432 = vmatpush.msra.mxu0 %v443
    %1433 = vmatpush.msra.mxu0 %v439
    %1434 = vmatpush.msra.mxu0 %v435
    %1435 = vmatpush.msra.mxu0 %v431
    %1436 = vmatpush.msra.mxu0 %v427
    %1437 = vmatpush.msra.mxu0 %v423
    %1438 = vmatpush.msra.mxu0 %v419
    %1439 = vmatpush.msra.mxu0 %v415
    %1440 = vmatpush.msra.mxu0 %v411
    %1441 = vmatpush.msra.mxu0 %v407
    %1442 = vmatpush.msra.mxu0 %v403
    %1443 = vmatmul.f32.gmra.mxu0 %v998
    %v1444 = vpop.f32.mrf.mxu0
    %v1445 = vadd.f32 %v1425, %v1444
    %1446 = vdwg.mxu0
    %1447 = vmatpush.msra.mxu0 %v527
    %1448 = vmatpush.msra.mxu0 %v523
    %1449 = vmatpush.msra.mxu0 %v519
    %1450 = vmatpush.msra.mxu0 %v515
    %1451 = vmatpush.msra.mxu0 %v511
    %1452 = vmatpush.msra.mxu0 %v507
    %1453 = vmatpush.msra.mxu0 %v503
    %1454 = vmatpush.msra.mxu0 %v499
    %1455 = vmatpush.msra.mxu0 %v495
    %1456 = vmatpush.msra.mxu0 %v491
    %1457 = vmatpush.msra.mxu0 %v487
    %1458 = vmatpush.msra.mxu0 %v483
    %1459 = vmatpush.msra.mxu0 %v479
    %1460 = vmatpush.msra.mxu0 %v475
    %1461 = vmatpush.msra.mxu0 %v471
    %1462 = vmatpush.msra.mxu0 %v467
    %1463 = vmatmul.f32.gmra.mxu0 %v999
    %v1464 = vpop.f32.mrf.mxu0
    %v1465 = vadd.f32 %v1445, %v1464
    %1466 = vdwg.mxu0
    %1467 = vmatpush.msra.mxu0 %v591
    %1468 = vmatpush.msra.mxu0 %v587
    %1469 = vmatpush.msra.mxu0 %v583
    %1470 = vmatpush.msra.mxu0 %v579
    %1471 = vmatpush.msra.mxu0 %v575
    %1472 = vmatpush.msra.mxu0 %v571
    %1473 = vmatpush.msra.mxu0 %v567
    %1474 = vmatpush.msra.mxu0 %v563
    %1475 = vmatpush.msra.mxu0 %v559
    %1476 = vmatpush.msra.mxu0 %v555
    %1477 = vmatpush.msra.mxu0 %v551
    %1478 = vmatpush.msra.mxu0 %v547
    %1479 = vmatpush.msra.mxu0 %v543
    %1480 = vmatpush.msra.mxu0 %v539
    %1481 = vmatpush.msra.mxu0 %v535
    %1482 = vmatpush.msra.mxu0 %v531
    %1483 = vmatmul.f32.gmra.mxu0 %v1000
    %v1484 = vpop.f32.mrf.mxu0
    %v1485 = vadd.f32 %v1465, %v1484
    %1486 = vdwg.mxu0
    %1487 = vmatpush.msra.mxu0 %v655
    %1488 = vmatpush.msra.mxu0 %v651
    %1489 = vmatpush.msra.mxu0 %v647
    %1490 = vmatpush.msra.mxu0 %v643
    %1491 = vmatpush.msra.mxu0 %v639
    %1492 = vmatpush.msra.mxu0 %v635
    %1493 = vmatpush.msra.mxu0 %v631
    %1494 = vmatpush.msra.mxu0 %v627
    %1495 = vmatpush.msra.mxu0 %v623
    %1496 = vmatpush.msra.mxu0 %v619
    %1497 = vmatpush.msra.mxu0 %v615
    %1498 = vmatpush.msra.mxu0 %v611
    %1499 = vmatpush.msra.mxu0 %v607
    %1500 = vmatpush.msra.mxu0 %v603
    %1501 = vmatpush.msra.mxu0 %v599
    %1502 = vmatpush.msra.mxu0 %v595
    %1503 = vmatmul.f32.gmra.mxu0 %v1003
    %v1504 = vpop.f32.mrf.mxu0
    %v1505 = vadd.f32 %v1485, %v1504
    %1506 = vdwg.mxu0
    %1507 = vmatpush.msra.mxu0 %v719
    %1508 = vmatpush.msra.mxu0 %v715
    %1509 = vmatpush.msra.mxu0 %v711
    %1510 = vmatpush.msra.mxu0 %v707
    %1511 = vmatpush.msra.mxu0 %v703
    %1512 = vmatpush.msra.mxu0 %v699
    %1513 = vmatpush.msra.mxu0 %v695
    %1514 = vmatpush.msra.mxu0 %v691
    %1515 = vmatpush.msra.mxu0 %v687
    %1516 = vmatpush.msra.mxu0 %v683
    %1517 = vmatpush.msra.mxu0 %v679
    %1518 = vmatpush.msra.mxu0 %v675
    %1519 = vmatpush.msra.mxu0 %v671
    %1520 = vmatpush.msra.mxu0 %v667
    %1521 = vmatpush.msra.mxu0 %v663
    %1522 = vmatpush.msra.mxu0 %v659
    %1523 = vmatmul.f32.gmra.mxu0 %v1004
    %v1524 = vpop.f32.mrf.mxu0
    %v1525 = vadd.f32 %v1505, %v1524
    %1526 = vdwg.mxu0
    %1527 = vmatpush.msra.mxu0 %v783
    %1528 = vmatpush.msra.mxu0 %v779
    %1529 = vmatpush.msra.mxu0 %v775
    %1530 = vmatpush.msra.mxu0 %v771
    %1531 = vmatpush.msra.mxu0 %v767
    %1532 = vmatpush.msra.mxu0 %v763
    %1533 = vmatpush.msra.mxu0 %v759
    %1534 = vmatpush.msra.mxu0 %v755
    %1535 = vmatpush.msra.mxu0 %v751
    %1536 = vmatpush.msra.mxu0 %v747
    %1537 = vmatpush.msra.mxu0 %v743
    %1538 = vmatpush.msra.mxu0 %v739
    %1539 = vmatpush.msra.mxu0 %v735
    %1540 = vmatpush.msra.mxu0 %v731
    %1541 = vmatpush.msra.mxu0 %v727
    %1542 = vmatpush.msra.mxu0 %v723
    %1543 = vmatmul.f32.gmra.mxu0 %v1005
    %v1544 = vpop.f32.mrf.mxu0
    %v1545 = vadd.f32 %v1525, %v1544
    %1546 = vdwg.mxu0
    %1547 = vmatpush.msra.mxu0 %v847
    %1548 = vmatpush.msra.mxu0 %v843
    %1549 = vmatpush.msra.mxu0 %v839
    %1550 = vmatpush.msra.mxu0 %v835
    %1551 = vmatpush.msra.mxu0 %v831
    %1552 = vmatpush.msra.mxu0 %v827
    %1553 = vmatpush.msra.mxu0 %v823
    %1554 = vmatpush.msra.mxu0 %v819
    %1555 = vmatpush.msra.mxu0 %v815
    %1556 = vmatpush.msra.mxu0 %v811
    %1557 = vmatpush.msra.mxu0 %v807
    %1558 = vmatpush.msra.mxu0 %v803
    %1559 = vmatpush.msra.mxu0 %v799
    %1560 = vmatpush.msra.mxu0 %v795
    %1561 = vmatpush.msra.mxu0 %v791
    %1562 = vmatpush.msra.mxu0 %v787
    %1563 = vmatmul.f32.gmra.mxu0 %v1006
    %v1564 = vpop.f32.mrf.mxu0
    %v1565 = vadd.f32 %v1545, %v1564
    %1566 = vdwg.mxu0
    %1567 = vmatpush.msra.mxu0 %v911
    %1568 = vmatpush.msra.mxu0 %v907
    %1569 = vmatpush.msra.mxu0 %v903
    %1570 = vmatpush.msra.mxu0 %v899
    %1571 = vmatpush.msra.mxu0 %v895
    %1572 = vmatpush.msra.mxu0 %v891
    %1573 = vmatpush.msra.mxu0 %v887
    %1574 = vmatpush.msra.mxu0 %v883
    %1575 = vmatpush.msra.mxu0 %v879
    %1576 = vmatpush.msra.mxu0 %v875
    %1577 = vmatpush.msra.mxu0 %v871
    %1578 = vmatpush.msra.mxu0 %v867
    %1579 = vmatpush.msra.mxu0 %v863
    %1580 = vmatpush.msra.mxu0 %v859
    %1581 = vmatpush.msra.mxu0 %v855
    %1582 = vmatpush.msra.mxu0 %v851
    %1583 = vmatmul.f32.gmra.mxu0 %v1007
    %v1584 = vpop.f32.mrf.mxu0
    %v1585 = vadd.f32 %v1565, %v1584
    %1586 = vdwg.mxu0
    %1587 = vmatpush.msra.mxu0 %v975
    %1588 = vmatpush.msra.mxu0 %v971
    %1589 = vmatpush.msra.mxu0 %v967
    %1590 = vmatpush.msra.mxu0 %v963
    %1591 = vmatpush.msra.mxu0 %v959
    %1592 = vmatpush.msra.mxu0 %v955
    %1593 = vmatpush.msra.mxu0 %v951
    %1594 = vmatpush.msra.mxu0 %v947
    %1595 = vmatpush.msra.mxu0 %v943
    %1596 = vmatpush.msra.mxu0 %v939
    %1597 = vmatpush.msra.mxu0 %v935
    %1598 = vmatpush.msra.mxu0 %v931
    %1599 = vmatpush.msra.mxu0 %v927
    %1600 = vmatpush.msra.mxu0 %v923
    %1601 = vmatpush.msra.mxu0 %v919
    %1602 = vmatpush.msra.mxu0 %v915
    %1603 = vmatmul.f32.gmra.mxu0 %v1008
    %v1604 = vpop.f32.mrf.mxu0
    %v1605 = vadd.f32 %v1585, %v1604
    %1606 = vdwg.mxu0
    %1607 = vmatpush.msra.mxu0 0.0
    %1608 = vmatpush.msra.mxu0 0.0
    %1609 = vmatpush.msra.mxu0 0.0
    %1610 = vmatpush.msra.mxu0 0.0
    %1611 = vmatpush.msra.mxu0 0.0
    %1612 = vmatpush.msra.mxu0 0.0
    %1613 = vmatpush.msra.mxu0 0.0
    %1614 = vmatpush.msra.mxu0 0.0
    %1615 = vmatpush.msra.mxu0 0.0
    %1616 = vmatpush.msra.mxu0 0.0
    %1617 = vmatpush.msra.mxu0 0.0
    %1618 = vmatpush.msra.mxu0 0.0
    %1619 = vmatpush.msra.mxu0 0.0
    %1620 = vmatpush.msra.mxu0 0.0
    %1621 = vmatpush.msra.mxu0 %v983
    %1622 = vmatpush.msra.mxu0 %v979
    %1623 = vmatmul.f32.gmra.mxu0 %v1025
    %v1624 = vpop.f32.mrf.mxu0
    %v1625 = vadd.f32 %v1605, %v1624
    %1626 = vdwg.mxu0
    %1627 = vmatpush.msra.mxu0 %v144
    %1628 = vmatpush.msra.mxu0 %v140
    %1629 = vmatpush.msra.mxu0 %v136
    %1630 = vmatpush.msra.mxu0 %v132
    %1631 = vmatpush.msra.mxu0 %v128
    %1632 = vmatpush.msra.mxu0 %v124
    %1633 = vmatpush.msra.mxu0 %v120
    %1634 = vmatpush.msra.mxu0 %v116
    %1635 = vmatpush.msra.mxu0 %v112
    %1636 = vmatpush.msra.mxu0 %v108
    %1637 = vmatpush.msra.mxu0 %v104
    %1638 = vmatpush.msra.mxu0 %v100
    %1639 = vmatpush.msra.mxu0 %v96
    %1640 = vmatpush.msra.mxu0 %v92
    %1641 = vmatpush.msra.mxu0 %v88
    %1642 = vmatpush.msra.mxu0 %v84
    %1643 = vmatmul.f32.gmra.mxu0 %v993
    %v1644 = vpop.f32.mrf.mxu0
    %v1645 = vadd.f32 0.0, %v1644
    %1646 = vdwg.mxu0
    %1647 = vmatpush.msra.mxu0 %v208
    %1648 = vmatpush.msra.mxu0 %v204
    %1649 = vmatpush.msra.mxu0 %v200
    %1650 = vmatpush.msra.mxu0 %v196
    %1651 = vmatpush.msra.mxu0 %v192
    %1652 = vmatpush.msra.mxu0 %v188
    %1653 = vmatpush.msra.mxu0 %v184
    %1654 = vmatpush.msra.mxu0 %v180
    %1655 = vmatpush.msra.mxu0 %v176
    %1656 = vmatpush.msra.mxu0 %v172
    %1657 = vmatpush.msra.mxu0 %v168
    %1658 = vmatpush.msra.mxu0 %v164
    %1659 = vmatpush.msra.mxu0 %v160
    %1660 = vmatpush.msra.mxu0 %v156
    %1661 = vmatpush.msra.mxu0 %v152
    %1662 = vmatpush.msra.mxu0 %v148
    %1663 = vmatmul.f32.gmra.mxu0 %v994
    %v1664 = vpop.f32.mrf.mxu0
    %v1665 = vadd.f32 %v1645, %v1664
    %1666 = vdwg.mxu0
    %1667 = vmatpush.msra.mxu0 %v272
    %1668 = vmatpush.msra.mxu0 %v268
    %1669 = vmatpush.msra.mxu0 %v264
    %1670 = vmatpush.msra.mxu0 %v260
    %1671 = vmatpush.msra.mxu0 %v256
    %1672 = vmatpush.msra.mxu0 %v252
    %1673 = vmatpush.msra.mxu0 %v248
    %1674 = vmatpush.msra.mxu0 %v244
    %1675 = vmatpush.msra.mxu0 %v240
    %1676 = vmatpush.msra.mxu0 %v236
    %1677 = vmatpush.msra.mxu0 %v232
    %1678 = vmatpush.msra.mxu0 %v228
    %1679 = vmatpush.msra.mxu0 %v224
    %1680 = vmatpush.msra.mxu0 %v220
    %1681 = vmatpush.msra.mxu0 %v216
    %1682 = vmatpush.msra.mxu0 %v212
    %1683 = vmatmul.f32.gmra.mxu0 %v995
    %v1684 = vpop.f32.mrf.mxu0
    %v1685 = vadd.f32 %v1665, %v1684
    %1686 = vdwg.mxu0
    %1687 = vmatpush.msra.mxu0 %v336
    %1688 = vmatpush.msra.mxu0 %v332
    %1689 = vmatpush.msra.mxu0 %v328
    %1690 = vmatpush.msra.mxu0 %v324
    %1691 = vmatpush.msra.mxu0 %v320
    %1692 = vmatpush.msra.mxu0 %v316
    %1693 = vmatpush.msra.mxu0 %v312
    %1694 = vmatpush.msra.mxu0 %v308
    %1695 = vmatpush.msra.mxu0 %v304
    %1696 = vmatpush.msra.mxu0 %v300
    %1697 = vmatpush.msra.mxu0 %v296
    %1698 = vmatpush.msra.mxu0 %v292
    %1699 = vmatpush.msra.mxu0 %v288
    %1700 = vmatpush.msra.mxu0 %v284
    %1701 = vmatpush.msra.mxu0 %v280
    %1702 = vmatpush.msra.mxu0 %v276
    %1703 = vmatmul.f32.gmra.mxu0 %v996
    %v1704 = vpop.f32.mrf.mxu0
    %v1705 = vadd.f32 %v1685, %v1704
    %1706 = vdwg.mxu0
    %1707 = vmatpush.msra.mxu0 %v400
    %1708 = vmatpush.msra.mxu0 %v396
    %1709 = vmatpush.msra.mxu0 %v392
    %1710 = vmatpush.msra.mxu0 %v388
    %1711 = vmatpush.msra.mxu0 %v384
    %1712 = vmatpush.msra.mxu0 %v380
    %1713 = vmatpush.msra.mxu0 %v376
    %1714 = vmatpush.msra.mxu0 %v372
    %1715 = vmatpush.msra.mxu0 %v368
    %1716 = vmatpush.msra.mxu0 %v364
    %1717 = vmatpush.msra.mxu0 %v360
    %1718 = vmatpush.msra.mxu0 %v356
    %1719 = vmatpush.msra.mxu0 %v352
    %1720 = vmatpush.msra.mxu0 %v348
    %1721 = vmatpush.msra.mxu0 %v344
    %1722 = vmatpush.msra.mxu0 %v340
    %1723 = vmatmul.f32.gmra.mxu0 %v997
    %v1724 = vpop.f32.mrf.mxu0
    %v1725 = vadd.f32 %v1705, %v1724
    %1726 = vdwg.mxu0
    %1727 = vmatpush.msra.mxu0 %v464
    %1728 = vmatpush.msra.mxu0 %v460
    %1729 = vmatpush.msra.mxu0 %v456
    %1730 = vmatpush.msra.mxu0 %v452
    %1731 = vmatpush.msra.mxu0 %v448
    %1732 = vmatpush.msra.mxu0 %v444
    %1733 = vmatpush.msra.mxu0 %v440
    %1734 = vmatpush.msra.mxu0 %v436
    %1735 = vmatpush.msra.mxu0 %v432
    %1736 = vmatpush.msra.mxu0 %v428
    %1737 = vmatpush.msra.mxu0 %v424
    %1738 = vmatpush.msra.mxu0 %v420
    %1739 = vmatpush.msra.mxu0 %v416
    %1740 = vmatpush.msra.mxu0 %v412
    %1741 = vmatpush.msra.mxu0 %v408
    %1742 = vmatpush.msra.mxu0 %v404
    %1743 = vmatmul.f32.gmra.mxu0 %v998
    %v1744 = vpop.f32.mrf.mxu0
    %v1745 = vadd.f32 %v1725, %v1744
    %1746 = vdwg.mxu0
    %1747 = vmatpush.msra.mxu0 %v528
    %1748 = vmatpush.msra.mxu0 %v524
    %1749 = vmatpush.msra.mxu0 %v520
    %1750 = vmatpush.msra.mxu0 %v516
    %1751 = vmatpush.msra.mxu0 %v512
    %1752 = vmatpush.msra.mxu0 %v508
    %1753 = vmatpush.msra.mxu0 %v504
    %1754 = vmatpush.msra.mxu0 %v500
    %1755 = vmatpush.msra.mxu0 %v496
    %1756 = vmatpush.msra.mxu0 %v492
    %1757 = vmatpush.msra.mxu0 %v488
    %1758 = vmatpush.msra.mxu0 %v484
    %1759 = vmatpush.msra.mxu0 %v480
    %1760 = vmatpush.msra.mxu0 %v476
    %1761 = vmatpush.msra.mxu0 %v472
    %1762 = vmatpush.msra.mxu0 %v468
    %1763 = vmatmul.f32.gmra.mxu0 %v999
    %v1764 = vpop.f32.mrf.mxu0
    %v1765 = vadd.f32 %v1745, %v1764
    %1766 = vdwg.mxu0
    %1767 = vmatpush.msra.mxu0 %v592
    %1768 = vmatpush.msra.mxu0 %v588
    %1769 = vmatpush.msra.mxu0 %v584
    %1770 = vmatpush.msra.mxu0 %v580
    %1771 = vmatpush.msra.mxu0 %v576
    %1772 = vmatpush.msra.mxu0 %v572
    %1773 = vmatpush.msra.mxu0 %v568
    %1774 = vmatpush.msra.mxu0 %v564
    %1775 = vmatpush.msra.mxu0 %v560
    %1776 = vmatpush.msra.mxu0 %v556
    %1777 = vmatpush.msra.mxu0 %v552
    %1778 = vmatpush.msra.mxu0 %v548
    %1779 = vmatpush.msra.mxu0 %v544
    %1780 = vmatpush.msra.mxu0 %v540
    %1781 = vmatpush.msra.mxu0 %v536
    %1782 = vmatpush.msra.mxu0 %v532
    %1783 = vmatmul.f32.gmra.mxu0 %v1000
    %v1784 = vpop.f32.mrf.mxu0
    %v1785 = vadd.f32 %v1765, %v1784
    %1786 = vdwg.mxu0
    %1787 = vmatpush.msra.mxu0 %v656
    %1788 = vmatpush.msra.mxu0 %v652
    %1789 = vmatpush.msra.mxu0 %v648
    %1790 = vmatpush.msra.mxu0 %v644
    %1791 = vmatpush.msra.mxu0 %v640
    %1792 = vmatpush.msra.mxu0 %v636
    %1793 = vmatpush.msra.mxu0 %v632
    %1794 = vmatpush.msra.mxu0 %v628
    %1795 = vmatpush.msra.mxu0 %v624
    %1796 = vmatpush.msra.mxu0 %v620
    %1797 = vmatpush.msra.mxu0 %v616
    %1798 = vmatpush.msra.mxu0 %v612
    %1799 = vmatpush.msra.mxu0 %v608
    %1800 = vmatpush.msra.mxu0 %v604
    %1801 = vmatpush.msra.mxu0 %v600
    %1802 = vmatpush.msra.mxu0 %v596
    %1803 = vmatmul.f32.gmra.mxu0 %v1003
    %v1804 = vpop.f32.mrf.mxu0
    %v1805 = vadd.f32 %v1785, %v1804
    %1806 = vdwg.mxu0
    %1807 = vmatpush.msra.mxu0 %v720
    %1808 = vmatpush.msra.mxu0 %v716
    %1809 = vmatpush.msra.mxu0 %v712
    %1810 = vmatpush.msra.mxu0 %v708
    %1811 = vmatpush.msra.mxu0 %v704
    %1812 = vmatpush.msra.mxu0 %v700
    %1813 = vmatpush.msra.mxu0 %v696
    %1814 = vmatpush.msra.mxu0 %v692
    %1815 = vmatpush.msra.mxu0 %v688
    %1816 = vmatpush.msra.mxu0 %v684
    %1817 = vmatpush.msra.mxu0 %v680
    %1818 = vmatpush.msra.mxu0 %v676
    %1819 = vmatpush.msra.mxu0 %v672
    %1820 = vmatpush.msra.mxu0 %v668
    %1821 = vmatpush.msra.mxu0 %v664
    %1822 = vmatpush.msra.mxu0 %v660
    %1823 = vmatmul.f32.gmra.mxu0 %v1004
    %v1824 = vpop.f32.mrf.mxu0
    %v1825 = vadd.f32 %v1805, %v1824
    %1826 = vdwg.mxu0
    %1827 = vmatpush.msra.mxu0 %v784
    %1828 = vmatpush.msra.mxu0 %v780
    %1829 = vmatpush.msra.mxu0 %v776
    %1830 = vmatpush.msra.mxu0 %v772
    %1831 = vmatpush.msra.mxu0 %v768
    %1832 = vmatpush.msra.mxu0 %v764
    %1833 = vmatpush.msra.mxu0 %v760
    %1834 = vmatpush.msra.mxu0 %v756
    %1835 = vmatpush.msra.mxu0 %v752
    %1836 = vmatpush.msra.mxu0 %v748
    %1837 = vmatpush.msra.mxu0 %v744
    %1838 = vmatpush.msra.mxu0 %v740
    %1839 = vmatpush.msra.mxu0 %v736
    %1840 = vmatpush.msra.mxu0 %v732
    %1841 = vmatpush.msra.mxu0 %v728
    %1842 = vmatpush.msra.mxu0 %v724
    %1843 = vmatmul.f32.gmra.mxu0 %v1005
    %v1844 = vpop.f32.mrf.mxu0
    %v1845 = vadd.f32 %v1825, %v1844
    %1846 = vdwg.mxu0
    %1847 = vmatpush.msra.mxu0 %v848
    %1848 = vmatpush.msra.mxu0 %v844
    %1849 = vmatpush.msra.mxu0 %v840
    %1850 = vmatpush.msra.mxu0 %v836
    %1851 = vmatpush.msra.mxu0 %v832
    %1852 = vmatpush.msra.mxu0 %v828
    %1853 = vmatpush.msra.mxu0 %v824
    %1854 = vmatpush.msra.mxu0 %v820
    %1855 = vmatpush.msra.mxu0 %v816
    %1856 = vmatpush.msra.mxu0 %v812
    %1857 = vmatpush.msra.mxu0 %v808
    %1858 = vmatpush.msra.mxu0 %v804
    %1859 = vmatpush.msra.mxu0 %v800
    %1860 = vmatpush.msra.mxu0 %v796
    %1861 = vmatpush.msra.mxu0 %v792
    %1862 = vmatpush.msra.mxu0 %v788
    %1863 = vmatmul.f32.gmra.mxu0 %v1006
    %v1864 = vpop.f32.mrf.mxu0
    %v1865 = vadd.f32 %v1845, %v1864
    %1866 = vdwg.mxu0
    %1867 = vmatpush.msra.mxu0 %v912
    %1868 = vmatpush.msra.mxu0 %v908
    %1869 = vmatpush.msra.mxu0 %v904
    %1870 = vmatpush.msra.mxu0 %v900
    %1871 = vmatpush.msra.mxu0 %v896
    %1872 = vmatpush.msra.mxu0 %v892
    %1873 = vmatpush.msra.mxu0 %v888
    %1874 = vmatpush.msra.mxu0 %v884
    %1875 = vmatpush.msra.mxu0 %v880
    %1876 = vmatpush.msra.mxu0 %v876
    %1877 = vmatpush.msra.mxu0 %v872
    %1878 = vmatpush.msra.mxu0 %v868
    %1879 = vmatpush.msra.mxu0 %v864
    %1880 = vmatpush.msra.mxu0 %v860
    %1881 = vmatpush.msra.mxu0 %v856
    %1882 = vmatpush.msra.mxu0 %v852
    %1883 = vmatmul.f32.gmra.mxu0 %v1007
    %v1884 = vpop.f32.mrf.mxu0
    %v1885 = vadd.f32 %v1865, %v1884
    %1886 = vdwg.mxu0
    %1887 = vmatpush.msra.mxu0 %v976
    %1888 = vmatpush.msra.mxu0 %v972
    %1889 = vmatpush.msra.mxu0 %v968
    %1890 = vmatpush.msra.mxu0 %v964
    %1891 = vmatpush.msra.mxu0 %v960
    %1892 = vmatpush.msra.mxu0 %v956
    %1893 = vmatpush.msra.mxu0 %v952
    %1894 = vmatpush.msra.mxu0 %v948
    %1895 = vmatpush.msra.mxu0 %v944
    %1896 = vmatpush.msra.mxu0 %v940
    %1897 = vmatpush.msra.mxu0 %v936
    %1898 = vmatpush.msra.mxu0 %v932
    %1899 = vmatpush.msra.mxu0 %v928
    %1900 = vmatpush.msra.mxu0 %v924
    %1901 = vmatpush.msra.mxu0 %v920
    %1902 = vmatpush.msra.mxu0 %v916
    %1903 = vmatmul.f32.gmra.mxu0 %v1008
    %v1904 = vpop.f32.mrf.mxu0
    %v1905 = vadd.f32 %v1885, %v1904
    %1906 = vdwg.mxu0
    %1907 = vmatpush.msra.mxu0 0.0
    %1908 = vmatpush.msra.mxu0 0.0
    %1909 = vmatpush.msra.mxu0 0.0
    %1910 = vmatpush.msra.mxu0 0.0
    %1911 = vmatpush.msra.mxu0 0.0
    %1912 = vmatpush.msra.mxu0 0.0
    %1913 = vmatpush.msra.mxu0 0.0
    %1914 = vmatpush.msra.mxu0 0.0
    %1915 = vmatpush.msra.mxu0 0.0
    %1916 = vmatpush.msra.mxu0 0.0
    %1917 = vmatpush.msra.mxu0 0.0
    %1918 = vmatpush.msra.mxu0 0.0
    %1919 = vmatpush.msra.mxu0 0.0
    %1920 = vmatpush.msra.mxu0 0.0
    %1921 = vmatpush.msra.mxu0 %v984
    %1922 = vmatpush.msra.mxu0 %v980
    %1923 = vmatmul.f32.gmra.mxu0 %v1025
    %v1924 = vpop.f32.mrf.mxu0
    %v1925 = vadd.f32 %v1905, %v1924
    %1926 = vdwg.mxu0
    %1927 = vmatpush.msra.mxu0 %v145
    %1928 = vmatpush.msra.mxu0 %v141
    %1929 = vmatpush.msra.mxu0 %v137
    %1930 = vmatpush.msra.mxu0 %v133
    %1931 = vmatpush.msra.mxu0 %v129
    %1932 = vmatpush.msra.mxu0 %v125
    %1933 = vmatpush.msra.mxu0 %v121
    %1934 = vmatpush.msra.mxu0 %v117
    %1935 = vmatpush.msra.mxu0 %v113
    %1936 = vmatpush.msra.mxu0 %v109
    %1937 = vmatpush.msra.mxu0 %v105
    %1938 = vmatpush.msra.mxu0 %v101
    %1939 = vmatpush.msra.mxu0 %v97
    %1940 = vmatpush.msra.mxu0 %v93
    %1941 = vmatpush.msra.mxu0 %v89
    %1942 = vmatpush.msra.mxu0 %v85
    %1943 = vmatmul.f32.gmra.mxu0 %v993
    %v1944 = vpop.f32.mrf.mxu0
    %v1945 = vadd.f32 0.0, %v1944
    %1946 = vdwg.mxu0
    %1947 = vmatpush.msra.mxu0 %v209
    %1948 = vmatpush.msra.mxu0 %v205
    %1949 = vmatpush.msra.mxu0 %v201
    %1950 = vmatpush.msra.mxu0 %v197
    %1951 = vmatpush.msra.mxu0 %v193
    %1952 = vmatpush.msra.mxu0 %v189
    %1953 = vmatpush.msra.mxu0 %v185
    %1954 = vmatpush.msra.mxu0 %v181
    %1955 = vmatpush.msra.mxu0 %v177
    %1956 = vmatpush.msra.mxu0 %v173
    %1957 = vmatpush.msra.mxu0 %v169
    %1958 = vmatpush.msra.mxu0 %v165
    %1959 = vmatpush.msra.mxu0 %v161
    %1960 = vmatpush.msra.mxu0 %v157
    %1961 = vmatpush.msra.mxu0 %v153
    %1962 = vmatpush.msra.mxu0 %v149
    %1963 = vmatmul.f32.gmra.mxu0 %v994
    %v1964 = vpop.f32.mrf.mxu0
    %v1965 = vadd.f32 %v1945, %v1964
    %1966 = vdwg.mxu0
    %1967 = vmatpush.msra.mxu0 %v273
    %1968 = vmatpush.msra.mxu0 %v269
    %1969 = vmatpush.msra.mxu0 %v265
    %1970 = vmatpush.msra.mxu0 %v261
    %1971 = vmatpush.msra.mxu0 %v257
    %1972 = vmatpush.msra.mxu0 %v253
    %1973 = vmatpush.msra.mxu0 %v249
    %1974 = vmatpush.msra.mxu0 %v245
    %1975 = vmatpush.msra.mxu0 %v241
    %1976 = vmatpush.msra.mxu0 %v237
    %1977 = vmatpush.msra.mxu0 %v233
    %1978 = vmatpush.msra.mxu0 %v229
    %1979 = vmatpush.msra.mxu0 %v225
    %1980 = vmatpush.msra.mxu0 %v221
    %1981 = vmatpush.msra.mxu0 %v217
    %1982 = vmatpush.msra.mxu0 %v213
    %1983 = vmatmul.f32.gmra.mxu0 %v995
    %v1984 = vpop.f32.mrf.mxu0
    %v1985 = vadd.f32 %v1965, %v1984
    %1986 = vdwg.mxu0
    %1987 = vmatpush.msra.mxu0 %v337
    %1988 = vmatpush.msra.mxu0 %v333
    %1989 = vmatpush.msra.mxu0 %v329
    %1990 = vmatpush.msra.mxu0 %v325
    %1991 = vmatpush.msra.mxu0 %v321
    %1992 = vmatpush.msra.mxu0 %v317
    %1993 = vmatpush.msra.mxu0 %v313
    %1994 = vmatpush.msra.mxu0 %v309
    %1995 = vmatpush.msra.mxu0 %v305
    %1996 = vmatpush.msra.mxu0 %v301
    %1997 = vmatpush.msra.mxu0 %v297
    %1998 = vmatpush.msra.mxu0 %v293
    %1999 = vmatpush.msra.mxu0 %v289
    %2000 = vmatpush.msra.mxu0 %v285
    %2001 = vmatpush.msra.mxu0 %v281
    %2002 = vmatpush.msra.mxu0 %v277
    %2003 = vmatmul.f32.gmra.mxu0 %v996
    %v2004 = vpop.f32.mrf.mxu0
    %v2005 = vadd.f32 %v1985, %v2004
    %2006 = vdwg.mxu0
    %2007 = vmatpush.msra.mxu0 %v401
    %2008 = vmatpush.msra.mxu0 %v397
    %2009 = vmatpush.msra.mxu0 %v393
    %2010 = vmatpush.msra.mxu0 %v389
    %2011 = vmatpush.msra.mxu0 %v385
    %2012 = vmatpush.msra.mxu0 %v381
    %2013 = vmatpush.msra.mxu0 %v377
    %2014 = vmatpush.msra.mxu0 %v373
    %2015 = vmatpush.msra.mxu0 %v369
    %2016 = vmatpush.msra.mxu0 %v365
    %2017 = vmatpush.msra.mxu0 %v361
    %2018 = vmatpush.msra.mxu0 %v357
    %2019 = vmatpush.msra.mxu0 %v353
    %2020 = vmatpush.msra.mxu0 %v349
    %2021 = vmatpush.msra.mxu0 %v345
    %2022 = vmatpush.msra.mxu0 %v341
    %2023 = vmatmul.f32.gmra.mxu0 %v997
    %v2024 = vpop.f32.mrf.mxu0
    %v2025 = vadd.f32 %v2005, %v2024
    %2026 = vdwg.mxu0
    %2027 = vmatpush.msra.mxu0 %v465
    %2028 = vmatpush.msra.mxu0 %v461
    %2029 = vmatpush.msra.mxu0 %v457
    %2030 = vmatpush.msra.mxu0 %v453
    %2031 = vmatpush.msra.mxu0 %v449
    %2032 = vmatpush.msra.mxu0 %v445
    %2033 = vmatpush.msra.mxu0 %v441
    %2034 = vmatpush.msra.mxu0 %v437
    %2035 = vmatpush.msra.mxu0 %v433
    %2036 = vmatpush.msra.mxu0 %v429
    %2037 = vmatpush.msra.mxu0 %v425
    %2038 = vmatpush.msra.mxu0 %v421
    %2039 = vmatpush.msra.mxu0 %v417
    %2040 = vmatpush.msra.mxu0 %v413
    %2041 = vmatpush.msra.mxu0 %v409
    %2042 = vmatpush.msra.mxu0 %v405
    %2043 = vmatmul.f32.gmra.mxu0 %v998
    %v2044 = vpop.f32.mrf.mxu0
    %v2045 = vadd.f32 %v2025, %v2044
    %2046 = vdwg.mxu0
    %2047 = vmatpush.msra.mxu0 %v529
    %2048 = vmatpush.msra.mxu0 %v525
    %2049 = vmatpush.msra.mxu0 %v521
    %2050 = vmatpush.msra.mxu0 %v517
    %2051 = vmatpush.msra.mxu0 %v513
    %2052 = vmatpush.msra.mxu0 %v509
    %2053 = vmatpush.msra.mxu0 %v505
    %2054 = vmatpush.msra.mxu0 %v501
    %2055 = vmatpush.msra.mxu0 %v497
    %2056 = vmatpush.msra.mxu0 %v493
    %2057 = vmatpush.msra.mxu0 %v489
    %2058 = vmatpush.msra.mxu0 %v485
    %2059 = vmatpush.msra.mxu0 %v481
    %2060 = vmatpush.msra.mxu0 %v477
    %2061 = vmatpush.msra.mxu0 %v473
    %2062 = vmatpush.msra.mxu0 %v469
    %2063 = vmatmul.f32.gmra.mxu0 %v999
    %v2064 = vpop.f32.mrf.mxu0
    %v2065 = vadd.f32 %v2045, %v2064
    %2066 = vdwg.mxu0
    %2067 = vmatpush.msra.mxu0 %v593
    %2068 = vmatpush.msra.mxu0 %v589
    %2069 = vmatpush.msra.mxu0 %v585
    %2070 = vmatpush.msra.mxu0 %v581
    %2071 = vmatpush.msra.mxu0 %v577
    %2072 = vmatpush.msra.mxu0 %v573
    %2073 = vmatpush.msra.mxu0 %v569
    %2074 = vmatpush.msra.mxu0 %v565
    %2075 = vmatpush.msra.mxu0 %v561
    %2076 = vmatpush.msra.mxu0 %v557
    %2077 = vmatpush.msra.mxu0 %v553
    %2078 = vmatpush.msra.mxu0 %v549
    %2079 = vmatpush.msra.mxu0 %v545
    %2080 = vmatpush.msra.mxu0 %v541
    %2081 = vmatpush.msra.mxu0 %v537
    %2082 = vmatpush.msra.mxu0 %v533
    %2083 = vmatmul.f32.gmra.mxu0 %v1000
    %v2084 = vpop.f32.mrf.mxu0
    %v2085 = vadd.f32 %v2065, %v2084
    %2086 = vdwg.mxu0
    %2087 = vmatpush.msra.mxu0 %v657
    %2088 = vmatpush.msra.mxu0 %v653
    %2089 = vmatpush.msra.mxu0 %v649
    %2090 = vmatpush.msra.mxu0 %v645
    %2091 = vmatpush.msra.mxu0 %v641
    %2092 = vmatpush.msra.mxu0 %v637
    %2093 = vmatpush.msra.mxu0 %v633
    %2094 = vmatpush.msra.mxu0 %v629
    %2095 = vmatpush.msra.mxu0 %v625
    %2096 = vmatpush.msra.mxu0 %v621
    %2097 = vmatpush.msra.mxu0 %v617
    %2098 = vmatpush.msra.mxu0 %v613
    %2099 = vmatpush.msra.mxu0 %v609
    %2100 = vmatpush.msra.mxu0 %v605
    %2101 = vmatpush.msra.mxu0 %v601
    %2102 = vmatpush.msra.mxu0 %v597
    %2103 = vmatmul.f32.gmra.mxu0 %v1003
    %v2104 = vpop.f32.mrf.mxu0
    %v2105 = vadd.f32 %v2085, %v2104
    %2106 = vdwg.mxu0
    %2107 = vmatpush.msra.mxu0 %v721
    %2108 = vmatpush.msra.mxu0 %v717
    %2109 = vmatpush.msra.mxu0 %v713
    %2110 = vmatpush.msra.mxu0 %v709
    %2111 = vmatpush.msra.mxu0 %v705
    %2112 = vmatpush.msra.mxu0 %v701
    %2113 = vmatpush.msra.mxu0 %v697
    %2114 = vmatpush.msra.mxu0 %v693
    %2115 = vmatpush.msra.mxu0 %v689
    %2116 = vmatpush.msra.mxu0 %v685
    %2117 = vmatpush.msra.mxu0 %v681
    %2118 = vmatpush.msra.mxu0 %v677
    %2119 = vmatpush.msra.mxu0 %v673
    %2120 = vmatpush.msra.mxu0 %v669
    %2121 = vmatpush.msra.mxu0 %v665
    %2122 = vmatpush.msra.mxu0 %v661
    %2123 = vmatmul.f32.gmra.mxu0 %v1004
    %v2124 = vpop.f32.mrf.mxu0
    %v2125 = vadd.f32 %v2105, %v2124
    %2126 = vdwg.mxu0
    %2127 = vmatpush.msra.mxu0 %v785
    %2128 = vmatpush.msra.mxu0 %v781
    %2129 = vmatpush.msra.mxu0 %v777
    %2130 = vmatpush.msra.mxu0 %v773
    %2131 = vmatpush.msra.mxu0 %v769
    %2132 = vmatpush.msra.mxu0 %v765
    %2133 = vmatpush.msra.mxu0 %v761
    %2134 = vmatpush.msra.mxu0 %v757
    %2135 = vmatpush.msra.mxu0 %v753
    %2136 = vmatpush.msra.mxu0 %v749
    %2137 = vmatpush.msra.mxu0 %v745
    %2138 = vmatpush.msra.mxu0 %v741
    %2139 = vmatpush.msra.mxu0 %v737
    %2140 = vmatpush.msra.mxu0 %v733
    %2141 = vmatpush.msra.mxu0 %v729
    %2142 = vmatpush.msra.mxu0 %v725
    %2143 = vmatmul.f32.gmra.mxu0 %v1005
    %v2144 = vpop.f32.mrf.mxu0
    %v2145 = vadd.f32 %v2125, %v2144
    %2146 = vdwg.mxu0
    %2147 = vmatpush.msra.mxu0 %v849
    %2148 = vmatpush.msra.mxu0 %v845
    %2149 = vmatpush.msra.mxu0 %v841
    %2150 = vmatpush.msra.mxu0 %v837
    %2151 = vmatpush.msra.mxu0 %v833
    %2152 = vmatpush.msra.mxu0 %v829
    %2153 = vmatpush.msra.mxu0 %v825
    %2154 = vmatpush.msra.mxu0 %v821
    %2155 = vmatpush.msra.mxu0 %v817
    %2156 = vmatpush.msra.mxu0 %v813
    %2157 = vmatpush.msra.mxu0 %v809
    %2158 = vmatpush.msra.mxu0 %v805
    %2159 = vmatpush.msra.mxu0 %v801
    %2160 = vmatpush.msra.mxu0 %v797
    %2161 = vmatpush.msra.mxu0 %v793
    %2162 = vmatpush.msra.mxu0 %v789
    %2163 = vmatmul.f32.gmra.mxu0 %v1006
    %v2164 = vpop.f32.mrf.mxu0
    %v2165 = vadd.f32 %v2145, %v2164
    %2166 = vdwg.mxu0
    %2167 = vmatpush.msra.mxu0 %v913
    %2168 = vmatpush.msra.mxu0 %v909
    %2169 = vmatpush.msra.mxu0 %v905
    %2170 = vmatpush.msra.mxu0 %v901
    %2171 = vmatpush.msra.mxu0 %v897
    %2172 = vmatpush.msra.mxu0 %v893
    %2173 = vmatpush.msra.mxu0 %v889
    %2174 = vmatpush.msra.mxu0 %v885
    %2175 = vmatpush.msra.mxu0 %v881
    %2176 = vmatpush.msra.mxu0 %v877
    %2177 = vmatpush.msra.mxu0 %v873
    %2178 = vmatpush.msra.mxu0 %v869
    %2179 = vmatpush.msra.mxu0 %v865
    %2180 = vmatpush.msra.mxu0 %v861
    %2181 = vmatpush.msra.mxu0 %v857
    %2182 = vmatpush.msra.mxu0 %v853
    %2183 = vmatmul.f32.gmra.mxu0 %v1007
    %v2184 = vpop.f32.mrf.mxu0
    %v2185 = vadd.f32 %v2165, %v2184
    %2186 = vdwg.mxu0
    %2187 = vmatpush.msra.mxu0 %v977
    %2188 = vmatpush.msra.mxu0 %v973
    %2189 = vmatpush.msra.mxu0 %v969
    %2190 = vmatpush.msra.mxu0 %v965
    %2191 = vmatpush.msra.mxu0 %v961
    %2192 = vmatpush.msra.mxu0 %v957
    %2193 = vmatpush.msra.mxu0 %v953
    %2194 = vmatpush.msra.mxu0 %v949
    %2195 = vmatpush.msra.mxu0 %v945
    %2196 = vmatpush.msra.mxu0 %v941
    %2197 = vmatpush.msra.mxu0 %v937
    %2198 = vmatpush.msra.mxu0 %v933
    %2199 = vmatpush.msra.mxu0 %v929
    %2200 = vmatpush.msra.mxu0 %v925
    %2201 = vmatpush.msra.mxu0 %v921
    %2202 = vmatpush.msra.mxu0 %v917
    %2203 = vmatmul.f32.gmra.mxu0 %v1008
    %v2204 = vpop.f32.mrf.mxu0
    %v2205 = vadd.f32 %v2185, %v2204
    %2206 = vdwg.mxu0
    %2207 = vmatpush.msra.mxu0 0.0
    %2208 = vmatpush.msra.mxu0 0.0
    %2209 = vmatpush.msra.mxu0 0.0
    %2210 = vmatpush.msra.mxu0 0.0
    %2211 = vmatpush.msra.mxu0 0.0
    %2212 = vmatpush.msra.mxu0 0.0
    %2213 = vmatpush.msra.mxu0 0.0
    %2214 = vmatpush.msra.mxu0 0.0
    %2215 = vmatpush.msra.mxu0 0.0
    %2216 = vmatpush.msra.mxu0 0.0
    %2217 = vmatpush.msra.mxu0 0.0
    %2218 = vmatpush.msra.mxu0 0.0
    %2219 = vmatpush.msra.mxu0 0.0
    %2220 = vmatpush.msra.mxu0 0.0
    %2221 = vmatpush.msra.mxu0 %v985
    %2222 = vmatpush.msra.mxu0 %v981
    %2223 = vmatmul.f32.gmra.mxu0 %v1025
    %v2224 = vpop.f32.mrf.mxu0
    %v2225 = vadd.f32 %v2205, %v2224
    %2226 = vdwg.mxu0
    %v2227 = vld [vmem:[%s2] sm:$0xf]
    %v2229 = vperm.slane %v2227, 0
    %v2230 = vperm.slane %v2227, 1
    %v2231 = vperm.slane %v2227, 2
    %v2232 = vperm.slane %v2227, 3
    %v2237 = vmul.f32 %v1325, %v2229
    %v2238 = vmul.f32 %v1625, %v2230
    %v2239 = vmul.f32 %v1925, %v2231
    %v2240 = vmul.f32 %v2225, %v2232
    %v2241 = vld [vmem:[%s3] sm:$0xf]
    %v2243 = vperm.slane %v2241, 0
    %v2244 = vperm.slane %v2241, 1
    %v2245 = vperm.slane %v2241, 2
    %v2246 = vperm.slane %v2241, 3
    %v2251 = vadd.f32 %v2237, %v2243
    %v2252 = vadd.f32 %v2238, %v2244
    %v2253 = vadd.f32 %v2239, %v2245
    %v2254 = vadd.f32 %v2240, %v2246
    %v2255 = vmax.f32 %v2251, 0.0
    %v2256 = vmax.f32 %v2252, 0.0
    %v2257 = vmax.f32 %v2253, 0.0
    %v2258 = vmax.f32 %v2254, 0.0
    %v2259 = vld [vmem:[#allocation5] sm:$0xff]
    %v2260 = vld [vmem:[#allocation5 + $0x8] sm:$0xff]
    %v2261 = vld [vmem:[#allocation5 + $0x10] sm:$0xff]
    %v2262 = vld [vmem:[#allocation5 + $0x18] sm:$0xff]
    %v2263 = vld [vmem:[#allocation5 + $0x20] sm:$0xff]
    %v2264 = vld [vmem:[#allocation5 + $0x28] sm:$0xff]
    %v2265 = vld [vmem:[#allocation5 + $0x30] sm:$0xff]
    %v2266 = vld [vmem:[#allocation5 + $0x38] sm:$0xff]
    %v2267 = vld [vmem:[#allocation5 + $0x40] sm:$0xff]
    %v2268 = vld [vmem:[#allocation5 + $0x48] sm:$0xff]
    %v2269 = vld [vmem:[#allocation5 + $0x50] sm:$0xff]
    %v2270 = vld [vmem:[#allocation5 + $0x58] sm:$0xff]
    %v2271 = vld [vmem:[#allocation5 + $0x60] sm:$0xff]
    %v2272 = vld [vmem:[#allocation5 + $0x68] sm:$0xff]
    %v2273 = vld [vmem:[#allocation5 + $0x70] sm:$0xff]
    %v2274 = vld [vmem:[#allocation5 + $0x78] sm:$0xff]
    %v2275 = vld [vmem:[#allocation5 + $0x80] sm:$0xff]
    %v2276 = vld [vmem:[#allocation5 + $0x88] sm:$0xff]
    %v2277 = vld [vmem:[#allocation5 + $0x90] sm:$0xff]
    %v2278 = vld [vmem:[#allocation5 + $0x98] sm:$0xff]
    %v2279 = vld [vmem:[#allocation5 + $0xa0] sm:$0xff]
    %v2280 = vld [vmem:[#allocation5 + $0xa8] sm:$0xff]
    %v2281 = vld [vmem:[#allocation5 + $0xb0] sm:$0xff]
    %v2282 = vld [vmem:[#allocation5 + $0xb8] sm:$0xff]
    %v2283 = vld [vmem:[#allocation5 + $0xc0] sm:$0xff]
    %v2284 = vld [vmem:[#allocation5 + $0xc8] sm:$0xff]
    %v2285 = vld [vmem:[#allocation5 + $0xd0] sm:$0xff]
    %v2286 = vld [vmem:[#allocation5 + $0xd8] sm:$0xff]
    %v2287 = vld [vmem:[#allocation5 + $0xe0] sm:$0xff]
    %v2288 = vld [vmem:[#allocation5 + $0xe8] sm:$0xff]
    %v2289 = vld [vmem:[#allocation5 + $0xf0] sm:$0xff]
    %v2290 = vld [vmem:[#allocation5 + $0xf8] sm:$0xff]
    %v2291 = vld [vmem:[#allocation5 + $0x100] sm:$0xff]
    %v2292 = vld [vmem:[#allocation5 + $0x108] sm:$0xff]
    %v2293 = vld [vmem:[#allocation5 + $0x110] sm:$0xff]
    %v2294 = vld [vmem:[#allocation5 + $0x118] sm:$0xff]
    %v2295 = vld [vmem:[#allocation5 + $0x120] sm:$0xff]
    %v2296 = vld [vmem:[#allocation5 + $0x128] sm:$0xff]
    %v2297 = vld [vmem:[#allocation5 + $0x130] sm:$0xff]
    %v2298 = vld [vmem:[#allocation5 + $0x138] sm:$0xff]
    %v2299 = vld [vmem:[#allocation5 + $0x140] sm:$0xff]
    %v2300 = vld [vmem:[#allocation5 + $0x148] sm:$0xff]
    %v2301 = vld [vmem:[#allocation5 + $0x150] sm:$0xff]
    %v2302 = vld [vmem:[#allocation5 + $0x158] sm:$0xff]
    %v2303 = vld [vmem:[#allocation5 + $0x160] sm:$0xff]
    %v2304 = vld [vmem:[#allocation5 + $0x168] sm:$0xff]
    %v2305 = vld [vmem:[#allocation5 + $0x170] sm:$0xff]
    %v2306 = vld [vmem:[#allocation5 + $0x178] sm:$0xff]
    %v2307 = vld [vmem:[#allocation5 + $0x180] sm:$0xff]
    %v2308 = vld [vmem:[#allocation5 + $0x188] sm:$0xff]
    %v2309 = vld [vmem:[#allocation5 + $0x190] sm:$0xff]
    %v2310 = vld [vmem:[#allocation5 + $0x198] sm:$0xff]
    %v2311 = vld [vmem:[#allocation5 + $0x1a0] sm:$0xff]
    %v2312 = vld [vmem:[#allocation5 + $0x1a8] sm:$0xff]
    %v2313 = vld [vmem:[#allocation5 + $0x1b0] sm:$0xff]
    %v2314 = vld [vmem:[#allocation5 + $0x1b8] sm:$0xff]
    %v2315 = vld [vmem:[#allocation5 + $0x1c0] sm:$0xff]
    %v2316 = vld [vmem:[#allocation5 + $0x1c8] sm:$0xff]
    %v2317 = vld [vmem:[#allocation5 + $0x1d0] sm:$0xff]
    %v2318 = vld [vmem:[#allocation5 + $0x1d8] sm:$0xff]
    %v2319 = vld [vmem:[#allocation5 + $0x1e0] sm:$0xff]
    %v2320 = vld [vmem:[#allocation5 + $0x1e8] sm:$0xff]
    %v2321 = vld [vmem:[#allocation5 + $0x1f0] sm:$0xff]
    %v2322 = vld [vmem:[#allocation5 + $0x1f8] sm:$0xff]
    %2323 = vmatpush.msra.mxu0 %v2274
    %2324 = vmatpush.msra.mxu0 %v2273
    %2325 = vmatpush.msra.mxu0 %v2272
    %2326 = vmatpush.msra.mxu0 %v2271
    %2327 = vmatpush.msra.mxu0 %v2270
    %2328 = vmatpush.msra.mxu0 %v2269
    %2329 = vmatpush.msra.mxu0 %v2268
    %2330 = vmatpush.msra.mxu0 %v2267
    %2331 = vmatpush.msra.mxu0 %v2266
    %2332 = vmatpush.msra.mxu0 %v2265
    %2333 = vmatpush.msra.mxu0 %v2264
    %2334 = vmatpush.msra.mxu0 %v2263
    %2335 = vmatpush.msra.mxu0 %v2262
    %2336 = vmatpush.msra.mxu0 %v2261
    %2337 = vmatpush.msra.mxu0 %v2260
    %2338 = vmatpush.msra.mxu0 %v2259
    %2339 = vmatmul.f32.gmra.mxu0 %v2255
    %v2340 = vpop.f32.mrf.mxu0
    %v2341 = vadd.f32 0.0, %v2340
    %2342 = vdwg.mxu0
    %2343 = vmatpush.msra.mxu0 %v2290
    %2344 = vmatpush.msra.mxu0 %v2289
    %2345 = vmatpush.msra.mxu0 %v2288
    %2346 = vmatpush.msra.mxu0 %v2287
    %2347 = vmatpush.msra.mxu0 %v2286
    %2348 = vmatpush.msra.mxu0 %v2285
    %2349 = vmatpush.msra.mxu0 %v2284
    %2350 = vmatpush.msra.mxu0 %v2283
    %2351 = vmatpush.msra.mxu0 %v2282
    %2352 = vmatpush.msra.mxu0 %v2281
    %2353 = vmatpush.msra.mxu0 %v2280
    %2354 = vmatpush.msra.mxu0 %v2279
    %2355 = vmatpush.msra.mxu0 %v2278
    %2356 = vmatpush.msra.mxu0 %v2277
    %2357 = vmatpush.msra.mxu0 %v2276
    %2358 = vmatpush.msra.mxu0 %v2275
    %2359 = vmatmul.f32.gmra.mxu0 %v2256
    %v2360 = vpop.f32.mrf.mxu0
    %v2361 = vadd.f32 %v2341, %v2360
    %2362 = vdwg.mxu0
    %2363 = vmatpush.msra.mxu0 %v2306
    %2364 = vmatpush.msra.mxu0 %v2305
    %2365 = vmatpush.msra.mxu0 %v2304
    %2366 = vmatpush.msra.mxu0 %v2303
    %2367 = vmatpush.msra.mxu0 %v2302
    %2368 = vmatpush.msra.mxu0 %v2301
    %2369 = vmatpush.msra.mxu0 %v2300
    %2370 = vmatpush.msra.mxu0 %v2299
    %2371 = vmatpush.msra.mxu0 %v2298
    %2372 = vmatpush.msra.mxu0 %v2297
    %2373 = vmatpush.msra.mxu0 %v2296
    %2374 = vmatpush.msra.mxu0 %v2295
    %2375 = vmatpush.msra.mxu0 %v2294
    %2376 = vmatpush.msra.mxu0 %v2293
    %2377 = vmatpush.msra.mxu0 %v2292
    %2378 = vmatpush.msra.mxu0 %v2291
    %2379 = vmatmul.f32.gmra.mxu0 %v2257
    %v2380 = vpop.f32.mrf.mxu0
    %v2381 = vadd.f32 %v2361, %v2380
    %2382 = vdwg.mxu0
    %2383 = vmatpush.msra.mxu0 %v2322
    %2384 = vmatpush.msra.mxu0 %v2321
    %2385 = vmatpush.msra.mxu0 %v2320
    %2386 = vmatpush.msra.mxu0 %v2319
    %2387 = vmatpush.msra.mxu0 %v2318
    %2388 = vmatpush.msra.mxu0 %v2317
    %2389 = vmatpush.msra.mxu0 %v2316
    %2390 = vmatpush.msra.mxu0 %v2315
    %2391 = vmatpush.msra.mxu0 %v2314
    %2392 = vmatpush.msra.mxu0 %v2313
    %2393 = vmatpush.msra.mxu0 %v2312
    %2394 = vmatpush.msra.mxu0 %v2311
    %2395 = vmatpush.msra.mxu0 %v2310
    %2396 = vmatpush.msra.mxu0 %v2309
    %2397 = vmatpush.msra.mxu0 %v2308
    %2398 = vmatpush.msra.mxu0 %v2307
    %2399 = vmatmul.f32.gmra.mxu0 %v2258
    %v2400 = vpop.f32.mrf.mxu0
    %v2401 = vadd.f32 %v2381, %v2400
    %2402 = vdwg.mxu0
    %v2403 = vld [vmem:[%s5] sm:$0x1]
    %v2405 = vperm.slane %v2403, 0
    %v2407 = vmul.f32 %v2401, %v2405
    %v2408 = vld [vmem:[%s6] sm:$0x1]
    %v2410 = vperm.slane %v2408, 0
    %v2412 = vadd.f32 %v2407, %v2410
    %v2413 = vmax.f32 %v2412, 0.0
    %v2414 = vld [vmem:[%s7] sm:$0xff]
    %v2415 = vld [vmem:[%s7 + $0x8] sm:$0xff]
    %v2416 = vld [vmem:[%s7 + $0x10] sm:$0xff]
    %v2417 = vld [vmem:[%s7 + $0x18] sm:$0xff]
    %v2418 = vld [vmem:[%s7 + $0x20] sm:$0xff]
    %v2419 = vld [vmem:[%s7 + $0x28] sm:$0xff]
    %v2420 = vld [vmem:[%s7 + $0x30] sm:$0xff]
    %v2421 = vld [vmem:[%s7 + $0x38] sm:$0xff]
    %v2422 = vld [vmem:[%s7 + $0x40] sm:$0xff]
    %v2423 = vld [vmem:[%s7 + $0x48] sm:$0xff]
    %v2424 = vld [vmem:[%s7 + $0x50] sm:$0xff]
    %v2425 = vld [vmem:[%s7 + $0x58] sm:$0xff]
    %v2426 = vld [vmem:[%s7 + $0x60] sm:$0xff]
    %v2427 = vld [vmem:[%s7 + $0x68] sm:$0xff]
    %v2428 = vld [vmem:[%s7 + $0x70] sm:$0xff]
    %v2429 = vld [vmem:[%s7 + $0x78] sm:$0xff]
    %v2430 = vld [vmem:[#allocation7] sm:$0x1]
    %v2432 = vperm.slane %v2430, 0
    %2434 = vmatpush.msra.mxu0 %v2429
    %2435 = vmatpush.msra.mxu0 %v2428
    %2436 = vmatpush.msra.mxu0 %v2427
    %2437 = vmatpush.msra.mxu0 %v2426
    %2438 = vmatpush.msra.mxu0 %v2425
    %2439 = vmatpush.msra.mxu0 %v2424
    %2440 = vmatpush.msra.mxu0 %v2423
    %2441 = vmatpush.msra.mxu0 %v2422
    %2442 = vmatpush.msra.mxu0 %v2421
    %2443 = vmatpush.msra.mxu0 %v2420
    %2444 = vmatpush.msra.mxu0 %v2419
    %2445 = vmatpush.msra.mxu0 %v2418
    %2446 = vmatpush.msra.mxu0 %v2417
    %2447 = vmatpush.msra.mxu0 %v2416
    %2448 = vmatpush.msra.mxu0 %v2415
    %2449 = vmatpush.msra.mxu0 %v2414
    %2450 = vmatmul.f32.gmra.mxu0 %v2413
    %v2451 = vpop.f32.mrf.mxu0
    %v2452 = vadd.f32 %v2432, %v2451
    %2453 = vdwg.mxu0
    %vm2454 = vcmask 74752
    %v2455 = vsel %vm2454, %v2452, -inf
    %2456 = vmax.xlane.f32.xlu0 %v2455
    %v2457 = vpop.xlane.xlu0 %2456
    %v2458 = vsub.f32 %v2452, %v2457
    %v2459 = vmul.f32 %v2458, 1.442695
    %v2460 = vpow.pop %v2459
    %v2461 = vsel %vm2454, %v2460, 0.0
    %2462 = vadd.xlane.f32.xlu0 %v2461
    %v2463 = vpop.xlane.xlu0 %2462
    %v2464 = vlog2.pop %v2463
    %v2465 = vmul.f32 %v2464, 0.6931472
    %v2466 = vsub.f32 %v2458, %v2465
    %2467 = vst.msk [vmem:[#allocation8] sm:$0x3] %vm2454, %v2466
    // Predicated region
    $region50: #{forward.9} parent=1 // pred_check
      _
    $region51: #{forward.9} parent=1 // pred_check_branch
      %2469 = sbr.rel (0) target = $region53
    $region52: #{forward.9} parent=1 // pred_region
      %2471 = vsyncadd [#allocation4], 0
      %s2473 = sshll.u32 [#allocation8], 4
      %s2474 = int_to_ptr.vmem [resolvable:$true] %s2473
      %s2475 = sshll.u32 %s9, 4
      %s2476 = int_to_ptr.hbm [resolvable:$true] %s2475
      %2478 = dma.vmem_to_hbm [thread:$0]  %s2474, 32, %s2476, [#allocation4]
    $region53: #{forward.9} parent=1 // pred_fallthru
      _
    // Predicated region
    $region54: #{forward.9} parent=1 // pred_check
      _
    $region55: #{forward.9} parent=1 // pred_check_branch
      %2480 = sbr.rel (0) target = $region57
    $region56: #{forward.9} parent=1 // pred_region
      %2482 = dma.done [#allocation4], 32
    $region57: #{forward.9} parent=1 // pred_fallthru
      _
    %2483 = vsyncpa [#allocation3], 1
    %2484 = vsyncpa [#allocation6], 1
    %2485 = vsyncpa [#allocation4], 1

</llo_original>
